<compile_context>
chip_gen: v5e
topology: v5e:2x2
jax: 0.10.0
libtpu: 0.0.40
codegen_flags: <defaults>
</compile_context>

<pallas_src>
import functools

import jax
import jax.numpy as jnp
import numpy as np
from jax import lax
from jax.experimental import pallas as pl
from jax.experimental.pallas import tpu as pltpu

INPUT_DIM = 768     # BERT hidden size (LSTM input)
HIDDEN = 128        # LSTM hidden size
CONV_OUT = 50       # Conv1d out channels
KERNEL = 20         # Conv1d kernel size
STRIDE = 2          # Conv1d stride
NUM_LABELS = 4      # see TODO above


# ----------------------------------------------------------------------------
# Fused kernel: input projection + LSTM recurrence + Conv1d (im2col) + FC +
# sigmoid, all in one pallas_call, everything VMEM-resident.
# ----------------------------------------------------------------------------
def _fused_kernel(x_ref, wih_ref, whh_ref, b_ref,
                  wconv_ref, bconv_ref, wfc_ref, bfc_ref,
                  out_ref, gx_scr, lstm_scr, col_scr,
                  *, seq_len, batch, l_out):
    # x_ref:     [S*Bp, 768]   time-major rows (row = t*Bp + b)
    # wih_ref:   [768, 4H]     whh_ref: [H, 4H]    b_ref: [1, 4H]
    # wconv_ref: [K*H, CONV_OUT]  bconv_ref: [1, CONV_OUT]
    # wfc_ref:   [CONV_OUT, NUM_LABELS]  bfc_ref: [1, NUM_LABELS]
    # out_ref:   [L_out*Bp, NUM_LABELS]  (row = l*Bp + b)
    # gx_scr:    [S*Bp, 4H]   lstm_scr: [S*Bp, H]   col_scr: [L_out*Bp, K*H]
    H = HIDDEN

    # ---- (1) batched input projection, hoisted out of the recurrence -------
    gx_scr[...] = (
        jnp.dot(x_ref[...], wih_ref[...], preferred_element_type=jnp.float32)
        + b_ref[...]
    )

    # ---- (2) sequential recurrence: only h @ W_hh^T remains on the critical
    #          path.  h, c are single-vreg [Bp, 128] carries.
    whh = whh_ref[...]                                     # hoisted load

    def step(t, carry):
        h, c = carry
        row = pl.multiple_of(t * batch, batch)             # sublane-aligned
        gates = gx_scr[pl.ds(row, batch), :] + jnp.dot(
            h, whh, preferred_element_type=jnp.float32)    # [Bp, 4H]
        i = jax.nn.sigmoid(gates[:, 0 * H:1 * H])
        f = jax.nn.sigmoid(gates[:, 1 * H:2 * H])
        g = jnp.tanh(gates[:, 2 * H:3 * H])
        o = jax.nn.sigmoid(gates[:, 3 * H:4 * H])
        c_new = f * c + i * g
        h_new = o * jnp.tanh(c_new)
        lstm_scr[pl.ds(row, batch), :] = h_new
        return h_new, c_new

    zeros = jnp.zeros((batch, H), jnp.float32)
    lax.fori_loop(0, seq_len, step, (zeros, zeros), unroll=True)

    # ---- (3) Conv1d(k=20, s=2) + FC + sigmoid via im2col --------------------
    # Static, tile-aligned copies (each [Bp, H] = one (8,128) tile) build the
    # [L_out*Bp, K*H] matrix, then a single MXU pass each for conv and FC.
    for l in range(l_out):
        for k in range(KERNEL):
            src = (l * STRIDE + k) * batch
            col_scr[pl.ds(l * batch, batch), pl.ds(k * H, H)] = (
                lstm_scr[pl.ds(src, batch), :])

    conv = jnp.dot(col_scr[...], wconv_ref[...],
                   preferred_element_type=jnp.float32) + bconv_ref[...]
    logits = jnp.dot(conv, wfc_ref[...],
                     preferred_element_type=jnp.float32) + bfc_ref[...]
    out_ref[...] = jax.nn.sigmoid(logits)                   # one batched store


def fused_forward(x_bsd, w_ih, w_hh, b_ih, b_hh, w_conv, b_conv, w_fc, b_fc):
    """x_bsd: [B, S, 768] -> sigmoid logits [B, L_out, NUM_LABELS]."""
    B, S, D = x_bsd.shape
    assert D == INPUT_DIM and S >= KERNEL
    Bp = ((B + 7) // 8) * 8                 # pad batch to f32 sublane count
    L_out = (S - KERNEL) // STRIDE + 1

    # Time-major, batch-padded rows: row = t*Bp + b.
    x_sb = jnp.transpose(x_bsd, (1, 0, 2))                  # [S, B, D]
    if Bp != B:
        x_sb = jnp.pad(x_sb, ((0, 0), (0, Bp - B), (0, 0)))
    x_flat = x_sb.reshape(S * Bp, D)

    w_ihT = jnp.transpose(w_ih)                             # [768, 4H]
    w_hhT = jnp.transpose(w_hh)                             # [H, 4H]
    bias = (b_ih + b_hh).reshape(1, 4 * HIDDEN)
    # Conv weight [Cout, Cin, K] -> im2col layout [K*Cin, Cout].
    w_conv_im2col = jnp.transpose(w_conv, (2, 1, 0)).reshape(
        KERNEL * HIDDEN, CONV_OUT)
    b_conv2 = b_conv.reshape(1, CONV_OUT)
    w_fcT = jnp.transpose(w_fc)                             # [Cout, NL]
    b_fc2 = b_fc.reshape(1, NUM_LABELS)

    vmem = pl.BlockSpec(memory_space=pltpu.MemorySpace.VMEM)
    out_flat = pl.pallas_call(
        functools.partial(_fused_kernel, seq_len=S, batch=Bp, l_out=L_out),
        out_shape=jax.ShapeDtypeStruct((L_out * Bp, NUM_LABELS), jnp.float32),
        in_specs=[vmem] * 8,
        out_specs=vmem,
        scratch_shapes=[
            pltpu.VMEM((S * Bp, 4 * HIDDEN), jnp.float32),          # gates_x
            pltpu.VMEM((S * Bp, HIDDEN), jnp.float32),              # lstm seq
            pltpu.VMEM((L_out * Bp, KERNEL * HIDDEN), jnp.float32),  # im2col
        ],
    )(x_flat, w_ihT, w_hhT, bias, w_conv_im2col, b_conv2, w_fcT, b_fc2)

    out = out_flat.reshape(L_out, Bp, NUM_LABELS)           # (l, b, label)
    return jnp.transpose(out, (1, 0, 2))[:B]                # [B, L_out, NL]


# ----------------------------------------------------------------------------
# Full model
# ----------------------------------------------------------------------------
def init_params(key):
    ks = jax.random.split(key, 8)
    s = 0.05
    return dict(
        emb=jax.random.normal(ks[0], (100, INPUT_DIM), jnp.float32) * s,
        w_ih=jax.random.normal(ks[1], (4 * HIDDEN, INPUT_DIM), jnp.float32) * s,
        w_hh=jax.random.normal(ks[2], (4 * HIDDEN, HIDDEN), jnp.float32) * s,
        b_ih=jax.random.normal(ks[3], (4 * HIDDEN,), jnp.float32) * s,
        b_hh=jax.random.normal(ks[4], (4 * HIDDEN,), jnp.float32) * s,
        w_conv=jax.random.normal(ks[5], (CONV_OUT, HIDDEN, KERNEL), jnp.float32) * s,
        b_conv=jax.random.normal(ks[6], (CONV_OUT,), jnp.float32) * s,
        w_fc=jax.random.normal(ks[7], (NUM_LABELS, CONV_OUT), jnp.float32) * s,
        b_fc=jnp.zeros((NUM_LABELS,), jnp.float32),
    )


@jax.jit
def bert_lstm_model(params, input_ids, attention_mask):
    # Stand-in for the BERT encoder (see TODO above): deterministic embedding
    # lookup, masked by attention_mask -> [B, S, 768] hidden states.
    bert_output = (params["emb"][input_ids]
                   * attention_mask[..., None].astype(jnp.float32))
    # Dropout(0.6): identity at inference.
    return fused_forward(bert_output,
                         params["w_ih"], params["w_hh"],
                         params["b_ih"], params["b_hh"],
                         params["w_conv"], params["b_conv"],
                         params["w_fc"], params["b_fc"])


# ----------------------------------------------------------------------------
# Pure-JAX reference (no Pallas) for a correctness check.
# ----------------------------------------------------------------------------
def reference(params, input_ids, attention_mask):
    x = params["emb"][input_ids] * attention_mask[..., None].astype(jnp.float32)
    B, S, _ = x.shape
    w_ih, w_hh = params["w_ih"], params["w_hh"]
    b = params["b_ih"] + params["b_hh"]

    def step(carry, x_t):
        h, c = carry
        gates = x_t @ w_ih.T + h @ w_hh.T + b
        i, f, g, o = jnp.split(gates, 4, axis=-1)
        i, f, o = jax.nn.sigmoid(i), jax.nn.sigmoid(f), jax.nn.sigmoid(o)
        g = jnp.tanh(g)
        c = f * c + i * g
        h = o * jnp.tanh(c)
        return (h, c), h

    h0 = jnp.zeros((B, HIDDEN), jnp.float32)
    (_, _), hs = jax.lax.scan(step, (h0, h0), jnp.transpose(x, (1, 0, 2)))
    lstm_out = jnp.transpose(hs, (1, 0, 2))           # [B, S, H]

    L_out = (S - KERNEL) // STRIDE + 1
    wins = jnp.stack([lstm_out[:, l * STRIDE:l * STRIDE + KERNEL, :]
                      for l in range(L_out)], axis=1)  # [B, L, K, H]
    conv = jnp.einsum("blkh,ohk->blo", wins, params["w_conv"]) + params["b_conv"]
    logits = conv @ params["w_fc"].T + params["b_fc"]
    return jax.nn.sigmoid(logits)


if __name__ == "__main__":
    B, S = 2, 26                                      # small shapes; S >= kernel(20)
    key = jax.random.PRNGKey(0)
    k_par, k_ids = jax.random.split(key)
    params = init_params(k_par)

    input_ids = jax.random.randint(k_ids, (B, S), 0, 100, dtype=jnp.int32)
    attention_mask = jnp.ones((B, S), jnp.int32)

    out = bert_lstm_model(params, input_ids, attention_mask)
    out = jax.block_until_ready(out)

    ref = reference(params, input_ids, attention_mask)
    np.testing.assert_allclose(np.asarray(out), np.asarray(ref),
                               rtol=1e-3, atol=1e-3)

    assert out.shape == (B, (S - KERNEL) // STRIDE + 1, NUM_LABELS)
    print("KERNEL_OK")
</pallas_src>

<mosaic_0001>
module attributes {stable_mosaic.version = 11 : i64} {
  func.func @_fused_kernel(%arg0: memref<208x768xf32, #tpu.memory_space<vmem>>, %arg1: memref<768x512xf32, #tpu.memory_space<vmem>>, %arg2: memref<128x512xf32, #tpu.memory_space<vmem>>, %arg3: memref<1x512xf32, #tpu.memory_space<vmem>>, %arg4: memref<2560x50xf32, #tpu.memory_space<vmem>>, %arg5: memref<1x50xf32, #tpu.memory_space<vmem>>, %arg6: memref<50x4xf32, #tpu.memory_space<vmem>>, %arg7: memref<1x4xf32, #tpu.memory_space<vmem>>, %arg8: memref<32x4xf32, #tpu.memory_space<vmem>>, %arg9: memref<208x512xf32, #tpu.memory_space<vmem>>, %arg10: memref<208x128xf32, #tpu.memory_space<vmem>>, %arg11: memref<32x2560xf32, #tpu.memory_space<vmem>>) attributes {dimension_semantics = [], scalar_prefetch = 0 : i64, scratch_operands = 3 : i64, tpu.core_type = #tpu.core_type<tc>} {
    %c0 = arith.constant 0 : index
    %c0_0 = arith.constant 0 : index
    %0 = vector.load %arg0[%c0, %c0_0] : memref<208x768xf32, #tpu.memory_space<vmem>>, vector<208x768xf32>
    %c0_1 = arith.constant 0 : index
    %c0_2 = arith.constant 0 : index
    %1 = vector.load %arg1[%c0_1, %c0_2] : memref<768x512xf32, #tpu.memory_space<vmem>>, vector<768x512xf32>
    %cst = arith.constant dense<0.000000e+00> : vector<208x512xf32>
    %2 = tpu.matmul %0, %1, %cst {dimension_numbers = #tpu.dot_dimension_numbers<[1], [0], [0], [1], [0, 0, 1, 1], [], []>} : vector<208x768xf32>, vector<768x512xf32>, vector<208x512xf32> -> vector<208x512xf32>
    %c0_3 = arith.constant 0 : index
    %c0_4 = arith.constant 0 : index
    %3 = vector.load %arg3[%c0_3, %c0_4] : memref<1x512xf32, #tpu.memory_space<vmem>>, vector<1x512xf32>
    %4 = vector.broadcast %3 : vector<1x512xf32> to vector<208x512xf32>
    %5 = arith.addf %2, %4 : vector<208x512xf32>
    %c0_5 = arith.constant 0 : index
    %c0_6 = arith.constant 0 : index
    %6 = vector.load %arg9[%c0_5, %c0_6] : memref<208x512xf32, #tpu.memory_space<vmem>>, vector<208x512xf32>
    tpu.vector_store %arg9[%c0_5, %c0_6], %5 {strides = array<i32>} : memref<208x512xf32, #tpu.memory_space<vmem>>, vector<208x512xf32>,
    %c0_7 = arith.constant 0 : index
    %c0_8 = arith.constant 0 : index
    %7 = vector.load %arg2[%c0_7, %c0_8] : memref<128x512xf32, #tpu.memory_space<vmem>>, vector<128x512xf32>
    %cst_9 = arith.constant 0.000000e+00 : f32
    %8 = vector.broadcast %cst_9 : f32 to vector<8x128xf32>
    %c0_i32 = arith.constant 0 : i32
    %c8_i32 = arith.constant 8 : i32
    %9 = arith.muli %c0_i32, %c8_i32 : i32
    %10 = tpu.assume_multiple %9, 8 : i32
    %11 = arith.index_cast %10 : i32 to index
    %c0_10 = arith.constant 0 : index
    %12 = vector.load %arg9[%11, %c0_10] : memref<208x512xf32, #tpu.memory_space<vmem>>, vector<8x512xf32>
    %cst_11 = arith.constant dense<0.000000e+00> : vector<8x512xf32>
    %13 = tpu.matmul %8, %7, %cst_11 {dimension_numbers = #tpu.dot_dimension_numbers<[1], [0], [0], [1], [0, 0, 1, 1], [], []>} : vector<8x128xf32>, vector<128x512xf32>, vector<8x512xf32> -> vector<8x512xf32>
    %14 = arith.addf %12, %13 : vector<8x512xf32>
    %15 = vector.extract_strided_slice %14 {offsets = [0, 0], sizes = [8, 128], strides = [1, 1]} : vector<8x512xf32> to vector<8x128xf32>
    %16 = arith.negf %15 : vector<8x128xf32>
    %17 = math.exp %16 : vector<8x128xf32>
    %cst_12 = arith.constant 1.000000e+00 : f32
    %18 = vector.broadcast %cst_12 : f32 to vector<8x128xf32>
    %19 = arith.addf %18, %17 : vector<8x128xf32>
    %20 = arith.divf %18, %19 : vector<8x128xf32>
    %21 = vector.extract_strided_slice %14 {offsets = [0, 128], sizes = [8, 128], strides = [1, 1]} : vector<8x512xf32> to vector<8x128xf32>
    %22 = arith.negf %21 : vector<8x128xf32>
    %23 = math.exp %22 : vector<8x128xf32>
    %cst_13 = arith.constant 1.000000e+00 : f32
    %24 = vector.broadcast %cst_13 : f32 to vector<8x128xf32>
    %25 = arith.addf %24, %23 : vector<8x128xf32>
    %26 = arith.divf %24, %25 : vector<8x128xf32>
    %27 = vector.extract_strided_slice %14 {offsets = [0, 256], sizes = [8, 128], strides = [1, 1]} : vector<8x512xf32> to vector<8x128xf32>
    %28 = math.tanh %27 : vector<8x128xf32>
    %29 = vector.extract_strided_slice %14 {offsets = [0, 384], sizes = [8, 128], strides = [1, 1]} : vector<8x512xf32> to vector<8x128xf32>
    %30 = arith.negf %29 : vector<8x128xf32>
    %31 = math.exp %30 : vector<8x128xf32>
    %cst_14 = arith.constant 1.000000e+00 : f32
    %32 = vector.broadcast %cst_14 : f32 to vector<8x128xf32>
    %33 = arith.addf %32, %31 : vector<8x128xf32>
    %34 = arith.divf %32, %33 : vector<8x128xf32>
    %35 = arith.mulf %26, %8 : vector<8x128xf32>
    %36 = arith.mulf %20, %28 : vector<8x128xf32>
    %37 = arith.addf %35, %36 : vector<8x128xf32>
    %38 = math.tanh %37 : vector<8x128xf32>
    %39 = arith.mulf %34, %38 : vector<8x128xf32>
    %40 = arith.index_cast %10 : i32 to index
    %c0_15 = arith.constant 0 : index
    %41 = vector.load %arg10[%40, %c0_15] : memref<208x128xf32, #tpu.memory_space<vmem>>, vector<8x128xf32>
    tpu.vector_store %arg10[%40, %c0_15], %39 {strides = array<i32>} : memref<208x128xf32, #tpu.memory_space<vmem>>, vector<8x128xf32>,
    %c1_i32 = arith.constant 1 : i32
    %c8_i32_16 = arith.constant 8 : i32
    %42 = arith.muli %c1_i32, %c8_i32_16 : i32
    %43 = tpu.assume_multiple %42, 8 : i32
    %44 = arith.index_cast %43 : i32 to index
    %c0_17 = arith.constant 0 : index
    %45 = vector.load %arg9[%44, %c0_17] : memref<208x512xf32, #tpu.memory_space<vmem>>, vector<8x512xf32>
    %cst_18 = arith.constant dense<0.000000e+00> : vector<8x512xf32>
    %46 = tpu.matmul %39, %7, %cst_18 {dimension_numbers = #tpu.dot_dimension_numbers<[1], [0], [0], [1], [0, 0, 1, 1], [], []>} : vector<8x128xf32>, vector<128x512xf32>, vector<8x512xf32> -> vector<8x512xf32>
    %47 = arith.addf %45, %46 : vector<8x512xf32>
    %48 = vector.extract_strided_slice %47 {offsets = [0, 0], sizes = [8, 128], strides = [1, 1]} : vector<8x512xf32> to vector<8x128xf32>
    %49 = arith.negf %48 : vector<8x128xf32>
    %50 = math.exp %49 : vector<8x128xf32>
    %cst_19 = arith.constant 1.000000e+00 : f32
    %51 = vector.broadcast %cst_19 : f32 to vector<8x128xf32>
    %52 = arith.addf %51, %50 : vector<8x128xf32>
    %53 = arith.divf %51, %52 : vector<8x128xf32>
    %54 = vector.extract_strided_slice %47 {offsets = [0, 128], sizes = [8, 128], strides = [1, 1]} : vector<8x512xf32> to vector<8x128xf32>
    %55 = arith.negf %54 : vector<8x128xf32>
    %56 = math.exp %55 : vector<8x128xf32>
    %cst_20 = arith.constant 1.000000e+00 : f32
    %57 = vector.broadcast %cst_20 : f32 to vector<8x128xf32>
    %58 = arith.addf %57, %56 : vector<8x128xf32>
    %59 = arith.divf %57, %58 : vector<8x128xf32>
    %60 = vector.extract_strided_slice %47 {offsets = [0, 256], sizes = [8, 128], strides = [1, 1]} : vector<8x512xf32> to vector<8x128xf32>
    %61 = math.tanh %60 : vector<8x128xf32>
    %62 = vector.extract_strided_slice %47 {offsets = [0, 384], sizes = [8, 128], strides = [1, 1]} : vector<8x512xf32> to vector<8x128xf32>
    %63 = arith.negf %62 : vector<8x128xf32>
    %64 = math.exp %63 : vector<8x128xf32>
    %cst_21 = arith.constant 1.000000e+00 : f32
    %65 = vector.broadcast %cst_21 : f32 to vector<8x128xf32>
    %66 = arith.addf %65, %64 : vector<8x128xf32>
    %67 = arith.divf %65, %66 : vector<8x128xf32>
    %68 = arith.mulf %59, %37 : vector<8x128xf32>
    %69 = arith.mulf %53, %61 : vector<8x128xf32>
    %70 = arith.addf %68, %69 : vector<8x128xf32>
    %71 = math.tanh %70 : vector<8x128xf32>
    %72 = arith.mulf %67, %71 : vector<8x128xf32>
    %73 = arith.index_cast %43 : i32 to index
    %c0_22 = arith.constant 0 : index
    %74 = vector.load %arg10[%73, %c0_22] : memref<208x128xf32, #tpu.memory_space<vmem>>, vector<8x128xf32>
    tpu.vector_store %arg10[%73, %c0_22], %72 {strides = array<i32>} : memref<208x128xf32, #tpu.memory_space<vmem>>, vector<8x128xf32>,
    %c2_i32 = arith.constant 2 : i32
    %c8_i32_23 = arith.constant 8 : i32
    %75 = arith.muli %c2_i32, %c8_i32_23 : i32
    %76 = tpu.assume_multiple %75, 8 : i32
    %77 = arith.index_cast %76 : i32 to index
    %c0_24 = arith.constant 0 : index
    %78 = vector.load %arg9[%77, %c0_24] : memref<208x512xf32, #tpu.memory_space<vmem>>, vector<8x512xf32>
    %cst_25 = arith.constant dense<0.000000e+00> : vector<8x512xf32>
    %79 = tpu.matmul %72, %7, %cst_25 {dimension_numbers = #tpu.dot_dimension_numbers<[1], [0], [0], [1], [0, 0, 1, 1], [], []>} : vector<8x128xf32>, vector<128x512xf32>, vector<8x512xf32> -> vector<8x512xf32>
    %80 = arith.addf %78, %79 : vector<8x512xf32>
    %81 = vector.extract_strided_slice %80 {offsets = [0, 0], sizes = [8, 128], strides = [1, 1]} : vector<8x512xf32> to vector<8x128xf32>
    %82 = arith.negf %81 : vector<8x128xf32>
    %83 = math.exp %82 : vector<8x128xf32>
    %cst_26 = arith.constant 1.000000e+00 : f32
    %84 = vector.broadcast %cst_26 : f32 to vector<8x128xf32>
    %85 = arith.addf %84, %83 : vector<8x128xf32>
    %86 = arith.divf %84, %85 : vector<8x128xf32>
    %87 = vector.extract_strided_slice %80 {offsets = [0, 128], sizes = [8, 128], strides = [1, 1]} : vector<8x512xf32> to vector<8x128xf32>
    %88 = arith.negf %87 : vector<8x128xf32>
    %89 = math.exp %88 : vector<8x128xf32>
    %cst_27 = arith.constant 1.000000e+00 : f32
    %90 = vector.broadcast %cst_27 : f32 to vector<8x128xf32>
    %91 = arith.addf %90, %89 : vector<8x128xf32>
    %92 = arith.divf %90, %91 : vector<8x128xf32>
    %93 = vector.extract_strided_slice %80 {offsets = [0, 256], sizes = [8, 128], strides = [1, 1]} : vector<8x512xf32> to vector<8x128xf32>
    %94 = math.tanh %93 : vector<8x128xf32>
    %95 = vector.extract_strided_slice %80 {offsets = [0, 384], sizes = [8, 128], strides = [1, 1]} : vector<8x512xf32> to vector<8x128xf32>
    %96 = arith.negf %95 : vector<8x128xf32>
    %97 = math.exp %96 : vector<8x128xf32>
    %cst_28 = arith.constant 1.000000e+00 : f32
    %98 = vector.broadcast %cst_28 : f32 to vector<8x128xf32>
    %99 = arith.addf %98, %97 : vector<8x128xf32>
    %100 = arith.divf %98, %99 : vector<8x128xf32>
    %101 = arith.mulf %92, %70 : vector<8x128xf32>
    %102 = arith.mulf %86, %94 : vector<8x128xf32>
    %103 = arith.addf %101, %102 : vector<8x128xf32>
    %104 = math.tanh %103 : vector<8x128xf32>
    %105 = arith.mulf %100, %104 : vector<8x128xf32>
    %106 = arith.index_cast %76 : i32 to index
    %c0_29 = arith.constant 0 : index
    %107 = vector.load %arg10[%106, %c0_29] : memref<208x128xf32, #tpu.memory_space<vmem>>, vector<8x128xf32>
    tpu.vector_store %arg10[%106, %c0_29], %105 {strides = array<i32>} : memref<208x128xf32, #tpu.memory_space<vmem>>, vector<8x128xf32>,
    %c3_i32 = arith.constant 3 : i32
    %c8_i32_30 = arith.constant 8 : i32
    %108 = arith.muli %c3_i32, %c8_i32_30 : i32
    %109 = tpu.assume_multiple %108, 8 : i32
    %110 = arith.index_cast %109 : i32 to index
    %c0_31 = arith.constant 0 : index
    %111 = vector.load %arg9[%110, %c0_31] : memref<208x512xf32, #tpu.memory_space<vmem>>, vector<8x512xf32>
    %cst_32 = arith.constant dense<0.000000e+00> : vector<8x512xf32>
    %112 = tpu.matmul %105, %7, %cst_32 {dimension_numbers = #tpu.dot_dimension_numbers<[1], [0], [0], [1], [0, 0, 1, 1], [], []>} : vector<8x128xf32>, vector<128x512xf32>, vector<8x512xf32> -> vector<8x512xf32>
    %113 = arith.addf %111, %112 : vector<8x512xf32>
    %114 = vector.extract_strided_slice %113 {offsets = [0, 0], sizes = [8, 128], strides = [1, 1]} : vector<8x512xf32> to vector<8x128xf32>
    %115 = arith.negf %114 : vector<8x128xf32>
    %116 = math.exp %115 : vector<8x128xf32>
    %cst_33 = arith.constant 1.000000e+00 : f32
    %117 = vector.broadcast %cst_33 : f32 to vector<8x128xf32>
    %118 = arith.addf %117, %116 : vector<8x128xf32>
    %119 = arith.divf %117, %118 : vector<8x128xf32>
    %120 = vector.extract_strided_slice %113 {offsets = [0, 128], sizes = [8, 128], strides = [1, 1]} : vector<8x512xf32> to vector<8x128xf32>
    %121 = arith.negf %120 : vector<8x128xf32>
    %122 = math.exp %121 : vector<8x128xf32>
    %cst_34 = arith.constant 1.000000e+00 : f32
    %123 = vector.broadcast %cst_34 : f32 to vector<8x128xf32>
    %124 = arith.addf %123, %122 : vector<8x128xf32>
    %125 = arith.divf %123, %124 : vector<8x128xf32>
    %126 = vector.extract_strided_slice %113 {offsets = [0, 256], sizes = [8, 128], strides = [1, 1]} : vector<8x512xf32> to vector<8x128xf32>
    %127 = math.tanh %126 : vector<8x128xf32>
    %128 = vector.extract_strided_slice %113 {offsets = [0, 384], sizes = [8, 128], strides = [1, 1]} : vector<8x512xf32> to vector<8x128xf32>
    %129 = arith.negf %128 : vector<8x128xf32>
    %130 = math.exp %129 : vector<8x128xf32>
    %cst_35 = arith.constant 1.000000e+00 : f32
    %131 = vector.broadcast %cst_35 : f32 to vector<8x128xf32>
    %132 = arith.addf %131, %130 : vector<8x128xf32>
    %133 = arith.divf %131, %132 : vector<8x128xf32>
    %134 = arith.mulf %125, %103 : vector<8x128xf32>
    %135 = arith.mulf %119, %127 : vector<8x128xf32>
    %136 = arith.addf %134, %135 : vector<8x128xf32>
    %137 = math.tanh %136 : vector<8x128xf32>
    %138 = arith.mulf %133, %137 : vector<8x128xf32>
    %139 = arith.index_cast %109 : i32 to index
    %c0_36 = arith.constant 0 : index
    %140 = vector.load %arg10[%139, %c0_36] : memref<208x128xf32, #tpu.memory_space<vmem>>, vector<8x128xf32>
    tpu.vector_store %arg10[%139, %c0_36], %138 {strides = array<i32>} : memref<208x128xf32, #tpu.memory_space<vmem>>, vector<8x128xf32>,
    %c4_i32 = arith.constant 4 : i32
    %c8_i32_37 = arith.constant 8 : i32
    %141 = arith.muli %c4_i32, %c8_i32_37 : i32
    %142 = tpu.assume_multiple %141, 8 : i32
    %143 = arith.index_cast %142 : i32 to index
    %c0_38 = arith.constant 0 : index
    %144 = vector.load %arg9[%143, %c0_38] : memref<208x512xf32, #tpu.memory_space<vmem>>, vector<8x512xf32>
    %cst_39 = arith.constant dense<0.000000e+00> : vector<8x512xf32>
    %145 = tpu.matmul %138, %7, %cst_39 {dimension_numbers = #tpu.dot_dimension_numbers<[1], [0], [0], [1], [0, 0, 1, 1], [], []>} : vector<8x128xf32>, vector<128x512xf32>, vector<8x512xf32> -> vector<8x512xf32>
    %146 = arith.addf %144, %145 : vector<8x512xf32>
    %147 = vector.extract_strided_slice %146 {offsets = [0, 0], sizes = [8, 128], strides = [1, 1]} : vector<8x512xf32> to vector<8x128xf32>
    %148 = arith.negf %147 : vector<8x128xf32>
    %149 = math.exp %148 : vector<8x128xf32>
    %cst_40 = arith.constant 1.000000e+00 : f32
    %150 = vector.broadcast %cst_40 : f32 to vector<8x128xf32>
    %151 = arith.addf %150, %149 : vector<8x128xf32>
    %152 = arith.divf %150, %151 : vector<8x128xf32>
    %153 = vector.extract_strided_slice %146 {offsets = [0, 128], sizes = [8, 128], strides = [1, 1]} : vector<8x512xf32> to vector<8x128xf32>
    %154 = arith.negf %153 : vector<8x128xf32>
    %155 = math.exp %154 : vector<8x128xf32>
    %cst_41 = arith.constant 1.000000e+00 : f32
    %156 = vector.broadcast %cst_41 : f32 to vector<8x128xf32>
    %157 = arith.addf %156, %155 : vector<8x128xf32>
    %158 = arith.divf %156, %157 : vector<8x128xf32>
    %159 = vector.extract_strided_slice %146 {offsets = [0, 256], sizes = [8, 128], strides = [1, 1]} : vector<8x512xf32> to vector<8x128xf32>
    %160 = math.tanh %159 : vector<8x128xf32>
    %161 = vector.extract_strided_slice %146 {offsets = [0, 384], sizes = [8, 128], strides = [1, 1]} : vector<8x512xf32> to vector<8x128xf32>
    %162 = arith.negf %161 : vector<8x128xf32>
    %163 = math.exp %162 : vector<8x128xf32>
    %cst_42 = arith.constant 1.000000e+00 : f32
    %164 = vector.broadcast %cst_42 : f32 to vector<8x128xf32>
    %165 = arith.addf %164, %163 : vector<8x128xf32>
    %166 = arith.divf %164, %165 : vector<8x128xf32>
    %167 = arith.mulf %158, %136 : vector<8x128xf32>
    %168 = arith.mulf %152, %160 : vector<8x128xf32>
    %169 = arith.addf %167, %168 : vector<8x128xf32>
    %170 = math.tanh %169 : vector<8x128xf32>
    %171 = arith.mulf %166, %170 : vector<8x128xf32>
    %172 = arith.index_cast %142 : i32 to index
    %c0_43 = arith.constant 0 : index
    %173 = vector.load %arg10[%172, %c0_43] : memref<208x128xf32, #tpu.memory_space<vmem>>, vector<8x128xf32>
    tpu.vector_store %arg10[%172, %c0_43], %171 {strides = array<i32>} : memref<208x128xf32, #tpu.memory_space<vmem>>, vector<8x128xf32>,
    %c5_i32 = arith.constant 5 : i32
    %c8_i32_44 = arith.constant 8 : i32
    %174 = arith.muli %c5_i32, %c8_i32_44 : i32
    %175 = tpu.assume_multiple %174, 8 : i32
    %176 = arith.index_cast %175 : i32 to index
    %c0_45 = arith.constant 0 : index
    %177 = vector.load %arg9[%176, %c0_45] : memref<208x512xf32, #tpu.memory_space<vmem>>, vector<8x512xf32>
    %cst_46 = arith.constant dense<0.000000e+00> : vector<8x512xf32>
    %178 = tpu.matmul %171, %7, %cst_46 {dimension_numbers = #tpu.dot_dimension_numbers<[1], [0], [0], [1], [0, 0, 1, 1], [], []>} : vector<8x128xf32>, vector<128x512xf32>, vector<8x512xf32> -> vector<8x512xf32>
    %179 = arith.addf %177, %178 : vector<8x512xf32>
    %180 = vector.extract_strided_slice %179 {offsets = [0, 0], sizes = [8, 128], strides = [1, 1]} : vector<8x512xf32> to vector<8x128xf32>
    %181 = arith.negf %180 : vector<8x128xf32>
    %182 = math.exp %181 : vector<8x128xf32>
    %cst_47 = arith.constant 1.000000e+00 : f32
    %183 = vector.broadcast %cst_47 : f32 to vector<8x128xf32>
    %184 = arith.addf %183, %182 : vector<8x128xf32>
    %185 = arith.divf %183, %184 : vector<8x128xf32>
    %186 = vector.extract_strided_slice %179 {offsets = [0, 128], sizes = [8, 128], strides = [1, 1]} : vector<8x512xf32> to vector<8x128xf32>
    %187 = arith.negf %186 : vector<8x128xf32>
    %188 = math.exp %187 : vector<8x128xf32>
    %cst_48 = arith.constant 1.000000e+00 : f32
    %189 = vector.broadcast %cst_48 : f32 to vector<8x128xf32>
    %190 = arith.addf %189, %188 : vector<8x128xf32>
    %191 = arith.divf %189, %190 : vector<8x128xf32>
    %192 = vector.extract_strided_slice %179 {offsets = [0, 256], sizes = [8, 128], strides = [1, 1]} : vector<8x512xf32> to vector<8x128xf32>
    %193 = math.tanh %192 : vector<8x128xf32>
    %194 = vector.extract_strided_slice %179 {offsets = [0, 384], sizes = [8, 128], strides = [1, 1]} : vector<8x512xf32> to vector<8x128xf32>
    %195 = arith.negf %194 : vector<8x128xf32>
    %196 = math.exp %195 : vector<8x128xf32>
    %cst_49 = arith.constant 1.000000e+00 : f32
    %197 = vector.broadcast %cst_49 : f32 to vector<8x128xf32>
    %198 = arith.addf %197, %196 : vector<8x128xf32>
    %199 = arith.divf %197, %198 : vector<8x128xf32>
    %200 = arith.mulf %191, %169 : vector<8x128xf32>
    %201 = arith.mulf %185, %193 : vector<8x128xf32>
    %202 = arith.addf %200, %201 : vector<8x128xf32>
    %203 = math.tanh %202 : vector<8x128xf32>
    %204 = arith.mulf %199, %203 : vector<8x128xf32>
    %205 = arith.index_cast %175 : i32 to index
    %c0_50 = arith.constant 0 : index
    %206 = vector.load %arg10[%205, %c0_50] : memref<208x128xf32, #tpu.memory_space<vmem>>, vector<8x128xf32>
    tpu.vector_store %arg10[%205, %c0_50], %204 {strides = array<i32>} : memref<208x128xf32, #tpu.memory_space<vmem>>, vector<8x128xf32>,
    %c6_i32 = arith.constant 6 : i32
    %c8_i32_51 = arith.constant 8 : i32
    %207 = arith.muli %c6_i32, %c8_i32_51 : i32
    %208 = tpu.assume_multiple %207, 8 : i32
    %209 = arith.index_cast %208 : i32 to index
    %c0_52 = arith.constant 0 : index
    %210 = vector.load %arg9[%209, %c0_52] : memref<208x512xf32, #tpu.memory_space<vmem>>, vector<8x512xf32>
    %cst_53 = arith.constant dense<0.000000e+00> : vector<8x512xf32>
    %211 = tpu.matmul %204, %7, %cst_53 {dimension_numbers = #tpu.dot_dimension_numbers<[1], [0], [0], [1], [0, 0, 1, 1], [], []>} : vector<8x128xf32>, vector<128x512xf32>, vector<8x512xf32> -> vector<8x512xf32>
    %212 = arith.addf %210, %211 : vector<8x512xf32>
    %213 = vector.extract_strided_slice %212 {offsets = [0, 0], sizes = [8, 128], strides = [1, 1]} : vector<8x512xf32> to vector<8x128xf32>
    %214 = arith.negf %213 : vector<8x128xf32>
    %215 = math.exp %214 : vector<8x128xf32>
    %cst_54 = arith.constant 1.000000e+00 : f32
    %216 = vector.broadcast %cst_54 : f32 to vector<8x128xf32>
    %217 = arith.addf %216, %215 : vector<8x128xf32>
    %218 = arith.divf %216, %217 : vector<8x128xf32>
    %219 = vector.extract_strided_slice %212 {offsets = [0, 128], sizes = [8, 128], strides = [1, 1]} : vector<8x512xf32> to vector<8x128xf32>
    %220 = arith.negf %219 : vector<8x128xf32>
    %221 = math.exp %220 : vector<8x128xf32>
    %cst_55 = arith.constant 1.000000e+00 : f32
    %222 = vector.broadcast %cst_55 : f32 to vector<8x128xf32>
    %223 = arith.addf %222, %221 : vector<8x128xf32>
    %224 = arith.divf %222, %223 : vector<8x128xf32>
    %225 = vector.extract_strided_slice %212 {offsets = [0, 256], sizes = [8, 128], strides = [1, 1]} : vector<8x512xf32> to vector<8x128xf32>
    %226 = math.tanh %225 : vector<8x128xf32>
    %227 = vector.extract_strided_slice %212 {offsets = [0, 384], sizes = [8, 128], strides = [1, 1]} : vector<8x512xf32> to vector<8x128xf32>
    %228 = arith.negf %227 : vector<8x128xf32>
    %229 = math.exp %228 : vector<8x128xf32>
    %cst_56 = arith.constant 1.000000e+00 : f32
    %230 = vector.broadcast %cst_56 : f32 to vector<8x128xf32>
    %231 = arith.addf %230, %229 : vector<8x128xf32>
    %232 = arith.divf %230, %231 : vector<8x128xf32>
    %233 = arith.mulf %224, %202 : vector<8x128xf32>
    %234 = arith.mulf %218, %226 : vector<8x128xf32>
    %235 = arith.addf %233, %234 : vector<8x128xf32>
    %236 = math.tanh %235 : vector<8x128xf32>
    %237 = arith.mulf %232, %236 : vector<8x128xf32>
    %238 = arith.index_cast %208 : i32 to index
    %c0_57 = arith.constant 0 : index
    %239 = vector.load %arg10[%238, %c0_57] : memref<208x128xf32, #tpu.memory_space<vmem>>, vector<8x128xf32>
    tpu.vector_store %arg10[%238, %c0_57], %237 {strides = array<i32>} : memref<208x128xf32, #tpu.memory_space<vmem>>, vector<8x128xf32>,
    %c7_i32 = arith.constant 7 : i32
    %c8_i32_58 = arith.constant 8 : i32
    %240 = arith.muli %c7_i32, %c8_i32_58 : i32
    %241 = tpu.assume_multiple %240, 8 : i32
    %242 = arith.index_cast %241 : i32 to index
    %c0_59 = arith.constant 0 : index
    %243 = vector.load %arg9[%242, %c0_59] : memref<208x512xf32, #tpu.memory_space<vmem>>, vector<8x512xf32>
    %cst_60 = arith.constant dense<0.000000e+00> : vector<8x512xf32>
    %244 = tpu.matmul %237, %7, %cst_60 {dimension_numbers = #tpu.dot_dimension_numbers<[1], [0], [0], [1], [0, 0, 1, 1], [], []>} : vector<8x128xf32>, vector<128x512xf32>, vector<8x512xf32> -> vector<8x512xf32>
    %245 = arith.addf %243, %244 : vector<8x512xf32>
    %246 = vector.extract_strided_slice %245 {offsets = [0, 0], sizes = [8, 128], strides = [1, 1]} : vector<8x512xf32> to vector<8x128xf32>
    %247 = arith.negf %246 : vector<8x128xf32>
    %248 = math.exp %247 : vector<8x128xf32>
    %cst_61 = arith.constant 1.000000e+00 : f32
    %249 = vector.broadcast %cst_61 : f32 to vector<8x128xf32>
    %250 = arith.addf %249, %248 : vector<8x128xf32>
    %251 = arith.divf %249, %250 : vector<8x128xf32>
    %252 = vector.extract_strided_slice %245 {offsets = [0, 128], sizes = [8, 128], strides = [1, 1]} : vector<8x512xf32> to vector<8x128xf32>
    %253 = arith.negf %252 : vector<8x128xf32>
    %254 = math.exp %253 : vector<8x128xf32>
    %cst_62 = arith.constant 1.000000e+00 : f32
    %255 = vector.broadcast %cst_62 : f32 to vector<8x128xf32>
    %256 = arith.addf %255, %254 : vector<8x128xf32>
    %257 = arith.divf %255, %256 : vector<8x128xf32>
    %258 = vector.extract_strided_slice %245 {offsets = [0, 256], sizes = [8, 128], strides = [1, 1]} : vector<8x512xf32> to vector<8x128xf32>
    %259 = math.tanh %258 : vector<8x128xf32>
    %260 = vector.extract_strided_slice %245 {offsets = [0, 384], sizes = [8, 128], strides = [1, 1]} : vector<8x512xf32> to vector<8x128xf32>
    %261 = arith.negf %260 : vector<8x128xf32>
    %262 = math.exp %261 : vector<8x128xf32>
    %cst_63 = arith.constant 1.000000e+00 : f32
    %263 = vector.broadcast %cst_63 : f32 to vector<8x128xf32>
    %264 = arith.addf %263, %262 : vector<8x128xf32>
    %265 = arith.divf %263, %264 : vector<8x128xf32>
    %266 = arith.mulf %257, %235 : vector<8x128xf32>
    %267 = arith.mulf %251, %259 : vector<8x128xf32>
    %268 = arith.addf %266, %267 : vector<8x128xf32>
    %269 = math.tanh %268 : vector<8x128xf32>
    %270 = arith.mulf %265, %269 : vector<8x128xf32>
    %271 = arith.index_cast %241 : i32 to index
    %c0_64 = arith.constant 0 : index
    %272 = vector.load %arg10[%271, %c0_64] : memref<208x128xf32, #tpu.memory_space<vmem>>, vector<8x128xf32>
    tpu.vector_store %arg10[%271, %c0_64], %270 {strides = array<i32>} : memref<208x128xf32, #tpu.memory_space<vmem>>, vector<8x128xf32>,
    %c8_i32_65 = arith.constant 8 : i32
    %c8_i32_66 = arith.constant 8 : i32
    %273 = arith.muli %c8_i32_65, %c8_i32_66 : i32
    %274 = tpu.assume_multiple %273, 8 : i32
    %275 = arith.index_cast %274 : i32 to index
    %c0_67 = arith.constant 0 : index
    %276 = vector.load %arg9[%275, %c0_67] : memref<208x512xf32, #tpu.memory_space<vmem>>, vector<8x512xf32>
    %cst_68 = arith.constant dense<0.000000e+00> : vector<8x512xf32>
    %277 = tpu.matmul %270, %7, %cst_68 {dimension_numbers = #tpu.dot_dimension_numbers<[1], [0], [0], [1], [0, 0, 1, 1], [], []>} : vector<8x128xf32>, vector<128x512xf32>, vector<8x512xf32> -> vector<8x512xf32>
    %278 = arith.addf %276, %277 : vector<8x512xf32>
    %279 = vector.extract_strided_slice %278 {offsets = [0, 0], sizes = [8, 128], strides = [1, 1]} : vector<8x512xf32> to vector<8x128xf32>
    %280 = arith.negf %279 : vector<8x128xf32>
    %281 = math.exp %280 : vector<8x128xf32>
    %cst_69 = arith.constant 1.000000e+00 : f32
    %282 = vector.broadcast %cst_69 : f32 to vector<8x128xf32>
    %283 = arith.addf %282, %281 : vector<8x128xf32>
    %284 = arith.divf %282, %283 : vector<8x128xf32>
    %285 = vector.extract_strided_slice %278 {offsets = [0, 128], sizes = [8, 128], strides = [1, 1]} : vector<8x512xf32> to vector<8x128xf32>
    %286 = arith.negf %285 : vector<8x128xf32>
    %287 = math.exp %286 : vector<8x128xf32>
    %cst_70 = arith.constant 1.000000e+00 : f32
    %288 = vector.broadcast %cst_70 : f32 to vector<8x128xf32>
    %289 = arith.addf %288, %287 : vector<8x128xf32>
    %290 = arith.divf %288, %289 : vector<8x128xf32>
    %291 = vector.extract_strided_slice %278 {offsets = [0, 256], sizes = [8, 128], strides = [1, 1]} : vector<8x512xf32> to vector<8x128xf32>
    %292 = math.tanh %291 : vector<8x128xf32>
    %293 = vector.extract_strided_slice %278 {offsets = [0, 384], sizes = [8, 128], strides = [1, 1]} : vector<8x512xf32> to vector<8x128xf32>
    %294 = arith.negf %293 : vector<8x128xf32>
    %295 = math.exp %294 : vector<8x128xf32>
    %cst_71 = arith.constant 1.000000e+00 : f32
    %296 = vector.broadcast %cst_71 : f32 to vector<8x128xf32>
    %297 = arith.addf %296, %295 : vector<8x128xf32>
    %298 = arith.divf %296, %297 : vector<8x128xf32>
    %299 = arith.mulf %290, %268 : vector<8x128xf32>
    %300 = arith.mulf %284, %292 : vector<8x128xf32>
    %301 = arith.addf %299, %300 : vector<8x128xf32>
    %302 = math.tanh %301 : vector<8x128xf32>
    %303 = arith.mulf %298, %302 : vector<8x128xf32>
    %304 = arith.index_cast %274 : i32 to index
    %c0_72 = arith.constant 0 : index
    %305 = vector.load %arg10[%304, %c0_72] : memref<208x128xf32, #tpu.memory_space<vmem>>, vector<8x128xf32>
    tpu.vector_store %arg10[%304, %c0_72], %303 {strides = array<i32>} : memref<208x128xf32, #tpu.memory_space<vmem>>, vector<8x128xf32>,
    %c9_i32 = arith.constant 9 : i32
    %c8_i32_73 = arith.constant 8 : i32
    %306 = arith.muli %c9_i32, %c8_i32_73 : i32
    %307 = tpu.assume_multiple %306, 8 : i32
    %308 = arith.index_cast %307 : i32 to index
    %c0_74 = arith.constant 0 : index
    %309 = vector.load %arg9[%308, %c0_74] : memref<208x512xf32, #tpu.memory_space<vmem>>, vector<8x512xf32>
    %cst_75 = arith.constant dense<0.000000e+00> : vector<8x512xf32>
    %310 = tpu.matmul %303, %7, %cst_75 {dimension_numbers = #tpu.dot_dimension_numbers<[1], [0], [0], [1], [0, 0, 1, 1], [], []>} : vector<8x128xf32>, vector<128x512xf32>, vector<8x512xf32> -> vector<8x512xf32>
    %311 = arith.addf %309, %310 : vector<8x512xf32>
    %312 = vector.extract_strided_slice %311 {offsets = [0, 0], sizes = [8, 128], strides = [1, 1]} : vector<8x512xf32> to vector<8x128xf32>
    %313 = arith.negf %312 : vector<8x128xf32>
    %314 = math.exp %313 : vector<8x128xf32>
    %cst_76 = arith.constant 1.000000e+00 : f32
    %315 = vector.broadcast %cst_76 : f32 to vector<8x128xf32>
    %316 = arith.addf %315, %314 : vector<8x128xf32>
    %317 = arith.divf %315, %316 : vector<8x128xf32>
    %318 = vector.extract_strided_slice %311 {offsets = [0, 128], sizes = [8, 128], strides = [1, 1]} : vector<8x512xf32> to vector<8x128xf32>
    %319 = arith.negf %318 : vector<8x128xf32>
    %320 = math.exp %319 : vector<8x128xf32>
    %cst_77 = arith.constant 1.000000e+00 : f32
    %321 = vector.broadcast %cst_77 : f32 to vector<8x128xf32>
    %322 = arith.addf %321, %320 : vector<8x128xf32>
    %323 = arith.divf %321, %322 : vector<8x128xf32>
    %324 = vector.extract_strided_slice %311 {offsets = [0, 256], sizes = [8, 128], strides = [1, 1]} : vector<8x512xf32> to vector<8x128xf32>
    %325 = math.tanh %324 : vector<8x128xf32>
    %326 = vector.extract_strided_slice %311 {offsets = [0, 384], sizes = [8, 128], strides = [1, 1]} : vector<8x512xf32> to vector<8x128xf32>
    %327 = arith.negf %326 : vector<8x128xf32>
    %328 = math.exp %327 : vector<8x128xf32>
    %cst_78 = arith.constant 1.000000e+00 : f32
    %329 = vector.broadcast %cst_78 : f32 to vector<8x128xf32>
    %330 = arith.addf %329, %328 : vector<8x128xf32>
    %331 = arith.divf %329, %330 : vector<8x128xf32>
    %332 = arith.mulf %323, %301 : vector<8x128xf32>
    %333 = arith.mulf %317, %325 : vector<8x128xf32>
    %334 = arith.addf %332, %333 : vector<8x128xf32>
    %335 = math.tanh %334 : vector<8x128xf32>
    %336 = arith.mulf %331, %335 : vector<8x128xf32>
    %337 = arith.index_cast %307 : i32 to index
    %c0_79 = arith.constant 0 : index
    %338 = vector.load %arg10[%337, %c0_79] : memref<208x128xf32, #tpu.memory_space<vmem>>, vector<8x128xf32>
    tpu.vector_store %arg10[%337, %c0_79], %336 {strides = array<i32>} : memref<208x128xf32, #tpu.memory_space<vmem>>, vector<8x128xf32>,
    %c10_i32 = arith.constant 10 : i32
    %c8_i32_80 = arith.constant 8 : i32
    %339 = arith.muli %c10_i32, %c8_i32_80 : i32
    %340 = tpu.assume_multiple %339, 8 : i32
    %341 = arith.index_cast %340 : i32 to index
    %c0_81 = arith.constant 0 : index
    %342 = vector.load %arg9[%341, %c0_81] : memref<208x512xf32, #tpu.memory_space<vmem>>, vector<8x512xf32>
    %cst_82 = arith.constant dense<0.000000e+00> : vector<8x512xf32>
    %343 = tpu.matmul %336, %7, %cst_82 {dimension_numbers = #tpu.dot_dimension_numbers<[1], [0], [0], [1], [0, 0, 1, 1], [], []>} : vector<8x128xf32>, vector<128x512xf32>, vector<8x512xf32> -> vector<8x512xf32>
    %344 = arith.addf %342, %343 : vector<8x512xf32>
    %345 = vector.extract_strided_slice %344 {offsets = [0, 0], sizes = [8, 128], strides = [1, 1]} : vector<8x512xf32> to vector<8x128xf32>
    %346 = arith.negf %345 : vector<8x128xf32>
    %347 = math.exp %346 : vector<8x128xf32>
    %cst_83 = arith.constant 1.000000e+00 : f32
    %348 = vector.broadcast %cst_83 : f32 to vector<8x128xf32>
    %349 = arith.addf %348, %347 : vector<8x128xf32>
    %350 = arith.divf %348, %349 : vector<8x128xf32>
    %351 = vector.extract_strided_slice %344 {offsets = [0, 128], sizes = [8, 128], strides = [1, 1]} : vector<8x512xf32> to vector<8x128xf32>
    %352 = arith.negf %351 : vector<8x128xf32>
    %353 = math.exp %352 : vector<8x128xf32>
    %cst_84 = arith.constant 1.000000e+00 : f32
    %354 = vector.broadcast %cst_84 : f32 to vector<8x128xf32>
    %355 = arith.addf %354, %353 : vector<8x128xf32>
    %356 = arith.divf %354, %355 : vector<8x128xf32>
    %357 = vector.extract_strided_slice %344 {offsets = [0, 256], sizes = [8, 128], strides = [1, 1]} : vector<8x512xf32> to vector<8x128xf32>
    %358 = math.tanh %357 : vector<8x128xf32>
    %359 = vector.extract_strided_slice %344 {offsets = [0, 384], sizes = [8, 128], strides = [1, 1]} : vector<8x512xf32> to vector<8x128xf32>
    %360 = arith.negf %359 : vector<8x128xf32>
    %361 = math.exp %360 : vector<8x128xf32>
    %cst_85 = arith.constant 1.000000e+00 : f32
    %362 = vector.broadcast %cst_85 : f32 to vector<8x128xf32>
    %363 = arith.addf %362, %361 : vector<8x128xf32>
    %364 = arith.divf %362, %363 : vector<8x128xf32>
    %365 = arith.mulf %356, %334 : vector<8x128xf32>
    %366 = arith.mulf %350, %358 : vector<8x128xf32>
    %367 = arith.addf %365, %366 : vector<8x128xf32>
    %368 = math.tanh %367 : vector<8x128xf32>
    %369 = arith.mulf %364, %368 : vector<8x128xf32>
    %370 = arith.index_cast %340 : i32 to index
    %c0_86 = arith.constant 0 : index
    %371 = vector.load %arg10[%370, %c0_86] : memref<208x128xf32, #tpu.memory_space<vmem>>, vector<8x128xf32>
    tpu.vector_store %arg10[%370, %c0_86], %369 {strides = array<i32>} : memref<208x128xf32, #tpu.memory_space<vmem>>, vector<8x128xf32>,
    %c11_i32 = arith.constant 11 : i32
    %c8_i32_87 = arith.constant 8 : i32
    %372 = arith.muli %c11_i32, %c8_i32_87 : i32
    %373 = tpu.assume_multiple %372, 8 : i32
    %374 = arith.index_cast %373 : i32 to index
    %c0_88 = arith.constant 0 : index
    %375 = vector.load %arg9[%374, %c0_88] : memref<208x512xf32, #tpu.memory_space<vmem>>, vector<8x512xf32>
    %cst_89 = arith.constant dense<0.000000e+00> : vector<8x512xf32>
    %376 = tpu.matmul %369, %7, %cst_89 {dimension_numbers = #tpu.dot_dimension_numbers<[1], [0], [0], [1], [0, 0, 1, 1], [], []>} : vector<8x128xf32>, vector<128x512xf32>, vector<8x512xf32> -> vector<8x512xf32>
    %377 = arith.addf %375, %376 : vector<8x512xf32>
    %378 = vector.extract_strided_slice %377 {offsets = [0, 0], sizes = [8, 128], strides = [1, 1]} : vector<8x512xf32> to vector<8x128xf32>
    %379 = arith.negf %378 : vector<8x128xf32>
    %380 = math.exp %379 : vector<8x128xf32>
    %cst_90 = arith.constant 1.000000e+00 : f32
    %381 = vector.broadcast %cst_90 : f32 to vector<8x128xf32>
    %382 = arith.addf %381, %380 : vector<8x128xf32>
    %383 = arith.divf %381, %382 : vector<8x128xf32>
    %384 = vector.extract_strided_slice %377 {offsets = [0, 128], sizes = [8, 128], strides = [1, 1]} : vector<8x512xf32> to vector<8x128xf32>
    %385 = arith.negf %384 : vector<8x128xf32>
    %386 = math.exp %385 : vector<8x128xf32>
    %cst_91 = arith.constant 1.000000e+00 : f32
    %387 = vector.broadcast %cst_91 : f32 to vector<8x128xf32>
    %388 = arith.addf %387, %386 : vector<8x128xf32>
    %389 = arith.divf %387, %388 : vector<8x128xf32>
    %390 = vector.extract_strided_slice %377 {offsets = [0, 256], sizes = [8, 128], strides = [1, 1]} : vector<8x512xf32> to vector<8x128xf32>
    %391 = math.tanh %390 : vector<8x128xf32>
    %392 = vector.extract_strided_slice %377 {offsets = [0, 384], sizes = [8, 128], strides = [1, 1]} : vector<8x512xf32> to vector<8x128xf32>
    %393 = arith.negf %392 : vector<8x128xf32>
    %394 = math.exp %393 : vector<8x128xf32>
    %cst_92 = arith.constant 1.000000e+00 : f32
    %395 = vector.broadcast %cst_92 : f32 to vector<8x128xf32>
    %396 = arith.addf %395, %394 : vector<8x128xf32>
    %397 = arith.divf %395, %396 : vector<8x128xf32>
    %398 = arith.mulf %389, %367 : vector<8x128xf32>
    %399 = arith.mulf %383, %391 : vector<8x128xf32>
    %400 = arith.addf %398, %399 : vector<8x128xf32>
    %401 = math.tanh %400 : vector<8x128xf32>
    %402 = arith.mulf %397, %401 : vector<8x128xf32>
    %403 = arith.index_cast %373 : i32 to index
    %c0_93 = arith.constant 0 : index
    %404 = vector.load %arg10[%403, %c0_93] : memref<208x128xf32, #tpu.memory_space<vmem>>, vector<8x128xf32>
    tpu.vector_store %arg10[%403, %c0_93], %402 {strides = array<i32>} : memref<208x128xf32, #tpu.memory_space<vmem>>, vector<8x128xf32>,
    %c12_i32 = arith.constant 12 : i32
    %c8_i32_94 = arith.constant 8 : i32
    %405 = arith.muli %c12_i32, %c8_i32_94 : i32
    %406 = tpu.assume_multiple %405, 8 : i32
    %407 = arith.index_cast %406 : i32 to index
    %c0_95 = arith.constant 0 : index
    %408 = vector.load %arg9[%407, %c0_95] : memref<208x512xf32, #tpu.memory_space<vmem>>, vector<8x512xf32>
    %cst_96 = arith.constant dense<0.000000e+00> : vector<8x512xf32>
    %409 = tpu.matmul %402, %7, %cst_96 {dimension_numbers = #tpu.dot_dimension_numbers<[1], [0], [0], [1], [0, 0, 1, 1], [], []>} : vector<8x128xf32>, vector<128x512xf32>, vector<8x512xf32> -> vector<8x512xf32>
    %410 = arith.addf %408, %409 : vector<8x512xf32>
    %411 = vector.extract_strided_slice %410 {offsets = [0, 0], sizes = [8, 128], strides = [1, 1]} : vector<8x512xf32> to vector<8x128xf32>
    %412 = arith.negf %411 : vector<8x128xf32>
    %413 = math.exp %412 : vector<8x128xf32>
    %cst_97 = arith.constant 1.000000e+00 : f32
    %414 = vector.broadcast %cst_97 : f32 to vector<8x128xf32>
    %415 = arith.addf %414, %413 : vector<8x128xf32>
    %416 = arith.divf %414, %415 : vector<8x128xf32>
    %417 = vector.extract_strided_slice %410 {offsets = [0, 128], sizes = [8, 128], strides = [1, 1]} : vector<8x512xf32> to vector<8x128xf32>
    %418 = arith.negf %417 : vector<8x128xf32>
    %419 = math.exp %418 : vector<8x128xf32>
    %cst_98 = arith.constant 1.000000e+00 : f32
    %420 = vector.broadcast %cst_98 : f32 to vector<8x128xf32>
    %421 = arith.addf %420, %419 : vector<8x128xf32>
    %422 = arith.divf %420, %421 : vector<8x128xf32>
    %423 = vector.extract_strided_slice %410 {offsets = [0, 256], sizes = [8, 128], strides = [1, 1]} : vector<8x512xf32> to vector<8x128xf32>
    %424 = math.tanh %423 : vector<8x128xf32>
    %425 = vector.extract_strided_slice %410 {offsets = [0, 384], sizes = [8, 128], strides = [1, 1]} : vector<8x512xf32> to vector<8x128xf32>
    %426 = arith.negf %425 : vector<8x128xf32>
    %427 = math.exp %426 : vector<8x128xf32>
    %cst_99 = arith.constant 1.000000e+00 : f32
    %428 = vector.broadcast %cst_99 : f32 to vector<8x128xf32>
    %429 = arith.addf %428, %427 : vector<8x128xf32>
    %430 = arith.divf %428, %429 : vector<8x128xf32>
    %431 = arith.mulf %422, %400 : vector<8x128xf32>
    %432 = arith.mulf %416, %424 : vector<8x128xf32>
    %433 = arith.addf %431, %432 : vector<8x128xf32>
    %434 = math.tanh %433 : vector<8x128xf32>
    %435 = arith.mulf %430, %434 : vector<8x128xf32>
    %436 = arith.index_cast %406 : i32 to index
    %c0_100 = arith.constant 0 : index
    %437 = vector.load %arg10[%436, %c0_100] : memref<208x128xf32, #tpu.memory_space<vmem>>, vector<8x128xf32>
    tpu.vector_store %arg10[%436, %c0_100], %435 {strides = array<i32>} : memref<208x128xf32, #tpu.memory_space<vmem>>, vector<8x128xf32>,
    %c13_i32 = arith.constant 13 : i32
    %c8_i32_101 = arith.constant 8 : i32
    %438 = arith.muli %c13_i32, %c8_i32_101 : i32
    %439 = tpu.assume_multiple %438, 8 : i32
    %440 = arith.index_cast %439 : i32 to index
    %c0_102 = arith.constant 0 : index
    %441 = vector.load %arg9[%440, %c0_102] : memref<208x512xf32, #tpu.memory_space<vmem>>, vector<8x512xf32>
    %cst_103 = arith.constant dense<0.000000e+00> : vector<8x512xf32>
    %442 = tpu.matmul %435, %7, %cst_103 {dimension_numbers = #tpu.dot_dimension_numbers<[1], [0], [0], [1], [0, 0, 1, 1], [], []>} : vector<8x128xf32>, vector<128x512xf32>, vector<8x512xf32> -> vector<8x512xf32>
    %443 = arith.addf %441, %442 : vector<8x512xf32>
    %444 = vector.extract_strided_slice %443 {offsets = [0, 0], sizes = [8, 128], strides = [1, 1]} : vector<8x512xf32> to vector<8x128xf32>
    %445 = arith.negf %444 : vector<8x128xf32>
    %446 = math.exp %445 : vector<8x128xf32>
    %cst_104 = arith.constant 1.000000e+00 : f32
    %447 = vector.broadcast %cst_104 : f32 to vector<8x128xf32>
    %448 = arith.addf %447, %446 : vector<8x128xf32>
    %449 = arith.divf %447, %448 : vector<8x128xf32>
    %450 = vector.extract_strided_slice %443 {offsets = [0, 128], sizes = [8, 128], strides = [1, 1]} : vector<8x512xf32> to vector<8x128xf32>
    %451 = arith.negf %450 : vector<8x128xf32>
    %452 = math.exp %451 : vector<8x128xf32>
    %cst_105 = arith.constant 1.000000e+00 : f32
    %453 = vector.broadcast %cst_105 : f32 to vector<8x128xf32>
    %454 = arith.addf %453, %452 : vector<8x128xf32>
    %455 = arith.divf %453, %454 : vector<8x128xf32>
    %456 = vector.extract_strided_slice %443 {offsets = [0, 256], sizes = [8, 128], strides = [1, 1]} : vector<8x512xf32> to vector<8x128xf32>
    %457 = math.tanh %456 : vector<8x128xf32>
    %458 = vector.extract_strided_slice %443 {offsets = [0, 384], sizes = [8, 128], strides = [1, 1]} : vector<8x512xf32> to vector<8x128xf32>
    %459 = arith.negf %458 : vector<8x128xf32>
    %460 = math.exp %459 : vector<8x128xf32>
    %cst_106 = arith.constant 1.000000e+00 : f32
    %461 = vector.broadcast %cst_106 : f32 to vector<8x128xf32>
    %462 = arith.addf %461, %460 : vector<8x128xf32>
    %463 = arith.divf %461, %462 : vector<8x128xf32>
    %464 = arith.mulf %455, %433 : vector<8x128xf32>
    %465 = arith.mulf %449, %457 : vector<8x128xf32>
    %466 = arith.addf %464, %465 : vector<8x128xf32>
    %467 = math.tanh %466 : vector<8x128xf32>
    %468 = arith.mulf %463, %467 : vector<8x128xf32>
    %469 = arith.index_cast %439 : i32 to index
    %c0_107 = arith.constant 0 : index
    %470 = vector.load %arg10[%469, %c0_107] : memref<208x128xf32, #tpu.memory_space<vmem>>, vector<8x128xf32>
    tpu.vector_store %arg10[%469, %c0_107], %468 {strides = array<i32>} : memref<208x128xf32, #tpu.memory_space<vmem>>, vector<8x128xf32>,
    %c14_i32 = arith.constant 14 : i32
    %c8_i32_108 = arith.constant 8 : i32
    %471 = arith.muli %c14_i32, %c8_i32_108 : i32
    %472 = tpu.assume_multiple %471, 8 : i32
    %473 = arith.index_cast %472 : i32 to index
    %c0_109 = arith.constant 0 : index
    %474 = vector.load %arg9[%473, %c0_109] : memref<208x512xf32, #tpu.memory_space<vmem>>, vector<8x512xf32>
    %cst_110 = arith.constant dense<0.000000e+00> : vector<8x512xf32>
    %475 = tpu.matmul %468, %7, %cst_110 {dimension_numbers = #tpu.dot_dimension_numbers<[1], [0], [0], [1], [0, 0, 1, 1], [], []>} : vector<8x128xf32>, vector<128x512xf32>, vector<8x512xf32> -> vector<8x512xf32>
    %476 = arith.addf %474, %475 : vector<8x512xf32>
    %477 = vector.extract_strided_slice %476 {offsets = [0, 0], sizes = [8, 128], strides = [1, 1]} : vector<8x512xf32> to vector<8x128xf32>
    %478 = arith.negf %477 : vector<8x128xf32>
    %479 = math.exp %478 : vector<8x128xf32>
    %cst_111 = arith.constant 1.000000e+00 : f32
    %480 = vector.broadcast %cst_111 : f32 to vector<8x128xf32>
    %481 = arith.addf %480, %479 : vector<8x128xf32>
    %482 = arith.divf %480, %481 : vector<8x128xf32>
    %483 = vector.extract_strided_slice %476 {offsets = [0, 128], sizes = [8, 128], strides = [1, 1]} : vector<8x512xf32> to vector<8x128xf32>
    %484 = arith.negf %483 : vector<8x128xf32>
    %485 = math.exp %484 : vector<8x128xf32>
    %cst_112 = arith.constant 1.000000e+00 : f32
    %486 = vector.broadcast %cst_112 : f32 to vector<8x128xf32>
    %487 = arith.addf %486, %485 : vector<8x128xf32>
    %488 = arith.divf %486, %487 : vector<8x128xf32>
    %489 = vector.extract_strided_slice %476 {offsets = [0, 256], sizes = [8, 128], strides = [1, 1]} : vector<8x512xf32> to vector<8x128xf32>
    %490 = math.tanh %489 : vector<8x128xf32>
    %491 = vector.extract_strided_slice %476 {offsets = [0, 384], sizes = [8, 128], strides = [1, 1]} : vector<8x512xf32> to vector<8x128xf32>
    %492 = arith.negf %491 : vector<8x128xf32>
    %493 = math.exp %492 : vector<8x128xf32>
    %cst_113 = arith.constant 1.000000e+00 : f32
    %494 = vector.broadcast %cst_113 : f32 to vector<8x128xf32>
    %495 = arith.addf %494, %493 : vector<8x128xf32>
    %496 = arith.divf %494, %495 : vector<8x128xf32>
    %497 = arith.mulf %488, %466 : vector<8x128xf32>
    %498 = arith.mulf %482, %490 : vector<8x128xf32>
    %499 = arith.addf %497, %498 : vector<8x128xf32>
    %500 = math.tanh %499 : vector<8x128xf32>
    %501 = arith.mulf %496, %500 : vector<8x128xf32>
    %502 = arith.index_cast %472 : i32 to index
    %c0_114 = arith.constant 0 : index
    %503 = vector.load %arg10[%502, %c0_114] : memref<208x128xf32, #tpu.memory_space<vmem>>, vector<8x128xf32>
    tpu.vector_store %arg10[%502, %c0_114], %501 {strides = array<i32>} : memref<208x128xf32, #tpu.memory_space<vmem>>, vector<8x128xf32>,
    %c15_i32 = arith.constant 15 : i32
    %c8_i32_115 = arith.constant 8 : i32
    %504 = arith.muli %c15_i32, %c8_i32_115 : i32
    %505 = tpu.assume_multiple %504, 8 : i32
    %506 = arith.index_cast %505 : i32 to index
    %c0_116 = arith.constant 0 : index
    %507 = vector.load %arg9[%506, %c0_116] : memref<208x512xf32, #tpu.memory_space<vmem>>, vector<8x512xf32>
    %cst_117 = arith.constant dense<0.000000e+00> : vector<8x512xf32>
    %508 = tpu.matmul %501, %7, %cst_117 {dimension_numbers = #tpu.dot_dimension_numbers<[1], [0], [0], [1], [0, 0, 1, 1], [], []>} : vector<8x128xf32>, vector<128x512xf32>, vector<8x512xf32> -> vector<8x512xf32>
    %509 = arith.addf %507, %508 : vector<8x512xf32>
    %510 = vector.extract_strided_slice %509 {offsets = [0, 0], sizes = [8, 128], strides = [1, 1]} : vector<8x512xf32> to vector<8x128xf32>
    %511 = arith.negf %510 : vector<8x128xf32>
    %512 = math.exp %511 : vector<8x128xf32>
    %cst_118 = arith.constant 1.000000e+00 : f32
    %513 = vector.broadcast %cst_118 : f32 to vector<8x128xf32>
    %514 = arith.addf %513, %512 : vector<8x128xf32>
    %515 = arith.divf %513, %514 : vector<8x128xf32>
    %516 = vector.extract_strided_slice %509 {offsets = [0, 128], sizes = [8, 128], strides = [1, 1]} : vector<8x512xf32> to vector<8x128xf32>
    %517 = arith.negf %516 : vector<8x128xf32>
    %518 = math.exp %517 : vector<8x128xf32>
    %cst_119 = arith.constant 1.000000e+00 : f32
    %519 = vector.broadcast %cst_119 : f32 to vector<8x128xf32>
    %520 = arith.addf %519, %518 : vector<8x128xf32>
    %521 = arith.divf %519, %520 : vector<8x128xf32>
    %522 = vector.extract_strided_slice %509 {offsets = [0, 256], sizes = [8, 128], strides = [1, 1]} : vector<8x512xf32> to vector<8x128xf32>
    %523 = math.tanh %522 : vector<8x128xf32>
    %524 = vector.extract_strided_slice %509 {offsets = [0, 384], sizes = [8, 128], strides = [1, 1]} : vector<8x512xf32> to vector<8x128xf32>
    %525 = arith.negf %524 : vector<8x128xf32>
    %526 = math.exp %525 : vector<8x128xf32>
    %cst_120 = arith.constant 1.000000e+00 : f32
    %527 = vector.broadcast %cst_120 : f32 to vector<8x128xf32>
    %528 = arith.addf %527, %526 : vector<8x128xf32>
    %529 = arith.divf %527, %528 : vector<8x128xf32>
    %530 = arith.mulf %521, %499 : vector<8x128xf32>
    %531 = arith.mulf %515, %523 : vector<8x128xf32>
    %532 = arith.addf %530, %531 : vector<8x128xf32>
    %533 = math.tanh %532 : vector<8x128xf32>
    %534 = arith.mulf %529, %533 : vector<8x128xf32>
    %535 = arith.index_cast %505 : i32 to index
    %c0_121 = arith.constant 0 : index
    %536 = vector.load %arg10[%535, %c0_121] : memref<208x128xf32, #tpu.memory_space<vmem>>, vector<8x128xf32>
    tpu.vector_store %arg10[%535, %c0_121], %534 {strides = array<i32>} : memref<208x128xf32, #tpu.memory_space<vmem>>, vector<8x128xf32>,
    %c16_i32 = arith.constant 16 : i32
    %c8_i32_122 = arith.constant 8 : i32
    %537 = arith.muli %c16_i32, %c8_i32_122 : i32
    %538 = tpu.assume_multiple %537, 8 : i32
    %539 = arith.index_cast %538 : i32 to index
    %c0_123 = arith.constant 0 : index
    %540 = vector.load %arg9[%539, %c0_123] : memref<208x512xf32, #tpu.memory_space<vmem>>, vector<8x512xf32>
    %cst_124 = arith.constant dense<0.000000e+00> : vector<8x512xf32>
    %541 = tpu.matmul %534, %7, %cst_124 {dimension_numbers = #tpu.dot_dimension_numbers<[1], [0], [0], [1], [0, 0, 1, 1], [], []>} : vector<8x128xf32>, vector<128x512xf32>, vector<8x512xf32> -> vector<8x512xf32>
    %542 = arith.addf %540, %541 : vector<8x512xf32>
    %543 = vector.extract_strided_slice %542 {offsets = [0, 0], sizes = [8, 128], strides = [1, 1]} : vector<8x512xf32> to vector<8x128xf32>
    %544 = arith.negf %543 : vector<8x128xf32>
    %545 = math.exp %544 : vector<8x128xf32>
    %cst_125 = arith.constant 1.000000e+00 : f32
    %546 = vector.broadcast %cst_125 : f32 to vector<8x128xf32>
    %547 = arith.addf %546, %545 : vector<8x128xf32>
    %548 = arith.divf %546, %547 : vector<8x128xf32>
    %549 = vector.extract_strided_slice %542 {offsets = [0, 128], sizes = [8, 128], strides = [1, 1]} : vector<8x512xf32> to vector<8x128xf32>
    %550 = arith.negf %549 : vector<8x128xf32>
    %551 = math.exp %550 : vector<8x128xf32>
    %cst_126 = arith.constant 1.000000e+00 : f32
    %552 = vector.broadcast %cst_126 : f32 to vector<8x128xf32>
    %553 = arith.addf %552, %551 : vector<8x128xf32>
    %554 = arith.divf %552, %553 : vector<8x128xf32>
    %555 = vector.extract_strided_slice %542 {offsets = [0, 256], sizes = [8, 128], strides = [1, 1]} : vector<8x512xf32> to vector<8x128xf32>
    %556 = math.tanh %555 : vector<8x128xf32>
    %557 = vector.extract_strided_slice %542 {offsets = [0, 384], sizes = [8, 128], strides = [1, 1]} : vector<8x512xf32> to vector<8x128xf32>
    %558 = arith.negf %557 : vector<8x128xf32>
    %559 = math.exp %558 : vector<8x128xf32>
    %cst_127 = arith.constant 1.000000e+00 : f32
    %560 = vector.broadcast %cst_127 : f32 to vector<8x128xf32>
    %561 = arith.addf %560, %559 : vector<8x128xf32>
    %562 = arith.divf %560, %561 : vector<8x128xf32>
    %563 = arith.mulf %554, %532 : vector<8x128xf32>
    %564 = arith.mulf %548, %556 : vector<8x128xf32>
    %565 = arith.addf %563, %564 : vector<8x128xf32>
    %566 = math.tanh %565 : vector<8x128xf32>
    %567 = arith.mulf %562, %566 : vector<8x128xf32>
    %568 = arith.index_cast %538 : i32 to index
    %c0_128 = arith.constant 0 : index
    %569 = vector.load %arg10[%568, %c0_128] : memref<208x128xf32, #tpu.memory_space<vmem>>, vector<8x128xf32>
    tpu.vector_store %arg10[%568, %c0_128], %567 {strides = array<i32>} : memref<208x128xf32, #tpu.memory_space<vmem>>, vector<8x128xf32>,
    %c17_i32 = arith.constant 17 : i32
    %c8_i32_129 = arith.constant 8 : i32
    %570 = arith.muli %c17_i32, %c8_i32_129 : i32
    %571 = tpu.assume_multiple %570, 8 : i32
    %572 = arith.index_cast %571 : i32 to index
    %c0_130 = arith.constant 0 : index
    %573 = vector.load %arg9[%572, %c0_130] : memref<208x512xf32, #tpu.memory_space<vmem>>, vector<8x512xf32>
    %cst_131 = arith.constant dense<0.000000e+00> : vector<8x512xf32>
    %574 = tpu.matmul %567, %7, %cst_131 {dimension_numbers = #tpu.dot_dimension_numbers<[1], [0], [0], [1], [0, 0, 1, 1], [], []>} : vector<8x128xf32>, vector<128x512xf32>, vector<8x512xf32> -> vector<8x512xf32>
    %575 = arith.addf %573, %574 : vector<8x512xf32>
    %576 = vector.extract_strided_slice %575 {offsets = [0, 0], sizes = [8, 128], strides = [1, 1]} : vector<8x512xf32> to vector<8x128xf32>
    %577 = arith.negf %576 : vector<8x128xf32>
    %578 = math.exp %577 : vector<8x128xf32>
    %cst_132 = arith.constant 1.000000e+00 : f32
    %579 = vector.broadcast %cst_132 : f32 to vector<8x128xf32>
    %580 = arith.addf %579, %578 : vector<8x128xf32>
    %581 = arith.divf %579, %580 : vector<8x128xf32>
    %582 = vector.extract_strided_slice %575 {offsets = [0, 128], sizes = [8, 128], strides = [1, 1]} : vector<8x512xf32> to vector<8x128xf32>
    %583 = arith.negf %582 : vector<8x128xf32>
    %584 = math.exp %583 : vector<8x128xf32>
    %cst_133 = arith.constant 1.000000e+00 : f32
    %585 = vector.broadcast %cst_133 : f32 to vector<8x128xf32>
    %586 = arith.addf %585, %584 : vector<8x128xf32>
    %587 = arith.divf %585, %586 : vector<8x128xf32>
    %588 = vector.extract_strided_slice %575 {offsets = [0, 256], sizes = [8, 128], strides = [1, 1]} : vector<8x512xf32> to vector<8x128xf32>
    %589 = math.tanh %588 : vector<8x128xf32>
    %590 = vector.extract_strided_slice %575 {offsets = [0, 384], sizes = [8, 128], strides = [1, 1]} : vector<8x512xf32> to vector<8x128xf32>
    %591 = arith.negf %590 : vector<8x128xf32>
    %592 = math.exp %591 : vector<8x128xf32>
    %cst_134 = arith.constant 1.000000e+00 : f32
    %593 = vector.broadcast %cst_134 : f32 to vector<8x128xf32>
    %594 = arith.addf %593, %592 : vector<8x128xf32>
    %595 = arith.divf %593, %594 : vector<8x128xf32>
    %596 = arith.mulf %587, %565 : vector<8x128xf32>
    %597 = arith.mulf %581, %589 : vector<8x128xf32>
    %598 = arith.addf %596, %597 : vector<8x128xf32>
    %599 = math.tanh %598 : vector<8x128xf32>
    %600 = arith.mulf %595, %599 : vector<8x128xf32>
    %601 = arith.index_cast %571 : i32 to index
    %c0_135 = arith.constant 0 : index
    %602 = vector.load %arg10[%601, %c0_135] : memref<208x128xf32, #tpu.memory_space<vmem>>, vector<8x128xf32>
    tpu.vector_store %arg10[%601, %c0_135], %600 {strides = array<i32>} : memref<208x128xf32, #tpu.memory_space<vmem>>, vector<8x128xf32>,
    %c18_i32 = arith.constant 18 : i32
    %c8_i32_136 = arith.constant 8 : i32
    %603 = arith.muli %c18_i32, %c8_i32_136 : i32
    %604 = tpu.assume_multiple %603, 8 : i32
    %605 = arith.index_cast %604 : i32 to index
    %c0_137 = arith.constant 0 : index
    %606 = vector.load %arg9[%605, %c0_137] : memref<208x512xf32, #tpu.memory_space<vmem>>, vector<8x512xf32>
    %cst_138 = arith.constant dense<0.000000e+00> : vector<8x512xf32>
    %607 = tpu.matmul %600, %7, %cst_138 {dimension_numbers = #tpu.dot_dimension_numbers<[1], [0], [0], [1], [0, 0, 1, 1], [], []>} : vector<8x128xf32>, vector<128x512xf32>, vector<8x512xf32> -> vector<8x512xf32>
    %608 = arith.addf %606, %607 : vector<8x512xf32>
    %609 = vector.extract_strided_slice %608 {offsets = [0, 0], sizes = [8, 128], strides = [1, 1]} : vector<8x512xf32> to vector<8x128xf32>
    %610 = arith.negf %609 : vector<8x128xf32>
    %611 = math.exp %610 : vector<8x128xf32>
    %cst_139 = arith.constant 1.000000e+00 : f32
    %612 = vector.broadcast %cst_139 : f32 to vector<8x128xf32>
    %613 = arith.addf %612, %611 : vector<8x128xf32>
    %614 = arith.divf %612, %613 : vector<8x128xf32>
    %615 = vector.extract_strided_slice %608 {offsets = [0, 128], sizes = [8, 128], strides = [1, 1]} : vector<8x512xf32> to vector<8x128xf32>
    %616 = arith.negf %615 : vector<8x128xf32>
    %617 = math.exp %616 : vector<8x128xf32>
    %cst_140 = arith.constant 1.000000e+00 : f32
    %618 = vector.broadcast %cst_140 : f32 to vector<8x128xf32>
    %619 = arith.addf %618, %617 : vector<8x128xf32>
    %620 = arith.divf %618, %619 : vector<8x128xf32>
    %621 = vector.extract_strided_slice %608 {offsets = [0, 256], sizes = [8, 128], strides = [1, 1]} : vector<8x512xf32> to vector<8x128xf32>
    %622 = math.tanh %621 : vector<8x128xf32>
    %623 = vector.extract_strided_slice %608 {offsets = [0, 384], sizes = [8, 128], strides = [1, 1]} : vector<8x512xf32> to vector<8x128xf32>
    %624 = arith.negf %623 : vector<8x128xf32>
    %625 = math.exp %624 : vector<8x128xf32>
    %cst_141 = arith.constant 1.000000e+00 : f32
    %626 = vector.broadcast %cst_141 : f32 to vector<8x128xf32>
    %627 = arith.addf %626, %625 : vector<8x128xf32>
    %628 = arith.divf %626, %627 : vector<8x128xf32>
    %629 = arith.mulf %620, %598 : vector<8x128xf32>
    %630 = arith.mulf %614, %622 : vector<8x128xf32>
    %631 = arith.addf %629, %630 : vector<8x128xf32>
    %632 = math.tanh %631 : vector<8x128xf32>
    %633 = arith.mulf %628, %632 : vector<8x128xf32>
    %634 = arith.index_cast %604 : i32 to index
    %c0_142 = arith.constant 0 : index
    %635 = vector.load %arg10[%634, %c0_142] : memref<208x128xf32, #tpu.memory_space<vmem>>, vector<8x128xf32>
    tpu.vector_store %arg10[%634, %c0_142], %633 {strides = array<i32>} : memref<208x128xf32, #tpu.memory_space<vmem>>, vector<8x128xf32>,
    %c19_i32 = arith.constant 19 : i32
    %c8_i32_143 = arith.constant 8 : i32
    %636 = arith.muli %c19_i32, %c8_i32_143 : i32
    %637 = tpu.assume_multiple %636, 8 : i32
    %638 = arith.index_cast %637 : i32 to index
    %c0_144 = arith.constant 0 : index
    %639 = vector.load %arg9[%638, %c0_144] : memref<208x512xf32, #tpu.memory_space<vmem>>, vector<8x512xf32>
    %cst_145 = arith.constant dense<0.000000e+00> : vector<8x512xf32>
    %640 = tpu.matmul %633, %7, %cst_145 {dimension_numbers = #tpu.dot_dimension_numbers<[1], [0], [0], [1], [0, 0, 1, 1], [], []>} : vector<8x128xf32>, vector<128x512xf32>, vector<8x512xf32> -> vector<8x512xf32>
    %641 = arith.addf %639, %640 : vector<8x512xf32>
    %642 = vector.extract_strided_slice %641 {offsets = [0, 0], sizes = [8, 128], strides = [1, 1]} : vector<8x512xf32> to vector<8x128xf32>
    %643 = arith.negf %642 : vector<8x128xf32>
    %644 = math.exp %643 : vector<8x128xf32>
    %cst_146 = arith.constant 1.000000e+00 : f32
    %645 = vector.broadcast %cst_146 : f32 to vector<8x128xf32>
    %646 = arith.addf %645, %644 : vector<8x128xf32>
    %647 = arith.divf %645, %646 : vector<8x128xf32>
    %648 = vector.extract_strided_slice %641 {offsets = [0, 128], sizes = [8, 128], strides = [1, 1]} : vector<8x512xf32> to vector<8x128xf32>
    %649 = arith.negf %648 : vector<8x128xf32>
    %650 = math.exp %649 : vector<8x128xf32>
    %cst_147 = arith.constant 1.000000e+00 : f32
    %651 = vector.broadcast %cst_147 : f32 to vector<8x128xf32>
    %652 = arith.addf %651, %650 : vector<8x128xf32>
    %653 = arith.divf %651, %652 : vector<8x128xf32>
    %654 = vector.extract_strided_slice %641 {offsets = [0, 256], sizes = [8, 128], strides = [1, 1]} : vector<8x512xf32> to vector<8x128xf32>
    %655 = math.tanh %654 : vector<8x128xf32>
    %656 = vector.extract_strided_slice %641 {offsets = [0, 384], sizes = [8, 128], strides = [1, 1]} : vector<8x512xf32> to vector<8x128xf32>
    %657 = arith.negf %656 : vector<8x128xf32>
    %658 = math.exp %657 : vector<8x128xf32>
    %cst_148 = arith.constant 1.000000e+00 : f32
    %659 = vector.broadcast %cst_148 : f32 to vector<8x128xf32>
    %660 = arith.addf %659, %658 : vector<8x128xf32>
    %661 = arith.divf %659, %660 : vector<8x128xf32>
    %662 = arith.mulf %653, %631 : vector<8x128xf32>
    %663 = arith.mulf %647, %655 : vector<8x128xf32>
    %664 = arith.addf %662, %663 : vector<8x128xf32>
    %665 = math.tanh %664 : vector<8x128xf32>
    %666 = arith.mulf %661, %665 : vector<8x128xf32>
    %667 = arith.index_cast %637 : i32 to index
    %c0_149 = arith.constant 0 : index
    %668 = vector.load %arg10[%667, %c0_149] : memref<208x128xf32, #tpu.memory_space<vmem>>, vector<8x128xf32>
    tpu.vector_store %arg10[%667, %c0_149], %666 {strides = array<i32>} : memref<208x128xf32, #tpu.memory_space<vmem>>, vector<8x128xf32>,
    %c20_i32 = arith.constant 20 : i32
    %c8_i32_150 = arith.constant 8 : i32
    %669 = arith.muli %c20_i32, %c8_i32_150 : i32
    %670 = tpu.assume_multiple %669, 8 : i32
    %671 = arith.index_cast %670 : i32 to index
    %c0_151 = arith.constant 0 : index
    %672 = vector.load %arg9[%671, %c0_151] : memref<208x512xf32, #tpu.memory_space<vmem>>, vector<8x512xf32>
    %cst_152 = arith.constant dense<0.000000e+00> : vector<8x512xf32>
    %673 = tpu.matmul %666, %7, %cst_152 {dimension_numbers = #tpu.dot_dimension_numbers<[1], [0], [0], [1], [0, 0, 1, 1], [], []>} : vector<8x128xf32>, vector<128x512xf32>, vector<8x512xf32> -> vector<8x512xf32>
    %674 = arith.addf %672, %673 : vector<8x512xf32>
    %675 = vector.extract_strided_slice %674 {offsets = [0, 0], sizes = [8, 128], strides = [1, 1]} : vector<8x512xf32> to vector<8x128xf32>
    %676 = arith.negf %675 : vector<8x128xf32>
    %677 = math.exp %676 : vector<8x128xf32>
    %cst_153 = arith.constant 1.000000e+00 : f32
    %678 = vector.broadcast %cst_153 : f32 to vector<8x128xf32>
    %679 = arith.addf %678, %677 : vector<8x128xf32>
    %680 = arith.divf %678, %679 : vector<8x128xf32>
    %681 = vector.extract_strided_slice %674 {offsets = [0, 128], sizes = [8, 128], strides = [1, 1]} : vector<8x512xf32> to vector<8x128xf32>
    %682 = arith.negf %681 : vector<8x128xf32>
    %683 = math.exp %682 : vector<8x128xf32>
    %cst_154 = arith.constant 1.000000e+00 : f32
    %684 = vector.broadcast %cst_154 : f32 to vector<8x128xf32>
    %685 = arith.addf %684, %683 : vector<8x128xf32>
    %686 = arith.divf %684, %685 : vector<8x128xf32>
    %687 = vector.extract_strided_slice %674 {offsets = [0, 256], sizes = [8, 128], strides = [1, 1]} : vector<8x512xf32> to vector<8x128xf32>
    %688 = math.tanh %687 : vector<8x128xf32>
    %689 = vector.extract_strided_slice %674 {offsets = [0, 384], sizes = [8, 128], strides = [1, 1]} : vector<8x512xf32> to vector<8x128xf32>
    %690 = arith.negf %689 : vector<8x128xf32>
    %691 = math.exp %690 : vector<8x128xf32>
    %cst_155 = arith.constant 1.000000e+00 : f32
    %692 = vector.broadcast %cst_155 : f32 to vector<8x128xf32>
    %693 = arith.addf %692, %691 : vector<8x128xf32>
    %694 = arith.divf %692, %693 : vector<8x128xf32>
    %695 = arith.mulf %686, %664 : vector<8x128xf32>
    %696 = arith.mulf %680, %688 : vector<8x128xf32>
    %697 = arith.addf %695, %696 : vector<8x128xf32>
    %698 = math.tanh %697 : vector<8x128xf32>
    %699 = arith.mulf %694, %698 : vector<8x128xf32>
    %700 = arith.index_cast %670 : i32 to index
    %c0_156 = arith.constant 0 : index
    %701 = vector.load %arg10[%700, %c0_156] : memref<208x128xf32, #tpu.memory_space<vmem>>, vector<8x128xf32>
    tpu.vector_store %arg10[%700, %c0_156], %699 {strides = array<i32>} : memref<208x128xf32, #tpu.memory_space<vmem>>, vector<8x128xf32>,
    %c21_i32 = arith.constant 21 : i32
    %c8_i32_157 = arith.constant 8 : i32
    %702 = arith.muli %c21_i32, %c8_i32_157 : i32
    %703 = tpu.assume_multiple %702, 8 : i32
    %704 = arith.index_cast %703 : i32 to index
    %c0_158 = arith.constant 0 : index
    %705 = vector.load %arg9[%704, %c0_158] : memref<208x512xf32, #tpu.memory_space<vmem>>, vector<8x512xf32>
    %cst_159 = arith.constant dense<0.000000e+00> : vector<8x512xf32>
    %706 = tpu.matmul %699, %7, %cst_159 {dimension_numbers = #tpu.dot_dimension_numbers<[1], [0], [0], [1], [0, 0, 1, 1], [], []>} : vector<8x128xf32>, vector<128x512xf32>, vector<8x512xf32> -> vector<8x512xf32>
    %707 = arith.addf %705, %706 : vector<8x512xf32>
    %708 = vector.extract_strided_slice %707 {offsets = [0, 0], sizes = [8, 128], strides = [1, 1]} : vector<8x512xf32> to vector<8x128xf32>
    %709 = arith.negf %708 : vector<8x128xf32>
    %710 = math.exp %709 : vector<8x128xf32>
    %cst_160 = arith.constant 1.000000e+00 : f32
    %711 = vector.broadcast %cst_160 : f32 to vector<8x128xf32>
    %712 = arith.addf %711, %710 : vector<8x128xf32>
    %713 = arith.divf %711, %712 : vector<8x128xf32>
    %714 = vector.extract_strided_slice %707 {offsets = [0, 128], sizes = [8, 128], strides = [1, 1]} : vector<8x512xf32> to vector<8x128xf32>
    %715 = arith.negf %714 : vector<8x128xf32>
    %716 = math.exp %715 : vector<8x128xf32>
    %cst_161 = arith.constant 1.000000e+00 : f32
    %717 = vector.broadcast %cst_161 : f32 to vector<8x128xf32>
    %718 = arith.addf %717, %716 : vector<8x128xf32>
    %719 = arith.divf %717, %718 : vector<8x128xf32>
    %720 = vector.extract_strided_slice %707 {offsets = [0, 256], sizes = [8, 128], strides = [1, 1]} : vector<8x512xf32> to vector<8x128xf32>
    %721 = math.tanh %720 : vector<8x128xf32>
    %722 = vector.extract_strided_slice %707 {offsets = [0, 384], sizes = [8, 128], strides = [1, 1]} : vector<8x512xf32> to vector<8x128xf32>
    %723 = arith.negf %722 : vector<8x128xf32>
    %724 = math.exp %723 : vector<8x128xf32>
    %cst_162 = arith.constant 1.000000e+00 : f32
    %725 = vector.broadcast %cst_162 : f32 to vector<8x128xf32>
    %726 = arith.addf %725, %724 : vector<8x128xf32>
    %727 = arith.divf %725, %726 : vector<8x128xf32>
    %728 = arith.mulf %719, %697 : vector<8x128xf32>
    %729 = arith.mulf %713, %721 : vector<8x128xf32>
    %730 = arith.addf %728, %729 : vector<8x128xf32>
    %731 = math.tanh %730 : vector<8x128xf32>
    %732 = arith.mulf %727, %731 : vector<8x128xf32>
    %733 = arith.index_cast %703 : i32 to index
    %c0_163 = arith.constant 0 : index
    %734 = vector.load %arg10[%733, %c0_163] : memref<208x128xf32, #tpu.memory_space<vmem>>, vector<8x128xf32>
    tpu.vector_store %arg10[%733, %c0_163], %732 {strides = array<i32>} : memref<208x128xf32, #tpu.memory_space<vmem>>, vector<8x128xf32>,
    %c22_i32 = arith.constant 22 : i32
    %c8_i32_164 = arith.constant 8 : i32
    %735 = arith.muli %c22_i32, %c8_i32_164 : i32
    %736 = tpu.assume_multiple %735, 8 : i32
    %737 = arith.index_cast %736 : i32 to index
    %c0_165 = arith.constant 0 : index
    %738 = vector.load %arg9[%737, %c0_165] : memref<208x512xf32, #tpu.memory_space<vmem>>, vector<8x512xf32>
    %cst_166 = arith.constant dense<0.000000e+00> : vector<8x512xf32>
    %739 = tpu.matmul %732, %7, %cst_166 {dimension_numbers = #tpu.dot_dimension_numbers<[1], [0], [0], [1], [0, 0, 1, 1], [], []>} : vector<8x128xf32>, vector<128x512xf32>, vector<8x512xf32> -> vector<8x512xf32>
    %740 = arith.addf %738, %739 : vector<8x512xf32>
    %741 = vector.extract_strided_slice %740 {offsets = [0, 0], sizes = [8, 128], strides = [1, 1]} : vector<8x512xf32> to vector<8x128xf32>
    %742 = arith.negf %741 : vector<8x128xf32>
    %743 = math.exp %742 : vector<8x128xf32>
    %cst_167 = arith.constant 1.000000e+00 : f32
    %744 = vector.broadcast %cst_167 : f32 to vector<8x128xf32>
    %745 = arith.addf %744, %743 : vector<8x128xf32>
    %746 = arith.divf %744, %745 : vector<8x128xf32>
    %747 = vector.extract_strided_slice %740 {offsets = [0, 128], sizes = [8, 128], strides = [1, 1]} : vector<8x512xf32> to vector<8x128xf32>
    %748 = arith.negf %747 : vector<8x128xf32>
    %749 = math.exp %748 : vector<8x128xf32>
    %cst_168 = arith.constant 1.000000e+00 : f32
    %750 = vector.broadcast %cst_168 : f32 to vector<8x128xf32>
    %751 = arith.addf %750, %749 : vector<8x128xf32>
    %752 = arith.divf %750, %751 : vector<8x128xf32>
    %753 = vector.extract_strided_slice %740 {offsets = [0, 256], sizes = [8, 128], strides = [1, 1]} : vector<8x512xf32> to vector<8x128xf32>
    %754 = math.tanh %753 : vector<8x128xf32>
    %755 = vector.extract_strided_slice %740 {offsets = [0, 384], sizes = [8, 128], strides = [1, 1]} : vector<8x512xf32> to vector<8x128xf32>
    %756 = arith.negf %755 : vector<8x128xf32>
    %757 = math.exp %756 : vector<8x128xf32>
    %cst_169 = arith.constant 1.000000e+00 : f32
    %758 = vector.broadcast %cst_169 : f32 to vector<8x128xf32>
    %759 = arith.addf %758, %757 : vector<8x128xf32>
    %760 = arith.divf %758, %759 : vector<8x128xf32>
    %761 = arith.mulf %752, %730 : vector<8x128xf32>
    %762 = arith.mulf %746, %754 : vector<8x128xf32>
    %763 = arith.addf %761, %762 : vector<8x128xf32>
    %764 = math.tanh %763 : vector<8x128xf32>
    %765 = arith.mulf %760, %764 : vector<8x128xf32>
    %766 = arith.index_cast %736 : i32 to index
    %c0_170 = arith.constant 0 : index
    %767 = vector.load %arg10[%766, %c0_170] : memref<208x128xf32, #tpu.memory_space<vmem>>, vector<8x128xf32>
    tpu.vector_store %arg10[%766, %c0_170], %765 {strides = array<i32>} : memref<208x128xf32, #tpu.memory_space<vmem>>, vector<8x128xf32>,
    %c23_i32 = arith.constant 23 : i32
    %c8_i32_171 = arith.constant 8 : i32
    %768 = arith.muli %c23_i32, %c8_i32_171 : i32
    %769 = tpu.assume_multiple %768, 8 : i32
    %770 = arith.index_cast %769 : i32 to index
    %c0_172 = arith.constant 0 : index
    %771 = vector.load %arg9[%770, %c0_172] : memref<208x512xf32, #tpu.memory_space<vmem>>, vector<8x512xf32>
    %cst_173 = arith.constant dense<0.000000e+00> : vector<8x512xf32>
    %772 = tpu.matmul %765, %7, %cst_173 {dimension_numbers = #tpu.dot_dimension_numbers<[1], [0], [0], [1], [0, 0, 1, 1], [], []>} : vector<8x128xf32>, vector<128x512xf32>, vector<8x512xf32> -> vector<8x512xf32>
    %773 = arith.addf %771, %772 : vector<8x512xf32>
    %774 = vector.extract_strided_slice %773 {offsets = [0, 0], sizes = [8, 128], strides = [1, 1]} : vector<8x512xf32> to vector<8x128xf32>
    %775 = arith.negf %774 : vector<8x128xf32>
    %776 = math.exp %775 : vector<8x128xf32>
    %cst_174 = arith.constant 1.000000e+00 : f32
    %777 = vector.broadcast %cst_174 : f32 to vector<8x128xf32>
    %778 = arith.addf %777, %776 : vector<8x128xf32>
    %779 = arith.divf %777, %778 : vector<8x128xf32>
    %780 = vector.extract_strided_slice %773 {offsets = [0, 128], sizes = [8, 128], strides = [1, 1]} : vector<8x512xf32> to vector<8x128xf32>
    %781 = arith.negf %780 : vector<8x128xf32>
    %782 = math.exp %781 : vector<8x128xf32>
    %cst_175 = arith.constant 1.000000e+00 : f32
    %783 = vector.broadcast %cst_175 : f32 to vector<8x128xf32>
    %784 = arith.addf %783, %782 : vector<8x128xf32>
    %785 = arith.divf %783, %784 : vector<8x128xf32>
    %786 = vector.extract_strided_slice %773 {offsets = [0, 256], sizes = [8, 128], strides = [1, 1]} : vector<8x512xf32> to vector<8x128xf32>
    %787 = math.tanh %786 : vector<8x128xf32>
    %788 = vector.extract_strided_slice %773 {offsets = [0, 384], sizes = [8, 128], strides = [1, 1]} : vector<8x512xf32> to vector<8x128xf32>
    %789 = arith.negf %788 : vector<8x128xf32>
    %790 = math.exp %789 : vector<8x128xf32>
    %cst_176 = arith.constant 1.000000e+00 : f32
    %791 = vector.broadcast %cst_176 : f32 to vector<8x128xf32>
    %792 = arith.addf %791, %790 : vector<8x128xf32>
    %793 = arith.divf %791, %792 : vector<8x128xf32>
    %794 = arith.mulf %785, %763 : vector<8x128xf32>
    %795 = arith.mulf %779, %787 : vector<8x128xf32>
    %796 = arith.addf %794, %795 : vector<8x128xf32>
    %797 = math.tanh %796 : vector<8x128xf32>
    %798 = arith.mulf %793, %797 : vector<8x128xf32>
    %799 = arith.index_cast %769 : i32 to index
    %c0_177 = arith.constant 0 : index
    %800 = vector.load %arg10[%799, %c0_177] : memref<208x128xf32, #tpu.memory_space<vmem>>, vector<8x128xf32>
    tpu.vector_store %arg10[%799, %c0_177], %798 {strides = array<i32>} : memref<208x128xf32, #tpu.memory_space<vmem>>, vector<8x128xf32>,
    %c24_i32 = arith.constant 24 : i32
    %c8_i32_178 = arith.constant 8 : i32
    %801 = arith.muli %c24_i32, %c8_i32_178 : i32
    %802 = tpu.assume_multiple %801, 8 : i32
    %803 = arith.index_cast %802 : i32 to index
    %c0_179 = arith.constant 0 : index
    %804 = vector.load %arg9[%803, %c0_179] : memref<208x512xf32, #tpu.memory_space<vmem>>, vector<8x512xf32>
    %cst_180 = arith.constant dense<0.000000e+00> : vector<8x512xf32>
    %805 = tpu.matmul %798, %7, %cst_180 {dimension_numbers = #tpu.dot_dimension_numbers<[1], [0], [0], [1], [0, 0, 1, 1], [], []>} : vector<8x128xf32>, vector<128x512xf32>, vector<8x512xf32> -> vector<8x512xf32>
    %806 = arith.addf %804, %805 : vector<8x512xf32>
    %807 = vector.extract_strided_slice %806 {offsets = [0, 0], sizes = [8, 128], strides = [1, 1]} : vector<8x512xf32> to vector<8x128xf32>
    %808 = arith.negf %807 : vector<8x128xf32>
    %809 = math.exp %808 : vector<8x128xf32>
    %cst_181 = arith.constant 1.000000e+00 : f32
    %810 = vector.broadcast %cst_181 : f32 to vector<8x128xf32>
    %811 = arith.addf %810, %809 : vector<8x128xf32>
    %812 = arith.divf %810, %811 : vector<8x128xf32>
    %813 = vector.extract_strided_slice %806 {offsets = [0, 128], sizes = [8, 128], strides = [1, 1]} : vector<8x512xf32> to vector<8x128xf32>
    %814 = arith.negf %813 : vector<8x128xf32>
    %815 = math.exp %814 : vector<8x128xf32>
    %cst_182 = arith.constant 1.000000e+00 : f32
    %816 = vector.broadcast %cst_182 : f32 to vector<8x128xf32>
    %817 = arith.addf %816, %815 : vector<8x128xf32>
    %818 = arith.divf %816, %817 : vector<8x128xf32>
    %819 = vector.extract_strided_slice %806 {offsets = [0, 256], sizes = [8, 128], strides = [1, 1]} : vector<8x512xf32> to vector<8x128xf32>
    %820 = math.tanh %819 : vector<8x128xf32>
    %821 = vector.extract_strided_slice %806 {offsets = [0, 384], sizes = [8, 128], strides = [1, 1]} : vector<8x512xf32> to vector<8x128xf32>
    %822 = arith.negf %821 : vector<8x128xf32>
    %823 = math.exp %822 : vector<8x128xf32>
    %cst_183 = arith.constant 1.000000e+00 : f32
    %824 = vector.broadcast %cst_183 : f32 to vector<8x128xf32>
    %825 = arith.addf %824, %823 : vector<8x128xf32>
    %826 = arith.divf %824, %825 : vector<8x128xf32>
    %827 = arith.mulf %818, %796 : vector<8x128xf32>
    %828 = arith.mulf %812, %820 : vector<8x128xf32>
    %829 = arith.addf %827, %828 : vector<8x128xf32>
    %830 = math.tanh %829 : vector<8x128xf32>
    %831 = arith.mulf %826, %830 : vector<8x128xf32>
    %832 = arith.index_cast %802 : i32 to index
    %c0_184 = arith.constant 0 : index
    %833 = vector.load %arg10[%832, %c0_184] : memref<208x128xf32, #tpu.memory_space<vmem>>, vector<8x128xf32>
    tpu.vector_store %arg10[%832, %c0_184], %831 {strides = array<i32>} : memref<208x128xf32, #tpu.memory_space<vmem>>, vector<8x128xf32>,
    %c25_i32 = arith.constant 25 : i32
    %c8_i32_185 = arith.constant 8 : i32
    %834 = arith.muli %c25_i32, %c8_i32_185 : i32
    %835 = tpu.assume_multiple %834, 8 : i32
    %836 = arith.index_cast %835 : i32 to index
    %c0_186 = arith.constant 0 : index
    %837 = vector.load %arg9[%836, %c0_186] : memref<208x512xf32, #tpu.memory_space<vmem>>, vector<8x512xf32>
    %cst_187 = arith.constant dense<0.000000e+00> : vector<8x512xf32>
    %838 = tpu.matmul %831, %7, %cst_187 {dimension_numbers = #tpu.dot_dimension_numbers<[1], [0], [0], [1], [0, 0, 1, 1], [], []>} : vector<8x128xf32>, vector<128x512xf32>, vector<8x512xf32> -> vector<8x512xf32>
    %839 = arith.addf %837, %838 : vector<8x512xf32>
    %840 = vector.extract_strided_slice %839 {offsets = [0, 0], sizes = [8, 128], strides = [1, 1]} : vector<8x512xf32> to vector<8x128xf32>
    %841 = arith.negf %840 : vector<8x128xf32>
    %842 = math.exp %841 : vector<8x128xf32>
    %cst_188 = arith.constant 1.000000e+00 : f32
    %843 = vector.broadcast %cst_188 : f32 to vector<8x128xf32>
    %844 = arith.addf %843, %842 : vector<8x128xf32>
    %845 = arith.divf %843, %844 : vector<8x128xf32>
    %846 = vector.extract_strided_slice %839 {offsets = [0, 128], sizes = [8, 128], strides = [1, 1]} : vector<8x512xf32> to vector<8x128xf32>
    %847 = arith.negf %846 : vector<8x128xf32>
    %848 = math.exp %847 : vector<8x128xf32>
    %cst_189 = arith.constant 1.000000e+00 : f32
    %849 = vector.broadcast %cst_189 : f32 to vector<8x128xf32>
    %850 = arith.addf %849, %848 : vector<8x128xf32>
    %851 = arith.divf %849, %850 : vector<8x128xf32>
    %852 = vector.extract_strided_slice %839 {offsets = [0, 256], sizes = [8, 128], strides = [1, 1]} : vector<8x512xf32> to vector<8x128xf32>
    %853 = math.tanh %852 : vector<8x128xf32>
    %854 = vector.extract_strided_slice %839 {offsets = [0, 384], sizes = [8, 128], strides = [1, 1]} : vector<8x512xf32> to vector<8x128xf32>
    %855 = arith.negf %854 : vector<8x128xf32>
    %856 = math.exp %855 : vector<8x128xf32>
    %cst_190 = arith.constant 1.000000e+00 : f32
    %857 = vector.broadcast %cst_190 : f32 to vector<8x128xf32>
    %858 = arith.addf %857, %856 : vector<8x128xf32>
    %859 = arith.divf %857, %858 : vector<8x128xf32>
    %860 = arith.mulf %851, %829 : vector<8x128xf32>
    %861 = arith.mulf %845, %853 : vector<8x128xf32>
    %862 = arith.addf %860, %861 : vector<8x128xf32>
    %863 = math.tanh %862 : vector<8x128xf32>
    %864 = arith.mulf %859, %863 : vector<8x128xf32>
    %865 = arith.index_cast %835 : i32 to index
    %c0_191 = arith.constant 0 : index
    %866 = vector.load %arg10[%865, %c0_191] : memref<208x128xf32, #tpu.memory_space<vmem>>, vector<8x128xf32>
    tpu.vector_store %arg10[%865, %c0_191], %864 {strides = array<i32>} : memref<208x128xf32, #tpu.memory_space<vmem>>, vector<8x128xf32>,
    %c26_i32 = arith.constant 26 : i32
    %c0_192 = arith.constant 0 : index
    %c0_193 = arith.constant 0 : index
    %867 = vector.load %arg10[%c0_192, %c0_193] : memref<208x128xf32, #tpu.memory_space<vmem>>, vector<8x128xf32>
    %c0_194 = arith.constant 0 : index
    %c0_195 = arith.constant 0 : index
    %868 = vector.load %arg11[%c0_194, %c0_195] : memref<32x2560xf32, #tpu.memory_space<vmem>>, vector<8x128xf32>
    tpu.vector_store %arg11[%c0_194, %c0_195], %867 {strides = array<i32>} : memref<32x2560xf32, #tpu.memory_space<vmem>>, vector<8x128xf32>,
    %c8 = arith.constant 8 : index
    %c0_196 = arith.constant 0 : index
    %869 = vector.load %arg10[%c8, %c0_196] : memref<208x128xf32, #tpu.memory_space<vmem>>, vector<8x128xf32>
    %c0_197 = arith.constant 0 : index
    %c128 = arith.constant 128 : index
    %870 = vector.load %arg11[%c0_197, %c128] : memref<32x2560xf32, #tpu.memory_space<vmem>>, vector<8x128xf32>
    tpu.vector_store %arg11[%c0_197, %c128], %869 {strides = array<i32>} : memref<32x2560xf32, #tpu.memory_space<vmem>>, vector<8x128xf32>,
    %c16 = arith.constant 16 : index
    %c0_198 = arith.constant 0 : index
    %871 = vector.load %arg10[%c16, %c0_198] : memref<208x128xf32, #tpu.memory_space<vmem>>, vector<8x128xf32>
    %c0_199 = arith.constant 0 : index
    %c256 = arith.constant 256 : index
    %872 = vector.load %arg11[%c0_199, %c256] : memref<32x2560xf32, #tpu.memory_space<vmem>>, vector<8x128xf32>
    tpu.vector_store %arg11[%c0_199, %c256], %871 {strides = array<i32>} : memref<32x2560xf32, #tpu.memory_space<vmem>>, vector<8x128xf32>,
    %c24 = arith.constant 24 : index
    %c0_200 = arith.constant 0 : index
    %873 = vector.load %arg10[%c24, %c0_200] : memref<208x128xf32, #tpu.memory_space<vmem>>, vector<8x128xf32>
    %c0_201 = arith.constant 0 : index
    %c384 = arith.constant 384 : index
    %874 = vector.load %arg11[%c0_201, %c384] : memref<32x2560xf32, #tpu.memory_space<vmem>>, vector<8x128xf32>
    tpu.vector_store %arg11[%c0_201, %c384], %873 {strides = array<i32>} : memref<32x2560xf32, #tpu.memory_space<vmem>>, vector<8x128xf32>,
    %c32 = arith.constant 32 : index
    %c0_202 = arith.constant 0 : index
    %875 = vector.load %arg10[%c32, %c0_202] : memref<208x128xf32, #tpu.memory_space<vmem>>, vector<8x128xf32>
    %c0_203 = arith.constant 0 : index
    %c512 = arith.constant 512 : index
    %876 = vector.load %arg11[%c0_203, %c512] : memref<32x2560xf32, #tpu.memory_space<vmem>>, vector<8x128xf32>
    tpu.vector_store %arg11[%c0_203, %c512], %875 {strides = array<i32>} : memref<32x2560xf32, #tpu.memory_space<vmem>>, vector<8x128xf32>,
    %c40 = arith.constant 40 : index
    %c0_204 = arith.constant 0 : index
    %877 = vector.load %arg10[%c40, %c0_204] : memref<208x128xf32, #tpu.memory_space<vmem>>, vector<8x128xf32>
    %c0_205 = arith.constant 0 : index
    %c640 = arith.constant 640 : index
    %878 = vector.load %arg11[%c0_205, %c640] : memref<32x2560xf32, #tpu.memory_space<vmem>>, vector<8x128xf32>
    tpu.vector_store %arg11[%c0_205, %c640], %877 {strides = array<i32>} : memref<32x2560xf32, #tpu.memory_space<vmem>>, vector<8x128xf32>,
    %c48 = arith.constant 48 : index
    %c0_206 = arith.constant 0 : index
    %879 = vector.load %arg10[%c48, %c0_206] : memref<208x128xf32, #tpu.memory_space<vmem>>, vector<8x128xf32>
    %c0_207 = arith.constant 0 : index
    %c768 = arith.constant 768 : index
    %880 = vector.load %arg11[%c0_207, %c768] : memref<32x2560xf32, #tpu.memory_space<vmem>>, vector<8x128xf32>
    tpu.vector_store %arg11[%c0_207, %c768], %879 {strides = array<i32>} : memref<32x2560xf32, #tpu.memory_space<vmem>>, vector<8x128xf32>,
    %c56 = arith.constant 56 : index
    %c0_208 = arith.constant 0 : index
    %881 = vector.load %arg10[%c56, %c0_208] : memref<208x128xf32, #tpu.memory_space<vmem>>, vector<8x128xf32>
    %c0_209 = arith.constant 0 : index
    %c896 = arith.constant 896 : index
    %882 = vector.load %arg11[%c0_209, %c896] : memref<32x2560xf32, #tpu.memory_space<vmem>>, vector<8x128xf32>
    tpu.vector_store %arg11[%c0_209, %c896], %881 {strides = array<i32>} : memref<32x2560xf32, #tpu.memory_space<vmem>>, vector<8x128xf32>,
    %c64 = arith.constant 64 : index
    %c0_210 = arith.constant 0 : index
    %883 = vector.load %arg10[%c64, %c0_210] : memref<208x128xf32, #tpu.memory_space<vmem>>, vector<8x128xf32>
    %c0_211 = arith.constant 0 : index
    %c1024 = arith.constant 1024 : index
    %884 = vector.load %arg11[%c0_211, %c1024] : memref<32x2560xf32, #tpu.memory_space<vmem>>, vector<8x128xf32>
    tpu.vector_store %arg11[%c0_211, %c1024], %883 {strides = array<i32>} : memref<32x2560xf32, #tpu.memory_space<vmem>>, vector<8x128xf32>,
    %c72 = arith.constant 72 : index
    %c0_212 = arith.constant 0 : index
    %885 = vector.load %arg10[%c72, %c0_212] : memref<208x128xf32, #tpu.memory_space<vmem>>, vector<8x128xf32>
    %c0_213 = arith.constant 0 : index
    %c1152 = arith.constant 1152 : index
    %886 = vector.load %arg11[%c0_213, %c1152] : memref<32x2560xf32, #tpu.memory_space<vmem>>, vector<8x128xf32>
    tpu.vector_store %arg11[%c0_213, %c1152], %885 {strides = array<i32>} : memref<32x2560xf32, #tpu.memory_space<vmem>>, vector<8x128xf32>,
    %c80 = arith.constant 80 : index
    %c0_214 = arith.constant 0 : index
    %887 = vector.load %arg10[%c80, %c0_214] : memref<208x128xf32, #tpu.memory_space<vmem>>, vector<8x128xf32>
    %c0_215 = arith.constant 0 : index
    %c1280 = arith.constant 1280 : index
    %888 = vector.load %arg11[%c0_215, %c1280] : memref<32x2560xf32, #tpu.memory_space<vmem>>, vector<8x128xf32>
    tpu.vector_store %arg11[%c0_215, %c1280], %887 {strides = array<i32>} : memref<32x2560xf32, #tpu.memory_space<vmem>>, vector<8x128xf32>,
    %c88 = arith.constant 88 : index
    %c0_216 = arith.constant 0 : index
    %889 = vector.load %arg10[%c88, %c0_216] : memref<208x128xf32, #tpu.memory_space<vmem>>, vector<8x128xf32>
    %c0_217 = arith.constant 0 : index
    %c1408 = arith.constant 1408 : index
    %890 = vector.load %arg11[%c0_217, %c1408] : memref<32x2560xf32, #tpu.memory_space<vmem>>, vector<8x128xf32>
    tpu.vector_store %arg11[%c0_217, %c1408], %889 {strides = array<i32>} : memref<32x2560xf32, #tpu.memory_space<vmem>>, vector<8x128xf32>,
    %c96 = arith.constant 96 : index
    %c0_218 = arith.constant 0 : index
    %891 = vector.load %arg10[%c96, %c0_218] : memref<208x128xf32, #tpu.memory_space<vmem>>, vector<8x128xf32>
    %c0_219 = arith.constant 0 : index
    %c1536 = arith.constant 1536 : index
    %892 = vector.load %arg11[%c0_219, %c1536] : memref<32x2560xf32, #tpu.memory_space<vmem>>, vector<8x128xf32>
    tpu.vector_store %arg11[%c0_219, %c1536], %891 {strides = array<i32>} : memref<32x2560xf32, #tpu.memory_space<vmem>>, vector<8x128xf32>,
    %c104 = arith.constant 104 : index
    %c0_220 = arith.constant 0 : index
    %893 = vector.load %arg10[%c104, %c0_220] : memref<208x128xf32, #tpu.memory_space<vmem>>, vector<8x128xf32>
    %c0_221 = arith.constant 0 : index
    %c1664 = arith.constant 1664 : index
    %894 = vector.load %arg11[%c0_221, %c1664] : memref<32x2560xf32, #tpu.memory_space<vmem>>, vector<8x128xf32>
    tpu.vector_store %arg11[%c0_221, %c1664], %893 {strides = array<i32>} : memref<32x2560xf32, #tpu.memory_space<vmem>>, vector<8x128xf32>,
    %c112 = arith.constant 112 : index
    %c0_222 = arith.constant 0 : index
    %895 = vector.load %arg10[%c112, %c0_222] : memref<208x128xf32, #tpu.memory_space<vmem>>, vector<8x128xf32>
    %c0_223 = arith.constant 0 : index
    %c1792 = arith.constant 1792 : index
    %896 = vector.load %arg11[%c0_223, %c1792] : memref<32x2560xf32, #tpu.memory_space<vmem>>, vector<8x128xf32>
    tpu.vector_store %arg11[%c0_223, %c1792], %895 {strides = array<i32>} : memref<32x2560xf32, #tpu.memory_space<vmem>>, vector<8x128xf32>,
    %c120 = arith.constant 120 : index
    %c0_224 = arith.constant 0 : index
    %897 = vector.load %arg10[%c120, %c0_224] : memref<208x128xf32, #tpu.memory_space<vmem>>, vector<8x128xf32>
    %c0_225 = arith.constant 0 : index
    %c1920 = arith.constant 1920 : index
    %898 = vector.load %arg11[%c0_225, %c1920] : memref<32x2560xf32, #tpu.memory_space<vmem>>, vector<8x128xf32>
    tpu.vector_store %arg11[%c0_225, %c1920], %897 {strides = array<i32>} : memref<32x2560xf32, #tpu.memory_space<vmem>>, vector<8x128xf32>,
    %c128_226 = arith.constant 128 : index
    %c0_227 = arith.constant 0 : index
    %899 = vector.load %arg10[%c128_226, %c0_227] : memref<208x128xf32, #tpu.memory_space<vmem>>, vector<8x128xf32>
    %c0_228 = arith.constant 0 : index
    %c2048 = arith.constant 2048 : index
    %900 = vector.load %arg11[%c0_228, %c2048] : memref<32x2560xf32, #tpu.memory_space<vmem>>, vector<8x128xf32>
    tpu.vector_store %arg11[%c0_228, %c2048], %899 {strides = array<i32>} : memref<32x2560xf32, #tpu.memory_space<vmem>>, vector<8x128xf32>,
    %c136 = arith.constant 136 : index
    %c0_229 = arith.constant 0 : index
    %901 = vector.load %arg10[%c136, %c0_229] : memref<208x128xf32, #tpu.memory_space<vmem>>, vector<8x128xf32>
    %c0_230 = arith.constant 0 : index
    %c2176 = arith.constant 2176 : index
    %902 = vector.load %arg11[%c0_230, %c2176] : memref<32x2560xf32, #tpu.memory_space<vmem>>, vector<8x128xf32>
    tpu.vector_store %arg11[%c0_230, %c2176], %901 {strides = array<i32>} : memref<32x2560xf32, #tpu.memory_space<vmem>>, vector<8x128xf32>,
    %c144 = arith.constant 144 : index
    %c0_231 = arith.constant 0 : index
    %903 = vector.load %arg10[%c144, %c0_231] : memref<208x128xf32, #tpu.memory_space<vmem>>, vector<8x128xf32>
    %c0_232 = arith.constant 0 : index
    %c2304 = arith.constant 2304 : index
    %904 = vector.load %arg11[%c0_232, %c2304] : memref<32x2560xf32, #tpu.memory_space<vmem>>, vector<8x128xf32>
    tpu.vector_store %arg11[%c0_232, %c2304], %903 {strides = array<i32>} : memref<32x2560xf32, #tpu.memory_space<vmem>>, vector<8x128xf32>,
    %c152 = arith.constant 152 : index
    %c0_233 = arith.constant 0 : index
    %905 = vector.load %arg10[%c152, %c0_233] : memref<208x128xf32, #tpu.memory_space<vmem>>, vector<8x128xf32>
    %c0_234 = arith.constant 0 : index
    %c2432 = arith.constant 2432 : index
    %906 = vector.load %arg11[%c0_234, %c2432] : memref<32x2560xf32, #tpu.memory_space<vmem>>, vector<8x128xf32>
    tpu.vector_store %arg11[%c0_234, %c2432], %905 {strides = array<i32>} : memref<32x2560xf32, #tpu.memory_space<vmem>>, vector<8x128xf32>,
    %c16_235 = arith.constant 16 : index
    %c0_236 = arith.constant 0 : index
    %907 = vector.load %arg10[%c16_235, %c0_236] : memref<208x128xf32, #tpu.memory_space<vmem>>, vector<8x128xf32>
    %c8_237 = arith.constant 8 : index
    %c0_238 = arith.constant 0 : index
    %908 = vector.load %arg11[%c8_237, %c0_238] : memref<32x2560xf32, #tpu.memory_space<vmem>>, vector<8x128xf32>
    tpu.vector_store %arg11[%c8_237, %c0_238], %907 {strides = array<i32>} : memref<32x2560xf32, #tpu.memory_space<vmem>>, vector<8x128xf32>,
    %c24_239 = arith.constant 24 : index
    %c0_240 = arith.constant 0 : index
    %909 = vector.load %arg10[%c24_239, %c0_240] : memref<208x128xf32, #tpu.memory_space<vmem>>, vector<8x128xf32>
    %c8_241 = arith.constant 8 : index
    %c128_242 = arith.constant 128 : index
    %910 = vector.load %arg11[%c8_241, %c128_242] : memref<32x2560xf32, #tpu.memory_space<vmem>>, vector<8x128xf32>
    tpu.vector_store %arg11[%c8_241, %c128_242], %909 {strides = array<i32>} : memref<32x2560xf32, #tpu.memory_space<vmem>>, vector<8x128xf32>,
    %c32_243 = arith.constant 32 : index
    %c0_244 = arith.constant 0 : index
    %911 = vector.load %arg10[%c32_243, %c0_244] : memref<208x128xf32, #tpu.memory_space<vmem>>, vector<8x128xf32>
    %c8_245 = arith.constant 8 : index
    %c256_246 = arith.constant 256 : index
    %912 = vector.load %arg11[%c8_245, %c256_246] : memref<32x2560xf32, #tpu.memory_space<vmem>>, vector<8x128xf32>
    tpu.vector_store %arg11[%c8_245, %c256_246], %911 {strides = array<i32>} : memref<32x2560xf32, #tpu.memory_space<vmem>>, vector<8x128xf32>,
    %c40_247 = arith.constant 40 : index
    %c0_248 = arith.constant 0 : index
    %913 = vector.load %arg10[%c40_247, %c0_248] : memref<208x128xf32, #tpu.memory_space<vmem>>, vector<8x128xf32>
    %c8_249 = arith.constant 8 : index
    %c384_250 = arith.constant 384 : index
    %914 = vector.load %arg11[%c8_249, %c384_250] : memref<32x2560xf32, #tpu.memory_space<vmem>>, vector<8x128xf32>
    tpu.vector_store %arg11[%c8_249, %c384_250], %913 {strides = array<i32>} : memref<32x2560xf32, #tpu.memory_space<vmem>>, vector<8x128xf32>,
    %c48_251 = arith.constant 48 : index
    %c0_252 = arith.constant 0 : index
    %915 = vector.load %arg10[%c48_251, %c0_252] : memref<208x128xf32, #tpu.memory_space<vmem>>, vector<8x128xf32>
    %c8_253 = arith.constant 8 : index
    %c512_254 = arith.constant 512 : index
    %916 = vector.load %arg11[%c8_253, %c512_254] : memref<32x2560xf32, #tpu.memory_space<vmem>>, vector<8x128xf32>
    tpu.vector_store %arg11[%c8_253, %c512_254], %915 {strides = array<i32>} : memref<32x2560xf32, #tpu.memory_space<vmem>>, vector<8x128xf32>,
    %c56_255 = arith.constant 56 : index
    %c0_256 = arith.constant 0 : index
    %917 = vector.load %arg10[%c56_255, %c0_256] : memref<208x128xf32, #tpu.memory_space<vmem>>, vector<8x128xf32>
    %c8_257 = arith.constant 8 : index
    %c640_258 = arith.constant 640 : index
    %918 = vector.load %arg11[%c8_257, %c640_258] : memref<32x2560xf32, #tpu.memory_space<vmem>>, vector<8x128xf32>
    tpu.vector_store %arg11[%c8_257, %c640_258], %917 {strides = array<i32>} : memref<32x2560xf32, #tpu.memory_space<vmem>>, vector<8x128xf32>,
    %c64_259 = arith.constant 64 : index
    %c0_260 = arith.constant 0 : index
    %919 = vector.load %arg10[%c64_259, %c0_260] : memref<208x128xf32, #tpu.memory_space<vmem>>, vector<8x128xf32>
    %c8_261 = arith.constant 8 : index
    %c768_262 = arith.constant 768 : index
    %920 = vector.load %arg11[%c8_261, %c768_262] : memref<32x2560xf32, #tpu.memory_space<vmem>>, vector<8x128xf32>
    tpu.vector_store %arg11[%c8_261, %c768_262], %919 {strides = array<i32>} : memref<32x2560xf32, #tpu.memory_space<vmem>>, vector<8x128xf32>,
    %c72_263 = arith.constant 72 : index
    %c0_264 = arith.constant 0 : index
    %921 = vector.load %arg10[%c72_263, %c0_264] : memref<208x128xf32, #tpu.memory_space<vmem>>, vector<8x128xf32>
    %c8_265 = arith.constant 8 : index
    %c896_266 = arith.constant 896 : index
    %922 = vector.load %arg11[%c8_265, %c896_266] : memref<32x2560xf32, #tpu.memory_space<vmem>>, vector<8x128xf32>
    tpu.vector_store %arg11[%c8_265, %c896_266], %921 {strides = array<i32>} : memref<32x2560xf32, #tpu.memory_space<vmem>>, vector<8x128xf32>,
    %c80_267 = arith.constant 80 : index
    %c0_268 = arith.constant 0 : index
    %923 = vector.load %arg10[%c80_267, %c0_268] : memref<208x128xf32, #tpu.memory_space<vmem>>, vector<8x128xf32>
    %c8_269 = arith.constant 8 : index
    %c1024_270 = arith.constant 1024 : index
    %924 = vector.load %arg11[%c8_269, %c1024_270] : memref<32x2560xf32, #tpu.memory_space<vmem>>, vector<8x128xf32>
    tpu.vector_store %arg11[%c8_269, %c1024_270], %923 {strides = array<i32>} : memref<32x2560xf32, #tpu.memory_space<vmem>>, vector<8x128xf32>,
    %c88_271 = arith.constant 88 : index
    %c0_272 = arith.constant 0 : index
    %925 = vector.load %arg10[%c88_271, %c0_272] : memref<208x128xf32, #tpu.memory_space<vmem>>, vector<8x128xf32>
    %c8_273 = arith.constant 8 : index
    %c1152_274 = arith.constant 1152 : index
    %926 = vector.load %arg11[%c8_273, %c1152_274] : memref<32x2560xf32, #tpu.memory_space<vmem>>, vector<8x128xf32>
    tpu.vector_store %arg11[%c8_273, %c1152_274], %925 {strides = array<i32>} : memref<32x2560xf32, #tpu.memory_space<vmem>>, vector<8x128xf32>,
    %c96_275 = arith.constant 96 : index
    %c0_276 = arith.constant 0 : index
    %927 = vector.load %arg10[%c96_275, %c0_276] : memref<208x128xf32, #tpu.memory_space<vmem>>, vector<8x128xf32>
    %c8_277 = arith.constant 8 : index
    %c1280_278 = arith.constant 1280 : index
    %928 = vector.load %arg11[%c8_277, %c1280_278] : memref<32x2560xf32, #tpu.memory_space<vmem>>, vector<8x128xf32>
    tpu.vector_store %arg11[%c8_277, %c1280_278], %927 {strides = array<i32>} : memref<32x2560xf32, #tpu.memory_space<vmem>>, vector<8x128xf32>,
    %c104_279 = arith.constant 104 : index
    %c0_280 = arith.constant 0 : index
    %929 = vector.load %arg10[%c104_279, %c0_280] : memref<208x128xf32, #tpu.memory_space<vmem>>, vector<8x128xf32>
    %c8_281 = arith.constant 8 : index
    %c1408_282 = arith.constant 1408 : index
    %930 = vector.load %arg11[%c8_281, %c1408_282] : memref<32x2560xf32, #tpu.memory_space<vmem>>, vector<8x128xf32>
    tpu.vector_store %arg11[%c8_281, %c1408_282], %929 {strides = array<i32>} : memref<32x2560xf32, #tpu.memory_space<vmem>>, vector<8x128xf32>,
    %c112_283 = arith.constant 112 : index
    %c0_284 = arith.constant 0 : index
    %931 = vector.load %arg10[%c112_283, %c0_284] : memref<208x128xf32, #tpu.memory_space<vmem>>, vector<8x128xf32>
    %c8_285 = arith.constant 8 : index
    %c1536_286 = arith.constant 1536 : index
    %932 = vector.load %arg11[%c8_285, %c1536_286] : memref<32x2560xf32, #tpu.memory_space<vmem>>, vector<8x128xf32>
    tpu.vector_store %arg11[%c8_285, %c1536_286], %931 {strides = array<i32>} : memref<32x2560xf32, #tpu.memory_space<vmem>>, vector<8x128xf32>,
    %c120_287 = arith.constant 120 : index
    %c0_288 = arith.constant 0 : index
    %933 = vector.load %arg10[%c120_287, %c0_288] : memref<208x128xf32, #tpu.memory_space<vmem>>, vector<8x128xf32>
    %c8_289 = arith.constant 8 : index
    %c1664_290 = arith.constant 1664 : index
    %934 = vector.load %arg11[%c8_289, %c1664_290] : memref<32x2560xf32, #tpu.memory_space<vmem>>, vector<8x128xf32>
    tpu.vector_store %arg11[%c8_289, %c1664_290], %933 {strides = array<i32>} : memref<32x2560xf32, #tpu.memory_space<vmem>>, vector<8x128xf32>,
    %c128_291 = arith.constant 128 : index
    %c0_292 = arith.constant 0 : index
    %935 = vector.load %arg10[%c128_291, %c0_292] : memref<208x128xf32, #tpu.memory_space<vmem>>, vector<8x128xf32>
    %c8_293 = arith.constant 8 : index
    %c1792_294 = arith.constant 1792 : index
    %936 = vector.load %arg11[%c8_293, %c1792_294] : memref<32x2560xf32, #tpu.memory_space<vmem>>, vector<8x128xf32>
    tpu.vector_store %arg11[%c8_293, %c1792_294], %935 {strides = array<i32>} : memref<32x2560xf32, #tpu.memory_space<vmem>>, vector<8x128xf32>,
    %c136_295 = arith.constant 136 : index
    %c0_296 = arith.constant 0 : index
    %937 = vector.load %arg10[%c136_295, %c0_296] : memref<208x128xf32, #tpu.memory_space<vmem>>, vector<8x128xf32>
    %c8_297 = arith.constant 8 : index
    %c1920_298 = arith.constant 1920 : index
    %938 = vector.load %arg11[%c8_297, %c1920_298] : memref<32x2560xf32, #tpu.memory_space<vmem>>, vector<8x128xf32>
    tpu.vector_store %arg11[%c8_297, %c1920_298], %937 {strides = array<i32>} : memref<32x2560xf32, #tpu.memory_space<vmem>>, vector<8x128xf32>,
    %c144_299 = arith.constant 144 : index
    %c0_300 = arith.constant 0 : index
    %939 = vector.load %arg10[%c144_299, %c0_300] : memref<208x128xf32, #tpu.memory_space<vmem>>, vector<8x128xf32>
    %c8_301 = arith.constant 8 : index
    %c2048_302 = arith.constant 2048 : index
    %940 = vector.load %arg11[%c8_301, %c2048_302] : memref<32x2560xf32, #tpu.memory_space<vmem>>, vector<8x128xf32>
    tpu.vector_store %arg11[%c8_301, %c2048_302], %939 {strides = array<i32>} : memref<32x2560xf32, #tpu.memory_space<vmem>>, vector<8x128xf32>,
    %c152_303 = arith.constant 152 : index
    %c0_304 = arith.constant 0 : index
    %941 = vector.load %arg10[%c152_303, %c0_304] : memref<208x128xf32, #tpu.memory_space<vmem>>, vector<8x128xf32>
    %c8_305 = arith.constant 8 : index
    %c2176_306 = arith.constant 2176 : index
    %942 = vector.load %arg11[%c8_305, %c2176_306] : memref<32x2560xf32, #tpu.memory_space<vmem>>, vector<8x128xf32>
    tpu.vector_store %arg11[%c8_305, %c2176_306], %941 {strides = array<i32>} : memref<32x2560xf32, #tpu.memory_space<vmem>>, vector<8x128xf32>,
    %c160 = arith.constant 160 : index
    %c0_307 = arith.constant 0 : index
    %943 = vector.load %arg10[%c160, %c0_307] : memref<208x128xf32, #tpu.memory_space<vmem>>, vector<8x128xf32>
    %c8_308 = arith.constant 8 : index
    %c2304_309 = arith.constant 2304 : index
    %944 = vector.load %arg11[%c8_308, %c2304_309] : memref<32x2560xf32, #tpu.memory_space<vmem>>, vector<8x128xf32>
    tpu.vector_store %arg11[%c8_308, %c2304_309], %943 {strides = array<i32>} : memref<32x2560xf32, #tpu.memory_space<vmem>>, vector<8x128xf32>,
    %c168 = arith.constant 168 : index
    %c0_310 = arith.constant 0 : index
    %945 = vector.load %arg10[%c168, %c0_310] : memref<208x128xf32, #tpu.memory_space<vmem>>, vector<8x128xf32>
    %c8_311 = arith.constant 8 : index
    %c2432_312 = arith.constant 2432 : index
    %946 = vector.load %arg11[%c8_311, %c2432_312] : memref<32x2560xf32, #tpu.memory_space<vmem>>, vector<8x128xf32>
    tpu.vector_store %arg11[%c8_311, %c2432_312], %945 {strides = array<i32>} : memref<32x2560xf32, #tpu.memory_space<vmem>>, vector<8x128xf32>,
    %c32_313 = arith.constant 32 : index
    %c0_314 = arith.constant 0 : index
    %947 = vector.load %arg10[%c32_313, %c0_314] : memref<208x128xf32, #tpu.memory_space<vmem>>, vector<8x128xf32>
    %c16_315 = arith.constant 16 : index
    %c0_316 = arith.constant 0 : index
    %948 = vector.load %arg11[%c16_315, %c0_316] : memref<32x2560xf32, #tpu.memory_space<vmem>>, vector<8x128xf32>
    tpu.vector_store %arg11[%c16_315, %c0_316], %947 {strides = array<i32>} : memref<32x2560xf32, #tpu.memory_space<vmem>>, vector<8x128xf32>,
    %c40_317 = arith.constant 40 : index
    %c0_318 = arith.constant 0 : index
    %949 = vector.load %arg10[%c40_317, %c0_318] : memref<208x128xf32, #tpu.memory_space<vmem>>, vector<8x128xf32>
    %c16_319 = arith.constant 16 : index
    %c128_320 = arith.constant 128 : index
    %950 = vector.load %arg11[%c16_319, %c128_320] : memref<32x2560xf32, #tpu.memory_space<vmem>>, vector<8x128xf32>
    tpu.vector_store %arg11[%c16_319, %c128_320], %949 {strides = array<i32>} : memref<32x2560xf32, #tpu.memory_space<vmem>>, vector<8x128xf32>,
    %c48_321 = arith.constant 48 : index
    %c0_322 = arith.constant 0 : index
    %951 = vector.load %arg10[%c48_321, %c0_322] : memref<208x128xf32, #tpu.memory_space<vmem>>, vector<8x128xf32>
    %c16_323 = arith.constant 16 : index
    %c256_324 = arith.constant 256 : index
    %952 = vector.load %arg11[%c16_323, %c256_324] : memref<32x2560xf32, #tpu.memory_space<vmem>>, vector<8x128xf32>
    tpu.vector_store %arg11[%c16_323, %c256_324], %951 {strides = array<i32>} : memref<32x2560xf32, #tpu.memory_space<vmem>>, vector<8x128xf32>,
    %c56_325 = arith.constant 56 : index
    %c0_326 = arith.constant 0 : index
    %953 = vector.load %arg10[%c56_325, %c0_326] : memref<208x128xf32, #tpu.memory_space<vmem>>, vector<8x128xf32>
    %c16_327 = arith.constant 16 : index
    %c384_328 = arith.constant 384 : index
    %954 = vector.load %arg11[%c16_327, %c384_328] : memref<32x2560xf32, #tpu.memory_space<vmem>>, vector<8x128xf32>
    tpu.vector_store %arg11[%c16_327, %c384_328], %953 {strides = array<i32>} : memref<32x2560xf32, #tpu.memory_space<vmem>>, vector<8x128xf32>,
    %c64_329 = arith.constant 64 : index
    %c0_330 = arith.constant 0 : index
    %955 = vector.load %arg10[%c64_329, %c0_330] : memref<208x128xf32, #tpu.memory_space<vmem>>, vector<8x128xf32>
    %c16_331 = arith.constant 16 : index
    %c512_332 = arith.constant 512 : index
    %956 = vector.load %arg11[%c16_331, %c512_332] : memref<32x2560xf32, #tpu.memory_space<vmem>>, vector<8x128xf32>
    tpu.vector_store %arg11[%c16_331, %c512_332], %955 {strides = array<i32>} : memref<32x2560xf32, #tpu.memory_space<vmem>>, vector<8x128xf32>,
    %c72_333 = arith.constant 72 : index
    %c0_334 = arith.constant 0 : index
    %957 = vector.load %arg10[%c72_333, %c0_334] : memref<208x128xf32, #tpu.memory_space<vmem>>, vector<8x128xf32>
    %c16_335 = arith.constant 16 : index
    %c640_336 = arith.constant 640 : index
    %958 = vector.load %arg11[%c16_335, %c640_336] : memref<32x2560xf32, #tpu.memory_space<vmem>>, vector<8x128xf32>
    tpu.vector_store %arg11[%c16_335, %c640_336], %957 {strides = array<i32>} : memref<32x2560xf32, #tpu.memory_space<vmem>>, vector<8x128xf32>,
    %c80_337 = arith.constant 80 : index
    %c0_338 = arith.constant 0 : index
    %959 = vector.load %arg10[%c80_337, %c0_338] : memref<208x128xf32, #tpu.memory_space<vmem>>, vector<8x128xf32>
    %c16_339 = arith.constant 16 : index
    %c768_340 = arith.constant 768 : index
    %960 = vector.load %arg11[%c16_339, %c768_340] : memref<32x2560xf32, #tpu.memory_space<vmem>>, vector<8x128xf32>
    tpu.vector_store %arg11[%c16_339, %c768_340], %959 {strides = array<i32>} : memref<32x2560xf32, #tpu.memory_space<vmem>>, vector<8x128xf32>,
    %c88_341 = arith.constant 88 : index
    %c0_342 = arith.constant 0 : index
    %961 = vector.load %arg10[%c88_341, %c0_342] : memref<208x128xf32, #tpu.memory_space<vmem>>, vector<8x128xf32>
    %c16_343 = arith.constant 16 : index
    %c896_344 = arith.constant 896 : index
    %962 = vector.load %arg11[%c16_343, %c896_344] : memref<32x2560xf32, #tpu.memory_space<vmem>>, vector<8x128xf32>
    tpu.vector_store %arg11[%c16_343, %c896_344], %961 {strides = array<i32>} : memref<32x2560xf32, #tpu.memory_space<vmem>>, vector<8x128xf32>,
    %c96_345 = arith.constant 96 : index
    %c0_346 = arith.constant 0 : index
    %963 = vector.load %arg10[%c96_345, %c0_346] : memref<208x128xf32, #tpu.memory_space<vmem>>, vector<8x128xf32>
    %c16_347 = arith.constant 16 : index
    %c1024_348 = arith.constant 1024 : index
    %964 = vector.load %arg11[%c16_347, %c1024_348] : memref<32x2560xf32, #tpu.memory_space<vmem>>, vector<8x128xf32>
    tpu.vector_store %arg11[%c16_347, %c1024_348], %963 {strides = array<i32>} : memref<32x2560xf32, #tpu.memory_space<vmem>>, vector<8x128xf32>,
    %c104_349 = arith.constant 104 : index
    %c0_350 = arith.constant 0 : index
    %965 = vector.load %arg10[%c104_349, %c0_350] : memref<208x128xf32, #tpu.memory_space<vmem>>, vector<8x128xf32>
    %c16_351 = arith.constant 16 : index
    %c1152_352 = arith.constant 1152 : index
    %966 = vector.load %arg11[%c16_351, %c1152_352] : memref<32x2560xf32, #tpu.memory_space<vmem>>, vector<8x128xf32>
    tpu.vector_store %arg11[%c16_351, %c1152_352], %965 {strides = array<i32>} : memref<32x2560xf32, #tpu.memory_space<vmem>>, vector<8x128xf32>,
    %c112_353 = arith.constant 112 : index
    %c0_354 = arith.constant 0 : index
    %967 = vector.load %arg10[%c112_353, %c0_354] : memref<208x128xf32, #tpu.memory_space<vmem>>, vector<8x128xf32>
    %c16_355 = arith.constant 16 : index
    %c1280_356 = arith.constant 1280 : index
    %968 = vector.load %arg11[%c16_355, %c1280_356] : memref<32x2560xf32, #tpu.memory_space<vmem>>, vector<8x128xf32>
    tpu.vector_store %arg11[%c16_355, %c1280_356], %967 {strides = array<i32>} : memref<32x2560xf32, #tpu.memory_space<vmem>>, vector<8x128xf32>,
    %c120_357 = arith.constant 120 : index
    %c0_358 = arith.constant 0 : index
    %969 = vector.load %arg10[%c120_357, %c0_358] : memref<208x128xf32, #tpu.memory_space<vmem>>, vector<8x128xf32>
    %c16_359 = arith.constant 16 : index
    %c1408_360 = arith.constant 1408 : index
    %970 = vector.load %arg11[%c16_359, %c1408_360] : memref<32x2560xf32, #tpu.memory_space<vmem>>, vector<8x128xf32>
    tpu.vector_store %arg11[%c16_359, %c1408_360], %969 {strides = array<i32>} : memref<32x2560xf32, #tpu.memory_space<vmem>>, vector<8x128xf32>,
    %c128_361 = arith.constant 128 : index
    %c0_362 = arith.constant 0 : index
    %971 = vector.load %arg10[%c128_361, %c0_362] : memref<208x128xf32, #tpu.memory_space<vmem>>, vector<8x128xf32>
    %c16_363 = arith.constant 16 : index
    %c1536_364 = arith.constant 1536 : index
    %972 = vector.load %arg11[%c16_363, %c1536_364] : memref<32x2560xf32, #tpu.memory_space<vmem>>, vector<8x128xf32>
    tpu.vector_store %arg11[%c16_363, %c1536_364], %971 {strides = array<i32>} : memref<32x2560xf32, #tpu.memory_space<vmem>>, vector<8x128xf32>,
    %c136_365 = arith.constant 136 : index
    %c0_366 = arith.constant 0 : index
    %973 = vector.load %arg10[%c136_365, %c0_366] : memref<208x128xf32, #tpu.memory_space<vmem>>, vector<8x128xf32>
    %c16_367 = arith.constant 16 : index
    %c1664_368 = arith.constant 1664 : index
    %974 = vector.load %arg11[%c16_367, %c1664_368] : memref<32x2560xf32, #tpu.memory_space<vmem>>, vector<8x128xf32>
    tpu.vector_store %arg11[%c16_367, %c1664_368], %973 {strides = array<i32>} : memref<32x2560xf32, #tpu.memory_space<vmem>>, vector<8x128xf32>,
    %c144_369 = arith.constant 144 : index
    %c0_370 = arith.constant 0 : index
    %975 = vector.load %arg10[%c144_369, %c0_370] : memref<208x128xf32, #tpu.memory_space<vmem>>, vector<8x128xf32>
    %c16_371 = arith.constant 16 : index
    %c1792_372 = arith.constant 1792 : index
    %976 = vector.load %arg11[%c16_371, %c1792_372] : memref<32x2560xf32, #tpu.memory_space<vmem>>, vector<8x128xf32>
    tpu.vector_store %arg11[%c16_371, %c1792_372], %975 {strides = array<i32>} : memref<32x2560xf32, #tpu.memory_space<vmem>>, vector<8x128xf32>,
    %c152_373 = arith.constant 152 : index
    %c0_374 = arith.constant 0 : index
    %977 = vector.load %arg10[%c152_373, %c0_374] : memref<208x128xf32, #tpu.memory_space<vmem>>, vector<8x128xf32>
    %c16_375 = arith.constant 16 : index
    %c1920_376 = arith.constant 1920 : index
    %978 = vector.load %arg11[%c16_375, %c1920_376] : memref<32x2560xf32, #tpu.memory_space<vmem>>, vector<8x128xf32>
    tpu.vector_store %arg11[%c16_375, %c1920_376], %977 {strides = array<i32>} : memref<32x2560xf32, #tpu.memory_space<vmem>>, vector<8x128xf32>,
    %c160_377 = arith.constant 160 : index
    %c0_378 = arith.constant 0 : index
    %979 = vector.load %arg10[%c160_377, %c0_378] : memref<208x128xf32, #tpu.memory_space<vmem>>, vector<8x128xf32>
    %c16_379 = arith.constant 16 : index
    %c2048_380 = arith.constant 2048 : index
    %980 = vector.load %arg11[%c16_379, %c2048_380] : memref<32x2560xf32, #tpu.memory_space<vmem>>, vector<8x128xf32>
    tpu.vector_store %arg11[%c16_379, %c2048_380], %979 {strides = array<i32>} : memref<32x2560xf32, #tpu.memory_space<vmem>>, vector<8x128xf32>,
    %c168_381 = arith.constant 168 : index
    %c0_382 = arith.constant 0 : index
    %981 = vector.load %arg10[%c168_381, %c0_382] : memref<208x128xf32, #tpu.memory_space<vmem>>, vector<8x128xf32>
    %c16_383 = arith.constant 16 : index
    %c2176_384 = arith.constant 2176 : index
    %982 = vector.load %arg11[%c16_383, %c2176_384] : memref<32x2560xf32, #tpu.memory_space<vmem>>, vector<8x128xf32>
    tpu.vector_store %arg11[%c16_383, %c2176_384], %981 {strides = array<i32>} : memref<32x2560xf32, #tpu.memory_space<vmem>>, vector<8x128xf32>,
    %c176 = arith.constant 176 : index
    %c0_385 = arith.constant 0 : index
    %983 = vector.load %arg10[%c176, %c0_385] : memref<208x128xf32, #tpu.memory_space<vmem>>, vector<8x128xf32>
    %c16_386 = arith.constant 16 : index
    %c2304_387 = arith.constant 2304 : index
    %984 = vector.load %arg11[%c16_386, %c2304_387] : memref<32x2560xf32, #tpu.memory_space<vmem>>, vector<8x128xf32>
    tpu.vector_store %arg11[%c16_386, %c2304_387], %983 {strides = array<i32>} : memref<32x2560xf32, #tpu.memory_space<vmem>>, vector<8x128xf32>,
    %c184 = arith.constant 184 : index
    %c0_388 = arith.constant 0 : index
    %985 = vector.load %arg10[%c184, %c0_388] : memref<208x128xf32, #tpu.memory_space<vmem>>, vector<8x128xf32>
    %c16_389 = arith.constant 16 : index
    %c2432_390 = arith.constant 2432 : index
    %986 = vector.load %arg11[%c16_389, %c2432_390] : memref<32x2560xf32, #tpu.memory_space<vmem>>, vector<8x128xf32>
    tpu.vector_store %arg11[%c16_389, %c2432_390], %985 {strides = array<i32>} : memref<32x2560xf32, #tpu.memory_space<vmem>>, vector<8x128xf32>,
    %c48_391 = arith.constant 48 : index
    %c0_392 = arith.constant 0 : index
    %987 = vector.load %arg10[%c48_391, %c0_392] : memref<208x128xf32, #tpu.memory_space<vmem>>, vector<8x128xf32>
    %c24_393 = arith.constant 24 : index
    %c0_394 = arith.constant 0 : index
    %988 = vector.load %arg11[%c24_393, %c0_394] : memref<32x2560xf32, #tpu.memory_space<vmem>>, vector<8x128xf32>
    tpu.vector_store %arg11[%c24_393, %c0_394], %987 {strides = array<i32>} : memref<32x2560xf32, #tpu.memory_space<vmem>>, vector<8x128xf32>,
    %c56_395 = arith.constant 56 : index
    %c0_396 = arith.constant 0 : index
    %989 = vector.load %arg10[%c56_395, %c0_396] : memref<208x128xf32, #tpu.memory_space<vmem>>, vector<8x128xf32>
    %c24_397 = arith.constant 24 : index
    %c128_398 = arith.constant 128 : index
    %990 = vector.load %arg11[%c24_397, %c128_398] : memref<32x2560xf32, #tpu.memory_space<vmem>>, vector<8x128xf32>
    tpu.vector_store %arg11[%c24_397, %c128_398], %989 {strides = array<i32>} : memref<32x2560xf32, #tpu.memory_space<vmem>>, vector<8x128xf32>,
    %c64_399 = arith.constant 64 : index
    %c0_400 = arith.constant 0 : index
    %991 = vector.load %arg10[%c64_399, %c0_400] : memref<208x128xf32, #tpu.memory_space<vmem>>, vector<8x128xf32>
    %c24_401 = arith.constant 24 : index
    %c256_402 = arith.constant 256 : index
    %992 = vector.load %arg11[%c24_401, %c256_402] : memref<32x2560xf32, #tpu.memory_space<vmem>>, vector<8x128xf32>
    tpu.vector_store %arg11[%c24_401, %c256_402], %991 {strides = array<i32>} : memref<32x2560xf32, #tpu.memory_space<vmem>>, vector<8x128xf32>,
    %c72_403 = arith.constant 72 : index
    %c0_404 = arith.constant 0 : index
    %993 = vector.load %arg10[%c72_403, %c0_404] : memref<208x128xf32, #tpu.memory_space<vmem>>, vector<8x128xf32>
    %c24_405 = arith.constant 24 : index
    %c384_406 = arith.constant 384 : index
    %994 = vector.load %arg11[%c24_405, %c384_406] : memref<32x2560xf32, #tpu.memory_space<vmem>>, vector<8x128xf32>
    tpu.vector_store %arg11[%c24_405, %c384_406], %993 {strides = array<i32>} : memref<32x2560xf32, #tpu.memory_space<vmem>>, vector<8x128xf32>,
    %c80_407 = arith.constant 80 : index
    %c0_408 = arith.constant 0 : index
    %995 = vector.load %arg10[%c80_407, %c0_408] : memref<208x128xf32, #tpu.memory_space<vmem>>, vector<8x128xf32>
    %c24_409 = arith.constant 24 : index
    %c512_410 = arith.constant 512 : index
    %996 = vector.load %arg11[%c24_409, %c512_410] : memref<32x2560xf32, #tpu.memory_space<vmem>>, vector<8x128xf32>
    tpu.vector_store %arg11[%c24_409, %c512_410], %995 {strides = array<i32>} : memref<32x2560xf32, #tpu.memory_space<vmem>>, vector<8x128xf32>,
    %c88_411 = arith.constant 88 : index
    %c0_412 = arith.constant 0 : index
    %997 = vector.load %arg10[%c88_411, %c0_412] : memref<208x128xf32, #tpu.memory_space<vmem>>, vector<8x128xf32>
    %c24_413 = arith.constant 24 : index
    %c640_414 = arith.constant 640 : index
    %998 = vector.load %arg11[%c24_413, %c640_414] : memref<32x2560xf32, #tpu.memory_space<vmem>>, vector<8x128xf32>
    tpu.vector_store %arg11[%c24_413, %c640_414], %997 {strides = array<i32>} : memref<32x2560xf32, #tpu.memory_space<vmem>>, vector<8x128xf32>,
    %c96_415 = arith.constant 96 : index
    %c0_416 = arith.constant 0 : index
    %999 = vector.load %arg10[%c96_415, %c0_416] : memref<208x128xf32, #tpu.memory_space<vmem>>, vector<8x128xf32>
    %c24_417 = arith.constant 24 : index
    %c768_418 = arith.constant 768 : index
    %1000 = vector.load %arg11[%c24_417, %c768_418] : memref<32x2560xf32, #tpu.memory_space<vmem>>, vector<8x128xf32>
    tpu.vector_store %arg11[%c24_417, %c768_418], %999 {strides = array<i32>} : memref<32x2560xf32, #tpu.memory_space<vmem>>, vector<8x128xf32>,
    %c104_419 = arith.constant 104 : index
    %c0_420 = arith.constant 0 : index
    %1001 = vector.load %arg10[%c104_419, %c0_420] : memref<208x128xf32, #tpu.memory_space<vmem>>, vector<8x128xf32>
    %c24_421 = arith.constant 24 : index
    %c896_422 = arith.constant 896 : index
    %1002 = vector.load %arg11[%c24_421, %c896_422] : memref<32x2560xf32, #tpu.memory_space<vmem>>, vector<8x128xf32>
    tpu.vector_store %arg11[%c24_421, %c896_422], %1001 {strides = array<i32>} : memref<32x2560xf32, #tpu.memory_space<vmem>>, vector<8x128xf32>,
    %c112_423 = arith.constant 112 : index
    %c0_424 = arith.constant 0 : index
    %1003 = vector.load %arg10[%c112_423, %c0_424] : memref<208x128xf32, #tpu.memory_space<vmem>>, vector<8x128xf32>
    %c24_425 = arith.constant 24 : index
    %c1024_426 = arith.constant 1024 : index
    %1004 = vector.load %arg11[%c24_425, %c1024_426] : memref<32x2560xf32, #tpu.memory_space<vmem>>, vector<8x128xf32>
    tpu.vector_store %arg11[%c24_425, %c1024_426], %1003 {strides = array<i32>} : memref<32x2560xf32, #tpu.memory_space<vmem>>, vector<8x128xf32>,
    %c120_427 = arith.constant 120 : index
    %c0_428 = arith.constant 0 : index
    %1005 = vector.load %arg10[%c120_427, %c0_428] : memref<208x128xf32, #tpu.memory_space<vmem>>, vector<8x128xf32>
    %c24_429 = arith.constant 24 : index
    %c1152_430 = arith.constant 1152 : index
    %1006 = vector.load %arg11[%c24_429, %c1152_430] : memref<32x2560xf32, #tpu.memory_space<vmem>>, vector<8x128xf32>
    tpu.vector_store %arg11[%c24_429, %c1152_430], %1005 {strides = array<i32>} : memref<32x2560xf32, #tpu.memory_space<vmem>>, vector<8x128xf32>,
    %c128_431 = arith.constant 128 : index
    %c0_432 = arith.constant 0 : index
    %1007 = vector.load %arg10[%c128_431, %c0_432] : memref<208x128xf32, #tpu.memory_space<vmem>>, vector<8x128xf32>
    %c24_433 = arith.constant 24 : index
    %c1280_434 = arith.constant 1280 : index
    %1008 = vector.load %arg11[%c24_433, %c1280_434] : memref<32x2560xf32, #tpu.memory_space<vmem>>, vector<8x128xf32>
    tpu.vector_store %arg11[%c24_433, %c1280_434], %1007 {strides = array<i32>} : memref<32x2560xf32, #tpu.memory_space<vmem>>, vector<8x128xf32>,
    %c136_435 = arith.constant 136 : index
    %c0_436 = arith.constant 0 : index
    %1009 = vector.load %arg10[%c136_435, %c0_436] : memref<208x128xf32, #tpu.memory_space<vmem>>, vector<8x128xf32>
    %c24_437 = arith.constant 24 : index
    %c1408_438 = arith.constant 1408 : index
    %1010 = vector.load %arg11[%c24_437, %c1408_438] : memref<32x2560xf32, #tpu.memory_space<vmem>>, vector<8x128xf32>
    tpu.vector_store %arg11[%c24_437, %c1408_438], %1009 {strides = array<i32>} : memref<32x2560xf32, #tpu.memory_space<vmem>>, vector<8x128xf32>,
    %c144_439 = arith.constant 144 : index
    %c0_440 = arith.constant 0 : index
    %1011 = vector.load %arg10[%c144_439, %c0_440] : memref<208x128xf32, #tpu.memory_space<vmem>>, vector<8x128xf32>
    %c24_441 = arith.constant 24 : index
    %c1536_442 = arith.constant 1536 : index
    %1012 = vector.load %arg11[%c24_441, %c1536_442] : memref<32x2560xf32, #tpu.memory_space<vmem>>, vector<8x128xf32>
    tpu.vector_store %arg11[%c24_441, %c1536_442], %1011 {strides = array<i32>} : memref<32x2560xf32, #tpu.memory_space<vmem>>, vector<8x128xf32>,
    %c152_443 = arith.constant 152 : index
    %c0_444 = arith.constant 0 : index
    %1013 = vector.load %arg10[%c152_443, %c0_444] : memref<208x128xf32, #tpu.memory_space<vmem>>, vector<8x128xf32>
    %c24_445 = arith.constant 24 : index
    %c1664_446 = arith.constant 1664 : index
    %1014 = vector.load %arg11[%c24_445, %c1664_446] : memref<32x2560xf32, #tpu.memory_space<vmem>>, vector<8x128xf32>
    tpu.vector_store %arg11[%c24_445, %c1664_446], %1013 {strides = array<i32>} : memref<32x2560xf32, #tpu.memory_space<vmem>>, vector<8x128xf32>,
    %c160_447 = arith.constant 160 : index
    %c0_448 = arith.constant 0 : index
    %1015 = vector.load %arg10[%c160_447, %c0_448] : memref<208x128xf32, #tpu.memory_space<vmem>>, vector<8x128xf32>
    %c24_449 = arith.constant 24 : index
    %c1792_450 = arith.constant 1792 : index
    %1016 = vector.load %arg11[%c24_449, %c1792_450] : memref<32x2560xf32, #tpu.memory_space<vmem>>, vector<8x128xf32>
    tpu.vector_store %arg11[%c24_449, %c1792_450], %1015 {strides = array<i32>} : memref<32x2560xf32, #tpu.memory_space<vmem>>, vector<8x128xf32>,
    %c168_451 = arith.constant 168 : index
    %c0_452 = arith.constant 0 : index
    %1017 = vector.load %arg10[%c168_451, %c0_452] : memref<208x128xf32, #tpu.memory_space<vmem>>, vector<8x128xf32>
    %c24_453 = arith.constant 24 : index
    %c1920_454 = arith.constant 1920 : index
    %1018 = vector.load %arg11[%c24_453, %c1920_454] : memref<32x2560xf32, #tpu.memory_space<vmem>>, vector<8x128xf32>
    tpu.vector_store %arg11[%c24_453, %c1920_454], %1017 {strides = array<i32>} : memref<32x2560xf32, #tpu.memory_space<vmem>>, vector<8x128xf32>,
    %c176_455 = arith.constant 176 : index
    %c0_456 = arith.constant 0 : index
    %1019 = vector.load %arg10[%c176_455, %c0_456] : memref<208x128xf32, #tpu.memory_space<vmem>>, vector<8x128xf32>
    %c24_457 = arith.constant 24 : index
    %c2048_458 = arith.constant 2048 : index
    %1020 = vector.load %arg11[%c24_457, %c2048_458] : memref<32x2560xf32, #tpu.memory_space<vmem>>, vector<8x128xf32>
    tpu.vector_store %arg11[%c24_457, %c2048_458], %1019 {strides = array<i32>} : memref<32x2560xf32, #tpu.memory_space<vmem>>, vector<8x128xf32>,
    %c184_459 = arith.constant 184 : index
    %c0_460 = arith.constant 0 : index
    %1021 = vector.load %arg10[%c184_459, %c0_460] : memref<208x128xf32, #tpu.memory_space<vmem>>, vector<8x128xf32>
    %c24_461 = arith.constant 24 : index
    %c2176_462 = arith.constant 2176 : index
    %1022 = vector.load %arg11[%c24_461, %c2176_462] : memref<32x2560xf32, #tpu.memory_space<vmem>>, vector<8x128xf32>
    tpu.vector_store %arg11[%c24_461, %c2176_462], %1021 {strides = array<i32>} : memref<32x2560xf32, #tpu.memory_space<vmem>>, vector<8x128xf32>,
    %c192 = arith.constant 192 : index
    %c0_463 = arith.constant 0 : index
    %1023 = vector.load %arg10[%c192, %c0_463] : memref<208x128xf32, #tpu.memory_space<vmem>>, vector<8x128xf32>
    %c24_464 = arith.constant 24 : index
    %c2304_465 = arith.constant 2304 : index
    %1024 = vector.load %arg11[%c24_464, %c2304_465] : memref<32x2560xf32, #tpu.memory_space<vmem>>, vector<8x128xf32>
    tpu.vector_store %arg11[%c24_464, %c2304_465], %1023 {strides = array<i32>} : memref<32x2560xf32, #tpu.memory_space<vmem>>, vector<8x128xf32>,
    %c200 = arith.constant 200 : index
    %c0_466 = arith.constant 0 : index
    %1025 = vector.load %arg10[%c200, %c0_466] : memref<208x128xf32, #tpu.memory_space<vmem>>, vector<8x128xf32>
    %c24_467 = arith.constant 24 : index
    %c2432_468 = arith.constant 2432 : index
    %1026 = vector.load %arg11[%c24_467, %c2432_468] : memref<32x2560xf32, #tpu.memory_space<vmem>>, vector<8x128xf32>
    tpu.vector_store %arg11[%c24_467, %c2432_468], %1025 {strides = array<i32>} : memref<32x2560xf32, #tpu.memory_space<vmem>>, vector<8x128xf32>,
    %c0_469 = arith.constant 0 : index
    %c0_470 = arith.constant 0 : index
    %1027 = vector.load %arg11[%c0_469, %c0_470] : memref<32x2560xf32, #tpu.memory_space<vmem>>, vector<32x2560xf32>
    %c0_471 = arith.constant 0 : index
    %c0_472 = arith.constant 0 : index
    %1028 = vector.load %arg4[%c0_471, %c0_472] : memref<2560x50xf32, #tpu.memory_space<vmem>>, vector<2560x50xf32>
    %cst_473 = arith.constant dense<0.000000e+00> : vector<32x50xf32>
    %1029 = tpu.matmul %1027, %1028, %cst_473 {dimension_numbers = #tpu.dot_dimension_numbers<[1], [0], [0], [1], [0, 0, 1, 1], [], []>} : vector<32x2560xf32>, vector<2560x50xf32>, vector<32x50xf32> -> vector<32x50xf32>
    %c0_474 = arith.constant 0 : index
    %c0_475 = arith.constant 0 : index
    %1030 = vector.load %arg5[%c0_474, %c0_475] : memref<1x50xf32, #tpu.memory_space<vmem>>, vector<1x50xf32>
    %1031 = vector.broadcast %1030 : vector<1x50xf32> to vector<32x50xf32>
    %1032 = arith.addf %1029, %1031 : vector<32x50xf32>
    %c0_476 = arith.constant 0 : index
    %c0_477 = arith.constant 0 : index
    %1033 = vector.load %arg6[%c0_476, %c0_477] : memref<50x4xf32, #tpu.memory_space<vmem>>, vector<50x4xf32>
    %cst_478 = arith.constant dense<0.000000e+00> : vector<32x4xf32>
    %1034 = tpu.matmul %1032, %1033, %cst_478 {dimension_numbers = #tpu.dot_dimension_numbers<[1], [0], [0], [1], [0, 0, 1, 1], [], []>} : vector<32x50xf32>, vector<50x4xf32>, vector<32x4xf32> -> vector<32x4xf32>
    %c0_479 = arith.constant 0 : index
    %c0_480 = arith.constant 0 : index
    %1035 = vector.load %arg7[%c0_479, %c0_480] : memref<1x4xf32, #tpu.memory_space<vmem>>, vector<1x4xf32>
    %1036 = vector.broadcast %1035 : vector<1x4xf32> to vector<32x4xf32>
    %1037 = arith.addf %1034, %1036 : vector<32x4xf32>
    %1038 = arith.negf %1037 : vector<32x4xf32>
    %1039 = math.exp %1038 : vector<32x4xf32>
    %cst_481 = arith.constant 1.000000e+00 : f32
    %1040 = vector.broadcast %cst_481 : f32 to vector<32x4xf32>
    %1041 = arith.addf %1040, %1039 : vector<32x4xf32>
    %1042 = arith.divf %1040, %1041 : vector<32x4xf32>
    %c0_482 = arith.constant 0 : index
    %c0_483 = arith.constant 0 : index
    %1043 = vector.load %arg8[%c0_482, %c0_483] : memref<32x4xf32, #tpu.memory_space<vmem>>, vector<32x4xf32>
    tpu.vector_store %arg8[%c0_482, %c0_483], %1042 {strides = array<i32>} : memref<32x4xf32, #tpu.memory_space<vmem>>, vector<32x4xf32>,
    return
  }
}

</mosaic_0001>

<llo_original>
// kernel: bert_lstm_model.1
$region0: #{bert_lstm_model.1}
  #allocation0 [shape = 'u32[]', space=smem, size = 0x4, offset = 0x4, fixed_abs, tag = 'smem constant byte address 0x4 - core index']
  #allocation1 [shape = 'u32[72,128]{1,0:T(1,128)}', space=vmem, size = 0x9000, scoped, tag = 'internal scratch']
  #allocation2 [shape = 'f32[208,512]{1,0:T(8,128)}', space=vmem, size = 0x68000, scoped, tag = 'scratch operand']
  #allocation3 [shape = 'f32[208,128]{1,0:T(8,128)}', space=vmem, size = 0x1a000, scoped, tag = 'scratch operand']
  #allocation4 [shape = 'f32[32,2560]{1,0:T(8,128)}', space=vmem, size = 0x50000, scoped, tag = 'scratch operand']
  %s0 = inlined_call_operand.vmem [shape: f32[208,768], index: 0, kind: input, shape index: {}]
  %s1 = inlined_call_operand.vmem [shape: f32[768,512], index: 1, kind: input, shape index: {}]
  %s2 = inlined_call_operand.vmem [shape: f32[128,512], index: 2, kind: input, shape index: {}]
  %s3 = inlined_call_operand.vmem [shape: f32[1,512], index: 3, kind: input, shape index: {}]
  %s4 = inlined_call_operand.vmem [shape: f32[2560,50], index: 4, kind: input, shape index: {}]
  %s5 = inlined_call_operand.vmem [shape: f32[1,50], index: 5, kind: input, shape index: {}]
  %s6 = inlined_call_operand.vmem [shape: f32[50,4], index: 6, kind: input, shape index: {}]
  %s7 = inlined_call_operand.vmem [shape: f32[1,4], index: 7, kind: input, shape index: {}]
  %s8 = inlined_call_operand.vmem [shape: f32[32,4], index: 8, kind: output, shape index: {}]
  %s9 = sld [smem:[#allocation0]]
  $region42: #{bert_lstm_model.1} parent=0
    _
  %s11 = ssub.s32 1, %s9
  %s12 = scalar_select 0, %s11, %s9
  // Predicated region
  $region2: #{bert_lstm_model.1} parent=0 // pred_check
    _
  $region3: #{bert_lstm_model.1} parent=0 // pred_check_branch
    %14 = sbr.rel (0) target = $region5
  $region4: #{bert_lstm_model.1} parent=0 // pred_region
    _
  $region5: #{bert_lstm_model.1} parent=0 // pred_fallthru
    _
  // Predicated region
  $region6: #{bert_lstm_model.1} parent=0 // pred_check
    _
  $region7: #{bert_lstm_model.1} parent=0 // pred_check_branch
    %16 = sbr.rel (0) target = $region9
  $region8: #{bert_lstm_model.1} parent=0 // pred_region
    _
  $region9: #{bert_lstm_model.1} parent=0 // pred_fallthru
    _
  // Predicated region
  $region10: #{bert_lstm_model.1} parent=0 // pred_check
    _
  $region11: #{bert_lstm_model.1} parent=0 // pred_check_branch
    %18 = sbr.rel (0) target = $region13
  $region12: #{bert_lstm_model.1} parent=0 // pred_region
    _
  $region13: #{bert_lstm_model.1} parent=0 // pred_fallthru
    _
  // Predicated region
  $region14: #{bert_lstm_model.1} parent=0 // pred_check
    _
  $region15: #{bert_lstm_model.1} parent=0 // pred_check_branch
    %20 = sbr.rel (0) target = $region17
  $region16: #{bert_lstm_model.1} parent=0 // pred_region
    _
  $region17: #{bert_lstm_model.1} parent=0 // pred_fallthru
    _
  // Predicated region
  $region18: #{bert_lstm_model.1} parent=0 // pred_check
    _
  $region19: #{bert_lstm_model.1} parent=0 // pred_check_branch
    %22 = sbr.rel (0) target = $region21
  $region20: #{bert_lstm_model.1} parent=0 // pred_region
    _
  $region21: #{bert_lstm_model.1} parent=0 // pred_fallthru
    _
  // Predicated region
  $region22: #{bert_lstm_model.1} parent=0 // pred_check
    _
  $region23: #{bert_lstm_model.1} parent=0 // pred_check_branch
    %24 = sbr.rel (0) target = $region25
  $region24: #{bert_lstm_model.1} parent=0 // pred_region
    _
  $region25: #{bert_lstm_model.1} parent=0 // pred_fallthru
    _
  // Predicated region
  $region26: #{bert_lstm_model.1} parent=0 // pred_check
    _
  $region27: #{bert_lstm_model.1} parent=0 // pred_check_branch
    %26 = sbr.rel (0) target = $region29
  $region28: #{bert_lstm_model.1} parent=0 // pred_region
    _
  $region29: #{bert_lstm_model.1} parent=0 // pred_fallthru
    _
  // Predicated region
  $region30: #{bert_lstm_model.1} parent=0 // pred_check
    _
  $region31: #{bert_lstm_model.1} parent=0 // pred_check_branch
    %28 = sbr.rel (0) target = $region33
  $region32: #{bert_lstm_model.1} parent=0 // pred_region
    _
  $region33: #{bert_lstm_model.1} parent=0 // pred_fallthru
    _
  %v29 = vld [vmem:[%s0] sm:$0xff]
  %v30 = vld [vmem:[%s0 + $0x8] sm:$0xff]
  %v31 = vld [vmem:[%s0 + $0x10] sm:$0xff]
  %v32 = vld [vmem:[%s0 + $0x18] sm:$0xff]
  %v33 = vld [vmem:[%s0 + $0x20] sm:$0xff]
  %v34 = vld [vmem:[%s0 + $0x28] sm:$0xff]
  %v35 = vld [vmem:[%s0 + $0x30] sm:$0xff]
  %v36 = vld [vmem:[%s0 + $0x38] sm:$0xff]
  %v37 = vld [vmem:[%s0 + $0x40] sm:$0xff]
  %v38 = vld [vmem:[%s0 + $0x48] sm:$0xff]
  %v39 = vld [vmem:[%s0 + $0x50] sm:$0xff]
  %v40 = vld [vmem:[%s0 + $0x58] sm:$0xff]
  %v41 = vld [vmem:[%s0 + $0x60] sm:$0xff]
  %v42 = vld [vmem:[%s0 + $0x68] sm:$0xff]
  %v43 = vld [vmem:[%s0 + $0x70] sm:$0xff]
  %v44 = vld [vmem:[%s0 + $0x78] sm:$0xff]
  %v45 = vld [vmem:[%s0 + $0x80] sm:$0xff]
  %v46 = vld [vmem:[%s0 + $0x88] sm:$0xff]
  %v47 = vld [vmem:[%s0 + $0x90] sm:$0xff]
  %v48 = vld [vmem:[%s0 + $0x98] sm:$0xff]
  %v49 = vld [vmem:[%s0 + $0xa0] sm:$0xff]
  %v50 = vld [vmem:[%s0 + $0xa8] sm:$0xff]
  %v51 = vld [vmem:[%s0 + $0xb0] sm:$0xff]
  %v52 = vld [vmem:[%s0 + $0xb8] sm:$0xff]
  %v53 = vld [vmem:[%s0 + $0xc0] sm:$0xff]
  %v54 = vld [vmem:[%s0 + $0xc8] sm:$0xff]
  %v55 = vld [vmem:[%s0 + $0xd0] sm:$0xff]
  %v56 = vld [vmem:[%s0 + $0xd8] sm:$0xff]
  %v57 = vld [vmem:[%s0 + $0xe0] sm:$0xff]
  %v58 = vld [vmem:[%s0 + $0xe8] sm:$0xff]
  %v59 = vld [vmem:[%s0 + $0xf0] sm:$0xff]
  %v60 = vld [vmem:[%s0 + $0xf8] sm:$0xff]
  %v61 = vld [vmem:[%s0 + $0x100] sm:$0xff]
  %v62 = vld [vmem:[%s0 + $0x108] sm:$0xff]
  %v63 = vld [vmem:[%s0 + $0x110] sm:$0xff]
  %v64 = vld [vmem:[%s0 + $0x118] sm:$0xff]
  %v65 = vld [vmem:[%s0 + $0x120] sm:$0xff]
  %v66 = vld [vmem:[%s0 + $0x128] sm:$0xff]
  %v67 = vld [vmem:[%s0 + $0x130] sm:$0xff]
  %v68 = vld [vmem:[%s0 + $0x138] sm:$0xff]
  %v69 = vld [vmem:[%s0 + $0x140] sm:$0xff]
  %v70 = vld [vmem:[%s0 + $0x148] sm:$0xff]
  %v71 = vld [vmem:[%s0 + $0x150] sm:$0xff]
  %v72 = vld [vmem:[%s0 + $0x158] sm:$0xff]
  %v73 = vld [vmem:[%s0 + $0x160] sm:$0xff]
  %v74 = vld [vmem:[%s0 + $0x168] sm:$0xff]
  %v75 = vld [vmem:[%s0 + $0x170] sm:$0xff]
  %v76 = vld [vmem:[%s0 + $0x178] sm:$0xff]
  %v77 = vld [vmem:[%s0 + $0x180] sm:$0xff]
  %v78 = vld [vmem:[%s0 + $0x188] sm:$0xff]
  %v79 = vld [vmem:[%s0 + $0x190] sm:$0xff]
  %v80 = vld [vmem:[%s0 + $0x198] sm:$0xff]
  %v81 = vld [vmem:[%s0 + $0x1a0] sm:$0xff]
  %v82 = vld [vmem:[%s0 + $0x1a8] sm:$0xff]
  %v83 = vld [vmem:[%s0 + $0x1b0] sm:$0xff]
  %v84 = vld [vmem:[%s0 + $0x1b8] sm:$0xff]
  %v85 = vld [vmem:[%s0 + $0x1c0] sm:$0xff]
  %v86 = vld [vmem:[%s0 + $0x1c8] sm:$0xff]
  %v87 = vld [vmem:[%s0 + $0x1d0] sm:$0xff]
  %v88 = vld [vmem:[%s0 + $0x1d8] sm:$0xff]
  %v89 = vld [vmem:[%s0 + $0x1e0] sm:$0xff]
  %v90 = vld [vmem:[%s0 + $0x1e8] sm:$0xff]
  %v91 = vld [vmem:[%s0 + $0x1f0] sm:$0xff]
  %v92 = vld [vmem:[%s0 + $0x1f8] sm:$0xff]
  %v93 = vld [vmem:[%s0 + $0x200] sm:$0xff]
  %v94 = vld [vmem:[%s0 + $0x208] sm:$0xff]
  %v95 = vld [vmem:[%s0 + $0x210] sm:$0xff]
  %v96 = vld [vmem:[%s0 + $0x218] sm:$0xff]
  %v97 = vld [vmem:[%s0 + $0x220] sm:$0xff]
  %v98 = vld [vmem:[%s0 + $0x228] sm:$0xff]
  %v99 = vld [vmem:[%s0 + $0x230] sm:$0xff]
  %v100 = vld [vmem:[%s0 + $0x238] sm:$0xff]
  %v101 = vld [vmem:[%s0 + $0x240] sm:$0xff]
  %v102 = vld [vmem:[%s0 + $0x248] sm:$0xff]
  %v103 = vld [vmem:[%s0 + $0x250] sm:$0xff]
  %v104 = vld [vmem:[%s0 + $0x258] sm:$0xff]
  %v105 = vld [vmem:[%s0 + $0x260] sm:$0xff]
  %v106 = vld [vmem:[%s0 + $0x268] sm:$0xff]
  %v107 = vld [vmem:[%s0 + $0x270] sm:$0xff]
  %v108 = vld [vmem:[%s0 + $0x278] sm:$0xff]
  %v109 = vld [vmem:[%s0 + $0x280] sm:$0xff]
  %v110 = vld [vmem:[%s0 + $0x288] sm:$0xff]
  %v111 = vld [vmem:[%s0 + $0x290] sm:$0xff]
  %v112 = vld [vmem:[%s0 + $0x298] sm:$0xff]
  %v113 = vld [vmem:[%s0 + $0x2a0] sm:$0xff]
  %v114 = vld [vmem:[%s0 + $0x2a8] sm:$0xff]
  %v115 = vld [vmem:[%s0 + $0x2b0] sm:$0xff]
  %v116 = vld [vmem:[%s0 + $0x2b8] sm:$0xff]
  %v117 = vld [vmem:[%s0 + $0x2c0] sm:$0xff]
  %v118 = vld [vmem:[%s0 + $0x2c8] sm:$0xff]
  %v119 = vld [vmem:[%s0 + $0x2d0] sm:$0xff]
  %v120 = vld [vmem:[%s0 + $0x2d8] sm:$0xff]
  %v121 = vld [vmem:[%s0 + $0x2e0] sm:$0xff]
  %v122 = vld [vmem:[%s0 + $0x2e8] sm:$0xff]
  %v123 = vld [vmem:[%s0 + $0x2f0] sm:$0xff]
  %v124 = vld [vmem:[%s0 + $0x2f8] sm:$0xff]
  %v125 = vld [vmem:[%s0 + $0x300] sm:$0xff]
  %v126 = vld [vmem:[%s0 + $0x308] sm:$0xff]
  %v127 = vld [vmem:[%s0 + $0x310] sm:$0xff]
  %v128 = vld [vmem:[%s0 + $0x318] sm:$0xff]
  %v129 = vld [vmem:[%s0 + $0x320] sm:$0xff]
  %v130 = vld [vmem:[%s0 + $0x328] sm:$0xff]
  %v131 = vld [vmem:[%s0 + $0x330] sm:$0xff]
  %v132 = vld [vmem:[%s0 + $0x338] sm:$0xff]
  %v133 = vld [vmem:[%s0 + $0x340] sm:$0xff]
  %v134 = vld [vmem:[%s0 + $0x348] sm:$0xff]
  %v135 = vld [vmem:[%s0 + $0x350] sm:$0xff]
  %v136 = vld [vmem:[%s0 + $0x358] sm:$0xff]
  %v137 = vld [vmem:[%s0 + $0x360] sm:$0xff]
  %v138 = vld [vmem:[%s0 + $0x368] sm:$0xff]
  %v139 = vld [vmem:[%s0 + $0x370] sm:$0xff]
  %v140 = vld [vmem:[%s0 + $0x378] sm:$0xff]
  %v141 = vld [vmem:[%s0 + $0x380] sm:$0xff]
  %v142 = vld [vmem:[%s0 + $0x388] sm:$0xff]
  %v143 = vld [vmem:[%s0 + $0x390] sm:$0xff]
  %v144 = vld [vmem:[%s0 + $0x398] sm:$0xff]
  %v145 = vld [vmem:[%s0 + $0x3a0] sm:$0xff]
  %v146 = vld [vmem:[%s0 + $0x3a8] sm:$0xff]
  %v147 = vld [vmem:[%s0 + $0x3b0] sm:$0xff]
  %v148 = vld [vmem:[%s0 + $0x3b8] sm:$0xff]
  %v149 = vld [vmem:[%s0 + $0x3c0] sm:$0xff]
  %v150 = vld [vmem:[%s0 + $0x3c8] sm:$0xff]
  %v151 = vld [vmem:[%s0 + $0x3d0] sm:$0xff]
  %v152 = vld [vmem:[%s0 + $0x3d8] sm:$0xff]
  %v153 = vld [vmem:[%s0 + $0x3e0] sm:$0xff]
  %v154 = vld [vmem:[%s0 + $0x3e8] sm:$0xff]
  %v155 = vld [vmem:[%s0 + $0x3f0] sm:$0xff]
  %v156 = vld [vmem:[%s0 + $0x3f8] sm:$0xff]
  %v157 = vld [vmem:[%s0 + $0x400] sm:$0xff]
  %v158 = vld [vmem:[%s0 + $0x408] sm:$0xff]
  %v159 = vld [vmem:[%s0 + $0x410] sm:$0xff]
  %v160 = vld [vmem:[%s0 + $0x418] sm:$0xff]
  %v161 = vld [vmem:[%s0 + $0x420] sm:$0xff]
  %v162 = vld [vmem:[%s0 + $0x428] sm:$0xff]
  %v163 = vld [vmem:[%s0 + $0x430] sm:$0xff]
  %v164 = vld [vmem:[%s0 + $0x438] sm:$0xff]
  %v165 = vld [vmem:[%s0 + $0x440] sm:$0xff]
  %v166 = vld [vmem:[%s0 + $0x448] sm:$0xff]
  %v167 = vld [vmem:[%s0 + $0x450] sm:$0xff]
  %v168 = vld [vmem:[%s0 + $0x458] sm:$0xff]
  %v169 = vld [vmem:[%s0 + $0x460] sm:$0xff]
  %v170 = vld [vmem:[%s0 + $0x468] sm:$0xff]
  %v171 = vld [vmem:[%s0 + $0x470] sm:$0xff]
  %v172 = vld [vmem:[%s0 + $0x478] sm:$0xff]
  %v173 = vld [vmem:[%s0 + $0x480] sm:$0xff]
  %v174 = vld [vmem:[%s0 + $0x488] sm:$0xff]
  %v175 = vld [vmem:[%s0 + $0x490] sm:$0xff]
  %v176 = vld [vmem:[%s0 + $0x498] sm:$0xff]
  %v177 = vld [vmem:[%s0 + $0x4a0] sm:$0xff]
  %v178 = vld [vmem:[%s0 + $0x4a8] sm:$0xff]
  %v179 = vld [vmem:[%s0 + $0x4b0] sm:$0xff]
  %v180 = vld [vmem:[%s0 + $0x4b8] sm:$0xff]
  %v181 = vld [vmem:[%s0 + $0x4c0] sm:$0xff]
  %v182 = vld [vmem:[%s0 + $0x4c8] sm:$0xff]
  %v183 = vld [vmem:[%s0 + $0x4d0] sm:$0xff]
  %v184 = vld [vmem:[%s0 + $0x4d8] sm:$0xff]
  %v185 = vld [vmem:[%s1] sm:$0xff]
  %v186 = vld [vmem:[%s1 + $0x8] sm:$0xff]
  %v187 = vld [vmem:[%s1 + $0x10] sm:$0xff]
  %v188 = vld [vmem:[%s1 + $0x18] sm:$0xff]
  %v189 = vld [vmem:[%s1 + $0x20] sm:$0xff]
  %v190 = vld [vmem:[%s1 + $0x28] sm:$0xff]
  %v191 = vld [vmem:[%s1 + $0x30] sm:$0xff]
  %v192 = vld [vmem:[%s1 + $0x38] sm:$0xff]
  %v193 = vld [vmem:[%s1 + $0x40] sm:$0xff]
  %v194 = vld [vmem:[%s1 + $0x48] sm:$0xff]
  %v195 = vld [vmem:[%s1 + $0x50] sm:$0xff]
  %v196 = vld [vmem:[%s1 + $0x58] sm:$0xff]
  %v197 = vld [vmem:[%s1 + $0x60] sm:$0xff]
  %v198 = vld [vmem:[%s1 + $0x68] sm:$0xff]
  %v199 = vld [vmem:[%s1 + $0x70] sm:$0xff]
  %v200 = vld [vmem:[%s1 + $0x78] sm:$0xff]
  %v201 = vld [vmem:[%s1 + $0x80] sm:$0xff]
  %v202 = vld [vmem:[%s1 + $0x88] sm:$0xff]
  %v203 = vld [vmem:[%s1 + $0x90] sm:$0xff]
  %v204 = vld [vmem:[%s1 + $0x98] sm:$0xff]
  %v205 = vld [vmem:[%s1 + $0xa0] sm:$0xff]
  %v206 = vld [vmem:[%s1 + $0xa8] sm:$0xff]
  %v207 = vld [vmem:[%s1 + $0xb0] sm:$0xff]
  %v208 = vld [vmem:[%s1 + $0xb8] sm:$0xff]
  %v209 = vld [vmem:[%s1 + $0xc0] sm:$0xff]
  %v210 = vld [vmem:[%s1 + $0xc8] sm:$0xff]
  %v211 = vld [vmem:[%s1 + $0xd0] sm:$0xff]
  %v212 = vld [vmem:[%s1 + $0xd8] sm:$0xff]
  %v213 = vld [vmem:[%s1 + $0xe0] sm:$0xff]
  %v214 = vld [vmem:[%s1 + $0xe8] sm:$0xff]
  %v215 = vld [vmem:[%s1 + $0xf0] sm:$0xff]
  %v216 = vld [vmem:[%s1 + $0xf8] sm:$0xff]
  %v217 = vld [vmem:[%s1 + $0x100] sm:$0xff]
  %v218 = vld [vmem:[%s1 + $0x108] sm:$0xff]
  %v219 = vld [vmem:[%s1 + $0x110] sm:$0xff]
  %v220 = vld [vmem:[%s1 + $0x118] sm:$0xff]
  %v221 = vld [vmem:[%s1 + $0x120] sm:$0xff]
  %v222 = vld [vmem:[%s1 + $0x128] sm:$0xff]
  %v223 = vld [vmem:[%s1 + $0x130] sm:$0xff]
  %v224 = vld [vmem:[%s1 + $0x138] sm:$0xff]
  %v225 = vld [vmem:[%s1 + $0x140] sm:$0xff]
  %v226 = vld [vmem:[%s1 + $0x148] sm:$0xff]
  %v227 = vld [vmem:[%s1 + $0x150] sm:$0xff]
  %v228 = vld [vmem:[%s1 + $0x158] sm:$0xff]
  %v229 = vld [vmem:[%s1 + $0x160] sm:$0xff]
  %v230 = vld [vmem:[%s1 + $0x168] sm:$0xff]
  %v231 = vld [vmem:[%s1 + $0x170] sm:$0xff]
  %v232 = vld [vmem:[%s1 + $0x178] sm:$0xff]
  %v233 = vld [vmem:[%s1 + $0x180] sm:$0xff]
  %v234 = vld [vmem:[%s1 + $0x188] sm:$0xff]
  %v235 = vld [vmem:[%s1 + $0x190] sm:$0xff]
  %v236 = vld [vmem:[%s1 + $0x198] sm:$0xff]
  %v237 = vld [vmem:[%s1 + $0x1a0] sm:$0xff]
  %v238 = vld [vmem:[%s1 + $0x1a8] sm:$0xff]
  %v239 = vld [vmem:[%s1 + $0x1b0] sm:$0xff]
  %v240 = vld [vmem:[%s1 + $0x1b8] sm:$0xff]
  %v241 = vld [vmem:[%s1 + $0x1c0] sm:$0xff]
  %v242 = vld [vmem:[%s1 + $0x1c8] sm:$0xff]
  %v243 = vld [vmem:[%s1 + $0x1d0] sm:$0xff]
  %v244 = vld [vmem:[%s1 + $0x1d8] sm:$0xff]
  %v245 = vld [vmem:[%s1 + $0x1e0] sm:$0xff]
  %v246 = vld [vmem:[%s1 + $0x1e8] sm:$0xff]
  %v247 = vld [vmem:[%s1 + $0x1f0] sm:$0xff]
  %v248 = vld [vmem:[%s1 + $0x1f8] sm:$0xff]
  %v249 = vld [vmem:[%s1 + $0x200] sm:$0xff]
  %v250 = vld [vmem:[%s1 + $0x208] sm:$0xff]
  %v251 = vld [vmem:[%s1 + $0x210] sm:$0xff]
  %v252 = vld [vmem:[%s1 + $0x218] sm:$0xff]
  %v253 = vld [vmem:[%s1 + $0x220] sm:$0xff]
  %v254 = vld [vmem:[%s1 + $0x228] sm:$0xff]
  %v255 = vld [vmem:[%s1 + $0x230] sm:$0xff]
  %v256 = vld [vmem:[%s1 + $0x238] sm:$0xff]
  %v257 = vld [vmem:[%s1 + $0x240] sm:$0xff]
  %v258 = vld [vmem:[%s1 + $0x248] sm:$0xff]
  %v259 = vld [vmem:[%s1 + $0x250] sm:$0xff]
  %v260 = vld [vmem:[%s1 + $0x258] sm:$0xff]
  %v261 = vld [vmem:[%s1 + $0x260] sm:$0xff]
  %v262 = vld [vmem:[%s1 + $0x268] sm:$0xff]
  %v263 = vld [vmem:[%s1 + $0x270] sm:$0xff]
  %v264 = vld [vmem:[%s1 + $0x278] sm:$0xff]
  %v265 = vld [vmem:[%s1 + $0x280] sm:$0xff]
  %v266 = vld [vmem:[%s1 + $0x288] sm:$0xff]
  %v267 = vld [vmem:[%s1 + $0x290] sm:$0xff]
  %v268 = vld [vmem:[%s1 + $0x298] sm:$0xff]
  %v269 = vld [vmem:[%s1 + $0x2a0] sm:$0xff]
  %v270 = vld [vmem:[%s1 + $0x2a8] sm:$0xff]
  %v271 = vld [vmem:[%s1 + $0x2b0] sm:$0xff]
  %v272 = vld [vmem:[%s1 + $0x2b8] sm:$0xff]
  %v273 = vld [vmem:[%s1 + $0x2c0] sm:$0xff]
  %v274 = vld [vmem:[%s1 + $0x2c8] sm:$0xff]
  %v275 = vld [vmem:[%s1 + $0x2d0] sm:$0xff]
  %v276 = vld [vmem:[%s1 + $0x2d8] sm:$0xff]
  %v277 = vld [vmem:[%s1 + $0x2e0] sm:$0xff]
  %v278 = vld [vmem:[%s1 + $0x2e8] sm:$0xff]
  %v279 = vld [vmem:[%s1 + $0x2f0] sm:$0xff]
  %v280 = vld [vmem:[%s1 + $0x2f8] sm:$0xff]
  %v281 = vld [vmem:[%s1 + $0x300] sm:$0xff]
  %v282 = vld [vmem:[%s1 + $0x308] sm:$0xff]
  %v283 = vld [vmem:[%s1 + $0x310] sm:$0xff]
  %v284 = vld [vmem:[%s1 + $0x318] sm:$0xff]
  %v285 = vld [vmem:[%s1 + $0x320] sm:$0xff]
  %v286 = vld [vmem:[%s1 + $0x328] sm:$0xff]
  %v287 = vld [vmem:[%s1 + $0x330] sm:$0xff]
  %v288 = vld [vmem:[%s1 + $0x338] sm:$0xff]
  %v289 = vld [vmem:[%s1 + $0x340] sm:$0xff]
  %v290 = vld [vmem:[%s1 + $0x348] sm:$0xff]
  %v291 = vld [vmem:[%s1 + $0x350] sm:$0xff]
  %v292 = vld [vmem:[%s1 + $0x358] sm:$0xff]
  %v293 = vld [vmem:[%s1 + $0x360] sm:$0xff]
  %v294 = vld [vmem:[%s1 + $0x368] sm:$0xff]
  %v295 = vld [vmem:[%s1 + $0x370] sm:$0xff]
  %v296 = vld [vmem:[%s1 + $0x378] sm:$0xff]
  %v297 = vld [vmem:[%s1 + $0x380] sm:$0xff]
  %v298 = vld [vmem:[%s1 + $0x388] sm:$0xff]
  %v299 = vld [vmem:[%s1 + $0x390] sm:$0xff]
  %v300 = vld [vmem:[%s1 + $0x398] sm:$0xff]
  %v301 = vld [vmem:[%s1 + $0x3a0] sm:$0xff]
  %v302 = vld [vmem:[%s1 + $0x3a8] sm:$0xff]
  %v303 = vld [vmem:[%s1 + $0x3b0] sm:$0xff]
  %v304 = vld [vmem:[%s1 + $0x3b8] sm:$0xff]
  %v305 = vld [vmem:[%s1 + $0x3c0] sm:$0xff]
  %v306 = vld [vmem:[%s1 + $0x3c8] sm:$0xff]
  %v307 = vld [vmem:[%s1 + $0x3d0] sm:$0xff]
  %v308 = vld [vmem:[%s1 + $0x3d8] sm:$0xff]
  %v309 = vld [vmem:[%s1 + $0x3e0] sm:$0xff]
  %v310 = vld [vmem:[%s1 + $0x3e8] sm:$0xff]
  %v311 = vld [vmem:[%s1 + $0x3f0] sm:$0xff]
  %v312 = vld [vmem:[%s1 + $0x3f8] sm:$0xff]
  %v313 = vld [vmem:[%s1 + $0x400] sm:$0xff]
  %v314 = vld [vmem:[%s1 + $0x408] sm:$0xff]
  %v315 = vld [vmem:[%s1 + $0x410] sm:$0xff]
  %v316 = vld [vmem:[%s1 + $0x418] sm:$0xff]
  %v317 = vld [vmem:[%s1 + $0x420] sm:$0xff]
  %v318 = vld [vmem:[%s1 + $0x428] sm:$0xff]
  %v319 = vld [vmem:[%s1 + $0x430] sm:$0xff]
  %v320 = vld [vmem:[%s1 + $0x438] sm:$0xff]
  %v321 = vld [vmem:[%s1 + $0x440] sm:$0xff]
  %v322 = vld [vmem:[%s1 + $0x448] sm:$0xff]
  %v323 = vld [vmem:[%s1 + $0x450] sm:$0xff]
  %v324 = vld [vmem:[%s1 + $0x458] sm:$0xff]
  %v325 = vld [vmem:[%s1 + $0x460] sm:$0xff]
  %v326 = vld [vmem:[%s1 + $0x468] sm:$0xff]
  %v327 = vld [vmem:[%s1 + $0x470] sm:$0xff]
  %v328 = vld [vmem:[%s1 + $0x478] sm:$0xff]
  %v329 = vld [vmem:[%s1 + $0x480] sm:$0xff]
  %v330 = vld [vmem:[%s1 + $0x488] sm:$0xff]
  %v331 = vld [vmem:[%s1 + $0x490] sm:$0xff]
  %v332 = vld [vmem:[%s1 + $0x498] sm:$0xff]
  %v333 = vld [vmem:[%s1 + $0x4a0] sm:$0xff]
  %v334 = vld [vmem:[%s1 + $0x4a8] sm:$0xff]
  %v335 = vld [vmem:[%s1 + $0x4b0] sm:$0xff]
  %v336 = vld [vmem:[%s1 + $0x4b8] sm:$0xff]
  %v337 = vld [vmem:[%s1 + $0x4c0] sm:$0xff]
  %v338 = vld [vmem:[%s1 + $0x4c8] sm:$0xff]
  %v339 = vld [vmem:[%s1 + $0x4d0] sm:$0xff]
  %v340 = vld [vmem:[%s1 + $0x4d8] sm:$0xff]
  %v341 = vld [vmem:[%s1 + $0x4e0] sm:$0xff]
  %v342 = vld [vmem:[%s1 + $0x4e8] sm:$0xff]
  %v343 = vld [vmem:[%s1 + $0x4f0] sm:$0xff]
  %v344 = vld [vmem:[%s1 + $0x4f8] sm:$0xff]
  %v345 = vld [vmem:[%s1 + $0x500] sm:$0xff]
  %v346 = vld [vmem:[%s1 + $0x508] sm:$0xff]
  %v347 = vld [vmem:[%s1 + $0x510] sm:$0xff]
  %v348 = vld [vmem:[%s1 + $0x518] sm:$0xff]
  %v349 = vld [vmem:[%s1 + $0x520] sm:$0xff]
  %v350 = vld [vmem:[%s1 + $0x528] sm:$0xff]
  %v351 = vld [vmem:[%s1 + $0x530] sm:$0xff]
  %v352 = vld [vmem:[%s1 + $0x538] sm:$0xff]
  %v353 = vld [vmem:[%s1 + $0x540] sm:$0xff]
  %v354 = vld [vmem:[%s1 + $0x548] sm:$0xff]
  %v355 = vld [vmem:[%s1 + $0x550] sm:$0xff]
  %v356 = vld [vmem:[%s1 + $0x558] sm:$0xff]
  %v357 = vld [vmem:[%s1 + $0x560] sm:$0xff]
  %v358 = vld [vmem:[%s1 + $0x568] sm:$0xff]
  %v359 = vld [vmem:[%s1 + $0x570] sm:$0xff]
  %v360 = vld [vmem:[%s1 + $0x578] sm:$0xff]
  %v361 = vld [vmem:[%s1 + $0x580] sm:$0xff]
  %v362 = vld [vmem:[%s1 + $0x588] sm:$0xff]
  %v363 = vld [vmem:[%s1 + $0x590] sm:$0xff]
  %v364 = vld [vmem:[%s1 + $0x598] sm:$0xff]
  %v365 = vld [vmem:[%s1 + $0x5a0] sm:$0xff]
  %v366 = vld [vmem:[%s1 + $0x5a8] sm:$0xff]
  %v367 = vld [vmem:[%s1 + $0x5b0] sm:$0xff]
  %v368 = vld [vmem:[%s1 + $0x5b8] sm:$0xff]
  %v369 = vld [vmem:[%s1 + $0x5c0] sm:$0xff]
  %v370 = vld [vmem:[%s1 + $0x5c8] sm:$0xff]
  %v371 = vld [vmem:[%s1 + $0x5d0] sm:$0xff]
  %v372 = vld [vmem:[%s1 + $0x5d8] sm:$0xff]
  %v373 = vld [vmem:[%s1 + $0x5e0] sm:$0xff]
  %v374 = vld [vmem:[%s1 + $0x5e8] sm:$0xff]
  %v375 = vld [vmem:[%s1 + $0x5f0] sm:$0xff]
  %v376 = vld [vmem:[%s1 + $0x5f8] sm:$0xff]
  %v377 = vld [vmem:[%s1 + $0x600] sm:$0xff]
  %v378 = vld [vmem:[%s1 + $0x608] sm:$0xff]
  %v379 = vld [vmem:[%s1 + $0x610] sm:$0xff]
  %v380 = vld [vmem:[%s1 + $0x618] sm:$0xff]
  %v381 = vld [vmem:[%s1 + $0x620] sm:$0xff]
  %v382 = vld [vmem:[%s1 + $0x628] sm:$0xff]
  %v383 = vld [vmem:[%s1 + $0x630] sm:$0xff]
  %v384 = vld [vmem:[%s1 + $0x638] sm:$0xff]
  %v385 = vld [vmem:[%s1 + $0x640] sm:$0xff]
  %v386 = vld [vmem:[%s1 + $0x648] sm:$0xff]
  %v387 = vld [vmem:[%s1 + $0x650] sm:$0xff]
  %v388 = vld [vmem:[%s1 + $0x658] sm:$0xff]
  %v389 = vld [vmem:[%s1 + $0x660] sm:$0xff]
  %v390 = vld [vmem:[%s1 + $0x668] sm:$0xff]
  %v391 = vld [vmem:[%s1 + $0x670] sm:$0xff]
  %v392 = vld [vmem:[%s1 + $0x678] sm:$0xff]
  %v393 = vld [vmem:[%s1 + $0x680] sm:$0xff]
  %v394 = vld [vmem:[%s1 + $0x688] sm:$0xff]
  %v395 = vld [vmem:[%s1 + $0x690] sm:$0xff]
  %v396 = vld [vmem:[%s1 + $0x698] sm:$0xff]
  %v397 = vld [vmem:[%s1 + $0x6a0] sm:$0xff]
  %v398 = vld [vmem:[%s1 + $0x6a8] sm:$0xff]
  %v399 = vld [vmem:[%s1 + $0x6b0] sm:$0xff]
  %v400 = vld [vmem:[%s1 + $0x6b8] sm:$0xff]
  %v401 = vld [vmem:[%s1 + $0x6c0] sm:$0xff]
  %v402 = vld [vmem:[%s1 + $0x6c8] sm:$0xff]
  %v403 = vld [vmem:[%s1 + $0x6d0] sm:$0xff]
  %v404 = vld [vmem:[%s1 + $0x6d8] sm:$0xff]
  %v405 = vld [vmem:[%s1 + $0x6e0] sm:$0xff]
  %v406 = vld [vmem:[%s1 + $0x6e8] sm:$0xff]
  %v407 = vld [vmem:[%s1 + $0x6f0] sm:$0xff]
  %v408 = vld [vmem:[%s1 + $0x6f8] sm:$0xff]
  %v409 = vld [vmem:[%s1 + $0x700] sm:$0xff]
  %v410 = vld [vmem:[%s1 + $0x708] sm:$0xff]
  %v411 = vld [vmem:[%s1 + $0x710] sm:$0xff]
  %v412 = vld [vmem:[%s1 + $0x718] sm:$0xff]
  %v413 = vld [vmem:[%s1 + $0x720] sm:$0xff]
  %v414 = vld [vmem:[%s1 + $0x728] sm:$0xff]
  %v415 = vld [vmem:[%s1 + $0x730] sm:$0xff]
  %v416 = vld [vmem:[%s1 + $0x738] sm:$0xff]
  %v417 = vld [vmem:[%s1 + $0x740] sm:$0xff]
  %v418 = vld [vmem:[%s1 + $0x748] sm:$0xff]
  %v419 = vld [vmem:[%s1 + $0x750] sm:$0xff]
  %v420 = vld [vmem:[%s1 + $0x758] sm:$0xff]
  %v421 = vld [vmem:[%s1 + $0x760] sm:$0xff]
  %v422 = vld [vmem:[%s1 + $0x768] sm:$0xff]
  %v423 = vld [vmem:[%s1 + $0x770] sm:$0xff]
  %v424 = vld [vmem:[%s1 + $0x778] sm:$0xff]
  %v425 = vld [vmem:[%s1 + $0x780] sm:$0xff]
  %v426 = vld [vmem:[%s1 + $0x788] sm:$0xff]
  %v427 = vld [vmem:[%s1 + $0x790] sm:$0xff]
  %v428 = vld [vmem:[%s1 + $0x798] sm:$0xff]
  %v429 = vld [vmem:[%s1 + $0x7a0] sm:$0xff]
  %v430 = vld [vmem:[%s1 + $0x7a8] sm:$0xff]
  %v431 = vld [vmem:[%s1 + $0x7b0] sm:$0xff]
  %v432 = vld [vmem:[%s1 + $0x7b8] sm:$0xff]
  %v433 = vld [vmem:[%s1 + $0x7c0] sm:$0xff]
  %v434 = vld [vmem:[%s1 + $0x7c8] sm:$0xff]
  %v435 = vld [vmem:[%s1 + $0x7d0] sm:$0xff]
  %v436 = vld [vmem:[%s1 + $0x7d8] sm:$0xff]
  %v437 = vld [vmem:[%s1 + $0x7e0] sm:$0xff]
  %v438 = vld [vmem:[%s1 + $0x7e8] sm:$0xff]
  %v439 = vld [vmem:[%s1 + $0x7f0] sm:$0xff]
  %v440 = vld [vmem:[%s1 + $0x7f8] sm:$0xff]
  %v441 = vld [vmem:[%s1 + $0x800] sm:$0xff]
  %v442 = vld [vmem:[%s1 + $0x808] sm:$0xff]
  %v443 = vld [vmem:[%s1 + $0x810] sm:$0xff]
  %v444 = vld [vmem:[%s1 + $0x818] sm:$0xff]
  %v445 = vld [vmem:[%s1 + $0x820] sm:$0xff]
  %v446 = vld [vmem:[%s1 + $0x828] sm:$0xff]
  %v447 = vld [vmem:[%s1 + $0x830] sm:$0xff]
  %v448 = vld [vmem:[%s1 + $0x838] sm:$0xff]
  %v449 = vld [vmem:[%s1 + $0x840] sm:$0xff]
  %v450 = vld [vmem:[%s1 + $0x848] sm:$0xff]
  %v451 = vld [vmem:[%s1 + $0x850] sm:$0xff]
  %v452 = vld [vmem:[%s1 + $0x858] sm:$0xff]
  %v453 = vld [vmem:[%s1 + $0x860] sm:$0xff]
  %v454 = vld [vmem:[%s1 + $0x868] sm:$0xff]
  %v455 = vld [vmem:[%s1 + $0x870] sm:$0xff]
  %v456 = vld [vmem:[%s1 + $0x878] sm:$0xff]
  %v457 = vld [vmem:[%s1 + $0x880] sm:$0xff]
  %v458 = vld [vmem:[%s1 + $0x888] sm:$0xff]
  %v459 = vld [vmem:[%s1 + $0x890] sm:$0xff]
  %v460 = vld [vmem:[%s1 + $0x898] sm:$0xff]
  %v461 = vld [vmem:[%s1 + $0x8a0] sm:$0xff]
  %v462 = vld [vmem:[%s1 + $0x8a8] sm:$0xff]
  %v463 = vld [vmem:[%s1 + $0x8b0] sm:$0xff]
  %v464 = vld [vmem:[%s1 + $0x8b8] sm:$0xff]
  %v465 = vld [vmem:[%s1 + $0x8c0] sm:$0xff]
  %v466 = vld [vmem:[%s1 + $0x8c8] sm:$0xff]
  %v467 = vld [vmem:[%s1 + $0x8d0] sm:$0xff]
  %v468 = vld [vmem:[%s1 + $0x8d8] sm:$0xff]
  %v469 = vld [vmem:[%s1 + $0x8e0] sm:$0xff]
  %v470 = vld [vmem:[%s1 + $0x8e8] sm:$0xff]
  %v471 = vld [vmem:[%s1 + $0x8f0] sm:$0xff]
  %v472 = vld [vmem:[%s1 + $0x8f8] sm:$0xff]
  %v473 = vld [vmem:[%s1 + $0x900] sm:$0xff]
  %v474 = vld [vmem:[%s1 + $0x908] sm:$0xff]
  %v475 = vld [vmem:[%s1 + $0x910] sm:$0xff]
  %v476 = vld [vmem:[%s1 + $0x918] sm:$0xff]
  %v477 = vld [vmem:[%s1 + $0x920] sm:$0xff]
  %v478 = vld [vmem:[%s1 + $0x928] sm:$0xff]
  %v479 = vld [vmem:[%s1 + $0x930] sm:$0xff]
  %v480 = vld [vmem:[%s1 + $0x938] sm:$0xff]
  %v481 = vld [vmem:[%s1 + $0x940] sm:$0xff]
  %v482 = vld [vmem:[%s1 + $0x948] sm:$0xff]
  %v483 = vld [vmem:[%s1 + $0x950] sm:$0xff]
  %v484 = vld [vmem:[%s1 + $0x958] sm:$0xff]
  %v485 = vld [vmem:[%s1 + $0x960] sm:$0xff]
  %v486 = vld [vmem:[%s1 + $0x968] sm:$0xff]
  %v487 = vld [vmem:[%s1 + $0x970] sm:$0xff]
  %v488 = vld [vmem:[%s1 + $0x978] sm:$0xff]
  %v489 = vld [vmem:[%s1 + $0x980] sm:$0xff]
  %v490 = vld [vmem:[%s1 + $0x988] sm:$0xff]
  %v491 = vld [vmem:[%s1 + $0x990] sm:$0xff]
  %v492 = vld [vmem:[%s1 + $0x998] sm:$0xff]
  %v493 = vld [vmem:[%s1 + $0x9a0] sm:$0xff]
  %v494 = vld [vmem:[%s1 + $0x9a8] sm:$0xff]
  %v495 = vld [vmem:[%s1 + $0x9b0] sm:$0xff]
  %v496 = vld [vmem:[%s1 + $0x9b8] sm:$0xff]
  %v497 = vld [vmem:[%s1 + $0x9c0] sm:$0xff]
  %v498 = vld [vmem:[%s1 + $0x9c8] sm:$0xff]
  %v499 = vld [vmem:[%s1 + $0x9d0] sm:$0xff]
  %v500 = vld [vmem:[%s1 + $0x9d8] sm:$0xff]
  %v501 = vld [vmem:[%s1 + $0x9e0] sm:$0xff]
  %v502 = vld [vmem:[%s1 + $0x9e8] sm:$0xff]
  %v503 = vld [vmem:[%s1 + $0x9f0] sm:$0xff]
  %v504 = vld [vmem:[%s1 + $0x9f8] sm:$0xff]
  %v505 = vld [vmem:[%s1 + $0xa00] sm:$0xff]
  %v506 = vld [vmem:[%s1 + $0xa08] sm:$0xff]
  %v507 = vld [vmem:[%s1 + $0xa10] sm:$0xff]
  %v508 = vld [vmem:[%s1 + $0xa18] sm:$0xff]
  %v509 = vld [vmem:[%s1 + $0xa20] sm:$0xff]
  %v510 = vld [vmem:[%s1 + $0xa28] sm:$0xff]
  %v511 = vld [vmem:[%s1 + $0xa30] sm:$0xff]
  %v512 = vld [vmem:[%s1 + $0xa38] sm:$0xff]
  %v513 = vld [vmem:[%s1 + $0xa40] sm:$0xff]
  %v514 = vld [vmem:[%s1 + $0xa48] sm:$0xff]
  %v515 = vld [vmem:[%s1 + $0xa50] sm:$0xff]
  %v516 = vld [vmem:[%s1 + $0xa58] sm:$0xff]
  %v517 = vld [vmem:[%s1 + $0xa60] sm:$0xff]
  %v518 = vld [vmem:[%s1 + $0xa68] sm:$0xff]
  %v519 = vld [vmem:[%s1 + $0xa70] sm:$0xff]
  %v520 = vld [vmem:[%s1 + $0xa78] sm:$0xff]
  %v521 = vld [vmem:[%s1 + $0xa80] sm:$0xff]
  %v522 = vld [vmem:[%s1 + $0xa88] sm:$0xff]
  %v523 = vld [vmem:[%s1 + $0xa90] sm:$0xff]
  %v524 = vld [vmem:[%s1 + $0xa98] sm:$0xff]
  %v525 = vld [vmem:[%s1 + $0xaa0] sm:$0xff]
  %v526 = vld [vmem:[%s1 + $0xaa8] sm:$0xff]
  %v527 = vld [vmem:[%s1 + $0xab0] sm:$0xff]
  %v528 = vld [vmem:[%s1 + $0xab8] sm:$0xff]
  %v529 = vld [vmem:[%s1 + $0xac0] sm:$0xff]
  %v530 = vld [vmem:[%s1 + $0xac8] sm:$0xff]
  %v531 = vld [vmem:[%s1 + $0xad0] sm:$0xff]
  %v532 = vld [vmem:[%s1 + $0xad8] sm:$0xff]
  %v533 = vld [vmem:[%s1 + $0xae0] sm:$0xff]
  %v534 = vld [vmem:[%s1 + $0xae8] sm:$0xff]
  %v535 = vld [vmem:[%s1 + $0xaf0] sm:$0xff]
  %v536 = vld [vmem:[%s1 + $0xaf8] sm:$0xff]
  %v537 = vld [vmem:[%s1 + $0xb00] sm:$0xff]
  %v538 = vld [vmem:[%s1 + $0xb08] sm:$0xff]
  %v539 = vld [vmem:[%s1 + $0xb10] sm:$0xff]
  %v540 = vld [vmem:[%s1 + $0xb18] sm:$0xff]
  %v541 = vld [vmem:[%s1 + $0xb20] sm:$0xff]
  %v542 = vld [vmem:[%s1 + $0xb28] sm:$0xff]
  %v543 = vld [vmem:[%s1 + $0xb30] sm:$0xff]
  %v544 = vld [vmem:[%s1 + $0xb38] sm:$0xff]
  %v545 = vld [vmem:[%s1 + $0xb40] sm:$0xff]
  %v546 = vld [vmem:[%s1 + $0xb48] sm:$0xff]
  %v547 = vld [vmem:[%s1 + $0xb50] sm:$0xff]
  %v548 = vld [vmem:[%s1 + $0xb58] sm:$0xff]
  %v549 = vld [vmem:[%s1 + $0xb60] sm:$0xff]
  %v550 = vld [vmem:[%s1 + $0xb68] sm:$0xff]
  %v551 = vld [vmem:[%s1 + $0xb70] sm:$0xff]
  %v552 = vld [vmem:[%s1 + $0xb78] sm:$0xff]
  %v553 = vld [vmem:[%s1 + $0xb80] sm:$0xff]
  %v554 = vld [vmem:[%s1 + $0xb88] sm:$0xff]
  %v555 = vld [vmem:[%s1 + $0xb90] sm:$0xff]
  %v556 = vld [vmem:[%s1 + $0xb98] sm:$0xff]
  %v557 = vld [vmem:[%s1 + $0xba0] sm:$0xff]
  %v558 = vld [vmem:[%s1 + $0xba8] sm:$0xff]
  %v559 = vld [vmem:[%s1 + $0xbb0] sm:$0xff]
  %v560 = vld [vmem:[%s1 + $0xbb8] sm:$0xff]
  %v561 = vld [vmem:[%s1 + $0xbc0] sm:$0xff]
  %v562 = vld [vmem:[%s1 + $0xbc8] sm:$0xff]
  %v563 = vld [vmem:[%s1 + $0xbd0] sm:$0xff]
  %v564 = vld [vmem:[%s1 + $0xbd8] sm:$0xff]
  %v565 = vld [vmem:[%s1 + $0xbe0] sm:$0xff]
  %v566 = vld [vmem:[%s1 + $0xbe8] sm:$0xff]
  %v567 = vld [vmem:[%s1 + $0xbf0] sm:$0xff]
  %v568 = vld [vmem:[%s1 + $0xbf8] sm:$0xff]
  %v569 = vld [vmem:[%s3] sm:$0xf]
  %v571 = vperm.slane %v569, 0
  %v572 = vperm.slane %v569, 1
  %v573 = vperm.slane %v569, 2
  %v574 = vperm.slane %v569, 3
  %579 = vmatpush.msra.mxu0 %v245
  %580 = vmatpush.msra.mxu0 %v241
  %581 = vmatpush.msra.mxu0 %v237
  %582 = vmatpush.msra.mxu0 %v233
  %583 = vmatpush.msra.mxu0 %v229
  %584 = vmatpush.msra.mxu0 %v225
  %585 = vmatpush.msra.mxu0 %v221
  %586 = vmatpush.msra.mxu0 %v217
  %587 = vmatpush.msra.mxu0 %v213
  %588 = vmatpush.msra.mxu0 %v209
  %589 = vmatpush.msra.mxu0 %v205
  %590 = vmatpush.msra.mxu0 %v201
  %591 = vmatpush.msra.mxu0 %v197
  %592 = vmatpush.msra.mxu0 %v193
  %593 = vmatpush.msra.mxu0 %v189
  %594 = vmatpush.msra.mxu0 %v185
  %595 = vmatmul.f32.gmra.mxu0 %v29
  %v596 = vpop.f32.mrf.mxu0
  %v597 = vadd.f32 %v571, %v596
  %598 = vmatmul.f32.gmra.mxu0 %v35
  %v599 = vpop.f32.mrf.mxu0
  %v600 = vadd.f32 %v571, %v599
  %601 = vmatmul.f32.gmra.mxu0 %v41
  %v602 = vpop.f32.mrf.mxu0
  %v603 = vadd.f32 %v571, %v602
  %604 = vmatmul.f32.gmra.mxu0 %v47
  %v605 = vpop.f32.mrf.mxu0
  %v606 = vadd.f32 %v571, %v605
  %607 = vmatmul.f32.gmra.mxu0 %v53
  %v608 = vpop.f32.mrf.mxu0
  %v609 = vadd.f32 %v571, %v608
  %610 = vmatmul.f32.gmra.mxu0 %v59
  %v611 = vpop.f32.mrf.mxu0
  %v612 = vadd.f32 %v571, %v611
  %613 = vmatmul.f32.gmra.mxu0 %v65
  %v614 = vpop.f32.mrf.mxu0
  %v615 = vadd.f32 %v571, %v614
  %616 = vmatmul.f32.gmra.mxu0 %v71
  %v617 = vpop.f32.mrf.mxu0
  %v618 = vadd.f32 %v571, %v617
  %619 = vmatmul.f32.gmra.mxu0 %v77
  %v620 = vpop.f32.mrf.mxu0
  %v621 = vadd.f32 %v571, %v620
  %622 = vmatmul.f32.gmra.mxu0 %v83
  %v623 = vpop.f32.mrf.mxu0
  %v624 = vadd.f32 %v571, %v623
  %625 = vmatmul.f32.gmra.mxu0 %v89
  %v626 = vpop.f32.mrf.mxu0
  %v627 = vadd.f32 %v571, %v626
  %628 = vmatmul.f32.gmra.mxu0 %v95
  %v629 = vpop.f32.mrf.mxu0
  %v630 = vadd.f32 %v571, %v629
  %631 = vmatmul.f32.gmra.mxu0 %v101
  %v632 = vpop.f32.mrf.mxu0
  %v633 = vadd.f32 %v571, %v632
  %634 = vmatmul.f32.gmra.mxu0 %v107
  %v635 = vpop.f32.mrf.mxu0
  %v636 = vadd.f32 %v571, %v635
  %637 = vmatmul.f32.gmra.mxu0 %v113
  %v638 = vpop.f32.mrf.mxu0
  %v639 = vadd.f32 %v571, %v638
  %640 = vmatmul.f32.gmra.mxu0 %v119
  %v641 = vpop.f32.mrf.mxu0
  %v642 = vadd.f32 %v571, %v641
  %643 = vmatmul.f32.gmra.mxu0 %v125
  %v644 = vpop.f32.mrf.mxu0
  %v645 = vadd.f32 %v571, %v644
  %646 = vmatmul.f32.gmra.mxu0 %v131
  %v647 = vpop.f32.mrf.mxu0
  %v648 = vadd.f32 %v571, %v647
  %649 = vmatmul.f32.gmra.mxu0 %v137
  %v650 = vpop.f32.mrf.mxu0
  %v651 = vadd.f32 %v571, %v650
  %652 = vmatmul.f32.gmra.mxu0 %v143
  %v653 = vpop.f32.mrf.mxu0
  %v654 = vadd.f32 %v571, %v653
  %655 = vmatmul.f32.gmra.mxu0 %v149
  %v656 = vpop.f32.mrf.mxu0
  %v657 = vadd.f32 %v571, %v656
  %658 = vmatmul.f32.gmra.mxu0 %v155
  %v659 = vpop.f32.mrf.mxu0
  %v660 = vadd.f32 %v571, %v659
  %661 = vmatmul.f32.gmra.mxu0 %v161
  %v662 = vpop.f32.mrf.mxu0
  %v663 = vadd.f32 %v571, %v662
  %664 = vmatmul.f32.gmra.mxu0 %v167
  %v665 = vpop.f32.mrf.mxu0
  %v666 = vadd.f32 %v571, %v665
  %667 = vmatmul.f32.gmra.mxu0 %v173
  %v668 = vpop.f32.mrf.mxu0
  %v669 = vadd.f32 %v571, %v668
  %670 = vmatmul.f32.gmra.mxu0 %v179
  %v671 = vpop.f32.mrf.mxu0
  %v672 = vadd.f32 %v571, %v671
  %673 = vdwg.mxu0
  %674 = vmatpush.msra.mxu0 %v309
  %675 = vmatpush.msra.mxu0 %v305
  %676 = vmatpush.msra.mxu0 %v301
  %677 = vmatpush.msra.mxu0 %v297
  %678 = vmatpush.msra.mxu0 %v293
  %679 = vmatpush.msra.mxu0 %v289
  %680 = vmatpush.msra.mxu0 %v285
  %681 = vmatpush.msra.mxu0 %v281
  %682 = vmatpush.msra.mxu0 %v277
  %683 = vmatpush.msra.mxu0 %v273
  %684 = vmatpush.msra.mxu0 %v269
  %685 = vmatpush.msra.mxu0 %v265
  %686 = vmatpush.msra.mxu0 %v261
  %687 = vmatpush.msra.mxu0 %v257
  %688 = vmatpush.msra.mxu0 %v253
  %689 = vmatpush.msra.mxu0 %v249
  %690 = vmatmul.f32.gmra.mxu0 %v30
  %v691 = vpop.f32.mrf.mxu0
  %v692 = vadd.f32 %v597, %v691
  %693 = vmatmul.f32.gmra.mxu0 %v36
  %v694 = vpop.f32.mrf.mxu0
  %v695 = vadd.f32 %v600, %v694
  %696 = vmatmul.f32.gmra.mxu0 %v42
  %v697 = vpop.f32.mrf.mxu0
  %v698 = vadd.f32 %v603, %v697
  %699 = vmatmul.f32.gmra.mxu0 %v48
  %v700 = vpop.f32.mrf.mxu0
  %v701 = vadd.f32 %v606, %v700
  %702 = vmatmul.f32.gmra.mxu0 %v54
  %v703 = vpop.f32.mrf.mxu0
  %v704 = vadd.f32 %v609, %v703
  %705 = vmatmul.f32.gmra.mxu0 %v60
  %v706 = vpop.f32.mrf.mxu0
  %v707 = vadd.f32 %v612, %v706
  %708 = vmatmul.f32.gmra.mxu0 %v66
  %v709 = vpop.f32.mrf.mxu0
  %v710 = vadd.f32 %v615, %v709
  %711 = vmatmul.f32.gmra.mxu0 %v72
  %v712 = vpop.f32.mrf.mxu0
  %v713 = vadd.f32 %v618, %v712
  %714 = vmatmul.f32.gmra.mxu0 %v78
  %v715 = vpop.f32.mrf.mxu0
  %v716 = vadd.f32 %v621, %v715
  %717 = vmatmul.f32.gmra.mxu0 %v84
  %v718 = vpop.f32.mrf.mxu0
  %v719 = vadd.f32 %v624, %v718
  %720 = vmatmul.f32.gmra.mxu0 %v90
  %v721 = vpop.f32.mrf.mxu0
  %v722 = vadd.f32 %v627, %v721
  %723 = vmatmul.f32.gmra.mxu0 %v96
  %v724 = vpop.f32.mrf.mxu0
  %v725 = vadd.f32 %v630, %v724
  %726 = vmatmul.f32.gmra.mxu0 %v102
  %v727 = vpop.f32.mrf.mxu0
  %v728 = vadd.f32 %v633, %v727
  %729 = vmatmul.f32.gmra.mxu0 %v108
  %v730 = vpop.f32.mrf.mxu0
  %v731 = vadd.f32 %v636, %v730
  %732 = vmatmul.f32.gmra.mxu0 %v114
  %v733 = vpop.f32.mrf.mxu0
  %v734 = vadd.f32 %v639, %v733
  %735 = vmatmul.f32.gmra.mxu0 %v120
  %v736 = vpop.f32.mrf.mxu0
  %v737 = vadd.f32 %v642, %v736
  %738 = vmatmul.f32.gmra.mxu0 %v126
  %v739 = vpop.f32.mrf.mxu0
  %v740 = vadd.f32 %v645, %v739
  %741 = vmatmul.f32.gmra.mxu0 %v132
  %v742 = vpop.f32.mrf.mxu0
  %v743 = vadd.f32 %v648, %v742
  %744 = vmatmul.f32.gmra.mxu0 %v138
  %v745 = vpop.f32.mrf.mxu0
  %v746 = vadd.f32 %v651, %v745
  %747 = vmatmul.f32.gmra.mxu0 %v144
  %v748 = vpop.f32.mrf.mxu0
  %v749 = vadd.f32 %v654, %v748
  %750 = vmatmul.f32.gmra.mxu0 %v150
  %v751 = vpop.f32.mrf.mxu0
  %v752 = vadd.f32 %v657, %v751
  %753 = vmatmul.f32.gmra.mxu0 %v156
  %v754 = vpop.f32.mrf.mxu0
  %v755 = vadd.f32 %v660, %v754
  %756 = vmatmul.f32.gmra.mxu0 %v162
  %v757 = vpop.f32.mrf.mxu0
  %v758 = vadd.f32 %v663, %v757
  %759 = vmatmul.f32.gmra.mxu0 %v168
  %v760 = vpop.f32.mrf.mxu0
  %v761 = vadd.f32 %v666, %v760
  %762 = vmatmul.f32.gmra.mxu0 %v174
  %v763 = vpop.f32.mrf.mxu0
  %v764 = vadd.f32 %v669, %v763
  %765 = vmatmul.f32.gmra.mxu0 %v180
  %v766 = vpop.f32.mrf.mxu0
  %v767 = vadd.f32 %v672, %v766
  %768 = vdwg.mxu0
  %769 = vmatpush.msra.mxu0 %v373
  %770 = vmatpush.msra.mxu0 %v369
  %771 = vmatpush.msra.mxu0 %v365
  %772 = vmatpush.msra.mxu0 %v361
  %773 = vmatpush.msra.mxu0 %v357
  %774 = vmatpush.msra.mxu0 %v353
  %775 = vmatpush.msra.mxu0 %v349
  %776 = vmatpush.msra.mxu0 %v345
  %777 = vmatpush.msra.mxu0 %v341
  %778 = vmatpush.msra.mxu0 %v337
  %779 = vmatpush.msra.mxu0 %v333
  %780 = vmatpush.msra.mxu0 %v329
  %781 = vmatpush.msra.mxu0 %v325
  %782 = vmatpush.msra.mxu0 %v321
  %783 = vmatpush.msra.mxu0 %v317
  %784 = vmatpush.msra.mxu0 %v313
  %785 = vmatmul.f32.gmra.mxu0 %v31
  %v786 = vpop.f32.mrf.mxu0
  %v787 = vadd.f32 %v692, %v786
  %788 = vmatmul.f32.gmra.mxu0 %v37
  %v789 = vpop.f32.mrf.mxu0
  %v790 = vadd.f32 %v695, %v789
  %791 = vmatmul.f32.gmra.mxu0 %v43
  %v792 = vpop.f32.mrf.mxu0
  %v793 = vadd.f32 %v698, %v792
  %794 = vmatmul.f32.gmra.mxu0 %v49
  %v795 = vpop.f32.mrf.mxu0
  %v796 = vadd.f32 %v701, %v795
  %797 = vmatmul.f32.gmra.mxu0 %v55
  %v798 = vpop.f32.mrf.mxu0
  %v799 = vadd.f32 %v704, %v798
  %800 = vmatmul.f32.gmra.mxu0 %v61
  %v801 = vpop.f32.mrf.mxu0
  %v802 = vadd.f32 %v707, %v801
  %803 = vmatmul.f32.gmra.mxu0 %v67
  %v804 = vpop.f32.mrf.mxu0
  %v805 = vadd.f32 %v710, %v804
  %806 = vmatmul.f32.gmra.mxu0 %v73
  %v807 = vpop.f32.mrf.mxu0
  %v808 = vadd.f32 %v713, %v807
  %809 = vmatmul.f32.gmra.mxu0 %v79
  %v810 = vpop.f32.mrf.mxu0
  %v811 = vadd.f32 %v716, %v810
  %812 = vmatmul.f32.gmra.mxu0 %v85
  %v813 = vpop.f32.mrf.mxu0
  %v814 = vadd.f32 %v719, %v813
  %815 = vmatmul.f32.gmra.mxu0 %v91
  %v816 = vpop.f32.mrf.mxu0
  %v817 = vadd.f32 %v722, %v816
  %818 = vmatmul.f32.gmra.mxu0 %v97
  %v819 = vpop.f32.mrf.mxu0
  %v820 = vadd.f32 %v725, %v819
  %821 = vmatmul.f32.gmra.mxu0 %v103
  %v822 = vpop.f32.mrf.mxu0
  %v823 = vadd.f32 %v728, %v822
  %824 = vmatmul.f32.gmra.mxu0 %v109
  %v825 = vpop.f32.mrf.mxu0
  %v826 = vadd.f32 %v731, %v825
  %827 = vmatmul.f32.gmra.mxu0 %v115
  %v828 = vpop.f32.mrf.mxu0
  %v829 = vadd.f32 %v734, %v828
  %830 = vmatmul.f32.gmra.mxu0 %v121
  %v831 = vpop.f32.mrf.mxu0
  %v832 = vadd.f32 %v737, %v831
  %833 = vmatmul.f32.gmra.mxu0 %v127
  %v834 = vpop.f32.mrf.mxu0
  %v835 = vadd.f32 %v740, %v834
  %836 = vmatmul.f32.gmra.mxu0 %v133
  %v837 = vpop.f32.mrf.mxu0
  %v838 = vadd.f32 %v743, %v837
  %839 = vmatmul.f32.gmra.mxu0 %v139
  %v840 = vpop.f32.mrf.mxu0
  %v841 = vadd.f32 %v746, %v840
  %842 = vmatmul.f32.gmra.mxu0 %v145
  %v843 = vpop.f32.mrf.mxu0
  %v844 = vadd.f32 %v749, %v843
  %845 = vmatmul.f32.gmra.mxu0 %v151
  %v846 = vpop.f32.mrf.mxu0
  %v847 = vadd.f32 %v752, %v846
  %848 = vmatmul.f32.gmra.mxu0 %v157
  %v849 = vpop.f32.mrf.mxu0
  %v850 = vadd.f32 %v755, %v849
  %851 = vmatmul.f32.gmra.mxu0 %v163
  %v852 = vpop.f32.mrf.mxu0
  %v853 = vadd.f32 %v758, %v852
  %854 = vmatmul.f32.gmra.mxu0 %v169
  %v855 = vpop.f32.mrf.mxu0
  %v856 = vadd.f32 %v761, %v855
  %857 = vmatmul.f32.gmra.mxu0 %v175
  %v858 = vpop.f32.mrf.mxu0
  %v859 = vadd.f32 %v764, %v858
  %860 = vmatmul.f32.gmra.mxu0 %v181
  %v861 = vpop.f32.mrf.mxu0
  %v862 = vadd.f32 %v767, %v861
  %863 = vdwg.mxu0
  %864 = vmatpush.msra.mxu0 %v437
  %865 = vmatpush.msra.mxu0 %v433
  %866 = vmatpush.msra.mxu0 %v429
  %867 = vmatpush.msra.mxu0 %v425
  %868 = vmatpush.msra.mxu0 %v421
  %869 = vmatpush.msra.mxu0 %v417
  %870 = vmatpush.msra.mxu0 %v413
  %871 = vmatpush.msra.mxu0 %v409
  %872 = vmatpush.msra.mxu0 %v405
  %873 = vmatpush.msra.mxu0 %v401
  %874 = vmatpush.msra.mxu0 %v397
  %875 = vmatpush.msra.mxu0 %v393
  %876 = vmatpush.msra.mxu0 %v389
  %877 = vmatpush.msra.mxu0 %v385
  %878 = vmatpush.msra.mxu0 %v381
  %879 = vmatpush.msra.mxu0 %v377
  %880 = vmatmul.f32.gmra.mxu0 %v32
  %v881 = vpop.f32.mrf.mxu0
  %v882 = vadd.f32 %v787, %v881
  %883 = vmatmul.f32.gmra.mxu0 %v38
  %v884 = vpop.f32.mrf.mxu0
  %v885 = vadd.f32 %v790, %v884
  %886 = vmatmul.f32.gmra.mxu0 %v44
  %v887 = vpop.f32.mrf.mxu0
  %v888 = vadd.f32 %v793, %v887
  %889 = vmatmul.f32.gmra.mxu0 %v50
  %v890 = vpop.f32.mrf.mxu0
  %v891 = vadd.f32 %v796, %v890
  %892 = vmatmul.f32.gmra.mxu0 %v56
  %v893 = vpop.f32.mrf.mxu0
  %v894 = vadd.f32 %v799, %v893
  %895 = vmatmul.f32.gmra.mxu0 %v62
  %v896 = vpop.f32.mrf.mxu0
  %v897 = vadd.f32 %v802, %v896
  %898 = vmatmul.f32.gmra.mxu0 %v68
  %v899 = vpop.f32.mrf.mxu0
  %v900 = vadd.f32 %v805, %v899
  %901 = vmatmul.f32.gmra.mxu0 %v74
  %v902 = vpop.f32.mrf.mxu0
  %v903 = vadd.f32 %v808, %v902
  %904 = vmatmul.f32.gmra.mxu0 %v80
  %v905 = vpop.f32.mrf.mxu0
  %v906 = vadd.f32 %v811, %v905
  %907 = vmatmul.f32.gmra.mxu0 %v86
  %v908 = vpop.f32.mrf.mxu0
  %v909 = vadd.f32 %v814, %v908
  %910 = vmatmul.f32.gmra.mxu0 %v92
  %v911 = vpop.f32.mrf.mxu0
  %v912 = vadd.f32 %v817, %v911
  %913 = vmatmul.f32.gmra.mxu0 %v98
  %v914 = vpop.f32.mrf.mxu0
  %v915 = vadd.f32 %v820, %v914
  %916 = vmatmul.f32.gmra.mxu0 %v104
  %v917 = vpop.f32.mrf.mxu0
  %v918 = vadd.f32 %v823, %v917
  %919 = vmatmul.f32.gmra.mxu0 %v110
  %v920 = vpop.f32.mrf.mxu0
  %v921 = vadd.f32 %v826, %v920
  %922 = vmatmul.f32.gmra.mxu0 %v116
  %v923 = vpop.f32.mrf.mxu0
  %v924 = vadd.f32 %v829, %v923
  %925 = vmatmul.f32.gmra.mxu0 %v122
  %v926 = vpop.f32.mrf.mxu0
  %v927 = vadd.f32 %v832, %v926
  %928 = vmatmul.f32.gmra.mxu0 %v128
  %v929 = vpop.f32.mrf.mxu0
  %v930 = vadd.f32 %v835, %v929
  %931 = vmatmul.f32.gmra.mxu0 %v134
  %v932 = vpop.f32.mrf.mxu0
  %v933 = vadd.f32 %v838, %v932
  %934 = vmatmul.f32.gmra.mxu0 %v140
  %v935 = vpop.f32.mrf.mxu0
  %v936 = vadd.f32 %v841, %v935
  %937 = vmatmul.f32.gmra.mxu0 %v146
  %v938 = vpop.f32.mrf.mxu0
  %v939 = vadd.f32 %v844, %v938
  %940 = vmatmul.f32.gmra.mxu0 %v152
  %v941 = vpop.f32.mrf.mxu0
  %v942 = vadd.f32 %v847, %v941
  %943 = vmatmul.f32.gmra.mxu0 %v158
  %v944 = vpop.f32.mrf.mxu0
  %v945 = vadd.f32 %v850, %v944
  %946 = vmatmul.f32.gmra.mxu0 %v164
  %v947 = vpop.f32.mrf.mxu0
  %v948 = vadd.f32 %v853, %v947
  %949 = vmatmul.f32.gmra.mxu0 %v170
  %v950 = vpop.f32.mrf.mxu0
  %v951 = vadd.f32 %v856, %v950
  %952 = vmatmul.f32.gmra.mxu0 %v176
  %v953 = vpop.f32.mrf.mxu0
  %v954 = vadd.f32 %v859, %v953
  %955 = vmatmul.f32.gmra.mxu0 %v182
  %v956 = vpop.f32.mrf.mxu0
  %v957 = vadd.f32 %v862, %v956
  %958 = vdwg.mxu0
  %959 = vmatpush.msra.mxu0 %v501
  %960 = vmatpush.msra.mxu0 %v497
  %961 = vmatpush.msra.mxu0 %v493
  %962 = vmatpush.msra.mxu0 %v489
  %963 = vmatpush.msra.mxu0 %v485
  %964 = vmatpush.msra.mxu0 %v481
  %965 = vmatpush.msra.mxu0 %v477
  %966 = vmatpush.msra.mxu0 %v473
  %967 = vmatpush.msra.mxu0 %v469
  %968 = vmatpush.msra.mxu0 %v465
  %969 = vmatpush.msra.mxu0 %v461
  %970 = vmatpush.msra.mxu0 %v457
  %971 = vmatpush.msra.mxu0 %v453
  %972 = vmatpush.msra.mxu0 %v449
  %973 = vmatpush.msra.mxu0 %v445
  %974 = vmatpush.msra.mxu0 %v441
  %975 = vmatmul.f32.gmra.mxu0 %v33
  %v976 = vpop.f32.mrf.mxu0
  %v977 = vadd.f32 %v882, %v976
  %978 = vmatmul.f32.gmra.mxu0 %v39
  %v979 = vpop.f32.mrf.mxu0
  %v980 = vadd.f32 %v885, %v979
  %981 = vmatmul.f32.gmra.mxu0 %v45
  %v982 = vpop.f32.mrf.mxu0
  %v983 = vadd.f32 %v888, %v982
  %984 = vmatmul.f32.gmra.mxu0 %v51
  %v985 = vpop.f32.mrf.mxu0
  %v986 = vadd.f32 %v891, %v985
  %987 = vmatmul.f32.gmra.mxu0 %v57
  %v988 = vpop.f32.mrf.mxu0
  %v989 = vadd.f32 %v894, %v988
  %990 = vmatmul.f32.gmra.mxu0 %v63
  %v991 = vpop.f32.mrf.mxu0
  %v992 = vadd.f32 %v897, %v991
  %993 = vmatmul.f32.gmra.mxu0 %v69
  %v994 = vpop.f32.mrf.mxu0
  %v995 = vadd.f32 %v900, %v994
  %996 = vmatmul.f32.gmra.mxu0 %v75
  %v997 = vpop.f32.mrf.mxu0
  %v998 = vadd.f32 %v903, %v997
  %999 = vmatmul.f32.gmra.mxu0 %v81
  %v1000 = vpop.f32.mrf.mxu0
  %v1001 = vadd.f32 %v906, %v1000
  %1002 = vmatmul.f32.gmra.mxu0 %v87
  %v1003 = vpop.f32.mrf.mxu0
  %v1004 = vadd.f32 %v909, %v1003
  %1005 = vmatmul.f32.gmra.mxu0 %v93
  %v1006 = vpop.f32.mrf.mxu0
  %v1007 = vadd.f32 %v912, %v1006
  %1008 = vmatmul.f32.gmra.mxu0 %v99
  %v1009 = vpop.f32.mrf.mxu0
  %v1010 = vadd.f32 %v915, %v1009
  %1011 = vmatmul.f32.gmra.mxu0 %v105
  %v1012 = vpop.f32.mrf.mxu0
  %v1013 = vadd.f32 %v918, %v1012
  %1014 = vmatmul.f32.gmra.mxu0 %v111
  %v1015 = vpop.f32.mrf.mxu0
  %v1016 = vadd.f32 %v921, %v1015
  %1017 = vmatmul.f32.gmra.mxu0 %v117
  %v1018 = vpop.f32.mrf.mxu0
  %v1019 = vadd.f32 %v924, %v1018
  %1020 = vmatmul.f32.gmra.mxu0 %v123
  %v1021 = vpop.f32.mrf.mxu0
  %v1022 = vadd.f32 %v927, %v1021
  %1023 = vmatmul.f32.gmra.mxu0 %v129
  %v1024 = vpop.f32.mrf.mxu0
  %v1025 = vadd.f32 %v930, %v1024
  %1026 = vmatmul.f32.gmra.mxu0 %v135
  %v1027 = vpop.f32.mrf.mxu0
  %v1028 = vadd.f32 %v933, %v1027
  %1029 = vmatmul.f32.gmra.mxu0 %v141
  %v1030 = vpop.f32.mrf.mxu0
  %v1031 = vadd.f32 %v936, %v1030
  %1032 = vmatmul.f32.gmra.mxu0 %v147
  %v1033 = vpop.f32.mrf.mxu0
  %v1034 = vadd.f32 %v939, %v1033
  %1035 = vmatmul.f32.gmra.mxu0 %v153
  %v1036 = vpop.f32.mrf.mxu0
  %v1037 = vadd.f32 %v942, %v1036
  %1038 = vmatmul.f32.gmra.mxu0 %v159
  %v1039 = vpop.f32.mrf.mxu0
  %v1040 = vadd.f32 %v945, %v1039
  %1041 = vmatmul.f32.gmra.mxu0 %v165
  %v1042 = vpop.f32.mrf.mxu0
  %v1043 = vadd.f32 %v948, %v1042
  %1044 = vmatmul.f32.gmra.mxu0 %v171
  %v1045 = vpop.f32.mrf.mxu0
  %v1046 = vadd.f32 %v951, %v1045
  %1047 = vmatmul.f32.gmra.mxu0 %v177
  %v1048 = vpop.f32.mrf.mxu0
  %v1049 = vadd.f32 %v954, %v1048
  %1050 = vmatmul.f32.gmra.mxu0 %v183
  %v1051 = vpop.f32.mrf.mxu0
  %v1052 = vadd.f32 %v957, %v1051
  %1053 = vdwg.mxu0
  %1054 = vmatpush.msra.mxu0 %v565
  %1055 = vmatpush.msra.mxu0 %v561
  %1056 = vmatpush.msra.mxu0 %v557
  %1057 = vmatpush.msra.mxu0 %v553
  %1058 = vmatpush.msra.mxu0 %v549
  %1059 = vmatpush.msra.mxu0 %v545
  %1060 = vmatpush.msra.mxu0 %v541
  %1061 = vmatpush.msra.mxu0 %v537
  %1062 = vmatpush.msra.mxu0 %v533
  %1063 = vmatpush.msra.mxu0 %v529
  %1064 = vmatpush.msra.mxu0 %v525
  %1065 = vmatpush.msra.mxu0 %v521
  %1066 = vmatpush.msra.mxu0 %v517
  %1067 = vmatpush.msra.mxu0 %v513
  %1068 = vmatpush.msra.mxu0 %v509
  %1069 = vmatpush.msra.mxu0 %v505
  %1070 = vmatmul.f32.gmra.mxu0 %v34
  %v1071 = vpop.f32.mrf.mxu0
  %v1072 = vadd.f32 %v977, %v1071
  %1073 = vmatmul.f32.gmra.mxu0 %v40
  %v1074 = vpop.f32.mrf.mxu0
  %v1075 = vadd.f32 %v980, %v1074
  %1076 = vmatmul.f32.gmra.mxu0 %v46
  %v1077 = vpop.f32.mrf.mxu0
  %v1078 = vadd.f32 %v983, %v1077
  %1079 = vmatmul.f32.gmra.mxu0 %v52
  %v1080 = vpop.f32.mrf.mxu0
  %v1081 = vadd.f32 %v986, %v1080
  %1082 = vmatmul.f32.gmra.mxu0 %v58
  %v1083 = vpop.f32.mrf.mxu0
  %v1084 = vadd.f32 %v989, %v1083
  %1085 = vmatmul.f32.gmra.mxu0 %v64
  %v1086 = vpop.f32.mrf.mxu0
  %v1087 = vadd.f32 %v992, %v1086
  %1088 = vmatmul.f32.gmra.mxu0 %v70
  %v1089 = vpop.f32.mrf.mxu0
  %v1090 = vadd.f32 %v995, %v1089
  %1091 = vmatmul.f32.gmra.mxu0 %v76
  %v1092 = vpop.f32.mrf.mxu0
  %v1093 = vadd.f32 %v998, %v1092
  %1094 = vmatmul.f32.gmra.mxu0 %v82
  %v1095 = vpop.f32.mrf.mxu0
  %v1096 = vadd.f32 %v1001, %v1095
  %1097 = vmatmul.f32.gmra.mxu0 %v88
  %v1098 = vpop.f32.mrf.mxu0
  %v1099 = vadd.f32 %v1004, %v1098
  %1100 = vmatmul.f32.gmra.mxu0 %v94
  %v1101 = vpop.f32.mrf.mxu0
  %v1102 = vadd.f32 %v1007, %v1101
  %1103 = vmatmul.f32.gmra.mxu0 %v100
  %v1104 = vpop.f32.mrf.mxu0
  %v1105 = vadd.f32 %v1010, %v1104
  %1106 = vmatmul.f32.gmra.mxu0 %v106
  %v1107 = vpop.f32.mrf.mxu0
  %v1108 = vadd.f32 %v1013, %v1107
  %1109 = vmatmul.f32.gmra.mxu0 %v112
  %v1110 = vpop.f32.mrf.mxu0
  %v1111 = vadd.f32 %v1016, %v1110
  %1112 = vmatmul.f32.gmra.mxu0 %v118
  %v1113 = vpop.f32.mrf.mxu0
  %v1114 = vadd.f32 %v1019, %v1113
  %1115 = vmatmul.f32.gmra.mxu0 %v124
  %v1116 = vpop.f32.mrf.mxu0
  %v1117 = vadd.f32 %v1022, %v1116
  %1118 = vmatmul.f32.gmra.mxu0 %v130
  %v1119 = vpop.f32.mrf.mxu0
  %v1120 = vadd.f32 %v1025, %v1119
  %1121 = vmatmul.f32.gmra.mxu0 %v136
  %v1122 = vpop.f32.mrf.mxu0
  %v1123 = vadd.f32 %v1028, %v1122
  %1124 = vmatmul.f32.gmra.mxu0 %v142
  %v1125 = vpop.f32.mrf.mxu0
  %v1126 = vadd.f32 %v1031, %v1125
  %1127 = vmatmul.f32.gmra.mxu0 %v148
  %v1128 = vpop.f32.mrf.mxu0
  %v1129 = vadd.f32 %v1034, %v1128
  %1130 = vmatmul.f32.gmra.mxu0 %v154
  %v1131 = vpop.f32.mrf.mxu0
  %v1132 = vadd.f32 %v1037, %v1131
  %1133 = vmatmul.f32.gmra.mxu0 %v160
  %v1134 = vpop.f32.mrf.mxu0
  %v1135 = vadd.f32 %v1040, %v1134
  %1136 = vmatmul.f32.gmra.mxu0 %v166
  %v1137 = vpop.f32.mrf.mxu0
  %v1138 = vadd.f32 %v1043, %v1137
  %1139 = vmatmul.f32.gmra.mxu0 %v172
  %v1140 = vpop.f32.mrf.mxu0
  %v1141 = vadd.f32 %v1046, %v1140
  %1142 = vmatmul.f32.gmra.mxu0 %v178
  %v1143 = vpop.f32.mrf.mxu0
  %v1144 = vadd.f32 %v1049, %v1143
  %1145 = vmatmul.f32.gmra.mxu0 %v184
  %v1146 = vpop.f32.mrf.mxu0
  %v1147 = vadd.f32 %v1052, %v1146
  %1148 = vdwg.mxu0
  %1149 = vmatpush.msra.mxu0 %v246
  %1150 = vmatpush.msra.mxu0 %v242
  %1151 = vmatpush.msra.mxu0 %v238
  %1152 = vmatpush.msra.mxu0 %v234
  %1153 = vmatpush.msra.mxu0 %v230
  %1154 = vmatpush.msra.mxu0 %v226
  %1155 = vmatpush.msra.mxu0 %v222
  %1156 = vmatpush.msra.mxu0 %v218
  %1157 = vmatpush.msra.mxu0 %v214
  %1158 = vmatpush.msra.mxu0 %v210
  %1159 = vmatpush.msra.mxu0 %v206
  %1160 = vmatpush.msra.mxu0 %v202
  %1161 = vmatpush.msra.mxu0 %v198
  %1162 = vmatpush.msra.mxu0 %v194
  %1163 = vmatpush.msra.mxu0 %v190
  %1164 = vmatpush.msra.mxu0 %v186
  %1165 = vmatmul.f32.gmra.mxu0 %v29
  %v1166 = vpop.f32.mrf.mxu0
  %v1167 = vadd.f32 %v572, %v1166
  %1168 = vmatmul.f32.gmra.mxu0 %v35
  %v1169 = vpop.f32.mrf.mxu0
  %v1170 = vadd.f32 %v572, %v1169
  %1171 = vmatmul.f32.gmra.mxu0 %v41
  %v1172 = vpop.f32.mrf.mxu0
  %v1173 = vadd.f32 %v572, %v1172
  %1174 = vmatmul.f32.gmra.mxu0 %v47
  %v1175 = vpop.f32.mrf.mxu0
  %v1176 = vadd.f32 %v572, %v1175
  %1177 = vmatmul.f32.gmra.mxu0 %v53
  %v1178 = vpop.f32.mrf.mxu0
  %v1179 = vadd.f32 %v572, %v1178
  %1180 = vmatmul.f32.gmra.mxu0 %v59
  %v1181 = vpop.f32.mrf.mxu0
  %v1182 = vadd.f32 %v572, %v1181
  %1183 = vmatmul.f32.gmra.mxu0 %v65
  %v1184 = vpop.f32.mrf.mxu0
  %v1185 = vadd.f32 %v572, %v1184
  %1186 = vmatmul.f32.gmra.mxu0 %v71
  %v1187 = vpop.f32.mrf.mxu0
  %v1188 = vadd.f32 %v572, %v1187
  %1189 = vmatmul.f32.gmra.mxu0 %v77
  %v1190 = vpop.f32.mrf.mxu0
  %v1191 = vadd.f32 %v572, %v1190
  %1192 = vmatmul.f32.gmra.mxu0 %v83
  %v1193 = vpop.f32.mrf.mxu0
  %v1194 = vadd.f32 %v572, %v1193
  %1195 = vmatmul.f32.gmra.mxu0 %v89
  %v1196 = vpop.f32.mrf.mxu0
  %v1197 = vadd.f32 %v572, %v1196
  %1198 = vmatmul.f32.gmra.mxu0 %v95
  %v1199 = vpop.f32.mrf.mxu0
  %v1200 = vadd.f32 %v572, %v1199
  %1201 = vmatmul.f32.gmra.mxu0 %v101
  %v1202 = vpop.f32.mrf.mxu0
  %v1203 = vadd.f32 %v572, %v1202
  %1204 = vmatmul.f32.gmra.mxu0 %v107
  %v1205 = vpop.f32.mrf.mxu0
  %v1206 = vadd.f32 %v572, %v1205
  %1207 = vmatmul.f32.gmra.mxu0 %v113
  %v1208 = vpop.f32.mrf.mxu0
  %v1209 = vadd.f32 %v572, %v1208
  %1210 = vmatmul.f32.gmra.mxu0 %v119
  %v1211 = vpop.f32.mrf.mxu0
  %v1212 = vadd.f32 %v572, %v1211
  %1213 = vmatmul.f32.gmra.mxu0 %v125
  %v1214 = vpop.f32.mrf.mxu0
  %v1215 = vadd.f32 %v572, %v1214
  %1216 = vmatmul.f32.gmra.mxu0 %v131
  %v1217 = vpop.f32.mrf.mxu0
  %v1218 = vadd.f32 %v572, %v1217
  %1219 = vmatmul.f32.gmra.mxu0 %v137
  %v1220 = vpop.f32.mrf.mxu0
  %v1221 = vadd.f32 %v572, %v1220
  %1222 = vmatmul.f32.gmra.mxu0 %v143
  %v1223 = vpop.f32.mrf.mxu0
  %v1224 = vadd.f32 %v572, %v1223
  %1225 = vmatmul.f32.gmra.mxu0 %v149
  %v1226 = vpop.f32.mrf.mxu0
  %v1227 = vadd.f32 %v572, %v1226
  %1228 = vmatmul.f32.gmra.mxu0 %v155
  %v1229 = vpop.f32.mrf.mxu0
  %v1230 = vadd.f32 %v572, %v1229
  %1231 = vmatmul.f32.gmra.mxu0 %v161
  %v1232 = vpop.f32.mrf.mxu0
  %v1233 = vadd.f32 %v572, %v1232
  %1234 = vmatmul.f32.gmra.mxu0 %v167
  %v1235 = vpop.f32.mrf.mxu0
  %v1236 = vadd.f32 %v572, %v1235
  %1237 = vmatmul.f32.gmra.mxu0 %v173
  %v1238 = vpop.f32.mrf.mxu0
  %v1239 = vadd.f32 %v572, %v1238
  %1240 = vmatmul.f32.gmra.mxu0 %v179
  %v1241 = vpop.f32.mrf.mxu0
  %v1242 = vadd.f32 %v572, %v1241
  %1243 = vdwg.mxu0
  %1244 = vmatpush.msra.mxu0 %v310
  %1245 = vmatpush.msra.mxu0 %v306
  %1246 = vmatpush.msra.mxu0 %v302
  %1247 = vmatpush.msra.mxu0 %v298
  %1248 = vmatpush.msra.mxu0 %v294
  %1249 = vmatpush.msra.mxu0 %v290
  %1250 = vmatpush.msra.mxu0 %v286
  %1251 = vmatpush.msra.mxu0 %v282
  %1252 = vmatpush.msra.mxu0 %v278
  %1253 = vmatpush.msra.mxu0 %v274
  %1254 = vmatpush.msra.mxu0 %v270
  %1255 = vmatpush.msra.mxu0 %v266
  %1256 = vmatpush.msra.mxu0 %v262
  %1257 = vmatpush.msra.mxu0 %v258
  %1258 = vmatpush.msra.mxu0 %v254
  %1259 = vmatpush.msra.mxu0 %v250
  %1260 = vmatmul.f32.gmra.mxu0 %v30
  %v1261 = vpop.f32.mrf.mxu0
  %v1262 = vadd.f32 %v1167, %v1261
  %1263 = vmatmul.f32.gmra.mxu0 %v36
  %v1264 = vpop.f32.mrf.mxu0
  %v1265 = vadd.f32 %v1170, %v1264
  %1266 = vmatmul.f32.gmra.mxu0 %v42
  %v1267 = vpop.f32.mrf.mxu0
  %v1268 = vadd.f32 %v1173, %v1267
  %1269 = vmatmul.f32.gmra.mxu0 %v48
  %v1270 = vpop.f32.mrf.mxu0
  %v1271 = vadd.f32 %v1176, %v1270
  %1272 = vmatmul.f32.gmra.mxu0 %v54
  %v1273 = vpop.f32.mrf.mxu0
  %v1274 = vadd.f32 %v1179, %v1273
  %1275 = vmatmul.f32.gmra.mxu0 %v60
  %v1276 = vpop.f32.mrf.mxu0
  %v1277 = vadd.f32 %v1182, %v1276
  %1278 = vmatmul.f32.gmra.mxu0 %v66
  %v1279 = vpop.f32.mrf.mxu0
  %v1280 = vadd.f32 %v1185, %v1279
  %1281 = vmatmul.f32.gmra.mxu0 %v72
  %v1282 = vpop.f32.mrf.mxu0
  %v1283 = vadd.f32 %v1188, %v1282
  %1284 = vmatmul.f32.gmra.mxu0 %v78
  %v1285 = vpop.f32.mrf.mxu0
  %v1286 = vadd.f32 %v1191, %v1285
  %1287 = vmatmul.f32.gmra.mxu0 %v84
  %v1288 = vpop.f32.mrf.mxu0
  %v1289 = vadd.f32 %v1194, %v1288
  %1290 = vmatmul.f32.gmra.mxu0 %v90
  %v1291 = vpop.f32.mrf.mxu0
  %v1292 = vadd.f32 %v1197, %v1291
  %1293 = vmatmul.f32.gmra.mxu0 %v96
  %v1294 = vpop.f32.mrf.mxu0
  %v1295 = vadd.f32 %v1200, %v1294
  %1296 = vmatmul.f32.gmra.mxu0 %v102
  %v1297 = vpop.f32.mrf.mxu0
  %v1298 = vadd.f32 %v1203, %v1297
  %1299 = vmatmul.f32.gmra.mxu0 %v108
  %v1300 = vpop.f32.mrf.mxu0
  %v1301 = vadd.f32 %v1206, %v1300
  %1302 = vmatmul.f32.gmra.mxu0 %v114
  %v1303 = vpop.f32.mrf.mxu0
  %v1304 = vadd.f32 %v1209, %v1303
  %1305 = vmatmul.f32.gmra.mxu0 %v120
  %v1306 = vpop.f32.mrf.mxu0
  %v1307 = vadd.f32 %v1212, %v1306
  %1308 = vmatmul.f32.gmra.mxu0 %v126
  %v1309 = vpop.f32.mrf.mxu0
  %v1310 = vadd.f32 %v1215, %v1309
  %1311 = vmatmul.f32.gmra.mxu0 %v132
  %v1312 = vpop.f32.mrf.mxu0
  %v1313 = vadd.f32 %v1218, %v1312
  %1314 = vmatmul.f32.gmra.mxu0 %v138
  %v1315 = vpop.f32.mrf.mxu0
  %v1316 = vadd.f32 %v1221, %v1315
  %1317 = vmatmul.f32.gmra.mxu0 %v144
  %v1318 = vpop.f32.mrf.mxu0
  %v1319 = vadd.f32 %v1224, %v1318
  %1320 = vmatmul.f32.gmra.mxu0 %v150
  %v1321 = vpop.f32.mrf.mxu0
  %v1322 = vadd.f32 %v1227, %v1321
  %1323 = vmatmul.f32.gmra.mxu0 %v156
  %v1324 = vpop.f32.mrf.mxu0
  %v1325 = vadd.f32 %v1230, %v1324
  %1326 = vmatmul.f32.gmra.mxu0 %v162
  %v1327 = vpop.f32.mrf.mxu0
  %v1328 = vadd.f32 %v1233, %v1327
  %1329 = vmatmul.f32.gmra.mxu0 %v168
  %v1330 = vpop.f32.mrf.mxu0
  %v1331 = vadd.f32 %v1236, %v1330
  %1332 = vmatmul.f32.gmra.mxu0 %v174
  %v1333 = vpop.f32.mrf.mxu0
  %v1334 = vadd.f32 %v1239, %v1333
  %1335 = vmatmul.f32.gmra.mxu0 %v180
  %v1336 = vpop.f32.mrf.mxu0
  %v1337 = vadd.f32 %v1242, %v1336
  %1338 = vdwg.mxu0
  %1339 = vmatpush.msra.mxu0 %v374
  %1340 = vmatpush.msra.mxu0 %v370
  %1341 = vmatpush.msra.mxu0 %v366
  %1342 = vmatpush.msra.mxu0 %v362
  %1343 = vmatpush.msra.mxu0 %v358
  %1344 = vmatpush.msra.mxu0 %v354
  %1345 = vmatpush.msra.mxu0 %v350
  %1346 = vmatpush.msra.mxu0 %v346
  %1347 = vmatpush.msra.mxu0 %v342
  %1348 = vmatpush.msra.mxu0 %v338
  %1349 = vmatpush.msra.mxu0 %v334
  %1350 = vmatpush.msra.mxu0 %v330
  %1351 = vmatpush.msra.mxu0 %v326
  %1352 = vmatpush.msra.mxu0 %v322
  %1353 = vmatpush.msra.mxu0 %v318
  %1354 = vmatpush.msra.mxu0 %v314
  %1355 = vmatmul.f32.gmra.mxu0 %v31
  %v1356 = vpop.f32.mrf.mxu0
  %v1357 = vadd.f32 %v1262, %v1356
  %1358 = vmatmul.f32.gmra.mxu0 %v37
  %v1359 = vpop.f32.mrf.mxu0
  %v1360 = vadd.f32 %v1265, %v1359
  %1361 = vmatmul.f32.gmra.mxu0 %v43
  %v1362 = vpop.f32.mrf.mxu0
  %v1363 = vadd.f32 %v1268, %v1362
  %1364 = vmatmul.f32.gmra.mxu0 %v49
  %v1365 = vpop.f32.mrf.mxu0
  %v1366 = vadd.f32 %v1271, %v1365
  %1367 = vmatmul.f32.gmra.mxu0 %v55
  %v1368 = vpop.f32.mrf.mxu0
  %v1369 = vadd.f32 %v1274, %v1368
  %1370 = vmatmul.f32.gmra.mxu0 %v61
  %v1371 = vpop.f32.mrf.mxu0
  %v1372 = vadd.f32 %v1277, %v1371
  %1373 = vmatmul.f32.gmra.mxu0 %v67
  %v1374 = vpop.f32.mrf.mxu0
  %v1375 = vadd.f32 %v1280, %v1374
  %1376 = vmatmul.f32.gmra.mxu0 %v73
  %v1377 = vpop.f32.mrf.mxu0
  %v1378 = vadd.f32 %v1283, %v1377
  %1379 = vmatmul.f32.gmra.mxu0 %v79
  %v1380 = vpop.f32.mrf.mxu0
  %v1381 = vadd.f32 %v1286, %v1380
  %1382 = vmatmul.f32.gmra.mxu0 %v85
  %v1383 = vpop.f32.mrf.mxu0
  %v1384 = vadd.f32 %v1289, %v1383
  %1385 = vmatmul.f32.gmra.mxu0 %v91
  %v1386 = vpop.f32.mrf.mxu0
  %v1387 = vadd.f32 %v1292, %v1386
  %1388 = vmatmul.f32.gmra.mxu0 %v97
  %v1389 = vpop.f32.mrf.mxu0
  %v1390 = vadd.f32 %v1295, %v1389
  %1391 = vmatmul.f32.gmra.mxu0 %v103
  %v1392 = vpop.f32.mrf.mxu0
  %v1393 = vadd.f32 %v1298, %v1392
  %1394 = vmatmul.f32.gmra.mxu0 %v109
  %v1395 = vpop.f32.mrf.mxu0
  %v1396 = vadd.f32 %v1301, %v1395
  %1397 = vmatmul.f32.gmra.mxu0 %v115
  %v1398 = vpop.f32.mrf.mxu0
  %v1399 = vadd.f32 %v1304, %v1398
  %1400 = vmatmul.f32.gmra.mxu0 %v121
  %v1401 = vpop.f32.mrf.mxu0
  %v1402 = vadd.f32 %v1307, %v1401
  %1403 = vmatmul.f32.gmra.mxu0 %v127
  %v1404 = vpop.f32.mrf.mxu0
  %v1405 = vadd.f32 %v1310, %v1404
  %1406 = vmatmul.f32.gmra.mxu0 %v133
  %v1407 = vpop.f32.mrf.mxu0
  %v1408 = vadd.f32 %v1313, %v1407
  %1409 = vmatmul.f32.gmra.mxu0 %v139
  %v1410 = vpop.f32.mrf.mxu0
  %v1411 = vadd.f32 %v1316, %v1410
  %1412 = vmatmul.f32.gmra.mxu0 %v145
  %v1413 = vpop.f32.mrf.mxu0
  %v1414 = vadd.f32 %v1319, %v1413
  %1415 = vmatmul.f32.gmra.mxu0 %v151
  %v1416 = vpop.f32.mrf.mxu0
  %v1417 = vadd.f32 %v1322, %v1416
  %1418 = vmatmul.f32.gmra.mxu0 %v157
  %v1419 = vpop.f32.mrf.mxu0
  %v1420 = vadd.f32 %v1325, %v1419
  %1421 = vmatmul.f32.gmra.mxu0 %v163
  %v1422 = vpop.f32.mrf.mxu0
  %v1423 = vadd.f32 %v1328, %v1422
  %1424 = vmatmul.f32.gmra.mxu0 %v169
  %v1425 = vpop.f32.mrf.mxu0
  %v1426 = vadd.f32 %v1331, %v1425
  %1427 = vmatmul.f32.gmra.mxu0 %v175
  %v1428 = vpop.f32.mrf.mxu0
  %v1429 = vadd.f32 %v1334, %v1428
  %1430 = vmatmul.f32.gmra.mxu0 %v181
  %v1431 = vpop.f32.mrf.mxu0
  %v1432 = vadd.f32 %v1337, %v1431
  %1433 = vdwg.mxu0
  %1434 = vmatpush.msra.mxu0 %v438
  %1435 = vmatpush.msra.mxu0 %v434
  %1436 = vmatpush.msra.mxu0 %v430
  %1437 = vmatpush.msra.mxu0 %v426
  %1438 = vmatpush.msra.mxu0 %v422
  %1439 = vmatpush.msra.mxu0 %v418
  %1440 = vmatpush.msra.mxu0 %v414
  %1441 = vmatpush.msra.mxu0 %v410
  %1442 = vmatpush.msra.mxu0 %v406
  %1443 = vmatpush.msra.mxu0 %v402
  %1444 = vmatpush.msra.mxu0 %v398
  %1445 = vmatpush.msra.mxu0 %v394
  %1446 = vmatpush.msra.mxu0 %v390
  %1447 = vmatpush.msra.mxu0 %v386
  %1448 = vmatpush.msra.mxu0 %v382
  %1449 = vmatpush.msra.mxu0 %v378
  %1450 = vmatmul.f32.gmra.mxu0 %v32
  %v1451 = vpop.f32.mrf.mxu0
  %v1452 = vadd.f32 %v1357, %v1451
  %1453 = vmatmul.f32.gmra.mxu0 %v38
  %v1454 = vpop.f32.mrf.mxu0
  %v1455 = vadd.f32 %v1360, %v1454
  %1456 = vmatmul.f32.gmra.mxu0 %v44
  %v1457 = vpop.f32.mrf.mxu0
  %v1458 = vadd.f32 %v1363, %v1457
  %1459 = vmatmul.f32.gmra.mxu0 %v50
  %v1460 = vpop.f32.mrf.mxu0
  %v1461 = vadd.f32 %v1366, %v1460
  %1462 = vmatmul.f32.gmra.mxu0 %v56
  %v1463 = vpop.f32.mrf.mxu0
  %v1464 = vadd.f32 %v1369, %v1463
  %1465 = vmatmul.f32.gmra.mxu0 %v62
  %v1466 = vpop.f32.mrf.mxu0
  %v1467 = vadd.f32 %v1372, %v1466
  %1468 = vmatmul.f32.gmra.mxu0 %v68
  %v1469 = vpop.f32.mrf.mxu0
  %v1470 = vadd.f32 %v1375, %v1469
  %1471 = vmatmul.f32.gmra.mxu0 %v74
  %v1472 = vpop.f32.mrf.mxu0
  %v1473 = vadd.f32 %v1378, %v1472
  %1474 = vmatmul.f32.gmra.mxu0 %v80
  %v1475 = vpop.f32.mrf.mxu0
  %v1476 = vadd.f32 %v1381, %v1475
  %1477 = vmatmul.f32.gmra.mxu0 %v86
  %v1478 = vpop.f32.mrf.mxu0
  %v1479 = vadd.f32 %v1384, %v1478
  %1480 = vmatmul.f32.gmra.mxu0 %v92
  %v1481 = vpop.f32.mrf.mxu0
  %v1482 = vadd.f32 %v1387, %v1481
  %1483 = vmatmul.f32.gmra.mxu0 %v98
  %v1484 = vpop.f32.mrf.mxu0
  %v1485 = vadd.f32 %v1390, %v1484
  %1486 = vmatmul.f32.gmra.mxu0 %v104
  %v1487 = vpop.f32.mrf.mxu0
  %v1488 = vadd.f32 %v1393, %v1487
  %1489 = vmatmul.f32.gmra.mxu0 %v110
  %v1490 = vpop.f32.mrf.mxu0
  %v1491 = vadd.f32 %v1396, %v1490
  %1492 = vmatmul.f32.gmra.mxu0 %v116
  %v1493 = vpop.f32.mrf.mxu0
  %v1494 = vadd.f32 %v1399, %v1493
  %1495 = vmatmul.f32.gmra.mxu0 %v122
  %v1496 = vpop.f32.mrf.mxu0
  %v1497 = vadd.f32 %v1402, %v1496
  %1498 = vmatmul.f32.gmra.mxu0 %v128
  %v1499 = vpop.f32.mrf.mxu0
  %v1500 = vadd.f32 %v1405, %v1499
  %1501 = vmatmul.f32.gmra.mxu0 %v134
  %v1502 = vpop.f32.mrf.mxu0
  %v1503 = vadd.f32 %v1408, %v1502
  %1504 = vmatmul.f32.gmra.mxu0 %v140
  %v1505 = vpop.f32.mrf.mxu0
  %v1506 = vadd.f32 %v1411, %v1505
  %1507 = vmatmul.f32.gmra.mxu0 %v146
  %v1508 = vpop.f32.mrf.mxu0
  %v1509 = vadd.f32 %v1414, %v1508
  %1510 = vmatmul.f32.gmra.mxu0 %v152
  %v1511 = vpop.f32.mrf.mxu0
  %v1512 = vadd.f32 %v1417, %v1511
  %1513 = vmatmul.f32.gmra.mxu0 %v158
  %v1514 = vpop.f32.mrf.mxu0
  %v1515 = vadd.f32 %v1420, %v1514
  %1516 = vmatmul.f32.gmra.mxu0 %v164
  %v1517 = vpop.f32.mrf.mxu0
  %v1518 = vadd.f32 %v1423, %v1517
  %1519 = vmatmul.f32.gmra.mxu0 %v170
  %v1520 = vpop.f32.mrf.mxu0
  %v1521 = vadd.f32 %v1426, %v1520
  %1522 = vmatmul.f32.gmra.mxu0 %v176
  %v1523 = vpop.f32.mrf.mxu0
  %v1524 = vadd.f32 %v1429, %v1523
  %1525 = vmatmul.f32.gmra.mxu0 %v182
  %v1526 = vpop.f32.mrf.mxu0
  %v1527 = vadd.f32 %v1432, %v1526
  %1528 = vdwg.mxu0
  %1529 = vmatpush.msra.mxu0 %v502
  %1530 = vmatpush.msra.mxu0 %v498
  %1531 = vmatpush.msra.mxu0 %v494
  %1532 = vmatpush.msra.mxu0 %v490
  %1533 = vmatpush.msra.mxu0 %v486
  %1534 = vmatpush.msra.mxu0 %v482
  %1535 = vmatpush.msra.mxu0 %v478
  %1536 = vmatpush.msra.mxu0 %v474
  %1537 = vmatpush.msra.mxu0 %v470
  %1538 = vmatpush.msra.mxu0 %v466
  %1539 = vmatpush.msra.mxu0 %v462
  %1540 = vmatpush.msra.mxu0 %v458
  %1541 = vmatpush.msra.mxu0 %v454
  %1542 = vmatpush.msra.mxu0 %v450
  %1543 = vmatpush.msra.mxu0 %v446
  %1544 = vmatpush.msra.mxu0 %v442
  %1545 = vmatmul.f32.gmra.mxu0 %v33
  %v1546 = vpop.f32.mrf.mxu0
  %v1547 = vadd.f32 %v1452, %v1546
  %1548 = vmatmul.f32.gmra.mxu0 %v39
  %v1549 = vpop.f32.mrf.mxu0
  %v1550 = vadd.f32 %v1455, %v1549
  %1551 = vmatmul.f32.gmra.mxu0 %v45
  %v1552 = vpop.f32.mrf.mxu0
  %v1553 = vadd.f32 %v1458, %v1552
  %1554 = vmatmul.f32.gmra.mxu0 %v51
  %v1555 = vpop.f32.mrf.mxu0
  %v1556 = vadd.f32 %v1461, %v1555
  %1557 = vmatmul.f32.gmra.mxu0 %v57
  %v1558 = vpop.f32.mrf.mxu0
  %v1559 = vadd.f32 %v1464, %v1558
  %1560 = vmatmul.f32.gmra.mxu0 %v63
  %v1561 = vpop.f32.mrf.mxu0
  %v1562 = vadd.f32 %v1467, %v1561
  %1563 = vmatmul.f32.gmra.mxu0 %v69
  %v1564 = vpop.f32.mrf.mxu0
  %v1565 = vadd.f32 %v1470, %v1564
  %1566 = vmatmul.f32.gmra.mxu0 %v75
  %v1567 = vpop.f32.mrf.mxu0
  %v1568 = vadd.f32 %v1473, %v1567
  %1569 = vmatmul.f32.gmra.mxu0 %v81
  %v1570 = vpop.f32.mrf.mxu0
  %v1571 = vadd.f32 %v1476, %v1570
  %1572 = vmatmul.f32.gmra.mxu0 %v87
  %v1573 = vpop.f32.mrf.mxu0
  %v1574 = vadd.f32 %v1479, %v1573
  %1575 = vmatmul.f32.gmra.mxu0 %v93
  %v1576 = vpop.f32.mrf.mxu0
  %v1577 = vadd.f32 %v1482, %v1576
  %1578 = vmatmul.f32.gmra.mxu0 %v99
  %v1579 = vpop.f32.mrf.mxu0
  %v1580 = vadd.f32 %v1485, %v1579
  %1581 = vmatmul.f32.gmra.mxu0 %v105
  %v1582 = vpop.f32.mrf.mxu0
  %v1583 = vadd.f32 %v1488, %v1582
  %1584 = vmatmul.f32.gmra.mxu0 %v111
  %v1585 = vpop.f32.mrf.mxu0
  %v1586 = vadd.f32 %v1491, %v1585
  %1587 = vmatmul.f32.gmra.mxu0 %v117
  %v1588 = vpop.f32.mrf.mxu0
  %v1589 = vadd.f32 %v1494, %v1588
  %1590 = vmatmul.f32.gmra.mxu0 %v123
  %v1591 = vpop.f32.mrf.mxu0
  %v1592 = vadd.f32 %v1497, %v1591
  %1593 = vmatmul.f32.gmra.mxu0 %v129
  %v1594 = vpop.f32.mrf.mxu0
  %v1595 = vadd.f32 %v1500, %v1594
  %1596 = vmatmul.f32.gmra.mxu0 %v135
  %v1597 = vpop.f32.mrf.mxu0
  %v1598 = vadd.f32 %v1503, %v1597
  %1599 = vmatmul.f32.gmra.mxu0 %v141
  %v1600 = vpop.f32.mrf.mxu0
  %v1601 = vadd.f32 %v1506, %v1600
  %1602 = vmatmul.f32.gmra.mxu0 %v147
  %v1603 = vpop.f32.mrf.mxu0
  %v1604 = vadd.f32 %v1509, %v1603
  %1605 = vmatmul.f32.gmra.mxu0 %v153
  %v1606 = vpop.f32.mrf.mxu0
  %v1607 = vadd.f32 %v1512, %v1606
  %1608 = vmatmul.f32.gmra.mxu0 %v159
  %v1609 = vpop.f32.mrf.mxu0
  %v1610 = vadd.f32 %v1515, %v1609
  %1611 = vmatmul.f32.gmra.mxu0 %v165
  %v1612 = vpop.f32.mrf.mxu0
  %v1613 = vadd.f32 %v1518, %v1612
  %1614 = vmatmul.f32.gmra.mxu0 %v171
  %v1615 = vpop.f32.mrf.mxu0
  %v1616 = vadd.f32 %v1521, %v1615
  %1617 = vmatmul.f32.gmra.mxu0 %v177
  %v1618 = vpop.f32.mrf.mxu0
  %v1619 = vadd.f32 %v1524, %v1618
  %1620 = vmatmul.f32.gmra.mxu0 %v183
  %v1621 = vpop.f32.mrf.mxu0
  %v1622 = vadd.f32 %v1527, %v1621
  %1623 = vdwg.mxu0
  %1624 = vmatpush.msra.mxu0 %v566
  %1625 = vmatpush.msra.mxu0 %v562
  %1626 = vmatpush.msra.mxu0 %v558
  %1627 = vmatpush.msra.mxu0 %v554
  %1628 = vmatpush.msra.mxu0 %v550
  %1629 = vmatpush.msra.mxu0 %v546
  %1630 = vmatpush.msra.mxu0 %v542
  %1631 = vmatpush.msra.mxu0 %v538
  %1632 = vmatpush.msra.mxu0 %v534
  %1633 = vmatpush.msra.mxu0 %v530
  %1634 = vmatpush.msra.mxu0 %v526
  %1635 = vmatpush.msra.mxu0 %v522
  %1636 = vmatpush.msra.mxu0 %v518
  %1637 = vmatpush.msra.mxu0 %v514
  %1638 = vmatpush.msra.mxu0 %v510
  %1639 = vmatpush.msra.mxu0 %v506
  %1640 = vmatmul.f32.gmra.mxu0 %v34
  %v1641 = vpop.f32.mrf.mxu0
  %v1642 = vadd.f32 %v1547, %v1641
  %1643 = vmatmul.f32.gmra.mxu0 %v40
  %v1644 = vpop.f32.mrf.mxu0
  %v1645 = vadd.f32 %v1550, %v1644
  %1646 = vmatmul.f32.gmra.mxu0 %v46
  %v1647 = vpop.f32.mrf.mxu0
  %v1648 = vadd.f32 %v1553, %v1647
  %1649 = vmatmul.f32.gmra.mxu0 %v52
  %v1650 = vpop.f32.mrf.mxu0
  %v1651 = vadd.f32 %v1556, %v1650
  %1652 = vmatmul.f32.gmra.mxu0 %v58
  %v1653 = vpop.f32.mrf.mxu0
  %v1654 = vadd.f32 %v1559, %v1653
  %1655 = vmatmul.f32.gmra.mxu0 %v64
  %v1656 = vpop.f32.mrf.mxu0
  %v1657 = vadd.f32 %v1562, %v1656
  %1658 = vmatmul.f32.gmra.mxu0 %v70
  %v1659 = vpop.f32.mrf.mxu0
  %v1660 = vadd.f32 %v1565, %v1659
  %1661 = vmatmul.f32.gmra.mxu0 %v76
  %v1662 = vpop.f32.mrf.mxu0
  %v1663 = vadd.f32 %v1568, %v1662
  %1664 = vmatmul.f32.gmra.mxu0 %v82
  %v1665 = vpop.f32.mrf.mxu0
  %v1666 = vadd.f32 %v1571, %v1665
  %1667 = vmatmul.f32.gmra.mxu0 %v88
  %v1668 = vpop.f32.mrf.mxu0
  %v1669 = vadd.f32 %v1574, %v1668
  %1670 = vmatmul.f32.gmra.mxu0 %v94
  %v1671 = vpop.f32.mrf.mxu0
  %v1672 = vadd.f32 %v1577, %v1671
  %1673 = vmatmul.f32.gmra.mxu0 %v100
  %v1674 = vpop.f32.mrf.mxu0
  %v1675 = vadd.f32 %v1580, %v1674
  %1676 = vmatmul.f32.gmra.mxu0 %v106
  %v1677 = vpop.f32.mrf.mxu0
  %v1678 = vadd.f32 %v1583, %v1677
  %1679 = vmatmul.f32.gmra.mxu0 %v112
  %v1680 = vpop.f32.mrf.mxu0
  %v1681 = vadd.f32 %v1586, %v1680
  %1682 = vmatmul.f32.gmra.mxu0 %v118
  %v1683 = vpop.f32.mrf.mxu0
  %v1684 = vadd.f32 %v1589, %v1683
  %1685 = vmatmul.f32.gmra.mxu0 %v124
  %v1686 = vpop.f32.mrf.mxu0
  %v1687 = vadd.f32 %v1592, %v1686
  %1688 = vmatmul.f32.gmra.mxu0 %v130
  %v1689 = vpop.f32.mrf.mxu0
  %v1690 = vadd.f32 %v1595, %v1689
  %1691 = vmatmul.f32.gmra.mxu0 %v136
  %v1692 = vpop.f32.mrf.mxu0
  %v1693 = vadd.f32 %v1598, %v1692
  %1694 = vmatmul.f32.gmra.mxu0 %v142
  %v1695 = vpop.f32.mrf.mxu0
  %v1696 = vadd.f32 %v1601, %v1695
  %1697 = vmatmul.f32.gmra.mxu0 %v148
  %v1698 = vpop.f32.mrf.mxu0
  %v1699 = vadd.f32 %v1604, %v1698
  %1700 = vmatmul.f32.gmra.mxu0 %v154
  %v1701 = vpop.f32.mrf.mxu0
  %v1702 = vadd.f32 %v1607, %v1701
  %1703 = vmatmul.f32.gmra.mxu0 %v160
  %v1704 = vpop.f32.mrf.mxu0
  %v1705 = vadd.f32 %v1610, %v1704
  %1706 = vmatmul.f32.gmra.mxu0 %v166
  %v1707 = vpop.f32.mrf.mxu0
  %v1708 = vadd.f32 %v1613, %v1707
  %1709 = vmatmul.f32.gmra.mxu0 %v172
  %v1710 = vpop.f32.mrf.mxu0
  %v1711 = vadd.f32 %v1616, %v1710
  %1712 = vmatmul.f32.gmra.mxu0 %v178
  %v1713 = vpop.f32.mrf.mxu0
  %v1714 = vadd.f32 %v1619, %v1713
  %1715 = vmatmul.f32.gmra.mxu0 %v184
  %v1716 = vpop.f32.mrf.mxu0
  %v1717 = vadd.f32 %v1622, %v1716
  %1718 = vdwg.mxu0
  %1719 = vmatpush.msra.mxu0 %v247
  %1720 = vmatpush.msra.mxu0 %v243
  %1721 = vmatpush.msra.mxu0 %v239
  %1722 = vmatpush.msra.mxu0 %v235
  %1723 = vmatpush.msra.mxu0 %v231
  %1724 = vmatpush.msra.mxu0 %v227
  %1725 = vmatpush.msra.mxu0 %v223
  %1726 = vmatpush.msra.mxu0 %v219
  %1727 = vmatpush.msra.mxu0 %v215
  %1728 = vmatpush.msra.mxu0 %v211
  %1729 = vmatpush.msra.mxu0 %v207
  %1730 = vmatpush.msra.mxu0 %v203
  %1731 = vmatpush.msra.mxu0 %v199
  %1732 = vmatpush.msra.mxu0 %v195
  %1733 = vmatpush.msra.mxu0 %v191
  %1734 = vmatpush.msra.mxu0 %v187
  %1735 = vmatmul.f32.gmra.mxu0 %v29
  %v1736 = vpop.f32.mrf.mxu0
  %v1737 = vadd.f32 %v573, %v1736
  %1738 = vmatmul.f32.gmra.mxu0 %v35
  %v1739 = vpop.f32.mrf.mxu0
  %v1740 = vadd.f32 %v573, %v1739
  %1741 = vmatmul.f32.gmra.mxu0 %v41
  %v1742 = vpop.f32.mrf.mxu0
  %v1743 = vadd.f32 %v573, %v1742
  %1744 = vmatmul.f32.gmra.mxu0 %v47
  %v1745 = vpop.f32.mrf.mxu0
  %v1746 = vadd.f32 %v573, %v1745
  %1747 = vmatmul.f32.gmra.mxu0 %v53
  %v1748 = vpop.f32.mrf.mxu0
  %v1749 = vadd.f32 %v573, %v1748
  %1750 = vmatmul.f32.gmra.mxu0 %v59
  %v1751 = vpop.f32.mrf.mxu0
  %v1752 = vadd.f32 %v573, %v1751
  %1753 = vmatmul.f32.gmra.mxu0 %v65
  %v1754 = vpop.f32.mrf.mxu0
  %v1755 = vadd.f32 %v573, %v1754
  %1756 = vmatmul.f32.gmra.mxu0 %v71
  %v1757 = vpop.f32.mrf.mxu0
  %v1758 = vadd.f32 %v573, %v1757
  %1759 = vmatmul.f32.gmra.mxu0 %v77
  %v1760 = vpop.f32.mrf.mxu0
  %v1761 = vadd.f32 %v573, %v1760
  %1762 = vmatmul.f32.gmra.mxu0 %v83
  %v1763 = vpop.f32.mrf.mxu0
  %v1764 = vadd.f32 %v573, %v1763
  %1765 = vmatmul.f32.gmra.mxu0 %v89
  %v1766 = vpop.f32.mrf.mxu0
  %v1767 = vadd.f32 %v573, %v1766
  %1768 = vmatmul.f32.gmra.mxu0 %v95
  %v1769 = vpop.f32.mrf.mxu0
  %v1770 = vadd.f32 %v573, %v1769
  %1771 = vmatmul.f32.gmra.mxu0 %v101
  %v1772 = vpop.f32.mrf.mxu0
  %v1773 = vadd.f32 %v573, %v1772
  %1774 = vmatmul.f32.gmra.mxu0 %v107
  %v1775 = vpop.f32.mrf.mxu0
  %v1776 = vadd.f32 %v573, %v1775
  %1777 = vmatmul.f32.gmra.mxu0 %v113
  %v1778 = vpop.f32.mrf.mxu0
  %v1779 = vadd.f32 %v573, %v1778
  %1780 = vmatmul.f32.gmra.mxu0 %v119
  %v1781 = vpop.f32.mrf.mxu0
  %v1782 = vadd.f32 %v573, %v1781
  %1783 = vmatmul.f32.gmra.mxu0 %v125
  %v1784 = vpop.f32.mrf.mxu0
  %v1785 = vadd.f32 %v573, %v1784
  %1786 = vmatmul.f32.gmra.mxu0 %v131
  %v1787 = vpop.f32.mrf.mxu0
  %v1788 = vadd.f32 %v573, %v1787
  %1789 = vmatmul.f32.gmra.mxu0 %v137
  %v1790 = vpop.f32.mrf.mxu0
  %v1791 = vadd.f32 %v573, %v1790
  %1792 = vmatmul.f32.gmra.mxu0 %v143
  %v1793 = vpop.f32.mrf.mxu0
  %v1794 = vadd.f32 %v573, %v1793
  %1795 = vmatmul.f32.gmra.mxu0 %v149
  %v1796 = vpop.f32.mrf.mxu0
  %v1797 = vadd.f32 %v573, %v1796
  %1798 = vmatmul.f32.gmra.mxu0 %v155
  %v1799 = vpop.f32.mrf.mxu0
  %v1800 = vadd.f32 %v573, %v1799
  %1801 = vmatmul.f32.gmra.mxu0 %v161
  %v1802 = vpop.f32.mrf.mxu0
  %v1803 = vadd.f32 %v573, %v1802
  %1804 = vmatmul.f32.gmra.mxu0 %v167
  %v1805 = vpop.f32.mrf.mxu0
  %v1806 = vadd.f32 %v573, %v1805
  %1807 = vmatmul.f32.gmra.mxu0 %v173
  %v1808 = vpop.f32.mrf.mxu0
  %v1809 = vadd.f32 %v573, %v1808
  %1810 = vmatmul.f32.gmra.mxu0 %v179
  %v1811 = vpop.f32.mrf.mxu0
  %v1812 = vadd.f32 %v573, %v1811
  %1813 = vdwg.mxu0
  %1814 = vmatpush.msra.mxu0 %v311
  %1815 = vmatpush.msra.mxu0 %v307
  %1816 = vmatpush.msra.mxu0 %v303
  %1817 = vmatpush.msra.mxu0 %v299
  %1818 = vmatpush.msra.mxu0 %v295
  %1819 = vmatpush.msra.mxu0 %v291
  %1820 = vmatpush.msra.mxu0 %v287
  %1821 = vmatpush.msra.mxu0 %v283
  %1822 = vmatpush.msra.mxu0 %v279
  %1823 = vmatpush.msra.mxu0 %v275
  %1824 = vmatpush.msra.mxu0 %v271
  %1825 = vmatpush.msra.mxu0 %v267
  %1826 = vmatpush.msra.mxu0 %v263
  %1827 = vmatpush.msra.mxu0 %v259
  %1828 = vmatpush.msra.mxu0 %v255
  %1829 = vmatpush.msra.mxu0 %v251
  %1830 = vmatmul.f32.gmra.mxu0 %v30
  %v1831 = vpop.f32.mrf.mxu0
  %v1832 = vadd.f32 %v1737, %v1831
  %1833 = vmatmul.f32.gmra.mxu0 %v36
  %v1834 = vpop.f32.mrf.mxu0
  %v1835 = vadd.f32 %v1740, %v1834
  %1836 = vmatmul.f32.gmra.mxu0 %v42
  %v1837 = vpop.f32.mrf.mxu0
  %v1838 = vadd.f32 %v1743, %v1837
  %1839 = vmatmul.f32.gmra.mxu0 %v48
  %v1840 = vpop.f32.mrf.mxu0
  %v1841 = vadd.f32 %v1746, %v1840
  %1842 = vmatmul.f32.gmra.mxu0 %v54
  %v1843 = vpop.f32.mrf.mxu0
  %v1844 = vadd.f32 %v1749, %v1843
  %1845 = vmatmul.f32.gmra.mxu0 %v60
  %v1846 = vpop.f32.mrf.mxu0
  %v1847 = vadd.f32 %v1752, %v1846
  %1848 = vmatmul.f32.gmra.mxu0 %v66
  %v1849 = vpop.f32.mrf.mxu0
  %v1850 = vadd.f32 %v1755, %v1849
  %1851 = vmatmul.f32.gmra.mxu0 %v72
  %v1852 = vpop.f32.mrf.mxu0
  %v1853 = vadd.f32 %v1758, %v1852
  %1854 = vmatmul.f32.gmra.mxu0 %v78
  %v1855 = vpop.f32.mrf.mxu0
  %v1856 = vadd.f32 %v1761, %v1855
  %1857 = vmatmul.f32.gmra.mxu0 %v84
  %v1858 = vpop.f32.mrf.mxu0
  %v1859 = vadd.f32 %v1764, %v1858
  %1860 = vmatmul.f32.gmra.mxu0 %v90
  %v1861 = vpop.f32.mrf.mxu0
  %v1862 = vadd.f32 %v1767, %v1861
  %1863 = vmatmul.f32.gmra.mxu0 %v96
  %v1864 = vpop.f32.mrf.mxu0
  %v1865 = vadd.f32 %v1770, %v1864
  %1866 = vmatmul.f32.gmra.mxu0 %v102
  %v1867 = vpop.f32.mrf.mxu0
  %v1868 = vadd.f32 %v1773, %v1867
  %1869 = vmatmul.f32.gmra.mxu0 %v108
  %v1870 = vpop.f32.mrf.mxu0
  %v1871 = vadd.f32 %v1776, %v1870
  %1872 = vmatmul.f32.gmra.mxu0 %v114
  %v1873 = vpop.f32.mrf.mxu0
  %v1874 = vadd.f32 %v1779, %v1873
  %1875 = vmatmul.f32.gmra.mxu0 %v120
  %v1876 = vpop.f32.mrf.mxu0
  %v1877 = vadd.f32 %v1782, %v1876
  %1878 = vmatmul.f32.gmra.mxu0 %v126
  %v1879 = vpop.f32.mrf.mxu0
  %v1880 = vadd.f32 %v1785, %v1879
  %1881 = vmatmul.f32.gmra.mxu0 %v132
  %v1882 = vpop.f32.mrf.mxu0
  %v1883 = vadd.f32 %v1788, %v1882
  %1884 = vmatmul.f32.gmra.mxu0 %v138
  %v1885 = vpop.f32.mrf.mxu0
  %v1886 = vadd.f32 %v1791, %v1885
  %1887 = vmatmul.f32.gmra.mxu0 %v144
  %v1888 = vpop.f32.mrf.mxu0
  %v1889 = vadd.f32 %v1794, %v1888
  %1890 = vmatmul.f32.gmra.mxu0 %v150
  %v1891 = vpop.f32.mrf.mxu0
  %v1892 = vadd.f32 %v1797, %v1891
  %1893 = vmatmul.f32.gmra.mxu0 %v156
  %v1894 = vpop.f32.mrf.mxu0
  %v1895 = vadd.f32 %v1800, %v1894
  %1896 = vmatmul.f32.gmra.mxu0 %v162
  %v1897 = vpop.f32.mrf.mxu0
  %v1898 = vadd.f32 %v1803, %v1897
  %1899 = vmatmul.f32.gmra.mxu0 %v168
  %v1900 = vpop.f32.mrf.mxu0
  %v1901 = vadd.f32 %v1806, %v1900
  %1902 = vmatmul.f32.gmra.mxu0 %v174
  %v1903 = vpop.f32.mrf.mxu0
  %v1904 = vadd.f32 %v1809, %v1903
  %1905 = vmatmul.f32.gmra.mxu0 %v180
  %v1906 = vpop.f32.mrf.mxu0
  %v1907 = vadd.f32 %v1812, %v1906
  %1908 = vdwg.mxu0
  %1909 = vmatpush.msra.mxu0 %v375
  %1910 = vmatpush.msra.mxu0 %v371
  %1911 = vmatpush.msra.mxu0 %v367
  %1912 = vmatpush.msra.mxu0 %v363
  %1913 = vmatpush.msra.mxu0 %v359
  %1914 = vmatpush.msra.mxu0 %v355
  %1915 = vmatpush.msra.mxu0 %v351
  %1916 = vmatpush.msra.mxu0 %v347
  %1917 = vmatpush.msra.mxu0 %v343
  %1918 = vmatpush.msra.mxu0 %v339
  %1919 = vmatpush.msra.mxu0 %v335
  %1920 = vmatpush.msra.mxu0 %v331
  %1921 = vmatpush.msra.mxu0 %v327
  %1922 = vmatpush.msra.mxu0 %v323
  %1923 = vmatpush.msra.mxu0 %v319
  %1924 = vmatpush.msra.mxu0 %v315
  %1925 = vmatmul.f32.gmra.mxu0 %v31
  %v1926 = vpop.f32.mrf.mxu0
  %v1927 = vadd.f32 %v1832, %v1926
  %1928 = vmatmul.f32.gmra.mxu0 %v37
  %v1929 = vpop.f32.mrf.mxu0
  %v1930 = vadd.f32 %v1835, %v1929
  %1931 = vmatmul.f32.gmra.mxu0 %v43
  %v1932 = vpop.f32.mrf.mxu0
  %v1933 = vadd.f32 %v1838, %v1932
  %1934 = vmatmul.f32.gmra.mxu0 %v49
  %v1935 = vpop.f32.mrf.mxu0
  %v1936 = vadd.f32 %v1841, %v1935
  %1937 = vmatmul.f32.gmra.mxu0 %v55
  %v1938 = vpop.f32.mrf.mxu0
  %v1939 = vadd.f32 %v1844, %v1938
  %1940 = vmatmul.f32.gmra.mxu0 %v61
  %v1941 = vpop.f32.mrf.mxu0
  %v1942 = vadd.f32 %v1847, %v1941
  %1943 = vmatmul.f32.gmra.mxu0 %v67
  %v1944 = vpop.f32.mrf.mxu0
  %v1945 = vadd.f32 %v1850, %v1944
  %1946 = vmatmul.f32.gmra.mxu0 %v73
  %v1947 = vpop.f32.mrf.mxu0
  %v1948 = vadd.f32 %v1853, %v1947
  %1949 = vmatmul.f32.gmra.mxu0 %v79
  %v1950 = vpop.f32.mrf.mxu0
  %v1951 = vadd.f32 %v1856, %v1950
  %1952 = vmatmul.f32.gmra.mxu0 %v85
  %v1953 = vpop.f32.mrf.mxu0
  %v1954 = vadd.f32 %v1859, %v1953
  %1955 = vmatmul.f32.gmra.mxu0 %v91
  %v1956 = vpop.f32.mrf.mxu0
  %v1957 = vadd.f32 %v1862, %v1956
  %1958 = vmatmul.f32.gmra.mxu0 %v97
  %v1959 = vpop.f32.mrf.mxu0
  %v1960 = vadd.f32 %v1865, %v1959
  %1961 = vmatmul.f32.gmra.mxu0 %v103
  %v1962 = vpop.f32.mrf.mxu0
  %v1963 = vadd.f32 %v1868, %v1962
  %1964 = vmatmul.f32.gmra.mxu0 %v109
  %v1965 = vpop.f32.mrf.mxu0
  %v1966 = vadd.f32 %v1871, %v1965
  %1967 = vmatmul.f32.gmra.mxu0 %v115
  %v1968 = vpop.f32.mrf.mxu0
  %v1969 = vadd.f32 %v1874, %v1968
  %1970 = vmatmul.f32.gmra.mxu0 %v121
  %v1971 = vpop.f32.mrf.mxu0
  %v1972 = vadd.f32 %v1877, %v1971
  %1973 = vmatmul.f32.gmra.mxu0 %v127
  %v1974 = vpop.f32.mrf.mxu0
  %v1975 = vadd.f32 %v1880, %v1974
  %1976 = vmatmul.f32.gmra.mxu0 %v133
  %v1977 = vpop.f32.mrf.mxu0
  %v1978 = vadd.f32 %v1883, %v1977
  %1979 = vmatmul.f32.gmra.mxu0 %v139
  %v1980 = vpop.f32.mrf.mxu0
  %v1981 = vadd.f32 %v1886, %v1980
  %1982 = vmatmul.f32.gmra.mxu0 %v145
  %v1983 = vpop.f32.mrf.mxu0
  %v1984 = vadd.f32 %v1889, %v1983
  %1985 = vmatmul.f32.gmra.mxu0 %v151
  %v1986 = vpop.f32.mrf.mxu0
  %v1987 = vadd.f32 %v1892, %v1986
  %1988 = vmatmul.f32.gmra.mxu0 %v157
  %v1989 = vpop.f32.mrf.mxu0
  %v1990 = vadd.f32 %v1895, %v1989
  %1991 = vmatmul.f32.gmra.mxu0 %v163
  %v1992 = vpop.f32.mrf.mxu0
  %v1993 = vadd.f32 %v1898, %v1992
  %1994 = vmatmul.f32.gmra.mxu0 %v169
  %v1995 = vpop.f32.mrf.mxu0
  %v1996 = vadd.f32 %v1901, %v1995
  %1997 = vmatmul.f32.gmra.mxu0 %v175
  %v1998 = vpop.f32.mrf.mxu0
  %v1999 = vadd.f32 %v1904, %v1998
  %2000 = vmatmul.f32.gmra.mxu0 %v181
  %v2001 = vpop.f32.mrf.mxu0
  %v2002 = vadd.f32 %v1907, %v2001
  %2003 = vdwg.mxu0
  %2004 = vmatpush.msra.mxu0 %v439
  %2005 = vmatpush.msra.mxu0 %v435
  %2006 = vmatpush.msra.mxu0 %v431
  %2007 = vmatpush.msra.mxu0 %v427
  %2008 = vmatpush.msra.mxu0 %v423
  %2009 = vmatpush.msra.mxu0 %v419
  %2010 = vmatpush.msra.mxu0 %v415
  %2011 = vmatpush.msra.mxu0 %v411
  %2012 = vmatpush.msra.mxu0 %v407
  %2013 = vmatpush.msra.mxu0 %v403
  %2014 = vmatpush.msra.mxu0 %v399
  %2015 = vmatpush.msra.mxu0 %v395
  %2016 = vmatpush.msra.mxu0 %v391
  %2017 = vmatpush.msra.mxu0 %v387
  %2018 = vmatpush.msra.mxu0 %v383
  %2019 = vmatpush.msra.mxu0 %v379
  %2020 = vmatmul.f32.gmra.mxu0 %v32
  %v2021 = vpop.f32.mrf.mxu0
  %v2022 = vadd.f32 %v1927, %v2021
  %2023 = vmatmul.f32.gmra.mxu0 %v38
  %v2024 = vpop.f32.mrf.mxu0
  %v2025 = vadd.f32 %v1930, %v2024
  %2026 = vmatmul.f32.gmra.mxu0 %v44
  %v2027 = vpop.f32.mrf.mxu0
  %v2028 = vadd.f32 %v1933, %v2027
  %2029 = vmatmul.f32.gmra.mxu0 %v50
  %v2030 = vpop.f32.mrf.mxu0
  %v2031 = vadd.f32 %v1936, %v2030
  %2032 = vmatmul.f32.gmra.mxu0 %v56
  %v2033 = vpop.f32.mrf.mxu0
  %v2034 = vadd.f32 %v1939, %v2033
  %2035 = vmatmul.f32.gmra.mxu0 %v62
  %v2036 = vpop.f32.mrf.mxu0
  %v2037 = vadd.f32 %v1942, %v2036
  %2038 = vmatmul.f32.gmra.mxu0 %v68
  %v2039 = vpop.f32.mrf.mxu0
  %v2040 = vadd.f32 %v1945, %v2039
  %2041 = vmatmul.f32.gmra.mxu0 %v74
  %v2042 = vpop.f32.mrf.mxu0
  %v2043 = vadd.f32 %v1948, %v2042
  %2044 = vmatmul.f32.gmra.mxu0 %v80
  %v2045 = vpop.f32.mrf.mxu0
  %v2046 = vadd.f32 %v1951, %v2045
  %2047 = vmatmul.f32.gmra.mxu0 %v86
  %v2048 = vpop.f32.mrf.mxu0
  %v2049 = vadd.f32 %v1954, %v2048
  %2050 = vmatmul.f32.gmra.mxu0 %v92
  %v2051 = vpop.f32.mrf.mxu0
  %v2052 = vadd.f32 %v1957, %v2051
  %2053 = vmatmul.f32.gmra.mxu0 %v98
  %v2054 = vpop.f32.mrf.mxu0
  %v2055 = vadd.f32 %v1960, %v2054
  %2056 = vmatmul.f32.gmra.mxu0 %v104
  %v2057 = vpop.f32.mrf.mxu0
  %v2058 = vadd.f32 %v1963, %v2057
  %2059 = vmatmul.f32.gmra.mxu0 %v110
  %v2060 = vpop.f32.mrf.mxu0
  %v2061 = vadd.f32 %v1966, %v2060
  %2062 = vmatmul.f32.gmra.mxu0 %v116
  %v2063 = vpop.f32.mrf.mxu0
  %v2064 = vadd.f32 %v1969, %v2063
  %2065 = vmatmul.f32.gmra.mxu0 %v122
  %v2066 = vpop.f32.mrf.mxu0
  %v2067 = vadd.f32 %v1972, %v2066
  %2068 = vmatmul.f32.gmra.mxu0 %v128
  %v2069 = vpop.f32.mrf.mxu0
  %v2070 = vadd.f32 %v1975, %v2069
  %2071 = vmatmul.f32.gmra.mxu0 %v134
  %v2072 = vpop.f32.mrf.mxu0
  %v2073 = vadd.f32 %v1978, %v2072
  %2074 = vmatmul.f32.gmra.mxu0 %v140
  %v2075 = vpop.f32.mrf.mxu0
  %v2076 = vadd.f32 %v1981, %v2075
  %2077 = vmatmul.f32.gmra.mxu0 %v146
  %v2078 = vpop.f32.mrf.mxu0
  %v2079 = vadd.f32 %v1984, %v2078
  %2080 = vmatmul.f32.gmra.mxu0 %v152
  %v2081 = vpop.f32.mrf.mxu0
  %v2082 = vadd.f32 %v1987, %v2081
  %2083 = vmatmul.f32.gmra.mxu0 %v158
  %v2084 = vpop.f32.mrf.mxu0
  %v2085 = vadd.f32 %v1990, %v2084
  %2086 = vmatmul.f32.gmra.mxu0 %v164
  %v2087 = vpop.f32.mrf.mxu0
  %v2088 = vadd.f32 %v1993, %v2087
  %2089 = vmatmul.f32.gmra.mxu0 %v170
  %v2090 = vpop.f32.mrf.mxu0
  %v2091 = vadd.f32 %v1996, %v2090
  %2092 = vmatmul.f32.gmra.mxu0 %v176
  %v2093 = vpop.f32.mrf.mxu0
  %v2094 = vadd.f32 %v1999, %v2093
  %2095 = vmatmul.f32.gmra.mxu0 %v182
  %v2096 = vpop.f32.mrf.mxu0
  %v2097 = vadd.f32 %v2002, %v2096
  %2098 = vdwg.mxu0
  %2099 = vmatpush.msra.mxu0 %v503
  %2100 = vmatpush.msra.mxu0 %v499
  %2101 = vmatpush.msra.mxu0 %v495
  %2102 = vmatpush.msra.mxu0 %v491
  %2103 = vmatpush.msra.mxu0 %v487
  %2104 = vmatpush.msra.mxu0 %v483
  %2105 = vmatpush.msra.mxu0 %v479
  %2106 = vmatpush.msra.mxu0 %v475
  %2107 = vmatpush.msra.mxu0 %v471
  %2108 = vmatpush.msra.mxu0 %v467
  %2109 = vmatpush.msra.mxu0 %v463
  %2110 = vmatpush.msra.mxu0 %v459
  %2111 = vmatpush.msra.mxu0 %v455
  %2112 = vmatpush.msra.mxu0 %v451
  %2113 = vmatpush.msra.mxu0 %v447
  %2114 = vmatpush.msra.mxu0 %v443
  %2115 = vmatmul.f32.gmra.mxu0 %v33
  %v2116 = vpop.f32.mrf.mxu0
  %v2117 = vadd.f32 %v2022, %v2116
  %2118 = vmatmul.f32.gmra.mxu0 %v39
  %v2119 = vpop.f32.mrf.mxu0
  %v2120 = vadd.f32 %v2025, %v2119
  %2121 = vmatmul.f32.gmra.mxu0 %v45
  %v2122 = vpop.f32.mrf.mxu0
  %v2123 = vadd.f32 %v2028, %v2122
  %2124 = vmatmul.f32.gmra.mxu0 %v51
  %v2125 = vpop.f32.mrf.mxu0
  %v2126 = vadd.f32 %v2031, %v2125
  %2127 = vmatmul.f32.gmra.mxu0 %v57
  %v2128 = vpop.f32.mrf.mxu0
  %v2129 = vadd.f32 %v2034, %v2128
  %2130 = vmatmul.f32.gmra.mxu0 %v63
  %v2131 = vpop.f32.mrf.mxu0
  %v2132 = vadd.f32 %v2037, %v2131
  %2133 = vmatmul.f32.gmra.mxu0 %v69
  %v2134 = vpop.f32.mrf.mxu0
  %v2135 = vadd.f32 %v2040, %v2134
  %2136 = vmatmul.f32.gmra.mxu0 %v75
  %v2137 = vpop.f32.mrf.mxu0
  %v2138 = vadd.f32 %v2043, %v2137
  %2139 = vmatmul.f32.gmra.mxu0 %v81
  %v2140 = vpop.f32.mrf.mxu0
  %v2141 = vadd.f32 %v2046, %v2140
  %2142 = vmatmul.f32.gmra.mxu0 %v87
  %v2143 = vpop.f32.mrf.mxu0
  %v2144 = vadd.f32 %v2049, %v2143
  %2145 = vmatmul.f32.gmra.mxu0 %v93
  %v2146 = vpop.f32.mrf.mxu0
  %v2147 = vadd.f32 %v2052, %v2146
  %2148 = vmatmul.f32.gmra.mxu0 %v99
  %v2149 = vpop.f32.mrf.mxu0
  %v2150 = vadd.f32 %v2055, %v2149
  %2151 = vmatmul.f32.gmra.mxu0 %v105
  %v2152 = vpop.f32.mrf.mxu0
  %v2153 = vadd.f32 %v2058, %v2152
  %2154 = vmatmul.f32.gmra.mxu0 %v111
  %v2155 = vpop.f32.mrf.mxu0
  %v2156 = vadd.f32 %v2061, %v2155
  %2157 = vmatmul.f32.gmra.mxu0 %v117
  %v2158 = vpop.f32.mrf.mxu0
  %v2159 = vadd.f32 %v2064, %v2158
  %2160 = vmatmul.f32.gmra.mxu0 %v123
  %v2161 = vpop.f32.mrf.mxu0
  %v2162 = vadd.f32 %v2067, %v2161
  %2163 = vmatmul.f32.gmra.mxu0 %v129
  %v2164 = vpop.f32.mrf.mxu0
  %v2165 = vadd.f32 %v2070, %v2164
  %2166 = vmatmul.f32.gmra.mxu0 %v135
  %v2167 = vpop.f32.mrf.mxu0
  %v2168 = vadd.f32 %v2073, %v2167
  %2169 = vmatmul.f32.gmra.mxu0 %v141
  %v2170 = vpop.f32.mrf.mxu0
  %v2171 = vadd.f32 %v2076, %v2170
  %2172 = vmatmul.f32.gmra.mxu0 %v147
  %v2173 = vpop.f32.mrf.mxu0
  %v2174 = vadd.f32 %v2079, %v2173
  %2175 = vmatmul.f32.gmra.mxu0 %v153
  %v2176 = vpop.f32.mrf.mxu0
  %v2177 = vadd.f32 %v2082, %v2176
  %2178 = vmatmul.f32.gmra.mxu0 %v159
  %v2179 = vpop.f32.mrf.mxu0
  %v2180 = vadd.f32 %v2085, %v2179
  %2181 = vmatmul.f32.gmra.mxu0 %v165
  %v2182 = vpop.f32.mrf.mxu0
  %v2183 = vadd.f32 %v2088, %v2182
  %2184 = vmatmul.f32.gmra.mxu0 %v171
  %v2185 = vpop.f32.mrf.mxu0
  %v2186 = vadd.f32 %v2091, %v2185
  %2187 = vmatmul.f32.gmra.mxu0 %v177
  %v2188 = vpop.f32.mrf.mxu0
  %v2189 = vadd.f32 %v2094, %v2188
  %2190 = vmatmul.f32.gmra.mxu0 %v183
  %v2191 = vpop.f32.mrf.mxu0
  %v2192 = vadd.f32 %v2097, %v2191
  %2193 = vdwg.mxu0
  %2194 = vmatpush.msra.mxu0 %v567
  %2195 = vmatpush.msra.mxu0 %v563
  %2196 = vmatpush.msra.mxu0 %v559
  %2197 = vmatpush.msra.mxu0 %v555
  %2198 = vmatpush.msra.mxu0 %v551
  %2199 = vmatpush.msra.mxu0 %v547
  %2200 = vmatpush.msra.mxu0 %v543
  %2201 = vmatpush.msra.mxu0 %v539
  %2202 = vmatpush.msra.mxu0 %v535
  %2203 = vmatpush.msra.mxu0 %v531
  %2204 = vmatpush.msra.mxu0 %v527
  %2205 = vmatpush.msra.mxu0 %v523
  %2206 = vmatpush.msra.mxu0 %v519
  %2207 = vmatpush.msra.mxu0 %v515
  %2208 = vmatpush.msra.mxu0 %v511
  %2209 = vmatpush.msra.mxu0 %v507
  %2210 = vmatmul.f32.gmra.mxu0 %v34
  %v2211 = vpop.f32.mrf.mxu0
  %v2212 = vadd.f32 %v2117, %v2211
  %2213 = vmatmul.f32.gmra.mxu0 %v40
  %v2214 = vpop.f32.mrf.mxu0
  %v2215 = vadd.f32 %v2120, %v2214
  %2216 = vmatmul.f32.gmra.mxu0 %v46
  %v2217 = vpop.f32.mrf.mxu0
  %v2218 = vadd.f32 %v2123, %v2217
  %2219 = vmatmul.f32.gmra.mxu0 %v52
  %v2220 = vpop.f32.mrf.mxu0
  %v2221 = vadd.f32 %v2126, %v2220
  %2222 = vmatmul.f32.gmra.mxu0 %v58
  %v2223 = vpop.f32.mrf.mxu0
  %v2224 = vadd.f32 %v2129, %v2223
  %2225 = vmatmul.f32.gmra.mxu0 %v64
  %v2226 = vpop.f32.mrf.mxu0
  %v2227 = vadd.f32 %v2132, %v2226
  %2228 = vmatmul.f32.gmra.mxu0 %v70
  %v2229 = vpop.f32.mrf.mxu0
  %v2230 = vadd.f32 %v2135, %v2229
  %2231 = vmatmul.f32.gmra.mxu0 %v76
  %v2232 = vpop.f32.mrf.mxu0
  %v2233 = vadd.f32 %v2138, %v2232
  %2234 = vmatmul.f32.gmra.mxu0 %v82
  %v2235 = vpop.f32.mrf.mxu0
  %v2236 = vadd.f32 %v2141, %v2235
  %2237 = vmatmul.f32.gmra.mxu0 %v88
  %v2238 = vpop.f32.mrf.mxu0
  %v2239 = vadd.f32 %v2144, %v2238
  %2240 = vmatmul.f32.gmra.mxu0 %v94
  %v2241 = vpop.f32.mrf.mxu0
  %v2242 = vadd.f32 %v2147, %v2241
  %2243 = vmatmul.f32.gmra.mxu0 %v100
  %v2244 = vpop.f32.mrf.mxu0
  %v2245 = vadd.f32 %v2150, %v2244
  %2246 = vmatmul.f32.gmra.mxu0 %v106
  %v2247 = vpop.f32.mrf.mxu0
  %v2248 = vadd.f32 %v2153, %v2247
  %2249 = vmatmul.f32.gmra.mxu0 %v112
  %v2250 = vpop.f32.mrf.mxu0
  %v2251 = vadd.f32 %v2156, %v2250
  %2252 = vmatmul.f32.gmra.mxu0 %v118
  %v2253 = vpop.f32.mrf.mxu0
  %v2254 = vadd.f32 %v2159, %v2253
  %2255 = vmatmul.f32.gmra.mxu0 %v124
  %v2256 = vpop.f32.mrf.mxu0
  %v2257 = vadd.f32 %v2162, %v2256
  %2258 = vmatmul.f32.gmra.mxu0 %v130
  %v2259 = vpop.f32.mrf.mxu0
  %v2260 = vadd.f32 %v2165, %v2259
  %2261 = vmatmul.f32.gmra.mxu0 %v136
  %v2262 = vpop.f32.mrf.mxu0
  %v2263 = vadd.f32 %v2168, %v2262
  %2264 = vmatmul.f32.gmra.mxu0 %v142
  %v2265 = vpop.f32.mrf.mxu0
  %v2266 = vadd.f32 %v2171, %v2265
  %2267 = vmatmul.f32.gmra.mxu0 %v148
  %v2268 = vpop.f32.mrf.mxu0
  %v2269 = vadd.f32 %v2174, %v2268
  %2270 = vmatmul.f32.gmra.mxu0 %v154
  %v2271 = vpop.f32.mrf.mxu0
  %v2272 = vadd.f32 %v2177, %v2271
  %2273 = vmatmul.f32.gmra.mxu0 %v160
  %v2274 = vpop.f32.mrf.mxu0
  %v2275 = vadd.f32 %v2180, %v2274
  %2276 = vmatmul.f32.gmra.mxu0 %v166
  %v2277 = vpop.f32.mrf.mxu0
  %v2278 = vadd.f32 %v2183, %v2277
  %2279 = vmatmul.f32.gmra.mxu0 %v172
  %v2280 = vpop.f32.mrf.mxu0
  %v2281 = vadd.f32 %v2186, %v2280
  %2282 = vmatmul.f32.gmra.mxu0 %v178
  %v2283 = vpop.f32.mrf.mxu0
  %v2284 = vadd.f32 %v2189, %v2283
  %2285 = vmatmul.f32.gmra.mxu0 %v184
  %v2286 = vpop.f32.mrf.mxu0
  %v2287 = vadd.f32 %v2192, %v2286
  %2288 = vdwg.mxu0
  %2289 = vmatpush.msra.mxu0 %v248
  %2290 = vmatpush.msra.mxu0 %v244
  %2291 = vmatpush.msra.mxu0 %v240
  %2292 = vmatpush.msra.mxu0 %v236
  %2293 = vmatpush.msra.mxu0 %v232
  %2294 = vmatpush.msra.mxu0 %v228
  %2295 = vmatpush.msra.mxu0 %v224
  %2296 = vmatpush.msra.mxu0 %v220
  %2297 = vmatpush.msra.mxu0 %v216
  %2298 = vmatpush.msra.mxu0 %v212
  %2299 = vmatpush.msra.mxu0 %v208
  %2300 = vmatpush.msra.mxu0 %v204
  %2301 = vmatpush.msra.mxu0 %v200
  %2302 = vmatpush.msra.mxu0 %v196
  %2303 = vmatpush.msra.mxu0 %v192
  %2304 = vmatpush.msra.mxu0 %v188
  %2305 = vmatmul.f32.gmra.mxu0 %v29
  %v2306 = vpop.f32.mrf.mxu0
  %v2307 = vadd.f32 %v574, %v2306
  %2308 = vmatmul.f32.gmra.mxu0 %v35
  %v2309 = vpop.f32.mrf.mxu0
  %v2310 = vadd.f32 %v574, %v2309
  %2311 = vmatmul.f32.gmra.mxu0 %v41
  %v2312 = vpop.f32.mrf.mxu0
  %v2313 = vadd.f32 %v574, %v2312
  %2314 = vmatmul.f32.gmra.mxu0 %v47
  %v2315 = vpop.f32.mrf.mxu0
  %v2316 = vadd.f32 %v574, %v2315
  %2317 = vmatmul.f32.gmra.mxu0 %v53
  %v2318 = vpop.f32.mrf.mxu0
  %v2319 = vadd.f32 %v574, %v2318
  %2320 = vmatmul.f32.gmra.mxu0 %v59
  %v2321 = vpop.f32.mrf.mxu0
  %v2322 = vadd.f32 %v574, %v2321
  %2323 = vmatmul.f32.gmra.mxu0 %v65
  %v2324 = vpop.f32.mrf.mxu0
  %v2325 = vadd.f32 %v574, %v2324
  %2326 = vmatmul.f32.gmra.mxu0 %v71
  %v2327 = vpop.f32.mrf.mxu0
  %v2328 = vadd.f32 %v574, %v2327
  %2329 = vmatmul.f32.gmra.mxu0 %v77
  %v2330 = vpop.f32.mrf.mxu0
  %v2331 = vadd.f32 %v574, %v2330
  %2332 = vmatmul.f32.gmra.mxu0 %v83
  %v2333 = vpop.f32.mrf.mxu0
  %v2334 = vadd.f32 %v574, %v2333
  %2335 = vmatmul.f32.gmra.mxu0 %v89
  %v2336 = vpop.f32.mrf.mxu0
  %v2337 = vadd.f32 %v574, %v2336
  %2338 = vmatmul.f32.gmra.mxu0 %v95
  %v2339 = vpop.f32.mrf.mxu0
  %v2340 = vadd.f32 %v574, %v2339
  %2341 = vmatmul.f32.gmra.mxu0 %v101
  %v2342 = vpop.f32.mrf.mxu0
  %v2343 = vadd.f32 %v574, %v2342
  %2344 = vmatmul.f32.gmra.mxu0 %v107
  %v2345 = vpop.f32.mrf.mxu0
  %v2346 = vadd.f32 %v574, %v2345
  %2347 = vmatmul.f32.gmra.mxu0 %v113
  %v2348 = vpop.f32.mrf.mxu0
  %v2349 = vadd.f32 %v574, %v2348
  %2350 = vmatmul.f32.gmra.mxu0 %v119
  %v2351 = vpop.f32.mrf.mxu0
  %v2352 = vadd.f32 %v574, %v2351
  %2353 = vmatmul.f32.gmra.mxu0 %v125
  %v2354 = vpop.f32.mrf.mxu0
  %v2355 = vadd.f32 %v574, %v2354
  %2356 = vmatmul.f32.gmra.mxu0 %v131
  %v2357 = vpop.f32.mrf.mxu0
  %v2358 = vadd.f32 %v574, %v2357
  %2359 = vmatmul.f32.gmra.mxu0 %v137
  %v2360 = vpop.f32.mrf.mxu0
  %v2361 = vadd.f32 %v574, %v2360
  %2362 = vmatmul.f32.gmra.mxu0 %v143
  %v2363 = vpop.f32.mrf.mxu0
  %v2364 = vadd.f32 %v574, %v2363
  %2365 = vmatmul.f32.gmra.mxu0 %v149
  %v2366 = vpop.f32.mrf.mxu0
  %v2367 = vadd.f32 %v574, %v2366
  %2368 = vmatmul.f32.gmra.mxu0 %v155
  %v2369 = vpop.f32.mrf.mxu0
  %v2370 = vadd.f32 %v574, %v2369
  %2371 = vmatmul.f32.gmra.mxu0 %v161
  %v2372 = vpop.f32.mrf.mxu0
  %v2373 = vadd.f32 %v574, %v2372
  %2374 = vmatmul.f32.gmra.mxu0 %v167
  %v2375 = vpop.f32.mrf.mxu0
  %v2376 = vadd.f32 %v574, %v2375
  %2377 = vmatmul.f32.gmra.mxu0 %v173
  %v2378 = vpop.f32.mrf.mxu0
  %v2379 = vadd.f32 %v574, %v2378
  %2380 = vmatmul.f32.gmra.mxu0 %v179
  %v2381 = vpop.f32.mrf.mxu0
  %v2382 = vadd.f32 %v574, %v2381
  %2383 = vdwg.mxu0
  %2384 = vmatpush.msra.mxu0 %v312
  %2385 = vmatpush.msra.mxu0 %v308
  %2386 = vmatpush.msra.mxu0 %v304
  %2387 = vmatpush.msra.mxu0 %v300
  %2388 = vmatpush.msra.mxu0 %v296
  %2389 = vmatpush.msra.mxu0 %v292
  %2390 = vmatpush.msra.mxu0 %v288
  %2391 = vmatpush.msra.mxu0 %v284
  %2392 = vmatpush.msra.mxu0 %v280
  %2393 = vmatpush.msra.mxu0 %v276
  %2394 = vmatpush.msra.mxu0 %v272
  %2395 = vmatpush.msra.mxu0 %v268
  %2396 = vmatpush.msra.mxu0 %v264
  %2397 = vmatpush.msra.mxu0 %v260
  %2398 = vmatpush.msra.mxu0 %v256
  %2399 = vmatpush.msra.mxu0 %v252
  %2400 = vmatmul.f32.gmra.mxu0 %v30
  %v2401 = vpop.f32.mrf.mxu0
  %v2402 = vadd.f32 %v2307, %v2401
  %2403 = vmatmul.f32.gmra.mxu0 %v36
  %v2404 = vpop.f32.mrf.mxu0
  %v2405 = vadd.f32 %v2310, %v2404
  %2406 = vmatmul.f32.gmra.mxu0 %v42
  %v2407 = vpop.f32.mrf.mxu0
  %v2408 = vadd.f32 %v2313, %v2407
  %2409 = vmatmul.f32.gmra.mxu0 %v48
  %v2410 = vpop.f32.mrf.mxu0
  %v2411 = vadd.f32 %v2316, %v2410
  %2412 = vmatmul.f32.gmra.mxu0 %v54
  %v2413 = vpop.f32.mrf.mxu0
  %v2414 = vadd.f32 %v2319, %v2413
  %2415 = vmatmul.f32.gmra.mxu0 %v60
  %v2416 = vpop.f32.mrf.mxu0
  %v2417 = vadd.f32 %v2322, %v2416
  %2418 = vmatmul.f32.gmra.mxu0 %v66
  %v2419 = vpop.f32.mrf.mxu0
  %v2420 = vadd.f32 %v2325, %v2419
  %2421 = vmatmul.f32.gmra.mxu0 %v72
  %v2422 = vpop.f32.mrf.mxu0
  %v2423 = vadd.f32 %v2328, %v2422
  %2424 = vmatmul.f32.gmra.mxu0 %v78
  %v2425 = vpop.f32.mrf.mxu0
  %v2426 = vadd.f32 %v2331, %v2425
  %2427 = vmatmul.f32.gmra.mxu0 %v84
  %v2428 = vpop.f32.mrf.mxu0
  %v2429 = vadd.f32 %v2334, %v2428
  %2430 = vmatmul.f32.gmra.mxu0 %v90
  %v2431 = vpop.f32.mrf.mxu0
  %v2432 = vadd.f32 %v2337, %v2431
  %2433 = vmatmul.f32.gmra.mxu0 %v96
  %v2434 = vpop.f32.mrf.mxu0
  %v2435 = vadd.f32 %v2340, %v2434
  %2436 = vmatmul.f32.gmra.mxu0 %v102
  %v2437 = vpop.f32.mrf.mxu0
  %v2438 = vadd.f32 %v2343, %v2437
  %2439 = vmatmul.f32.gmra.mxu0 %v108
  %v2440 = vpop.f32.mrf.mxu0
  %v2441 = vadd.f32 %v2346, %v2440
  %2442 = vmatmul.f32.gmra.mxu0 %v114
  %v2443 = vpop.f32.mrf.mxu0
  %v2444 = vadd.f32 %v2349, %v2443
  %2445 = vmatmul.f32.gmra.mxu0 %v120
  %v2446 = vpop.f32.mrf.mxu0
  %v2447 = vadd.f32 %v2352, %v2446
  %2448 = vmatmul.f32.gmra.mxu0 %v126
  %v2449 = vpop.f32.mrf.mxu0
  %v2450 = vadd.f32 %v2355, %v2449
  %2451 = vmatmul.f32.gmra.mxu0 %v132
  %v2452 = vpop.f32.mrf.mxu0
  %v2453 = vadd.f32 %v2358, %v2452
  %2454 = vmatmul.f32.gmra.mxu0 %v138
  %v2455 = vpop.f32.mrf.mxu0
  %v2456 = vadd.f32 %v2361, %v2455
  %2457 = vmatmul.f32.gmra.mxu0 %v144
  %v2458 = vpop.f32.mrf.mxu0
  %v2459 = vadd.f32 %v2364, %v2458
  %2460 = vmatmul.f32.gmra.mxu0 %v150
  %v2461 = vpop.f32.mrf.mxu0
  %v2462 = vadd.f32 %v2367, %v2461
  %2463 = vmatmul.f32.gmra.mxu0 %v156
  %v2464 = vpop.f32.mrf.mxu0
  %v2465 = vadd.f32 %v2370, %v2464
  %2466 = vmatmul.f32.gmra.mxu0 %v162
  %v2467 = vpop.f32.mrf.mxu0
  %v2468 = vadd.f32 %v2373, %v2467
  %2469 = vmatmul.f32.gmra.mxu0 %v168
  %v2470 = vpop.f32.mrf.mxu0
  %v2471 = vadd.f32 %v2376, %v2470
  %2472 = vmatmul.f32.gmra.mxu0 %v174
  %v2473 = vpop.f32.mrf.mxu0
  %v2474 = vadd.f32 %v2379, %v2473
  %2475 = vmatmul.f32.gmra.mxu0 %v180
  %v2476 = vpop.f32.mrf.mxu0
  %v2477 = vadd.f32 %v2382, %v2476
  %2478 = vdwg.mxu0
  %2479 = vmatpush.msra.mxu0 %v376
  %2480 = vmatpush.msra.mxu0 %v372
  %2481 = vmatpush.msra.mxu0 %v368
  %2482 = vmatpush.msra.mxu0 %v364
  %2483 = vmatpush.msra.mxu0 %v360
  %2484 = vmatpush.msra.mxu0 %v356
  %2485 = vmatpush.msra.mxu0 %v352
  %2486 = vmatpush.msra.mxu0 %v348
  %2487 = vmatpush.msra.mxu0 %v344
  %2488 = vmatpush.msra.mxu0 %v340
  %2489 = vmatpush.msra.mxu0 %v336
  %2490 = vmatpush.msra.mxu0 %v332
  %2491 = vmatpush.msra.mxu0 %v328
  %2492 = vmatpush.msra.mxu0 %v324
  %2493 = vmatpush.msra.mxu0 %v320
  %2494 = vmatpush.msra.mxu0 %v316
  %2495 = vmatmul.f32.gmra.mxu0 %v31
  %v2496 = vpop.f32.mrf.mxu0
  %v2497 = vadd.f32 %v2402, %v2496
  %2498 = vmatmul.f32.gmra.mxu0 %v37
  %v2499 = vpop.f32.mrf.mxu0
  %v2500 = vadd.f32 %v2405, %v2499
  %2501 = vmatmul.f32.gmra.mxu0 %v43
  %v2502 = vpop.f32.mrf.mxu0
  %v2503 = vadd.f32 %v2408, %v2502
  %2504 = vmatmul.f32.gmra.mxu0 %v49
  %v2505 = vpop.f32.mrf.mxu0
  %v2506 = vadd.f32 %v2411, %v2505
  %2507 = vmatmul.f32.gmra.mxu0 %v55
  %v2508 = vpop.f32.mrf.mxu0
  %v2509 = vadd.f32 %v2414, %v2508
  %2510 = vmatmul.f32.gmra.mxu0 %v61
  %v2511 = vpop.f32.mrf.mxu0
  %v2512 = vadd.f32 %v2417, %v2511
  %2513 = vmatmul.f32.gmra.mxu0 %v67
  %v2514 = vpop.f32.mrf.mxu0
  %v2515 = vadd.f32 %v2420, %v2514
  %2516 = vmatmul.f32.gmra.mxu0 %v73
  %v2517 = vpop.f32.mrf.mxu0
  %v2518 = vadd.f32 %v2423, %v2517
  %2519 = vmatmul.f32.gmra.mxu0 %v79
  %v2520 = vpop.f32.mrf.mxu0
  %v2521 = vadd.f32 %v2426, %v2520
  %2522 = vmatmul.f32.gmra.mxu0 %v85
  %v2523 = vpop.f32.mrf.mxu0
  %v2524 = vadd.f32 %v2429, %v2523
  %2525 = vmatmul.f32.gmra.mxu0 %v91
  %v2526 = vpop.f32.mrf.mxu0
  %v2527 = vadd.f32 %v2432, %v2526
  %2528 = vmatmul.f32.gmra.mxu0 %v97
  %v2529 = vpop.f32.mrf.mxu0
  %v2530 = vadd.f32 %v2435, %v2529
  %2531 = vmatmul.f32.gmra.mxu0 %v103
  %v2532 = vpop.f32.mrf.mxu0
  %v2533 = vadd.f32 %v2438, %v2532
  %2534 = vmatmul.f32.gmra.mxu0 %v109
  %v2535 = vpop.f32.mrf.mxu0
  %v2536 = vadd.f32 %v2441, %v2535
  %2537 = vmatmul.f32.gmra.mxu0 %v115
  %v2538 = vpop.f32.mrf.mxu0
  %v2539 = vadd.f32 %v2444, %v2538
  %2540 = vmatmul.f32.gmra.mxu0 %v121
  %v2541 = vpop.f32.mrf.mxu0
  %v2542 = vadd.f32 %v2447, %v2541
  %2543 = vmatmul.f32.gmra.mxu0 %v127
  %v2544 = vpop.f32.mrf.mxu0
  %v2545 = vadd.f32 %v2450, %v2544
  %2546 = vmatmul.f32.gmra.mxu0 %v133
  %v2547 = vpop.f32.mrf.mxu0
  %v2548 = vadd.f32 %v2453, %v2547
  %2549 = vmatmul.f32.gmra.mxu0 %v139
  %v2550 = vpop.f32.mrf.mxu0
  %v2551 = vadd.f32 %v2456, %v2550
  %2552 = vmatmul.f32.gmra.mxu0 %v145
  %v2553 = vpop.f32.mrf.mxu0
  %v2554 = vadd.f32 %v2459, %v2553
  %2555 = vmatmul.f32.gmra.mxu0 %v151
  %v2556 = vpop.f32.mrf.mxu0
  %v2557 = vadd.f32 %v2462, %v2556
  %2558 = vmatmul.f32.gmra.mxu0 %v157
  %v2559 = vpop.f32.mrf.mxu0
  %v2560 = vadd.f32 %v2465, %v2559
  %2561 = vmatmul.f32.gmra.mxu0 %v163
  %v2562 = vpop.f32.mrf.mxu0
  %v2563 = vadd.f32 %v2468, %v2562
  %2564 = vmatmul.f32.gmra.mxu0 %v169
  %v2565 = vpop.f32.mrf.mxu0
  %v2566 = vadd.f32 %v2471, %v2565
  %2567 = vmatmul.f32.gmra.mxu0 %v175
  %v2568 = vpop.f32.mrf.mxu0
  %v2569 = vadd.f32 %v2474, %v2568
  %2570 = vmatmul.f32.gmra.mxu0 %v181
  %v2571 = vpop.f32.mrf.mxu0
  %v2572 = vadd.f32 %v2477, %v2571
  %2573 = vdwg.mxu0
  %2574 = vmatpush.msra.mxu0 %v440
  %2575 = vmatpush.msra.mxu0 %v436
  %2576 = vmatpush.msra.mxu0 %v432
  %2577 = vmatpush.msra.mxu0 %v428
  %2578 = vmatpush.msra.mxu0 %v424
  %2579 = vmatpush.msra.mxu0 %v420
  %2580 = vmatpush.msra.mxu0 %v416
  %2581 = vmatpush.msra.mxu0 %v412
  %2582 = vmatpush.msra.mxu0 %v408
  %2583 = vmatpush.msra.mxu0 %v404
  %2584 = vmatpush.msra.mxu0 %v400
  %2585 = vmatpush.msra.mxu0 %v396
  %2586 = vmatpush.msra.mxu0 %v392
  %2587 = vmatpush.msra.mxu0 %v388
  %2588 = vmatpush.msra.mxu0 %v384
  %2589 = vmatpush.msra.mxu0 %v380
  %2590 = vmatmul.f32.gmra.mxu0 %v32
  %v2591 = vpop.f32.mrf.mxu0
  %v2592 = vadd.f32 %v2497, %v2591
  %2593 = vmatmul.f32.gmra.mxu0 %v38
  %v2594 = vpop.f32.mrf.mxu0
  %v2595 = vadd.f32 %v2500, %v2594
  %2596 = vmatmul.f32.gmra.mxu0 %v44
  %v2597 = vpop.f32.mrf.mxu0
  %v2598 = vadd.f32 %v2503, %v2597
  %2599 = vmatmul.f32.gmra.mxu0 %v50
  %v2600 = vpop.f32.mrf.mxu0
  %v2601 = vadd.f32 %v2506, %v2600
  %2602 = vmatmul.f32.gmra.mxu0 %v56
  %v2603 = vpop.f32.mrf.mxu0
  %v2604 = vadd.f32 %v2509, %v2603
  %2605 = vmatmul.f32.gmra.mxu0 %v62
  %v2606 = vpop.f32.mrf.mxu0
  %v2607 = vadd.f32 %v2512, %v2606
  %2608 = vmatmul.f32.gmra.mxu0 %v68
  %v2609 = vpop.f32.mrf.mxu0
  %v2610 = vadd.f32 %v2515, %v2609
  %2611 = vmatmul.f32.gmra.mxu0 %v74
  %v2612 = vpop.f32.mrf.mxu0
  %v2613 = vadd.f32 %v2518, %v2612
  %2614 = vmatmul.f32.gmra.mxu0 %v80
  %v2615 = vpop.f32.mrf.mxu0
  %v2616 = vadd.f32 %v2521, %v2615
  %2617 = vmatmul.f32.gmra.mxu0 %v86
  %v2618 = vpop.f32.mrf.mxu0
  %v2619 = vadd.f32 %v2524, %v2618
  %2620 = vmatmul.f32.gmra.mxu0 %v92
  %v2621 = vpop.f32.mrf.mxu0
  %v2622 = vadd.f32 %v2527, %v2621
  %2623 = vmatmul.f32.gmra.mxu0 %v98
  %v2624 = vpop.f32.mrf.mxu0
  %v2625 = vadd.f32 %v2530, %v2624
  %2626 = vmatmul.f32.gmra.mxu0 %v104
  %v2627 = vpop.f32.mrf.mxu0
  %v2628 = vadd.f32 %v2533, %v2627
  %2629 = vmatmul.f32.gmra.mxu0 %v110
  %v2630 = vpop.f32.mrf.mxu0
  %v2631 = vadd.f32 %v2536, %v2630
  %2632 = vmatmul.f32.gmra.mxu0 %v116
  %v2633 = vpop.f32.mrf.mxu0
  %v2634 = vadd.f32 %v2539, %v2633
  %2635 = vmatmul.f32.gmra.mxu0 %v122
  %v2636 = vpop.f32.mrf.mxu0
  %v2637 = vadd.f32 %v2542, %v2636
  %2638 = vmatmul.f32.gmra.mxu0 %v128
  %v2639 = vpop.f32.mrf.mxu0
  %v2640 = vadd.f32 %v2545, %v2639
  %2641 = vmatmul.f32.gmra.mxu0 %v134
  %v2642 = vpop.f32.mrf.mxu0
  %v2643 = vadd.f32 %v2548, %v2642
  %2644 = vmatmul.f32.gmra.mxu0 %v140
  %v2645 = vpop.f32.mrf.mxu0
  %v2646 = vadd.f32 %v2551, %v2645
  %2647 = vmatmul.f32.gmra.mxu0 %v146
  %v2648 = vpop.f32.mrf.mxu0
  %v2649 = vadd.f32 %v2554, %v2648
  %2650 = vmatmul.f32.gmra.mxu0 %v152
  %v2651 = vpop.f32.mrf.mxu0
  %v2652 = vadd.f32 %v2557, %v2651
  %2653 = vmatmul.f32.gmra.mxu0 %v158
  %v2654 = vpop.f32.mrf.mxu0
  %v2655 = vadd.f32 %v2560, %v2654
  %2656 = vmatmul.f32.gmra.mxu0 %v164
  %v2657 = vpop.f32.mrf.mxu0
  %v2658 = vadd.f32 %v2563, %v2657
  %2659 = vmatmul.f32.gmra.mxu0 %v170
  %v2660 = vpop.f32.mrf.mxu0
  %v2661 = vadd.f32 %v2566, %v2660
  %2662 = vmatmul.f32.gmra.mxu0 %v176
  %v2663 = vpop.f32.mrf.mxu0
  %v2664 = vadd.f32 %v2569, %v2663
  %2665 = vmatmul.f32.gmra.mxu0 %v182
  %v2666 = vpop.f32.mrf.mxu0
  %v2667 = vadd.f32 %v2572, %v2666
  %2668 = vdwg.mxu0
  %2669 = vmatpush.msra.mxu0 %v504
  %2670 = vmatpush.msra.mxu0 %v500
  %2671 = vmatpush.msra.mxu0 %v496
  %2672 = vmatpush.msra.mxu0 %v492
  %2673 = vmatpush.msra.mxu0 %v488
  %2674 = vmatpush.msra.mxu0 %v484
  %2675 = vmatpush.msra.mxu0 %v480
  %2676 = vmatpush.msra.mxu0 %v476
  %2677 = vmatpush.msra.mxu0 %v472
  %2678 = vmatpush.msra.mxu0 %v468
  %2679 = vmatpush.msra.mxu0 %v464
  %2680 = vmatpush.msra.mxu0 %v460
  %2681 = vmatpush.msra.mxu0 %v456
  %2682 = vmatpush.msra.mxu0 %v452
  %2683 = vmatpush.msra.mxu0 %v448
  %2684 = vmatpush.msra.mxu0 %v444
  %2685 = vmatmul.f32.gmra.mxu0 %v33
  %v2686 = vpop.f32.mrf.mxu0
  %v2687 = vadd.f32 %v2592, %v2686
  %2688 = vmatmul.f32.gmra.mxu0 %v39
  %v2689 = vpop.f32.mrf.mxu0
  %v2690 = vadd.f32 %v2595, %v2689
  %2691 = vmatmul.f32.gmra.mxu0 %v45
  %v2692 = vpop.f32.mrf.mxu0
  %v2693 = vadd.f32 %v2598, %v2692
  %2694 = vmatmul.f32.gmra.mxu0 %v51
  %v2695 = vpop.f32.mrf.mxu0
  %v2696 = vadd.f32 %v2601, %v2695
  %2697 = vmatmul.f32.gmra.mxu0 %v57
  %v2698 = vpop.f32.mrf.mxu0
  %v2699 = vadd.f32 %v2604, %v2698
  %2700 = vmatmul.f32.gmra.mxu0 %v63
  %v2701 = vpop.f32.mrf.mxu0
  %v2702 = vadd.f32 %v2607, %v2701
  %2703 = vmatmul.f32.gmra.mxu0 %v69
  %v2704 = vpop.f32.mrf.mxu0
  %v2705 = vadd.f32 %v2610, %v2704
  %2706 = vmatmul.f32.gmra.mxu0 %v75
  %v2707 = vpop.f32.mrf.mxu0
  %v2708 = vadd.f32 %v2613, %v2707
  %2709 = vmatmul.f32.gmra.mxu0 %v81
  %v2710 = vpop.f32.mrf.mxu0
  %v2711 = vadd.f32 %v2616, %v2710
  %2712 = vmatmul.f32.gmra.mxu0 %v87
  %v2713 = vpop.f32.mrf.mxu0
  %v2714 = vadd.f32 %v2619, %v2713
  %2715 = vmatmul.f32.gmra.mxu0 %v93
  %v2716 = vpop.f32.mrf.mxu0
  %v2717 = vadd.f32 %v2622, %v2716
  %2718 = vmatmul.f32.gmra.mxu0 %v99
  %v2719 = vpop.f32.mrf.mxu0
  %v2720 = vadd.f32 %v2625, %v2719
  %2721 = vmatmul.f32.gmra.mxu0 %v105
  %v2722 = vpop.f32.mrf.mxu0
  %v2723 = vadd.f32 %v2628, %v2722
  %2724 = vmatmul.f32.gmra.mxu0 %v111
  %v2725 = vpop.f32.mrf.mxu0
  %v2726 = vadd.f32 %v2631, %v2725
  %2727 = vmatmul.f32.gmra.mxu0 %v117
  %v2728 = vpop.f32.mrf.mxu0
  %v2729 = vadd.f32 %v2634, %v2728
  %2730 = vmatmul.f32.gmra.mxu0 %v123
  %v2731 = vpop.f32.mrf.mxu0
  %v2732 = vadd.f32 %v2637, %v2731
  %2733 = vmatmul.f32.gmra.mxu0 %v129
  %v2734 = vpop.f32.mrf.mxu0
  %v2735 = vadd.f32 %v2640, %v2734
  %2736 = vmatmul.f32.gmra.mxu0 %v135
  %v2737 = vpop.f32.mrf.mxu0
  %v2738 = vadd.f32 %v2643, %v2737
  %2739 = vmatmul.f32.gmra.mxu0 %v141
  %v2740 = vpop.f32.mrf.mxu0
  %v2741 = vadd.f32 %v2646, %v2740
  %2742 = vmatmul.f32.gmra.mxu0 %v147
  %v2743 = vpop.f32.mrf.mxu0
  %v2744 = vadd.f32 %v2649, %v2743
  %2745 = vmatmul.f32.gmra.mxu0 %v153
  %v2746 = vpop.f32.mrf.mxu0
  %v2747 = vadd.f32 %v2652, %v2746
  %2748 = vmatmul.f32.gmra.mxu0 %v159
  %v2749 = vpop.f32.mrf.mxu0
  %v2750 = vadd.f32 %v2655, %v2749
  %2751 = vmatmul.f32.gmra.mxu0 %v165
  %v2752 = vpop.f32.mrf.mxu0
  %v2753 = vadd.f32 %v2658, %v2752
  %2754 = vmatmul.f32.gmra.mxu0 %v171
  %v2755 = vpop.f32.mrf.mxu0
  %v2756 = vadd.f32 %v2661, %v2755
  %2757 = vmatmul.f32.gmra.mxu0 %v177
  %v2758 = vpop.f32.mrf.mxu0
  %v2759 = vadd.f32 %v2664, %v2758
  %2760 = vmatmul.f32.gmra.mxu0 %v183
  %v2761 = vpop.f32.mrf.mxu0
  %v2762 = vadd.f32 %v2667, %v2761
  %2763 = vdwg.mxu0
  %2764 = vmatpush.msra.mxu0 %v568
  %2765 = vmatpush.msra.mxu0 %v564
  %2766 = vmatpush.msra.mxu0 %v560
  %2767 = vmatpush.msra.mxu0 %v556
  %2768 = vmatpush.msra.mxu0 %v552
  %2769 = vmatpush.msra.mxu0 %v548
  %2770 = vmatpush.msra.mxu0 %v544
  %2771 = vmatpush.msra.mxu0 %v540
  %2772 = vmatpush.msra.mxu0 %v536
  %2773 = vmatpush.msra.mxu0 %v532
  %2774 = vmatpush.msra.mxu0 %v528
  %2775 = vmatpush.msra.mxu0 %v524
  %2776 = vmatpush.msra.mxu0 %v520
  %2777 = vmatpush.msra.mxu0 %v516
  %2778 = vmatpush.msra.mxu0 %v512
  %2779 = vmatpush.msra.mxu0 %v508
  %2780 = vmatmul.f32.gmra.mxu0 %v34
  %v2781 = vpop.f32.mrf.mxu0
  %v2782 = vadd.f32 %v2687, %v2781
  %2783 = vmatmul.f32.gmra.mxu0 %v40
  %v2784 = vpop.f32.mrf.mxu0
  %v2785 = vadd.f32 %v2690, %v2784
  %2786 = vmatmul.f32.gmra.mxu0 %v46
  %v2787 = vpop.f32.mrf.mxu0
  %v2788 = vadd.f32 %v2693, %v2787
  %2789 = vmatmul.f32.gmra.mxu0 %v52
  %v2790 = vpop.f32.mrf.mxu0
  %v2791 = vadd.f32 %v2696, %v2790
  %2792 = vmatmul.f32.gmra.mxu0 %v58
  %v2793 = vpop.f32.mrf.mxu0
  %v2794 = vadd.f32 %v2699, %v2793
  %2795 = vmatmul.f32.gmra.mxu0 %v64
  %v2796 = vpop.f32.mrf.mxu0
  %v2797 = vadd.f32 %v2702, %v2796
  %2798 = vmatmul.f32.gmra.mxu0 %v70
  %v2799 = vpop.f32.mrf.mxu0
  %v2800 = vadd.f32 %v2705, %v2799
  %2801 = vmatmul.f32.gmra.mxu0 %v76
  %v2802 = vpop.f32.mrf.mxu0
  %v2803 = vadd.f32 %v2708, %v2802
  %2804 = vmatmul.f32.gmra.mxu0 %v82
  %v2805 = vpop.f32.mrf.mxu0
  %v2806 = vadd.f32 %v2711, %v2805
  %2807 = vmatmul.f32.gmra.mxu0 %v88
  %v2808 = vpop.f32.mrf.mxu0
  %v2809 = vadd.f32 %v2714, %v2808
  %2810 = vmatmul.f32.gmra.mxu0 %v94
  %v2811 = vpop.f32.mrf.mxu0
  %v2812 = vadd.f32 %v2717, %v2811
  %2813 = vmatmul.f32.gmra.mxu0 %v100
  %v2814 = vpop.f32.mrf.mxu0
  %v2815 = vadd.f32 %v2720, %v2814
  %2816 = vmatmul.f32.gmra.mxu0 %v106
  %v2817 = vpop.f32.mrf.mxu0
  %v2818 = vadd.f32 %v2723, %v2817
  %2819 = vmatmul.f32.gmra.mxu0 %v112
  %v2820 = vpop.f32.mrf.mxu0
  %v2821 = vadd.f32 %v2726, %v2820
  %2822 = vmatmul.f32.gmra.mxu0 %v118
  %v2823 = vpop.f32.mrf.mxu0
  %v2824 = vadd.f32 %v2729, %v2823
  %2825 = vmatmul.f32.gmra.mxu0 %v124
  %v2826 = vpop.f32.mrf.mxu0
  %v2827 = vadd.f32 %v2732, %v2826
  %2828 = vmatmul.f32.gmra.mxu0 %v130
  %v2829 = vpop.f32.mrf.mxu0
  %v2830 = vadd.f32 %v2735, %v2829
  %2831 = vmatmul.f32.gmra.mxu0 %v136
  %v2832 = vpop.f32.mrf.mxu0
  %v2833 = vadd.f32 %v2738, %v2832
  %2834 = vmatmul.f32.gmra.mxu0 %v142
  %v2835 = vpop.f32.mrf.mxu0
  %v2836 = vadd.f32 %v2741, %v2835
  %2837 = vmatmul.f32.gmra.mxu0 %v148
  %v2838 = vpop.f32.mrf.mxu0
  %v2839 = vadd.f32 %v2744, %v2838
  %2840 = vmatmul.f32.gmra.mxu0 %v154
  %v2841 = vpop.f32.mrf.mxu0
  %v2842 = vadd.f32 %v2747, %v2841
  %2843 = vmatmul.f32.gmra.mxu0 %v160
  %v2844 = vpop.f32.mrf.mxu0
  %v2845 = vadd.f32 %v2750, %v2844
  %2846 = vmatmul.f32.gmra.mxu0 %v166
  %v2847 = vpop.f32.mrf.mxu0
  %v2848 = vadd.f32 %v2753, %v2847
  %2849 = vmatmul.f32.gmra.mxu0 %v172
  %v2850 = vpop.f32.mrf.mxu0
  %v2851 = vadd.f32 %v2756, %v2850
  %2852 = vmatmul.f32.gmra.mxu0 %v178
  %v2853 = vpop.f32.mrf.mxu0
  %v2854 = vadd.f32 %v2759, %v2853
  %2855 = vmatmul.f32.gmra.mxu0 %v184
  %v2856 = vpop.f32.mrf.mxu0
  %v2857 = vadd.f32 %v2762, %v2856
  %2858 = vdwg.mxu0
  %2859 = vst [vmem:[#allocation2] sm:$0xff] %v1072
  %2860 = vst [vmem:[#allocation2 + $0x8] sm:$0xff] %v1642
  %2861 = vst [vmem:[#allocation2 + $0x10] sm:$0xff] %v2212
  %2862 = vst [vmem:[#allocation2 + $0x18] sm:$0xff] %v2782
  %2863 = vst [vmem:[#allocation2 + $0x20] sm:$0xff] %v1075
  %2864 = vst [vmem:[#allocation2 + $0x28] sm:$0xff] %v1645
  %2865 = vst [vmem:[#allocation2 + $0x30] sm:$0xff] %v2215
  %2866 = vst [vmem:[#allocation2 + $0x38] sm:$0xff] %v2785
  %2867 = vst [vmem:[#allocation2 + $0x40] sm:$0xff] %v1078
  %2868 = vst [vmem:[#allocation2 + $0x48] sm:$0xff] %v1648
  %2869 = vst [vmem:[#allocation2 + $0x50] sm:$0xff] %v2218
  %2870 = vst [vmem:[#allocation2 + $0x58] sm:$0xff] %v2788
  %2871 = vst [vmem:[#allocation2 + $0x60] sm:$0xff] %v1081
  %2872 = vst [vmem:[#allocation2 + $0x68] sm:$0xff] %v1651
  %2873 = vst [vmem:[#allocation2 + $0x70] sm:$0xff] %v2221
  %2874 = vst [vmem:[#allocation2 + $0x78] sm:$0xff] %v2791
  %2875 = vst [vmem:[#allocation2 + $0x80] sm:$0xff] %v1084
  %2876 = vst [vmem:[#allocation2 + $0x88] sm:$0xff] %v1654
  %2877 = vst [vmem:[#allocation2 + $0x90] sm:$0xff] %v2224
  %2878 = vst [vmem:[#allocation2 + $0x98] sm:$0xff] %v2794
  %2879 = vst [vmem:[#allocation2 + $0xa0] sm:$0xff] %v1087
  %2880 = vst [vmem:[#allocation2 + $0xa8] sm:$0xff] %v1657
  %2881 = vst [vmem:[#allocation2 + $0xb0] sm:$0xff] %v2227
  %2882 = vst [vmem:[#allocation2 + $0xb8] sm:$0xff] %v2797
  %2883 = vst [vmem:[#allocation2 + $0xc0] sm:$0xff] %v1090
  %2884 = vst [vmem:[#allocation2 + $0xc8] sm:$0xff] %v1660
  %2885 = vst [vmem:[#allocation2 + $0xd0] sm:$0xff] %v2230
  %2886 = vst [vmem:[#allocation2 + $0xd8] sm:$0xff] %v2800
  %2887 = vst [vmem:[#allocation2 + $0xe0] sm:$0xff] %v1093
  %2888 = vst [vmem:[#allocation2 + $0xe8] sm:$0xff] %v1663
  %2889 = vst [vmem:[#allocation2 + $0xf0] sm:$0xff] %v2233
  %2890 = vst [vmem:[#allocation2 + $0xf8] sm:$0xff] %v2803
  %2891 = vst [vmem:[#allocation2 + $0x100] sm:$0xff] %v1096
  %2892 = vst [vmem:[#allocation2 + $0x108] sm:$0xff] %v1666
  %2893 = vst [vmem:[#allocation2 + $0x110] sm:$0xff] %v2236
  %2894 = vst [vmem:[#allocation2 + $0x118] sm:$0xff] %v2806
  %2895 = vst [vmem:[#allocation2 + $0x120] sm:$0xff] %v1099
  %2896 = vst [vmem:[#allocation2 + $0x128] sm:$0xff] %v1669
  %2897 = vst [vmem:[#allocation2 + $0x130] sm:$0xff] %v2239
  %2898 = vst [vmem:[#allocation2 + $0x138] sm:$0xff] %v2809
  %2899 = vst [vmem:[#allocation2 + $0x140] sm:$0xff] %v1102
  %2900 = vst [vmem:[#allocation2 + $0x148] sm:$0xff] %v1672
  %2901 = vst [vmem:[#allocation2 + $0x150] sm:$0xff] %v2242
  %2902 = vst [vmem:[#allocation2 + $0x158] sm:$0xff] %v2812
  %2903 = vst [vmem:[#allocation2 + $0x160] sm:$0xff] %v1105
  %2904 = vst [vmem:[#allocation2 + $0x168] sm:$0xff] %v1675
  %2905 = vst [vmem:[#allocation2 + $0x170] sm:$0xff] %v2245
  %2906 = vst [vmem:[#allocation2 + $0x178] sm:$0xff] %v2815
  %2907 = vst [vmem:[#allocation2 + $0x180] sm:$0xff] %v1108
  %2908 = vst [vmem:[#allocation2 + $0x188] sm:$0xff] %v1678
  %2909 = vst [vmem:[#allocation2 + $0x190] sm:$0xff] %v2248
  %2910 = vst [vmem:[#allocation2 + $0x198] sm:$0xff] %v2818
  %2911 = vst [vmem:[#allocation2 + $0x1a0] sm:$0xff] %v1111
  %2912 = vst [vmem:[#allocation2 + $0x1a8] sm:$0xff] %v1681
  %2913 = vst [vmem:[#allocation2 + $0x1b0] sm:$0xff] %v2251
  %2914 = vst [vmem:[#allocation2 + $0x1b8] sm:$0xff] %v2821
  %2915 = vst [vmem:[#allocation2 + $0x1c0] sm:$0xff] %v1114
  %2916 = vst [vmem:[#allocation2 + $0x1c8] sm:$0xff] %v1684
  %2917 = vst [vmem:[#allocation2 + $0x1d0] sm:$0xff] %v2254
  %2918 = vst [vmem:[#allocation2 + $0x1d8] sm:$0xff] %v2824
  %2919 = vst [vmem:[#allocation2 + $0x1e0] sm:$0xff] %v1117
  %2920 = vst [vmem:[#allocation2 + $0x1e8] sm:$0xff] %v1687
  %2921 = vst [vmem:[#allocation2 + $0x1f0] sm:$0xff] %v2257
  %2922 = vst [vmem:[#allocation2 + $0x1f8] sm:$0xff] %v2827
  %2923 = vst [vmem:[#allocation2 + $0x200] sm:$0xff] %v1120
  %2924 = vst [vmem:[#allocation2 + $0x208] sm:$0xff] %v1690
  %2925 = vst [vmem:[#allocation2 + $0x210] sm:$0xff] %v2260
  %2926 = vst [vmem:[#allocation2 + $0x218] sm:$0xff] %v2830
  %2927 = vst [vmem:[#allocation2 + $0x220] sm:$0xff] %v1123
  %2928 = vst [vmem:[#allocation2 + $0x228] sm:$0xff] %v1693
  %2929 = vst [vmem:[#allocation2 + $0x230] sm:$0xff] %v2263
  %2930 = vst [vmem:[#allocation2 + $0x238] sm:$0xff] %v2833
  %2931 = vst [vmem:[#allocation2 + $0x240] sm:$0xff] %v1126
  %2932 = vst [vmem:[#allocation2 + $0x248] sm:$0xff] %v1696
  %2933 = vst [vmem:[#allocation2 + $0x250] sm:$0xff] %v2266
  %2934 = vst [vmem:[#allocation2 + $0x258] sm:$0xff] %v2836
  %2935 = vst [vmem:[#allocation2 + $0x260] sm:$0xff] %v1129
  %2936 = vst [vmem:[#allocation2 + $0x268] sm:$0xff] %v1699
  %2937 = vst [vmem:[#allocation2 + $0x270] sm:$0xff] %v2269
  %2938 = vst [vmem:[#allocation2 + $0x278] sm:$0xff] %v2839
  %2939 = vst [vmem:[#allocation2 + $0x280] sm:$0xff] %v1132
  %2940 = vst [vmem:[#allocation2 + $0x288] sm:$0xff] %v1702
  %2941 = vst [vmem:[#allocation2 + $0x290] sm:$0xff] %v2272
  %2942 = vst [vmem:[#allocation2 + $0x298] sm:$0xff] %v2842
  %2943 = vst [vmem:[#allocation2 + $0x2a0] sm:$0xff] %v1135
  %2944 = vst [vmem:[#allocation2 + $0x2a8] sm:$0xff] %v1705
  %2945 = vst [vmem:[#allocation2 + $0x2b0] sm:$0xff] %v2275
  %2946 = vst [vmem:[#allocation2 + $0x2b8] sm:$0xff] %v2845
  %2947 = vst [vmem:[#allocation2 + $0x2c0] sm:$0xff] %v1138
  %2948 = vst [vmem:[#allocation2 + $0x2c8] sm:$0xff] %v1708
  %2949 = vst [vmem:[#allocation2 + $0x2d0] sm:$0xff] %v2278
  %2950 = vst [vmem:[#allocation2 + $0x2d8] sm:$0xff] %v2848
  %2951 = vst [vmem:[#allocation2 + $0x2e0] sm:$0xff] %v1141
  %2952 = vst [vmem:[#allocation2 + $0x2e8] sm:$0xff] %v1711
  %2953 = vst [vmem:[#allocation2 + $0x2f0] sm:$0xff] %v2281
  %2954 = vst [vmem:[#allocation2 + $0x2f8] sm:$0xff] %v2851
  %2955 = vst [vmem:[#allocation2 + $0x300] sm:$0xff] %v1144
  %2956 = vst [vmem:[#allocation2 + $0x308] sm:$0xff] %v1714
  %2957 = vst [vmem:[#allocation2 + $0x310] sm:$0xff] %v2284
  %2958 = vst [vmem:[#allocation2 + $0x318] sm:$0xff] %v2854
  %2959 = vst [vmem:[#allocation2 + $0x320] sm:$0xff] %v1147
  %2960 = vst [vmem:[#allocation2 + $0x328] sm:$0xff] %v1717
  %2961 = vst [vmem:[#allocation2 + $0x330] sm:$0xff] %v2287
  %2962 = vst [vmem:[#allocation2 + $0x338] sm:$0xff] %v2857
  %v2963 = vld [vmem:[%s2] sm:$0xff]
  %v2964 = vld [vmem:[%s2 + $0x8] sm:$0xff]
  %v2965 = vld [vmem:[%s2 + $0x10] sm:$0xff]
  %v2966 = vld [vmem:[%s2 + $0x18] sm:$0xff]
  %v2967 = vld [vmem:[%s2 + $0x20] sm:$0xff]
  %v2968 = vld [vmem:[%s2 + $0x28] sm:$0xff]
  %v2969 = vld [vmem:[%s2 + $0x30] sm:$0xff]
  %v2970 = vld [vmem:[%s2 + $0x38] sm:$0xff]
  %v2971 = vld [vmem:[%s2 + $0x40] sm:$0xff]
  %v2972 = vld [vmem:[%s2 + $0x48] sm:$0xff]
  %v2973 = vld [vmem:[%s2 + $0x50] sm:$0xff]
  %v2974 = vld [vmem:[%s2 + $0x58] sm:$0xff]
  %v2975 = vld [vmem:[%s2 + $0x60] sm:$0xff]
  %v2976 = vld [vmem:[%s2 + $0x68] sm:$0xff]
  %v2977 = vld [vmem:[%s2 + $0x70] sm:$0xff]
  %v2978 = vld [vmem:[%s2 + $0x78] sm:$0xff]
  %v2979 = vld [vmem:[%s2 + $0x80] sm:$0xff]
  %v2980 = vld [vmem:[%s2 + $0x88] sm:$0xff]
  %v2981 = vld [vmem:[%s2 + $0x90] sm:$0xff]
  %v2982 = vld [vmem:[%s2 + $0x98] sm:$0xff]
  %v2983 = vld [vmem:[%s2 + $0xa0] sm:$0xff]
  %v2984 = vld [vmem:[%s2 + $0xa8] sm:$0xff]
  %v2985 = vld [vmem:[%s2 + $0xb0] sm:$0xff]
  %v2986 = vld [vmem:[%s2 + $0xb8] sm:$0xff]
  %v2987 = vld [vmem:[%s2 + $0xc0] sm:$0xff]
  %v2988 = vld [vmem:[%s2 + $0xc8] sm:$0xff]
  %v2989 = vld [vmem:[%s2 + $0xd0] sm:$0xff]
  %v2990 = vld [vmem:[%s2 + $0xd8] sm:$0xff]
  %v2991 = vld [vmem:[%s2 + $0xe0] sm:$0xff]
  %v2992 = vld [vmem:[%s2 + $0xe8] sm:$0xff]
  %v2993 = vld [vmem:[%s2 + $0xf0] sm:$0xff]
  %v2994 = vld [vmem:[%s2 + $0xf8] sm:$0xff]
  %v2995 = vld [vmem:[%s2 + $0x100] sm:$0xff]
  %v2996 = vld [vmem:[%s2 + $0x108] sm:$0xff]
  %v2997 = vld [vmem:[%s2 + $0x110] sm:$0xff]
  %v2998 = vld [vmem:[%s2 + $0x118] sm:$0xff]
  %v2999 = vld [vmem:[%s2 + $0x120] sm:$0xff]
  %v3000 = vld [vmem:[%s2 + $0x128] sm:$0xff]
  %v3001 = vld [vmem:[%s2 + $0x130] sm:$0xff]
  %v3002 = vld [vmem:[%s2 + $0x138] sm:$0xff]
  %v3003 = vld [vmem:[%s2 + $0x140] sm:$0xff]
  %v3004 = vld [vmem:[%s2 + $0x148] sm:$0xff]
  %v3005 = vld [vmem:[%s2 + $0x150] sm:$0xff]
  %v3006 = vld [vmem:[%s2 + $0x158] sm:$0xff]
  %v3007 = vld [vmem:[%s2 + $0x160] sm:$0xff]
  %v3008 = vld [vmem:[%s2 + $0x168] sm:$0xff]
  %v3009 = vld [vmem:[%s2 + $0x170] sm:$0xff]
  %v3010 = vld [vmem:[%s2 + $0x178] sm:$0xff]
  %v3011 = vld [vmem:[%s2 + $0x180] sm:$0xff]
  %v3012 = vld [vmem:[%s2 + $0x188] sm:$0xff]
  %v3013 = vld [vmem:[%s2 + $0x190] sm:$0xff]
  %v3014 = vld [vmem:[%s2 + $0x198] sm:$0xff]
  %v3015 = vld [vmem:[%s2 + $0x1a0] sm:$0xff]
  %v3016 = vld [vmem:[%s2 + $0x1a8] sm:$0xff]
  %v3017 = vld [vmem:[%s2 + $0x1b0] sm:$0xff]
  %v3018 = vld [vmem:[%s2 + $0x1b8] sm:$0xff]
  %v3019 = vld [vmem:[%s2 + $0x1c0] sm:$0xff]
  %v3020 = vld [vmem:[%s2 + $0x1c8] sm:$0xff]
  %v3021 = vld [vmem:[%s2 + $0x1d0] sm:$0xff]
  %v3022 = vld [vmem:[%s2 + $0x1d8] sm:$0xff]
  %v3023 = vld [vmem:[%s2 + $0x1e0] sm:$0xff]
  %v3024 = vld [vmem:[%s2 + $0x1e8] sm:$0xff]
  %v3025 = vld [vmem:[%s2 + $0x1f0] sm:$0xff]
  %v3026 = vld [vmem:[%s2 + $0x1f8] sm:$0xff]
  %s3027 = smul.u32 0, 4
  %s3028 = smul.addr %s3027, 8
  %s3029 = scalar_lea.vmem [#allocation2], %s3028
  %v3030 = vld [vmem:[%s3029] sm:$0xff]
  %v3031 = vld [vmem:[%s3029 + $0x8] sm:$0xff]
  %v3032 = vld [vmem:[%s3029 + $0x10] sm:$0xff]
  %v3033 = vld [vmem:[%s3029 + $0x18] sm:$0xff]
  %3034 = vmatpush.msra.mxu0 %v3023
  %3035 = vmatpush.msra.mxu0 %v3019
  %3036 = vmatpush.msra.mxu0 %v3015
  %3037 = vmatpush.msra.mxu0 %v3011
  %3038 = vmatpush.msra.mxu0 %v3007
  %3039 = vmatpush.msra.mxu0 %v3003
  %3040 = vmatpush.msra.mxu0 %v2999
  %3041 = vmatpush.msra.mxu0 %v2995
  %3042 = vmatpush.msra.mxu0 %v2991
  %3043 = vmatpush.msra.mxu0 %v2987
  %3044 = vmatpush.msra.mxu0 %v2983
  %3045 = vmatpush.msra.mxu0 %v2979
  %3046 = vmatpush.msra.mxu0 %v2975
  %3047 = vmatpush.msra.mxu0 %v2971
  %3048 = vmatpush.msra.mxu0 %v2967
  %3049 = vmatpush.msra.mxu0 %v2963
  %3050 = vmatmul.f32.gmra.mxu0 0.0
  %v3051 = vpop.f32.mrf.mxu0
  %v3052 = vadd.f32 0.0, %v3051
  %3053 = vdwg.mxu0
  %3054 = vmatpush.msra.mxu0 %v3024
  %3055 = vmatpush.msra.mxu0 %v3020
  %3056 = vmatpush.msra.mxu0 %v3016
  %3057 = vmatpush.msra.mxu0 %v3012
  %3058 = vmatpush.msra.mxu0 %v3008
  %3059 = vmatpush.msra.mxu0 %v3004
  %3060 = vmatpush.msra.mxu0 %v3000
  %3061 = vmatpush.msra.mxu0 %v2996
  %3062 = vmatpush.msra.mxu0 %v2992
  %3063 = vmatpush.msra.mxu0 %v2988
  %3064 = vmatpush.msra.mxu0 %v2984
  %3065 = vmatpush.msra.mxu0 %v2980
  %3066 = vmatpush.msra.mxu0 %v2976
  %3067 = vmatpush.msra.mxu0 %v2972
  %3068 = vmatpush.msra.mxu0 %v2968
  %3069 = vmatpush.msra.mxu0 %v2964
  %3070 = vmatmul.f32.gmra.mxu0 0.0
  %v3071 = vpop.f32.mrf.mxu0
  %v3072 = vadd.f32 0.0, %v3071
  %3073 = vdwg.mxu0
  %3074 = vmatpush.msra.mxu0 %v3025
  %3075 = vmatpush.msra.mxu0 %v3021
  %3076 = vmatpush.msra.mxu0 %v3017
  %3077 = vmatpush.msra.mxu0 %v3013
  %3078 = vmatpush.msra.mxu0 %v3009
  %3079 = vmatpush.msra.mxu0 %v3005
  %3080 = vmatpush.msra.mxu0 %v3001
  %3081 = vmatpush.msra.mxu0 %v2997
  %3082 = vmatpush.msra.mxu0 %v2993
  %3083 = vmatpush.msra.mxu0 %v2989
  %3084 = vmatpush.msra.mxu0 %v2985
  %3085 = vmatpush.msra.mxu0 %v2981
  %3086 = vmatpush.msra.mxu0 %v2977
  %3087 = vmatpush.msra.mxu0 %v2973
  %3088 = vmatpush.msra.mxu0 %v2969
  %3089 = vmatpush.msra.mxu0 %v2965
  %3090 = vmatmul.f32.gmra.mxu0 0.0
  %v3091 = vpop.f32.mrf.mxu0
  %v3092 = vadd.f32 0.0, %v3091
  %3093 = vdwg.mxu0
  %3094 = vmatpush.msra.mxu0 %v3026
  %3095 = vmatpush.msra.mxu0 %v3022
  %3096 = vmatpush.msra.mxu0 %v3018
  %3097 = vmatpush.msra.mxu0 %v3014
  %3098 = vmatpush.msra.mxu0 %v3010
  %3099 = vmatpush.msra.mxu0 %v3006
  %3100 = vmatpush.msra.mxu0 %v3002
  %3101 = vmatpush.msra.mxu0 %v2998
  %3102 = vmatpush.msra.mxu0 %v2994
  %3103 = vmatpush.msra.mxu0 %v2990
  %3104 = vmatpush.msra.mxu0 %v2986
  %3105 = vmatpush.msra.mxu0 %v2982
  %3106 = vmatpush.msra.mxu0 %v2978
  %3107 = vmatpush.msra.mxu0 %v2974
  %3108 = vmatpush.msra.mxu0 %v2970
  %3109 = vmatpush.msra.mxu0 %v2966
  %3110 = vmatmul.f32.gmra.mxu0 0.0
  %v3111 = vpop.f32.mrf.mxu0
  %v3112 = vadd.f32 0.0, %v3111
  %3113 = vdwg.mxu0
  %v3114 = vadd.f32 %v3030, %v3052
  %v3115 = vadd.f32 %v3031, %v3072
  %v3116 = vadd.f32 %v3032, %v3092
  %v3117 = vadd.f32 %v3033, %v3112
  %v3118 = vxor.u32 %v3114, 2147483648
  %v3119 = vmul.f32 %v3118, 1.442695
  %v3120 = vpow.pop %v3119
  %v3121 = vadd.f32 %v3120, 1.0
  %v3122 = vrcp.pop %v3121
  %v3123 = vmul.f32 %v3121, %v3122
  %v3124 = vsub.f32 1.0, %v3123
  %v3125 = vmul.f32 %v3122, %v3124
  %v3126 = vadd.f32 %v3122, %v3125
  %vm3127 = vweird.f32 %v3121
  %vm3128 = vweird.f32 %v3122
  %vm3129 = vmor %vm3127, %vm3128
  %v3130 = vsel %vm3129, %v3122, %v3126
  %v3131 = vand.u32 2147483647, %v3121
  %vm3132 = vcmp.eq.f32.partialorder %v3131, 8.507059e+37
  %v3133 = vand.u32 %v3121, 2147483648
  %v3134 = vor.u32 1.1754944e-38, %v3133
  %v3135 = vsel %vm3132, %v3134, %v3130
  %v3136 = vmul.f32 1.0, %v3135
  %v3137 = vxor.u32 %v3115, 2147483648
  %v3138 = vmul.f32 %v3137, 1.442695
  %v3139 = vpow.pop %v3138
  %v3140 = vadd.f32 %v3139, 1.0
  %v3141 = vrcp.pop %v3140
  %v3142 = vmul.f32 %v3140, %v3141
  %v3143 = vsub.f32 1.0, %v3142
  %v3144 = vmul.f32 %v3141, %v3143
  %v3145 = vadd.f32 %v3141, %v3144
  %vm3146 = vweird.f32 %v3140
  %vm3147 = vweird.f32 %v3141
  %vm3148 = vmor %vm3146, %vm3147
  %v3149 = vsel %vm3148, %v3141, %v3145
  %v3150 = vand.u32 2147483647, %v3140
  %vm3151 = vcmp.eq.f32.partialorder %v3150, 8.507059e+37
  %v3152 = vand.u32 %v3140, 2147483648
  %v3153 = vor.u32 1.1754944e-38, %v3152
  %v3154 = vsel %vm3151, %v3153, %v3149
  %v3155 = vmul.f32 1.0, %v3154
  %v3156 = vtanh.pop %v3116
  %v3157 = vxor.u32 %v3117, 2147483648
  %v3158 = vmul.f32 %v3157, 1.442695
  %v3159 = vpow.pop %v3158
  %v3160 = vadd.f32 %v3159, 1.0
  %v3161 = vrcp.pop %v3160
  %v3162 = vmul.f32 %v3160, %v3161
  %v3163 = vsub.f32 1.0, %v3162
  %v3164 = vmul.f32 %v3161, %v3163
  %v3165 = vadd.f32 %v3161, %v3164
  %vm3166 = vweird.f32 %v3160
  %vm3167 = vweird.f32 %v3161
  %vm3168 = vmor %vm3166, %vm3167
  %v3169 = vsel %vm3168, %v3161, %v3165
  %v3170 = vand.u32 2147483647, %v3160
  %vm3171 = vcmp.eq.f32.partialorder %v3170, 8.507059e+37
  %v3172 = vand.u32 %v3160, 2147483648
  %v3173 = vor.u32 1.1754944e-38, %v3172
  %v3174 = vsel %vm3171, %v3173, %v3169
  %v3175 = vmul.f32 1.0, %v3174
  %v3176 = vmul.f32 %v3155, 0.0
  %v3177 = vmul.f32 %v3136, %v3156
  %v3178 = vadd.f32 %v3176, %v3177
  %v3179 = vtanh.pop %v3178
  %v3180 = vmul.f32 %v3175, %v3179
  %3181 = vst [vmem:[#allocation3] sm:$0xff] %v3180
  %s3182 = smul.u32 1, 4
  %s3183 = smul.addr %s3182, 8
  %s3184 = scalar_lea.vmem [#allocation2], %s3183
  %v3185 = vld [vmem:[%s3184] sm:$0xff]
  %v3186 = vld [vmem:[%s3184 + $0x8] sm:$0xff]
  %v3187 = vld [vmem:[%s3184 + $0x10] sm:$0xff]
  %v3188 = vld [vmem:[%s3184 + $0x18] sm:$0xff]
  %3189 = vmatpush.msra.mxu0 %v3023
  %3190 = vmatpush.msra.mxu0 %v3019
  %3191 = vmatpush.msra.mxu0 %v3015
  %3192 = vmatpush.msra.mxu0 %v3011
  %3193 = vmatpush.msra.mxu0 %v3007
  %3194 = vmatpush.msra.mxu0 %v3003
  %3195 = vmatpush.msra.mxu0 %v2999
  %3196 = vmatpush.msra.mxu0 %v2995
  %3197 = vmatpush.msra.mxu0 %v2991
  %3198 = vmatpush.msra.mxu0 %v2987
  %3199 = vmatpush.msra.mxu0 %v2983
  %3200 = vmatpush.msra.mxu0 %v2979
  %3201 = vmatpush.msra.mxu0 %v2975
  %3202 = vmatpush.msra.mxu0 %v2971
  %3203 = vmatpush.msra.mxu0 %v2967
  %3204 = vmatpush.msra.mxu0 %v2963
  %3205 = vmatmul.f32.gmra.mxu0 %v3180
  %v3206 = vpop.f32.mrf.mxu0
  %v3207 = vadd.f32 0.0, %v3206
  %3208 = vdwg.mxu0
  %3209 = vmatpush.msra.mxu0 %v3024
  %3210 = vmatpush.msra.mxu0 %v3020
  %3211 = vmatpush.msra.mxu0 %v3016
  %3212 = vmatpush.msra.mxu0 %v3012
  %3213 = vmatpush.msra.mxu0 %v3008
  %3214 = vmatpush.msra.mxu0 %v3004
  %3215 = vmatpush.msra.mxu0 %v3000
  %3216 = vmatpush.msra.mxu0 %v2996
  %3217 = vmatpush.msra.mxu0 %v2992
  %3218 = vmatpush.msra.mxu0 %v2988
  %3219 = vmatpush.msra.mxu0 %v2984
  %3220 = vmatpush.msra.mxu0 %v2980
  %3221 = vmatpush.msra.mxu0 %v2976
  %3222 = vmatpush.msra.mxu0 %v2972
  %3223 = vmatpush.msra.mxu0 %v2968
  %3224 = vmatpush.msra.mxu0 %v2964
  %3225 = vmatmul.f32.gmra.mxu0 %v3180
  %v3226 = vpop.f32.mrf.mxu0
  %v3227 = vadd.f32 0.0, %v3226
  %3228 = vdwg.mxu0
  %3229 = vmatpush.msra.mxu0 %v3025
  %3230 = vmatpush.msra.mxu0 %v3021
  %3231 = vmatpush.msra.mxu0 %v3017
  %3232 = vmatpush.msra.mxu0 %v3013
  %3233 = vmatpush.msra.mxu0 %v3009
  %3234 = vmatpush.msra.mxu0 %v3005
  %3235 = vmatpush.msra.mxu0 %v3001
  %3236 = vmatpush.msra.mxu0 %v2997
  %3237 = vmatpush.msra.mxu0 %v2993
  %3238 = vmatpush.msra.mxu0 %v2989
  %3239 = vmatpush.msra.mxu0 %v2985
  %3240 = vmatpush.msra.mxu0 %v2981
  %3241 = vmatpush.msra.mxu0 %v2977
  %3242 = vmatpush.msra.mxu0 %v2973
  %3243 = vmatpush.msra.mxu0 %v2969
  %3244 = vmatpush.msra.mxu0 %v2965
  %3245 = vmatmul.f32.gmra.mxu0 %v3180
  %v3246 = vpop.f32.mrf.mxu0
  %v3247 = vadd.f32 0.0, %v3246
  %3248 = vdwg.mxu0
  %3249 = vmatpush.msra.mxu0 %v3026
  %3250 = vmatpush.msra.mxu0 %v3022
  %3251 = vmatpush.msra.mxu0 %v3018
  %3252 = vmatpush.msra.mxu0 %v3014
  %3253 = vmatpush.msra.mxu0 %v3010
  %3254 = vmatpush.msra.mxu0 %v3006
  %3255 = vmatpush.msra.mxu0 %v3002
  %3256 = vmatpush.msra.mxu0 %v2998
  %3257 = vmatpush.msra.mxu0 %v2994
  %3258 = vmatpush.msra.mxu0 %v2990
  %3259 = vmatpush.msra.mxu0 %v2986
  %3260 = vmatpush.msra.mxu0 %v2982
  %3261 = vmatpush.msra.mxu0 %v2978
  %3262 = vmatpush.msra.mxu0 %v2974
  %3263 = vmatpush.msra.mxu0 %v2970
  %3264 = vmatpush.msra.mxu0 %v2966
  %3265 = vmatmul.f32.gmra.mxu0 %v3180
  %v3266 = vpop.f32.mrf.mxu0
  %v3267 = vadd.f32 0.0, %v3266
  %3268 = vdwg.mxu0
  %v3269 = vadd.f32 %v3185, %v3207
  %v3270 = vadd.f32 %v3186, %v3227
  %v3271 = vadd.f32 %v3187, %v3247
  %v3272 = vadd.f32 %v3188, %v3267
  %v3273 = vxor.u32 %v3269, 2147483648
  %v3274 = vmul.f32 %v3273, 1.442695
  %v3275 = vpow.pop %v3274
  %v3276 = vadd.f32 %v3275, 1.0
  %v3277 = vrcp.pop %v3276
  %v3278 = vmul.f32 %v3276, %v3277
  %v3279 = vsub.f32 1.0, %v3278
  %v3280 = vmul.f32 %v3277, %v3279
  %v3281 = vadd.f32 %v3277, %v3280
  %vm3282 = vweird.f32 %v3276
  %vm3283 = vweird.f32 %v3277
  %vm3284 = vmor %vm3282, %vm3283
  %v3285 = vsel %vm3284, %v3277, %v3281
  %v3286 = vand.u32 2147483647, %v3276
  %vm3287 = vcmp.eq.f32.partialorder %v3286, 8.507059e+37
  %v3288 = vand.u32 %v3276, 2147483648
  %v3289 = vor.u32 1.1754944e-38, %v3288
  %v3290 = vsel %vm3287, %v3289, %v3285
  %v3291 = vmul.f32 1.0, %v3290
  %v3292 = vxor.u32 %v3270, 2147483648
  %v3293 = vmul.f32 %v3292, 1.442695
  %v3294 = vpow.pop %v3293
  %v3295 = vadd.f32 %v3294, 1.0
  %v3296 = vrcp.pop %v3295
  %v3297 = vmul.f32 %v3295, %v3296
  %v3298 = vsub.f32 1.0, %v3297
  %v3299 = vmul.f32 %v3296, %v3298
  %v3300 = vadd.f32 %v3296, %v3299
  %vm3301 = vweird.f32 %v3295
  %vm3302 = vweird.f32 %v3296
  %vm3303 = vmor %vm3301, %vm3302
  %v3304 = vsel %vm3303, %v3296, %v3300
  %v3305 = vand.u32 2147483647, %v3295
  %vm3306 = vcmp.eq.f32.partialorder %v3305, 8.507059e+37
  %v3307 = vand.u32 %v3295, 2147483648
  %v3308 = vor.u32 1.1754944e-38, %v3307
  %v3309 = vsel %vm3306, %v3308, %v3304
  %v3310 = vmul.f32 1.0, %v3309
  %v3311 = vtanh.pop %v3271
  %v3312 = vxor.u32 %v3272, 2147483648
  %v3313 = vmul.f32 %v3312, 1.442695
  %v3314 = vpow.pop %v3313
  %v3315 = vadd.f32 %v3314, 1.0
  %v3316 = vrcp.pop %v3315
  %v3317 = vmul.f32 %v3315, %v3316
  %v3318 = vsub.f32 1.0, %v3317
  %v3319 = vmul.f32 %v3316, %v3318
  %v3320 = vadd.f32 %v3316, %v3319
  %vm3321 = vweird.f32 %v3315
  %vm3322 = vweird.f32 %v3316
  %vm3323 = vmor %vm3321, %vm3322
  %v3324 = vsel %vm3323, %v3316, %v3320
  %v3325 = vand.u32 2147483647, %v3315
  %vm3326 = vcmp.eq.f32.partialorder %v3325, 8.507059e+37
  %v3327 = vand.u32 %v3315, 2147483648
  %v3328 = vor.u32 1.1754944e-38, %v3327
  %v3329 = vsel %vm3326, %v3328, %v3324
  %v3330 = vmul.f32 1.0, %v3329
  %v3331 = vmul.f32 %v3310, %v3178
  %v3332 = vmul.f32 %v3291, %v3311
  %v3333 = vadd.f32 %v3331, %v3332
  %v3334 = vtanh.pop %v3333
  %v3335 = vmul.f32 %v3330, %v3334
  %s3336 = scalar_lea.vmem [#allocation3], 8
  %3337 = vst [vmem:[%s3336] sm:$0xff] %v3335
  %s3338 = smul.u32 2, 4
  %s3339 = smul.addr %s3338, 8
  %s3340 = scalar_lea.vmem [#allocation2], %s3339
  %v3341 = vld [vmem:[%s3340] sm:$0xff]
  %v3342 = vld [vmem:[%s3340 + $0x8] sm:$0xff]
  %v3343 = vld [vmem:[%s3340 + $0x10] sm:$0xff]
  %v3344 = vld [vmem:[%s3340 + $0x18] sm:$0xff]
  %3345 = vmatpush.msra.mxu0 %v3023
  %3346 = vmatpush.msra.mxu0 %v3019
  %3347 = vmatpush.msra.mxu0 %v3015
  %3348 = vmatpush.msra.mxu0 %v3011
  %3349 = vmatpush.msra.mxu0 %v3007
  %3350 = vmatpush.msra.mxu0 %v3003
  %3351 = vmatpush.msra.mxu0 %v2999
  %3352 = vmatpush.msra.mxu0 %v2995
  %3353 = vmatpush.msra.mxu0 %v2991
  %3354 = vmatpush.msra.mxu0 %v2987
  %3355 = vmatpush.msra.mxu0 %v2983
  %3356 = vmatpush.msra.mxu0 %v2979
  %3357 = vmatpush.msra.mxu0 %v2975
  %3358 = vmatpush.msra.mxu0 %v2971
  %3359 = vmatpush.msra.mxu0 %v2967
  %3360 = vmatpush.msra.mxu0 %v2963
  %3361 = vmatmul.f32.gmra.mxu0 %v3335
  %v3362 = vpop.f32.mrf.mxu0
  %v3363 = vadd.f32 0.0, %v3362
  %3364 = vdwg.mxu0
  %3365 = vmatpush.msra.mxu0 %v3024
  %3366 = vmatpush.msra.mxu0 %v3020
  %3367 = vmatpush.msra.mxu0 %v3016
  %3368 = vmatpush.msra.mxu0 %v3012
  %3369 = vmatpush.msra.mxu0 %v3008
  %3370 = vmatpush.msra.mxu0 %v3004
  %3371 = vmatpush.msra.mxu0 %v3000
  %3372 = vmatpush.msra.mxu0 %v2996
  %3373 = vmatpush.msra.mxu0 %v2992
  %3374 = vmatpush.msra.mxu0 %v2988
  %3375 = vmatpush.msra.mxu0 %v2984
  %3376 = vmatpush.msra.mxu0 %v2980
  %3377 = vmatpush.msra.mxu0 %v2976
  %3378 = vmatpush.msra.mxu0 %v2972
  %3379 = vmatpush.msra.mxu0 %v2968
  %3380 = vmatpush.msra.mxu0 %v2964
  %3381 = vmatmul.f32.gmra.mxu0 %v3335
  %v3382 = vpop.f32.mrf.mxu0
  %v3383 = vadd.f32 0.0, %v3382
  %3384 = vdwg.mxu0
  %3385 = vmatpush.msra.mxu0 %v3025
  %3386 = vmatpush.msra.mxu0 %v3021
  %3387 = vmatpush.msra.mxu0 %v3017
  %3388 = vmatpush.msra.mxu0 %v3013
  %3389 = vmatpush.msra.mxu0 %v3009
  %3390 = vmatpush.msra.mxu0 %v3005
  %3391 = vmatpush.msra.mxu0 %v3001
  %3392 = vmatpush.msra.mxu0 %v2997
  %3393 = vmatpush.msra.mxu0 %v2993
  %3394 = vmatpush.msra.mxu0 %v2989
  %3395 = vmatpush.msra.mxu0 %v2985
  %3396 = vmatpush.msra.mxu0 %v2981
  %3397 = vmatpush.msra.mxu0 %v2977
  %3398 = vmatpush.msra.mxu0 %v2973
  %3399 = vmatpush.msra.mxu0 %v2969
  %3400 = vmatpush.msra.mxu0 %v2965
  %3401 = vmatmul.f32.gmra.mxu0 %v3335
  %v3402 = vpop.f32.mrf.mxu0
  %v3403 = vadd.f32 0.0, %v3402
  %3404 = vdwg.mxu0
  %3405 = vmatpush.msra.mxu0 %v3026
  %3406 = vmatpush.msra.mxu0 %v3022
  %3407 = vmatpush.msra.mxu0 %v3018
  %3408 = vmatpush.msra.mxu0 %v3014
  %3409 = vmatpush.msra.mxu0 %v3010
  %3410 = vmatpush.msra.mxu0 %v3006
  %3411 = vmatpush.msra.mxu0 %v3002
  %3412 = vmatpush.msra.mxu0 %v2998
  %3413 = vmatpush.msra.mxu0 %v2994
  %3414 = vmatpush.msra.mxu0 %v2990
  %3415 = vmatpush.msra.mxu0 %v2986
  %3416 = vmatpush.msra.mxu0 %v2982
  %3417 = vmatpush.msra.mxu0 %v2978
  %3418 = vmatpush.msra.mxu0 %v2974
  %3419 = vmatpush.msra.mxu0 %v2970
  %3420 = vmatpush.msra.mxu0 %v2966
  %3421 = vmatmul.f32.gmra.mxu0 %v3335
  %v3422 = vpop.f32.mrf.mxu0
  %v3423 = vadd.f32 0.0, %v3422
  %3424 = vdwg.mxu0
  %v3425 = vadd.f32 %v3341, %v3363
  %v3426 = vadd.f32 %v3342, %v3383
  %v3427 = vadd.f32 %v3343, %v3403
  %v3428 = vadd.f32 %v3344, %v3423
  %v3429 = vxor.u32 %v3425, 2147483648
  %v3430 = vmul.f32 %v3429, 1.442695
  %v3431 = vpow.pop %v3430
  %v3432 = vadd.f32 %v3431, 1.0
  %v3433 = vrcp.pop %v3432
  %v3434 = vmul.f32 %v3432, %v3433
  %v3435 = vsub.f32 1.0, %v3434
  %v3436 = vmul.f32 %v3433, %v3435
  %v3437 = vadd.f32 %v3433, %v3436
  %vm3438 = vweird.f32 %v3432
  %vm3439 = vweird.f32 %v3433
  %vm3440 = vmor %vm3438, %vm3439
  %v3441 = vsel %vm3440, %v3433, %v3437
  %v3442 = vand.u32 2147483647, %v3432
  %vm3443 = vcmp.eq.f32.partialorder %v3442, 8.507059e+37
  %v3444 = vand.u32 %v3432, 2147483648
  %v3445 = vor.u32 1.1754944e-38, %v3444
  %v3446 = vsel %vm3443, %v3445, %v3441
  %v3447 = vmul.f32 1.0, %v3446
  %v3448 = vxor.u32 %v3426, 2147483648
  %v3449 = vmul.f32 %v3448, 1.442695
  %v3450 = vpow.pop %v3449
  %v3451 = vadd.f32 %v3450, 1.0
  %v3452 = vrcp.pop %v3451
  %v3453 = vmul.f32 %v3451, %v3452
  %v3454 = vsub.f32 1.0, %v3453
  %v3455 = vmul.f32 %v3452, %v3454
  %v3456 = vadd.f32 %v3452, %v3455
  %vm3457 = vweird.f32 %v3451
  %vm3458 = vweird.f32 %v3452
  %vm3459 = vmor %vm3457, %vm3458
  %v3460 = vsel %vm3459, %v3452, %v3456
  %v3461 = vand.u32 2147483647, %v3451
  %vm3462 = vcmp.eq.f32.partialorder %v3461, 8.507059e+37
  %v3463 = vand.u32 %v3451, 2147483648
  %v3464 = vor.u32 1.1754944e-38, %v3463
  %v3465 = vsel %vm3462, %v3464, %v3460
  %v3466 = vmul.f32 1.0, %v3465
  %v3467 = vtanh.pop %v3427
  %v3468 = vxor.u32 %v3428, 2147483648
  %v3469 = vmul.f32 %v3468, 1.442695
  %v3470 = vpow.pop %v3469
  %v3471 = vadd.f32 %v3470, 1.0
  %v3472 = vrcp.pop %v3471
  %v3473 = vmul.f32 %v3471, %v3472
  %v3474 = vsub.f32 1.0, %v3473
  %v3475 = vmul.f32 %v3472, %v3474
  %v3476 = vadd.f32 %v3472, %v3475
  %vm3477 = vweird.f32 %v3471
  %vm3478 = vweird.f32 %v3472
  %vm3479 = vmor %vm3477, %vm3478
  %v3480 = vsel %vm3479, %v3472, %v3476
  %v3481 = vand.u32 2147483647, %v3471
  %vm3482 = vcmp.eq.f32.partialorder %v3481, 8.507059e+37
  %v3483 = vand.u32 %v3471, 2147483648
  %v3484 = vor.u32 1.1754944e-38, %v3483
  %v3485 = vsel %vm3482, %v3484, %v3480
  %v3486 = vmul.f32 1.0, %v3485
  %v3487 = vmul.f32 %v3466, %v3333
  %v3488 = vmul.f32 %v3447, %v3467
  %v3489 = vadd.f32 %v3487, %v3488
  %v3490 = vtanh.pop %v3489
  %v3491 = vmul.f32 %v3486, %v3490
  %s3492 = scalar_lea.vmem [#allocation3], 16
  %3493 = vst [vmem:[%s3492] sm:$0xff] %v3491
  %s3494 = smul.u32 3, 4
  %s3495 = smul.addr %s3494, 8
  %s3496 = scalar_lea.vmem [#allocation2], %s3495
  %v3497 = vld [vmem:[%s3496] sm:$0xff]
  %v3498 = vld [vmem:[%s3496 + $0x8] sm:$0xff]
  %v3499 = vld [vmem:[%s3496 + $0x10] sm:$0xff]
  %v3500 = vld [vmem:[%s3496 + $0x18] sm:$0xff]
  %3501 = vmatpush.msra.mxu0 %v3023
  %3502 = vmatpush.msra.mxu0 %v3019
  %3503 = vmatpush.msra.mxu0 %v3015
  %3504 = vmatpush.msra.mxu0 %v3011
  %3505 = vmatpush.msra.mxu0 %v3007
  %3506 = vmatpush.msra.mxu0 %v3003
  %3507 = vmatpush.msra.mxu0 %v2999
  %3508 = vmatpush.msra.mxu0 %v2995
  %3509 = vmatpush.msra.mxu0 %v2991
  %3510 = vmatpush.msra.mxu0 %v2987
  %3511 = vmatpush.msra.mxu0 %v2983
  %3512 = vmatpush.msra.mxu0 %v2979
  %3513 = vmatpush.msra.mxu0 %v2975
  %3514 = vmatpush.msra.mxu0 %v2971
  %3515 = vmatpush.msra.mxu0 %v2967
  %3516 = vmatpush.msra.mxu0 %v2963
  %3517 = vmatmul.f32.gmra.mxu0 %v3491
  %v3518 = vpop.f32.mrf.mxu0
  %v3519 = vadd.f32 0.0, %v3518
  %3520 = vdwg.mxu0
  %3521 = vmatpush.msra.mxu0 %v3024
  %3522 = vmatpush.msra.mxu0 %v3020
  %3523 = vmatpush.msra.mxu0 %v3016
  %3524 = vmatpush.msra.mxu0 %v3012
  %3525 = vmatpush.msra.mxu0 %v3008
  %3526 = vmatpush.msra.mxu0 %v3004
  %3527 = vmatpush.msra.mxu0 %v3000
  %3528 = vmatpush.msra.mxu0 %v2996
  %3529 = vmatpush.msra.mxu0 %v2992
  %3530 = vmatpush.msra.mxu0 %v2988
  %3531 = vmatpush.msra.mxu0 %v2984
  %3532 = vmatpush.msra.mxu0 %v2980
  %3533 = vmatpush.msra.mxu0 %v2976
  %3534 = vmatpush.msra.mxu0 %v2972
  %3535 = vmatpush.msra.mxu0 %v2968
  %3536 = vmatpush.msra.mxu0 %v2964
  %3537 = vmatmul.f32.gmra.mxu0 %v3491
  %v3538 = vpop.f32.mrf.mxu0
  %v3539 = vadd.f32 0.0, %v3538
  %3540 = vdwg.mxu0
  %3541 = vmatpush.msra.mxu0 %v3025
  %3542 = vmatpush.msra.mxu0 %v3021
  %3543 = vmatpush.msra.mxu0 %v3017
  %3544 = vmatpush.msra.mxu0 %v3013
  %3545 = vmatpush.msra.mxu0 %v3009
  %3546 = vmatpush.msra.mxu0 %v3005
  %3547 = vmatpush.msra.mxu0 %v3001
  %3548 = vmatpush.msra.mxu0 %v2997
  %3549 = vmatpush.msra.mxu0 %v2993
  %3550 = vmatpush.msra.mxu0 %v2989
  %3551 = vmatpush.msra.mxu0 %v2985
  %3552 = vmatpush.msra.mxu0 %v2981
  %3553 = vmatpush.msra.mxu0 %v2977
  %3554 = vmatpush.msra.mxu0 %v2973
  %3555 = vmatpush.msra.mxu0 %v2969
  %3556 = vmatpush.msra.mxu0 %v2965
  %3557 = vmatmul.f32.gmra.mxu0 %v3491
  %v3558 = vpop.f32.mrf.mxu0
  %v3559 = vadd.f32 0.0, %v3558
  %3560 = vdwg.mxu0
  %3561 = vmatpush.msra.mxu0 %v3026
  %3562 = vmatpush.msra.mxu0 %v3022
  %3563 = vmatpush.msra.mxu0 %v3018
  %3564 = vmatpush.msra.mxu0 %v3014
  %3565 = vmatpush.msra.mxu0 %v3010
  %3566 = vmatpush.msra.mxu0 %v3006
  %3567 = vmatpush.msra.mxu0 %v3002
  %3568 = vmatpush.msra.mxu0 %v2998
  %3569 = vmatpush.msra.mxu0 %v2994
  %3570 = vmatpush.msra.mxu0 %v2990
  %3571 = vmatpush.msra.mxu0 %v2986
  %3572 = vmatpush.msra.mxu0 %v2982
  %3573 = vmatpush.msra.mxu0 %v2978
  %3574 = vmatpush.msra.mxu0 %v2974
  %3575 = vmatpush.msra.mxu0 %v2970
  %3576 = vmatpush.msra.mxu0 %v2966
  %3577 = vmatmul.f32.gmra.mxu0 %v3491
  %v3578 = vpop.f32.mrf.mxu0
  %v3579 = vadd.f32 0.0, %v3578
  %3580 = vdwg.mxu0
  %v3581 = vadd.f32 %v3497, %v3519
  %v3582 = vadd.f32 %v3498, %v3539
  %v3583 = vadd.f32 %v3499, %v3559
  %v3584 = vadd.f32 %v3500, %v3579
  %v3585 = vxor.u32 %v3581, 2147483648
  %v3586 = vmul.f32 %v3585, 1.442695
  %v3587 = vpow.pop %v3586
  %v3588 = vadd.f32 %v3587, 1.0
  %v3589 = vrcp.pop %v3588
  %v3590 = vmul.f32 %v3588, %v3589
  %v3591 = vsub.f32 1.0, %v3590
  %v3592 = vmul.f32 %v3589, %v3591
  %v3593 = vadd.f32 %v3589, %v3592
  %vm3594 = vweird.f32 %v3588
  %vm3595 = vweird.f32 %v3589
  %vm3596 = vmor %vm3594, %vm3595
  %v3597 = vsel %vm3596, %v3589, %v3593
  %v3598 = vand.u32 2147483647, %v3588
  %vm3599 = vcmp.eq.f32.partialorder %v3598, 8.507059e+37
  %v3600 = vand.u32 %v3588, 2147483648
  %v3601 = vor.u32 1.1754944e-38, %v3600
  %v3602 = vsel %vm3599, %v3601, %v3597
  %v3603 = vmul.f32 1.0, %v3602
  %v3604 = vxor.u32 %v3582, 2147483648
  %v3605 = vmul.f32 %v3604, 1.442695
  %v3606 = vpow.pop %v3605
  %v3607 = vadd.f32 %v3606, 1.0
  %v3608 = vrcp.pop %v3607
  %v3609 = vmul.f32 %v3607, %v3608
  %v3610 = vsub.f32 1.0, %v3609
  %v3611 = vmul.f32 %v3608, %v3610
  %v3612 = vadd.f32 %v3608, %v3611
  %vm3613 = vweird.f32 %v3607
  %vm3614 = vweird.f32 %v3608
  %vm3615 = vmor %vm3613, %vm3614
  %v3616 = vsel %vm3615, %v3608, %v3612
  %v3617 = vand.u32 2147483647, %v3607
  %vm3618 = vcmp.eq.f32.partialorder %v3617, 8.507059e+37
  %v3619 = vand.u32 %v3607, 2147483648
  %v3620 = vor.u32 1.1754944e-38, %v3619
  %v3621 = vsel %vm3618, %v3620, %v3616
  %v3622 = vmul.f32 1.0, %v3621
  %v3623 = vtanh.pop %v3583
  %v3624 = vxor.u32 %v3584, 2147483648
  %v3625 = vmul.f32 %v3624, 1.442695
  %v3626 = vpow.pop %v3625
  %v3627 = vadd.f32 %v3626, 1.0
  %v3628 = vrcp.pop %v3627
  %v3629 = vmul.f32 %v3627, %v3628
  %v3630 = vsub.f32 1.0, %v3629
  %v3631 = vmul.f32 %v3628, %v3630
  %v3632 = vadd.f32 %v3628, %v3631
  %vm3633 = vweird.f32 %v3627
  %vm3634 = vweird.f32 %v3628
  %vm3635 = vmor %vm3633, %vm3634
  %v3636 = vsel %vm3635, %v3628, %v3632
  %v3637 = vand.u32 2147483647, %v3627
  %vm3638 = vcmp.eq.f32.partialorder %v3637, 8.507059e+37
  %v3639 = vand.u32 %v3627, 2147483648
  %v3640 = vor.u32 1.1754944e-38, %v3639
  %v3641 = vsel %vm3638, %v3640, %v3636
  %v3642 = vmul.f32 1.0, %v3641
  %v3643 = vmul.f32 %v3622, %v3489
  %v3644 = vmul.f32 %v3603, %v3623
  %v3645 = vadd.f32 %v3643, %v3644
  %v3646 = vtanh.pop %v3645
  %v3647 = vmul.f32 %v3642, %v3646
  %s3648 = scalar_lea.vmem [#allocation3], 24
  %3649 = vst [vmem:[%s3648] sm:$0xff] %v3647
  %s3650 = smul.u32 4, 4
  %s3651 = smul.addr %s3650, 8
  %s3652 = scalar_lea.vmem [#allocation2], %s3651
  %v3653 = vld [vmem:[%s3652] sm:$0xff]
  %v3654 = vld [vmem:[%s3652 + $0x8] sm:$0xff]
  %v3655 = vld [vmem:[%s3652 + $0x10] sm:$0xff]
  %v3656 = vld [vmem:[%s3652 + $0x18] sm:$0xff]
  %3657 = vmatpush.msra.mxu0 %v3023
  %3658 = vmatpush.msra.mxu0 %v3019
  %3659 = vmatpush.msra.mxu0 %v3015
  %3660 = vmatpush.msra.mxu0 %v3011
  %3661 = vmatpush.msra.mxu0 %v3007
  %3662 = vmatpush.msra.mxu0 %v3003
  %3663 = vmatpush.msra.mxu0 %v2999
  %3664 = vmatpush.msra.mxu0 %v2995
  %3665 = vmatpush.msra.mxu0 %v2991
  %3666 = vmatpush.msra.mxu0 %v2987
  %3667 = vmatpush.msra.mxu0 %v2983
  %3668 = vmatpush.msra.mxu0 %v2979
  %3669 = vmatpush.msra.mxu0 %v2975
  %3670 = vmatpush.msra.mxu0 %v2971
  %3671 = vmatpush.msra.mxu0 %v2967
  %3672 = vmatpush.msra.mxu0 %v2963
  %3673 = vmatmul.f32.gmra.mxu0 %v3647
  %v3674 = vpop.f32.mrf.mxu0
  %v3675 = vadd.f32 0.0, %v3674
  %3676 = vdwg.mxu0
  %3677 = vmatpush.msra.mxu0 %v3024
  %3678 = vmatpush.msra.mxu0 %v3020
  %3679 = vmatpush.msra.mxu0 %v3016
  %3680 = vmatpush.msra.mxu0 %v3012
  %3681 = vmatpush.msra.mxu0 %v3008
  %3682 = vmatpush.msra.mxu0 %v3004
  %3683 = vmatpush.msra.mxu0 %v3000
  %3684 = vmatpush.msra.mxu0 %v2996
  %3685 = vmatpush.msra.mxu0 %v2992
  %3686 = vmatpush.msra.mxu0 %v2988
  %3687 = vmatpush.msra.mxu0 %v2984
  %3688 = vmatpush.msra.mxu0 %v2980
  %3689 = vmatpush.msra.mxu0 %v2976
  %3690 = vmatpush.msra.mxu0 %v2972
  %3691 = vmatpush.msra.mxu0 %v2968
  %3692 = vmatpush.msra.mxu0 %v2964
  %3693 = vmatmul.f32.gmra.mxu0 %v3647
  %v3694 = vpop.f32.mrf.mxu0
  %v3695 = vadd.f32 0.0, %v3694
  %3696 = vdwg.mxu0
  %3697 = vmatpush.msra.mxu0 %v3025
  %3698 = vmatpush.msra.mxu0 %v3021
  %3699 = vmatpush.msra.mxu0 %v3017
  %3700 = vmatpush.msra.mxu0 %v3013
  %3701 = vmatpush.msra.mxu0 %v3009
  %3702 = vmatpush.msra.mxu0 %v3005
  %3703 = vmatpush.msra.mxu0 %v3001
  %3704 = vmatpush.msra.mxu0 %v2997
  %3705 = vmatpush.msra.mxu0 %v2993
  %3706 = vmatpush.msra.mxu0 %v2989
  %3707 = vmatpush.msra.mxu0 %v2985
  %3708 = vmatpush.msra.mxu0 %v2981
  %3709 = vmatpush.msra.mxu0 %v2977
  %3710 = vmatpush.msra.mxu0 %v2973
  %3711 = vmatpush.msra.mxu0 %v2969
  %3712 = vmatpush.msra.mxu0 %v2965
  %3713 = vmatmul.f32.gmra.mxu0 %v3647
  %v3714 = vpop.f32.mrf.mxu0
  %v3715 = vadd.f32 0.0, %v3714
  %3716 = vdwg.mxu0
  %3717 = vmatpush.msra.mxu0 %v3026
  %3718 = vmatpush.msra.mxu0 %v3022
  %3719 = vmatpush.msra.mxu0 %v3018
  %3720 = vmatpush.msra.mxu0 %v3014
  %3721 = vmatpush.msra.mxu0 %v3010
  %3722 = vmatpush.msra.mxu0 %v3006
  %3723 = vmatpush.msra.mxu0 %v3002
  %3724 = vmatpush.msra.mxu0 %v2998
  %3725 = vmatpush.msra.mxu0 %v2994
  %3726 = vmatpush.msra.mxu0 %v2990
  %3727 = vmatpush.msra.mxu0 %v2986
  %3728 = vmatpush.msra.mxu0 %v2982
  %3729 = vmatpush.msra.mxu0 %v2978
  %3730 = vmatpush.msra.mxu0 %v2974
  %3731 = vmatpush.msra.mxu0 %v2970
  %3732 = vmatpush.msra.mxu0 %v2966
  %3733 = vmatmul.f32.gmra.mxu0 %v3647
  %v3734 = vpop.f32.mrf.mxu0
  %v3735 = vadd.f32 0.0, %v3734
  %3736 = vdwg.mxu0
  %v3737 = vadd.f32 %v3653, %v3675
  %v3738 = vadd.f32 %v3654, %v3695
  %v3739 = vadd.f32 %v3655, %v3715
  %v3740 = vadd.f32 %v3656, %v3735
  %v3741 = vxor.u32 %v3737, 2147483648
  %v3742 = vmul.f32 %v3741, 1.442695
  %v3743 = vpow.pop %v3742
  %v3744 = vadd.f32 %v3743, 1.0
  %v3745 = vrcp.pop %v3744
  %v3746 = vmul.f32 %v3744, %v3745
  %v3747 = vsub.f32 1.0, %v3746
  %v3748 = vmul.f32 %v3745, %v3747
  %v3749 = vadd.f32 %v3745, %v3748
  %vm3750 = vweird.f32 %v3744
  %vm3751 = vweird.f32 %v3745
  %vm3752 = vmor %vm3750, %vm3751
  %v3753 = vsel %vm3752, %v3745, %v3749
  %v3754 = vand.u32 2147483647, %v3744
  %vm3755 = vcmp.eq.f32.partialorder %v3754, 8.507059e+37
  %v3756 = vand.u32 %v3744, 2147483648
  %v3757 = vor.u32 1.1754944e-38, %v3756
  %v3758 = vsel %vm3755, %v3757, %v3753
  %v3759 = vmul.f32 1.0, %v3758
  %v3760 = vxor.u32 %v3738, 2147483648
  %v3761 = vmul.f32 %v3760, 1.442695
  %v3762 = vpow.pop %v3761
  %v3763 = vadd.f32 %v3762, 1.0
  %v3764 = vrcp.pop %v3763
  %v3765 = vmul.f32 %v3763, %v3764
  %v3766 = vsub.f32 1.0, %v3765
  %v3767 = vmul.f32 %v3764, %v3766
  %v3768 = vadd.f32 %v3764, %v3767
  %vm3769 = vweird.f32 %v3763
  %vm3770 = vweird.f32 %v3764
  %vm3771 = vmor %vm3769, %vm3770
  %v3772 = vsel %vm3771, %v3764, %v3768
  %v3773 = vand.u32 2147483647, %v3763
  %vm3774 = vcmp.eq.f32.partialorder %v3773, 8.507059e+37
  %v3775 = vand.u32 %v3763, 2147483648
  %v3776 = vor.u32 1.1754944e-38, %v3775
  %v3777 = vsel %vm3774, %v3776, %v3772
  %v3778 = vmul.f32 1.0, %v3777
  %v3779 = vtanh.pop %v3739
  %v3780 = vxor.u32 %v3740, 2147483648
  %v3781 = vmul.f32 %v3780, 1.442695
  %v3782 = vpow.pop %v3781
  %v3783 = vadd.f32 %v3782, 1.0
  %v3784 = vrcp.pop %v3783
  %v3785 = vmul.f32 %v3783, %v3784
  %v3786 = vsub.f32 1.0, %v3785
  %v3787 = vmul.f32 %v3784, %v3786
  %v3788 = vadd.f32 %v3784, %v3787
  %vm3789 = vweird.f32 %v3783
  %vm3790 = vweird.f32 %v3784
  %vm3791 = vmor %vm3789, %vm3790
  %v3792 = vsel %vm3791, %v3784, %v3788
  %v3793 = vand.u32 2147483647, %v3783
  %vm3794 = vcmp.eq.f32.partialorder %v3793, 8.507059e+37
  %v3795 = vand.u32 %v3783, 2147483648
  %v3796 = vor.u32 1.1754944e-38, %v3795
  %v3797 = vsel %vm3794, %v3796, %v3792
  %v3798 = vmul.f32 1.0, %v3797
  %v3799 = vmul.f32 %v3778, %v3645
  %v3800 = vmul.f32 %v3759, %v3779
  %v3801 = vadd.f32 %v3799, %v3800
  %v3802 = vtanh.pop %v3801
  %v3803 = vmul.f32 %v3798, %v3802
  %s3804 = scalar_lea.vmem [#allocation3], 32
  %3805 = vst [vmem:[%s3804] sm:$0xff] %v3803
  %s3806 = smul.u32 5, 4
  %s3807 = smul.addr %s3806, 8
  %s3808 = scalar_lea.vmem [#allocation2], %s3807
  %v3809 = vld [vmem:[%s3808] sm:$0xff]
  %v3810 = vld [vmem:[%s3808 + $0x8] sm:$0xff]
  %v3811 = vld [vmem:[%s3808 + $0x10] sm:$0xff]
  %v3812 = vld [vmem:[%s3808 + $0x18] sm:$0xff]
  %3813 = vmatpush.msra.mxu0 %v3023
  %3814 = vmatpush.msra.mxu0 %v3019
  %3815 = vmatpush.msra.mxu0 %v3015
  %3816 = vmatpush.msra.mxu0 %v3011
  %3817 = vmatpush.msra.mxu0 %v3007
  %3818 = vmatpush.msra.mxu0 %v3003
  %3819 = vmatpush.msra.mxu0 %v2999
  %3820 = vmatpush.msra.mxu0 %v2995
  %3821 = vmatpush.msra.mxu0 %v2991
  %3822 = vmatpush.msra.mxu0 %v2987
  %3823 = vmatpush.msra.mxu0 %v2983
  %3824 = vmatpush.msra.mxu0 %v2979
  %3825 = vmatpush.msra.mxu0 %v2975
  %3826 = vmatpush.msra.mxu0 %v2971
  %3827 = vmatpush.msra.mxu0 %v2967
  %3828 = vmatpush.msra.mxu0 %v2963
  %3829 = vmatmul.f32.gmra.mxu0 %v3803
  %v3830 = vpop.f32.mrf.mxu0
  %v3831 = vadd.f32 0.0, %v3830
  %3832 = vdwg.mxu0
  %3833 = vmatpush.msra.mxu0 %v3024
  %3834 = vmatpush.msra.mxu0 %v3020
  %3835 = vmatpush.msra.mxu0 %v3016
  %3836 = vmatpush.msra.mxu0 %v3012
  %3837 = vmatpush.msra.mxu0 %v3008
  %3838 = vmatpush.msra.mxu0 %v3004
  %3839 = vmatpush.msra.mxu0 %v3000
  %3840 = vmatpush.msra.mxu0 %v2996
  %3841 = vmatpush.msra.mxu0 %v2992
  %3842 = vmatpush.msra.mxu0 %v2988
  %3843 = vmatpush.msra.mxu0 %v2984
  %3844 = vmatpush.msra.mxu0 %v2980
  %3845 = vmatpush.msra.mxu0 %v2976
  %3846 = vmatpush.msra.mxu0 %v2972
  %3847 = vmatpush.msra.mxu0 %v2968
  %3848 = vmatpush.msra.mxu0 %v2964
  %3849 = vmatmul.f32.gmra.mxu0 %v3803
  %v3850 = vpop.f32.mrf.mxu0
  %v3851 = vadd.f32 0.0, %v3850
  %3852 = vdwg.mxu0
  %3853 = vmatpush.msra.mxu0 %v3025
  %3854 = vmatpush.msra.mxu0 %v3021
  %3855 = vmatpush.msra.mxu0 %v3017
  %3856 = vmatpush.msra.mxu0 %v3013
  %3857 = vmatpush.msra.mxu0 %v3009
  %3858 = vmatpush.msra.mxu0 %v3005
  %3859 = vmatpush.msra.mxu0 %v3001
  %3860 = vmatpush.msra.mxu0 %v2997
  %3861 = vmatpush.msra.mxu0 %v2993
  %3862 = vmatpush.msra.mxu0 %v2989
  %3863 = vmatpush.msra.mxu0 %v2985
  %3864 = vmatpush.msra.mxu0 %v2981
  %3865 = vmatpush.msra.mxu0 %v2977
  %3866 = vmatpush.msra.mxu0 %v2973
  %3867 = vmatpush.msra.mxu0 %v2969
  %3868 = vmatpush.msra.mxu0 %v2965
  %3869 = vmatmul.f32.gmra.mxu0 %v3803
  %v3870 = vpop.f32.mrf.mxu0
  %v3871 = vadd.f32 0.0, %v3870
  %3872 = vdwg.mxu0
  %3873 = vmatpush.msra.mxu0 %v3026
  %3874 = vmatpush.msra.mxu0 %v3022
  %3875 = vmatpush.msra.mxu0 %v3018
  %3876 = vmatpush.msra.mxu0 %v3014
  %3877 = vmatpush.msra.mxu0 %v3010
  %3878 = vmatpush.msra.mxu0 %v3006
  %3879 = vmatpush.msra.mxu0 %v3002
  %3880 = vmatpush.msra.mxu0 %v2998
  %3881 = vmatpush.msra.mxu0 %v2994
  %3882 = vmatpush.msra.mxu0 %v2990
  %3883 = vmatpush.msra.mxu0 %v2986
  %3884 = vmatpush.msra.mxu0 %v2982
  %3885 = vmatpush.msra.mxu0 %v2978
  %3886 = vmatpush.msra.mxu0 %v2974
  %3887 = vmatpush.msra.mxu0 %v2970
  %3888 = vmatpush.msra.mxu0 %v2966
  %3889 = vmatmul.f32.gmra.mxu0 %v3803
  %v3890 = vpop.f32.mrf.mxu0
  %v3891 = vadd.f32 0.0, %v3890
  %3892 = vdwg.mxu0
  %v3893 = vadd.f32 %v3809, %v3831
  %v3894 = vadd.f32 %v3810, %v3851
  %v3895 = vadd.f32 %v3811, %v3871
  %v3896 = vadd.f32 %v3812, %v3891
  %v3897 = vxor.u32 %v3893, 2147483648
  %v3898 = vmul.f32 %v3897, 1.442695
  %v3899 = vpow.pop %v3898
  %v3900 = vadd.f32 %v3899, 1.0
  %v3901 = vrcp.pop %v3900
  %v3902 = vmul.f32 %v3900, %v3901
  %v3903 = vsub.f32 1.0, %v3902
  %v3904 = vmul.f32 %v3901, %v3903
  %v3905 = vadd.f32 %v3901, %v3904
  %vm3906 = vweird.f32 %v3900
  %vm3907 = vweird.f32 %v3901
  %vm3908 = vmor %vm3906, %vm3907
  %v3909 = vsel %vm3908, %v3901, %v3905
  %v3910 = vand.u32 2147483647, %v3900
  %vm3911 = vcmp.eq.f32.partialorder %v3910, 8.507059e+37
  %v3912 = vand.u32 %v3900, 2147483648
  %v3913 = vor.u32 1.1754944e-38, %v3912
  %v3914 = vsel %vm3911, %v3913, %v3909
  %v3915 = vmul.f32 1.0, %v3914
  %v3916 = vxor.u32 %v3894, 2147483648
  %v3917 = vmul.f32 %v3916, 1.442695
  %v3918 = vpow.pop %v3917
  %v3919 = vadd.f32 %v3918, 1.0
  %v3920 = vrcp.pop %v3919
  %v3921 = vmul.f32 %v3919, %v3920
  %v3922 = vsub.f32 1.0, %v3921
  %v3923 = vmul.f32 %v3920, %v3922
  %v3924 = vadd.f32 %v3920, %v3923
  %vm3925 = vweird.f32 %v3919
  %vm3926 = vweird.f32 %v3920
  %vm3927 = vmor %vm3925, %vm3926
  %v3928 = vsel %vm3927, %v3920, %v3924
  %v3929 = vand.u32 2147483647, %v3919
  %vm3930 = vcmp.eq.f32.partialorder %v3929, 8.507059e+37
  %v3931 = vand.u32 %v3919, 2147483648
  %v3932 = vor.u32 1.1754944e-38, %v3931
  %v3933 = vsel %vm3930, %v3932, %v3928
  %v3934 = vmul.f32 1.0, %v3933
  %v3935 = vtanh.pop %v3895
  %v3936 = vxor.u32 %v3896, 2147483648
  %v3937 = vmul.f32 %v3936, 1.442695
  %v3938 = vpow.pop %v3937
  %v3939 = vadd.f32 %v3938, 1.0
  %v3940 = vrcp.pop %v3939
  %v3941 = vmul.f32 %v3939, %v3940
  %v3942 = vsub.f32 1.0, %v3941
  %v3943 = vmul.f32 %v3940, %v3942
  %v3944 = vadd.f32 %v3940, %v3943
  %vm3945 = vweird.f32 %v3939
  %vm3946 = vweird.f32 %v3940
  %vm3947 = vmor %vm3945, %vm3946
  %v3948 = vsel %vm3947, %v3940, %v3944
  %v3949 = vand.u32 2147483647, %v3939
  %vm3950 = vcmp.eq.f32.partialorder %v3949, 8.507059e+37
  %v3951 = vand.u32 %v3939, 2147483648
  %v3952 = vor.u32 1.1754944e-38, %v3951
  %v3953 = vsel %vm3950, %v3952, %v3948
  %v3954 = vmul.f32 1.0, %v3953
  %v3955 = vmul.f32 %v3934, %v3801
  %v3956 = vmul.f32 %v3915, %v3935
  %v3957 = vadd.f32 %v3955, %v3956
  %v3958 = vtanh.pop %v3957
  %v3959 = vmul.f32 %v3954, %v3958
  %s3960 = scalar_lea.vmem [#allocation3], 40
  %3961 = vst [vmem:[%s3960] sm:$0xff] %v3959
  %s3962 = smul.u32 6, 4
  %s3963 = smul.addr %s3962, 8
  %s3964 = scalar_lea.vmem [#allocation2], %s3963
  %v3965 = vld [vmem:[%s3964] sm:$0xff]
  %v3966 = vld [vmem:[%s3964 + $0x8] sm:$0xff]
  %v3967 = vld [vmem:[%s3964 + $0x10] sm:$0xff]
  %v3968 = vld [vmem:[%s3964 + $0x18] sm:$0xff]
  %3969 = vmatpush.msra.mxu0 %v3023
  %3970 = vmatpush.msra.mxu0 %v3019
  %3971 = vmatpush.msra.mxu0 %v3015
  %3972 = vmatpush.msra.mxu0 %v3011
  %3973 = vmatpush.msra.mxu0 %v3007
  %3974 = vmatpush.msra.mxu0 %v3003
  %3975 = vmatpush.msra.mxu0 %v2999
  %3976 = vmatpush.msra.mxu0 %v2995
  %3977 = vmatpush.msra.mxu0 %v2991
  %3978 = vmatpush.msra.mxu0 %v2987
  %3979 = vmatpush.msra.mxu0 %v2983
  %3980 = vmatpush.msra.mxu0 %v2979
  %3981 = vmatpush.msra.mxu0 %v2975
  %3982 = vmatpush.msra.mxu0 %v2971
  %3983 = vmatpush.msra.mxu0 %v2967
  %3984 = vmatpush.msra.mxu0 %v2963
  %3985 = vmatmul.f32.gmra.mxu0 %v3959
  %v3986 = vpop.f32.mrf.mxu0
  %v3987 = vadd.f32 0.0, %v3986
  %3988 = vdwg.mxu0
  %3989 = vmatpush.msra.mxu0 %v3024
  %3990 = vmatpush.msra.mxu0 %v3020
  %3991 = vmatpush.msra.mxu0 %v3016
  %3992 = vmatpush.msra.mxu0 %v3012
  %3993 = vmatpush.msra.mxu0 %v3008
  %3994 = vmatpush.msra.mxu0 %v3004
  %3995 = vmatpush.msra.mxu0 %v3000
  %3996 = vmatpush.msra.mxu0 %v2996
  %3997 = vmatpush.msra.mxu0 %v2992
  %3998 = vmatpush.msra.mxu0 %v2988
  %3999 = vmatpush.msra.mxu0 %v2984
  %4000 = vmatpush.msra.mxu0 %v2980
  %4001 = vmatpush.msra.mxu0 %v2976
  %4002 = vmatpush.msra.mxu0 %v2972
  %4003 = vmatpush.msra.mxu0 %v2968
  %4004 = vmatpush.msra.mxu0 %v2964
  %4005 = vmatmul.f32.gmra.mxu0 %v3959
  %v4006 = vpop.f32.mrf.mxu0
  %v4007 = vadd.f32 0.0, %v4006
  %4008 = vdwg.mxu0
  %4009 = vmatpush.msra.mxu0 %v3025
  %4010 = vmatpush.msra.mxu0 %v3021
  %4011 = vmatpush.msra.mxu0 %v3017
  %4012 = vmatpush.msra.mxu0 %v3013
  %4013 = vmatpush.msra.mxu0 %v3009
  %4014 = vmatpush.msra.mxu0 %v3005
  %4015 = vmatpush.msra.mxu0 %v3001
  %4016 = vmatpush.msra.mxu0 %v2997
  %4017 = vmatpush.msra.mxu0 %v2993
  %4018 = vmatpush.msra.mxu0 %v2989
  %4019 = vmatpush.msra.mxu0 %v2985
  %4020 = vmatpush.msra.mxu0 %v2981
  %4021 = vmatpush.msra.mxu0 %v2977
  %4022 = vmatpush.msra.mxu0 %v2973
  %4023 = vmatpush.msra.mxu0 %v2969
  %4024 = vmatpush.msra.mxu0 %v2965
  %4025 = vmatmul.f32.gmra.mxu0 %v3959
  %v4026 = vpop.f32.mrf.mxu0
  %v4027 = vadd.f32 0.0, %v4026
  %4028 = vdwg.mxu0
  %4029 = vmatpush.msra.mxu0 %v3026
  %4030 = vmatpush.msra.mxu0 %v3022
  %4031 = vmatpush.msra.mxu0 %v3018
  %4032 = vmatpush.msra.mxu0 %v3014
  %4033 = vmatpush.msra.mxu0 %v3010
  %4034 = vmatpush.msra.mxu0 %v3006
  %4035 = vmatpush.msra.mxu0 %v3002
  %4036 = vmatpush.msra.mxu0 %v2998
  %4037 = vmatpush.msra.mxu0 %v2994
  %4038 = vmatpush.msra.mxu0 %v2990
  %4039 = vmatpush.msra.mxu0 %v2986
  %4040 = vmatpush.msra.mxu0 %v2982
  %4041 = vmatpush.msra.mxu0 %v2978
  %4042 = vmatpush.msra.mxu0 %v2974
  %4043 = vmatpush.msra.mxu0 %v2970
  %4044 = vmatpush.msra.mxu0 %v2966
  %4045 = vmatmul.f32.gmra.mxu0 %v3959
  %v4046 = vpop.f32.mrf.mxu0
  %v4047 = vadd.f32 0.0, %v4046
  %4048 = vdwg.mxu0
  %v4049 = vadd.f32 %v3965, %v3987
  %v4050 = vadd.f32 %v3966, %v4007
  %v4051 = vadd.f32 %v3967, %v4027
  %v4052 = vadd.f32 %v3968, %v4047
  %v4053 = vxor.u32 %v4049, 2147483648
  %v4054 = vmul.f32 %v4053, 1.442695
  %v4055 = vpow.pop %v4054
  %v4056 = vadd.f32 %v4055, 1.0
  %v4057 = vrcp.pop %v4056
  %v4058 = vmul.f32 %v4056, %v4057
  %v4059 = vsub.f32 1.0, %v4058
  %v4060 = vmul.f32 %v4057, %v4059
  %v4061 = vadd.f32 %v4057, %v4060
  %vm4062 = vweird.f32 %v4056
  %vm4063 = vweird.f32 %v4057
  %vm4064 = vmor %vm4062, %vm4063
  %v4065 = vsel %vm4064, %v4057, %v4061
  %v4066 = vand.u32 2147483647, %v4056
  %vm4067 = vcmp.eq.f32.partialorder %v4066, 8.507059e+37
  %v4068 = vand.u32 %v4056, 2147483648
  %v4069 = vor.u32 1.1754944e-38, %v4068
  %v4070 = vsel %vm4067, %v4069, %v4065
  %v4071 = vmul.f32 1.0, %v4070
  %v4072 = vxor.u32 %v4050, 2147483648
  %v4073 = vmul.f32 %v4072, 1.442695
  %v4074 = vpow.pop %v4073
  %v4075 = vadd.f32 %v4074, 1.0
  %v4076 = vrcp.pop %v4075
  %v4077 = vmul.f32 %v4075, %v4076
  %v4078 = vsub.f32 1.0, %v4077
  %v4079 = vmul.f32 %v4076, %v4078
  %v4080 = vadd.f32 %v4076, %v4079
  %vm4081 = vweird.f32 %v4075
  %vm4082 = vweird.f32 %v4076
  %vm4083 = vmor %vm4081, %vm4082
  %v4084 = vsel %vm4083, %v4076, %v4080
  %v4085 = vand.u32 2147483647, %v4075
  %vm4086 = vcmp.eq.f32.partialorder %v4085, 8.507059e+37
  %v4087 = vand.u32 %v4075, 2147483648
  %v4088 = vor.u32 1.1754944e-38, %v4087
  %v4089 = vsel %vm4086, %v4088, %v4084
  %v4090 = vmul.f32 1.0, %v4089
  %v4091 = vtanh.pop %v4051
  %v4092 = vxor.u32 %v4052, 2147483648
  %v4093 = vmul.f32 %v4092, 1.442695
  %v4094 = vpow.pop %v4093
  %v4095 = vadd.f32 %v4094, 1.0
  %v4096 = vrcp.pop %v4095
  %v4097 = vmul.f32 %v4095, %v4096
  %v4098 = vsub.f32 1.0, %v4097
  %v4099 = vmul.f32 %v4096, %v4098
  %v4100 = vadd.f32 %v4096, %v4099
  %vm4101 = vweird.f32 %v4095
  %vm4102 = vweird.f32 %v4096
  %vm4103 = vmor %vm4101, %vm4102
  %v4104 = vsel %vm4103, %v4096, %v4100
  %v4105 = vand.u32 2147483647, %v4095
  %vm4106 = vcmp.eq.f32.partialorder %v4105, 8.507059e+37
  %v4107 = vand.u32 %v4095, 2147483648
  %v4108 = vor.u32 1.1754944e-38, %v4107
  %v4109 = vsel %vm4106, %v4108, %v4104
  %v4110 = vmul.f32 1.0, %v4109
  %v4111 = vmul.f32 %v4090, %v3957
  %v4112 = vmul.f32 %v4071, %v4091
  %v4113 = vadd.f32 %v4111, %v4112
  %v4114 = vtanh.pop %v4113
  %v4115 = vmul.f32 %v4110, %v4114
  %s4116 = scalar_lea.vmem [#allocation3], 48
  %4117 = vst [vmem:[%s4116] sm:$0xff] %v4115
  %s4118 = smul.u32 7, 4
  %s4119 = smul.addr %s4118, 8
  %s4120 = scalar_lea.vmem [#allocation2], %s4119
  %v4121 = vld [vmem:[%s4120] sm:$0xff]
  %v4122 = vld [vmem:[%s4120 + $0x8] sm:$0xff]
  %v4123 = vld [vmem:[%s4120 + $0x10] sm:$0xff]
  %v4124 = vld [vmem:[%s4120 + $0x18] sm:$0xff]
  %4125 = vmatpush.msra.mxu0 %v3023
  %4126 = vmatpush.msra.mxu0 %v3019
  %4127 = vmatpush.msra.mxu0 %v3015
  %4128 = vmatpush.msra.mxu0 %v3011
  %4129 = vmatpush.msra.mxu0 %v3007
  %4130 = vmatpush.msra.mxu0 %v3003
  %4131 = vmatpush.msra.mxu0 %v2999
  %4132 = vmatpush.msra.mxu0 %v2995
  %4133 = vmatpush.msra.mxu0 %v2991
  %4134 = vmatpush.msra.mxu0 %v2987
  %4135 = vmatpush.msra.mxu0 %v2983
  %4136 = vmatpush.msra.mxu0 %v2979
  %4137 = vmatpush.msra.mxu0 %v2975
  %4138 = vmatpush.msra.mxu0 %v2971
  %4139 = vmatpush.msra.mxu0 %v2967
  %4140 = vmatpush.msra.mxu0 %v2963
  %4141 = vmatmul.f32.gmra.mxu0 %v4115
  %v4142 = vpop.f32.mrf.mxu0
  %v4143 = vadd.f32 0.0, %v4142
  %4144 = vdwg.mxu0
  %4145 = vmatpush.msra.mxu0 %v3024
  %4146 = vmatpush.msra.mxu0 %v3020
  %4147 = vmatpush.msra.mxu0 %v3016
  %4148 = vmatpush.msra.mxu0 %v3012
  %4149 = vmatpush.msra.mxu0 %v3008
  %4150 = vmatpush.msra.mxu0 %v3004
  %4151 = vmatpush.msra.mxu0 %v3000
  %4152 = vmatpush.msra.mxu0 %v2996
  %4153 = vmatpush.msra.mxu0 %v2992
  %4154 = vmatpush.msra.mxu0 %v2988
  %4155 = vmatpush.msra.mxu0 %v2984
  %4156 = vmatpush.msra.mxu0 %v2980
  %4157 = vmatpush.msra.mxu0 %v2976
  %4158 = vmatpush.msra.mxu0 %v2972
  %4159 = vmatpush.msra.mxu0 %v2968
  %4160 = vmatpush.msra.mxu0 %v2964
  %4161 = vmatmul.f32.gmra.mxu0 %v4115
  %v4162 = vpop.f32.mrf.mxu0
  %v4163 = vadd.f32 0.0, %v4162
  %4164 = vdwg.mxu0
  %4165 = vmatpush.msra.mxu0 %v3025
  %4166 = vmatpush.msra.mxu0 %v3021
  %4167 = vmatpush.msra.mxu0 %v3017
  %4168 = vmatpush.msra.mxu0 %v3013
  %4169 = vmatpush.msra.mxu0 %v3009
  %4170 = vmatpush.msra.mxu0 %v3005
  %4171 = vmatpush.msra.mxu0 %v3001
  %4172 = vmatpush.msra.mxu0 %v2997
  %4173 = vmatpush.msra.mxu0 %v2993
  %4174 = vmatpush.msra.mxu0 %v2989
  %4175 = vmatpush.msra.mxu0 %v2985
  %4176 = vmatpush.msra.mxu0 %v2981
  %4177 = vmatpush.msra.mxu0 %v2977
  %4178 = vmatpush.msra.mxu0 %v2973
  %4179 = vmatpush.msra.mxu0 %v2969
  %4180 = vmatpush.msra.mxu0 %v2965
  %4181 = vmatmul.f32.gmra.mxu0 %v4115
  %v4182 = vpop.f32.mrf.mxu0
  %v4183 = vadd.f32 0.0, %v4182
  %4184 = vdwg.mxu0
  %4185 = vmatpush.msra.mxu0 %v3026
  %4186 = vmatpush.msra.mxu0 %v3022
  %4187 = vmatpush.msra.mxu0 %v3018
  %4188 = vmatpush.msra.mxu0 %v3014
  %4189 = vmatpush.msra.mxu0 %v3010
  %4190 = vmatpush.msra.mxu0 %v3006
  %4191 = vmatpush.msra.mxu0 %v3002
  %4192 = vmatpush.msra.mxu0 %v2998
  %4193 = vmatpush.msra.mxu0 %v2994
  %4194 = vmatpush.msra.mxu0 %v2990
  %4195 = vmatpush.msra.mxu0 %v2986
  %4196 = vmatpush.msra.mxu0 %v2982
  %4197 = vmatpush.msra.mxu0 %v2978
  %4198 = vmatpush.msra.mxu0 %v2974
  %4199 = vmatpush.msra.mxu0 %v2970
  %4200 = vmatpush.msra.mxu0 %v2966
  %4201 = vmatmul.f32.gmra.mxu0 %v4115
  %v4202 = vpop.f32.mrf.mxu0
  %v4203 = vadd.f32 0.0, %v4202
  %4204 = vdwg.mxu0
  %v4205 = vadd.f32 %v4121, %v4143
  %v4206 = vadd.f32 %v4122, %v4163
  %v4207 = vadd.f32 %v4123, %v4183
  %v4208 = vadd.f32 %v4124, %v4203
  %v4209 = vxor.u32 %v4205, 2147483648
  %v4210 = vmul.f32 %v4209, 1.442695
  %v4211 = vpow.pop %v4210
  %v4212 = vadd.f32 %v4211, 1.0
  %v4213 = vrcp.pop %v4212
  %v4214 = vmul.f32 %v4212, %v4213
  %v4215 = vsub.f32 1.0, %v4214
  %v4216 = vmul.f32 %v4213, %v4215
  %v4217 = vadd.f32 %v4213, %v4216
  %vm4218 = vweird.f32 %v4212
  %vm4219 = vweird.f32 %v4213
  %vm4220 = vmor %vm4218, %vm4219
  %v4221 = vsel %vm4220, %v4213, %v4217
  %v4222 = vand.u32 2147483647, %v4212
  %vm4223 = vcmp.eq.f32.partialorder %v4222, 8.507059e+37
  %v4224 = vand.u32 %v4212, 2147483648
  %v4225 = vor.u32 1.1754944e-38, %v4224
  %v4226 = vsel %vm4223, %v4225, %v4221
  %v4227 = vmul.f32 1.0, %v4226
  %v4228 = vxor.u32 %v4206, 2147483648
  %v4229 = vmul.f32 %v4228, 1.442695
  %v4230 = vpow.pop %v4229
  %v4231 = vadd.f32 %v4230, 1.0
  %v4232 = vrcp.pop %v4231
  %v4233 = vmul.f32 %v4231, %v4232
  %v4234 = vsub.f32 1.0, %v4233
  %v4235 = vmul.f32 %v4232, %v4234
  %v4236 = vadd.f32 %v4232, %v4235
  %vm4237 = vweird.f32 %v4231
  %vm4238 = vweird.f32 %v4232
  %vm4239 = vmor %vm4237, %vm4238
  %v4240 = vsel %vm4239, %v4232, %v4236
  %v4241 = vand.u32 2147483647, %v4231
  %vm4242 = vcmp.eq.f32.partialorder %v4241, 8.507059e+37
  %v4243 = vand.u32 %v4231, 2147483648
  %v4244 = vor.u32 1.1754944e-38, %v4243
  %v4245 = vsel %vm4242, %v4244, %v4240
  %v4246 = vmul.f32 1.0, %v4245
  %v4247 = vtanh.pop %v4207
  %v4248 = vxor.u32 %v4208, 2147483648
  %v4249 = vmul.f32 %v4248, 1.442695
  %v4250 = vpow.pop %v4249
  %v4251 = vadd.f32 %v4250, 1.0
  %v4252 = vrcp.pop %v4251
  %v4253 = vmul.f32 %v4251, %v4252
  %v4254 = vsub.f32 1.0, %v4253
  %v4255 = vmul.f32 %v4252, %v4254
  %v4256 = vadd.f32 %v4252, %v4255
  %vm4257 = vweird.f32 %v4251
  %vm4258 = vweird.f32 %v4252
  %vm4259 = vmor %vm4257, %vm4258
  %v4260 = vsel %vm4259, %v4252, %v4256
  %v4261 = vand.u32 2147483647, %v4251
  %vm4262 = vcmp.eq.f32.partialorder %v4261, 8.507059e+37
  %v4263 = vand.u32 %v4251, 2147483648
  %v4264 = vor.u32 1.1754944e-38, %v4263
  %v4265 = vsel %vm4262, %v4264, %v4260
  %v4266 = vmul.f32 1.0, %v4265
  %v4267 = vmul.f32 %v4246, %v4113
  %v4268 = vmul.f32 %v4227, %v4247
  %v4269 = vadd.f32 %v4267, %v4268
  %v4270 = vtanh.pop %v4269
  %v4271 = vmul.f32 %v4266, %v4270
  %s4272 = scalar_lea.vmem [#allocation3], 56
  %4273 = vst [vmem:[%s4272] sm:$0xff] %v4271
  %s4274 = smul.u32 8, 4
  %s4275 = smul.addr %s4274, 8
  %s4276 = scalar_lea.vmem [#allocation2], %s4275
  %v4277 = vld [vmem:[%s4276] sm:$0xff]
  %v4278 = vld [vmem:[%s4276 + $0x8] sm:$0xff]
  %v4279 = vld [vmem:[%s4276 + $0x10] sm:$0xff]
  %v4280 = vld [vmem:[%s4276 + $0x18] sm:$0xff]
  %4281 = vmatpush.msra.mxu0 %v3023
  %4282 = vmatpush.msra.mxu0 %v3019
  %4283 = vmatpush.msra.mxu0 %v3015
  %4284 = vmatpush.msra.mxu0 %v3011
  %4285 = vmatpush.msra.mxu0 %v3007
  %4286 = vmatpush.msra.mxu0 %v3003
  %4287 = vmatpush.msra.mxu0 %v2999
  %4288 = vmatpush.msra.mxu0 %v2995
  %4289 = vmatpush.msra.mxu0 %v2991
  %4290 = vmatpush.msra.mxu0 %v2987
  %4291 = vmatpush.msra.mxu0 %v2983
  %4292 = vmatpush.msra.mxu0 %v2979
  %4293 = vmatpush.msra.mxu0 %v2975
  %4294 = vmatpush.msra.mxu0 %v2971
  %4295 = vmatpush.msra.mxu0 %v2967
  %4296 = vmatpush.msra.mxu0 %v2963
  %4297 = vmatmul.f32.gmra.mxu0 %v4271
  %v4298 = vpop.f32.mrf.mxu0
  %v4299 = vadd.f32 0.0, %v4298
  %4300 = vdwg.mxu0
  %4301 = vmatpush.msra.mxu0 %v3024
  %4302 = vmatpush.msra.mxu0 %v3020
  %4303 = vmatpush.msra.mxu0 %v3016
  %4304 = vmatpush.msra.mxu0 %v3012
  %4305 = vmatpush.msra.mxu0 %v3008
  %4306 = vmatpush.msra.mxu0 %v3004
  %4307 = vmatpush.msra.mxu0 %v3000
  %4308 = vmatpush.msra.mxu0 %v2996
  %4309 = vmatpush.msra.mxu0 %v2992
  %4310 = vmatpush.msra.mxu0 %v2988
  %4311 = vmatpush.msra.mxu0 %v2984
  %4312 = vmatpush.msra.mxu0 %v2980
  %4313 = vmatpush.msra.mxu0 %v2976
  %4314 = vmatpush.msra.mxu0 %v2972
  %4315 = vmatpush.msra.mxu0 %v2968
  %4316 = vmatpush.msra.mxu0 %v2964
  %4317 = vmatmul.f32.gmra.mxu0 %v4271
  %v4318 = vpop.f32.mrf.mxu0
  %v4319 = vadd.f32 0.0, %v4318
  %4320 = vdwg.mxu0
  %4321 = vmatpush.msra.mxu0 %v3025
  %4322 = vmatpush.msra.mxu0 %v3021
  %4323 = vmatpush.msra.mxu0 %v3017
  %4324 = vmatpush.msra.mxu0 %v3013
  %4325 = vmatpush.msra.mxu0 %v3009
  %4326 = vmatpush.msra.mxu0 %v3005
  %4327 = vmatpush.msra.mxu0 %v3001
  %4328 = vmatpush.msra.mxu0 %v2997
  %4329 = vmatpush.msra.mxu0 %v2993
  %4330 = vmatpush.msra.mxu0 %v2989
  %4331 = vmatpush.msra.mxu0 %v2985
  %4332 = vmatpush.msra.mxu0 %v2981
  %4333 = vmatpush.msra.mxu0 %v2977
  %4334 = vmatpush.msra.mxu0 %v2973
  %4335 = vmatpush.msra.mxu0 %v2969
  %4336 = vmatpush.msra.mxu0 %v2965
  %4337 = vmatmul.f32.gmra.mxu0 %v4271
  %v4338 = vpop.f32.mrf.mxu0
  %v4339 = vadd.f32 0.0, %v4338
  %4340 = vdwg.mxu0
  %4341 = vmatpush.msra.mxu0 %v3026
  %4342 = vmatpush.msra.mxu0 %v3022
  %4343 = vmatpush.msra.mxu0 %v3018
  %4344 = vmatpush.msra.mxu0 %v3014
  %4345 = vmatpush.msra.mxu0 %v3010
  %4346 = vmatpush.msra.mxu0 %v3006
  %4347 = vmatpush.msra.mxu0 %v3002
  %4348 = vmatpush.msra.mxu0 %v2998
  %4349 = vmatpush.msra.mxu0 %v2994
  %4350 = vmatpush.msra.mxu0 %v2990
  %4351 = vmatpush.msra.mxu0 %v2986
  %4352 = vmatpush.msra.mxu0 %v2982
  %4353 = vmatpush.msra.mxu0 %v2978
  %4354 = vmatpush.msra.mxu0 %v2974
  %4355 = vmatpush.msra.mxu0 %v2970
  %4356 = vmatpush.msra.mxu0 %v2966
  %4357 = vmatmul.f32.gmra.mxu0 %v4271
  %v4358 = vpop.f32.mrf.mxu0
  %v4359 = vadd.f32 0.0, %v4358
  %4360 = vdwg.mxu0
  %v4361 = vadd.f32 %v4277, %v4299
  %v4362 = vadd.f32 %v4278, %v4319
  %v4363 = vadd.f32 %v4279, %v4339
  %v4364 = vadd.f32 %v4280, %v4359
  %v4365 = vxor.u32 %v4361, 2147483648
  %v4366 = vmul.f32 %v4365, 1.442695
  %v4367 = vpow.pop %v4366
  %v4368 = vadd.f32 %v4367, 1.0
  %v4369 = vrcp.pop %v4368
  %v4370 = vmul.f32 %v4368, %v4369
  %v4371 = vsub.f32 1.0, %v4370
  %v4372 = vmul.f32 %v4369, %v4371
  %v4373 = vadd.f32 %v4369, %v4372
  %vm4374 = vweird.f32 %v4368
  %vm4375 = vweird.f32 %v4369
  %vm4376 = vmor %vm4374, %vm4375
  %v4377 = vsel %vm4376, %v4369, %v4373
  %v4378 = vand.u32 2147483647, %v4368
  %vm4379 = vcmp.eq.f32.partialorder %v4378, 8.507059e+37
  %v4380 = vand.u32 %v4368, 2147483648
  %v4381 = vor.u32 1.1754944e-38, %v4380
  %v4382 = vsel %vm4379, %v4381, %v4377
  %v4383 = vmul.f32 1.0, %v4382
  %v4384 = vxor.u32 %v4362, 2147483648
  %v4385 = vmul.f32 %v4384, 1.442695
  %v4386 = vpow.pop %v4385
  %v4387 = vadd.f32 %v4386, 1.0
  %v4388 = vrcp.pop %v4387
  %v4389 = vmul.f32 %v4387, %v4388
  %v4390 = vsub.f32 1.0, %v4389
  %v4391 = vmul.f32 %v4388, %v4390
  %v4392 = vadd.f32 %v4388, %v4391
  %vm4393 = vweird.f32 %v4387
  %vm4394 = vweird.f32 %v4388
  %vm4395 = vmor %vm4393, %vm4394
  %v4396 = vsel %vm4395, %v4388, %v4392
  %v4397 = vand.u32 2147483647, %v4387
  %vm4398 = vcmp.eq.f32.partialorder %v4397, 8.507059e+37
  %v4399 = vand.u32 %v4387, 2147483648
  %v4400 = vor.u32 1.1754944e-38, %v4399
  %v4401 = vsel %vm4398, %v4400, %v4396
  %v4402 = vmul.f32 1.0, %v4401
  %v4403 = vtanh.pop %v4363
  %v4404 = vxor.u32 %v4364, 2147483648
  %v4405 = vmul.f32 %v4404, 1.442695
  %v4406 = vpow.pop %v4405
  %v4407 = vadd.f32 %v4406, 1.0
  %v4408 = vrcp.pop %v4407
  %v4409 = vmul.f32 %v4407, %v4408
  %v4410 = vsub.f32 1.0, %v4409
  %v4411 = vmul.f32 %v4408, %v4410
  %v4412 = vadd.f32 %v4408, %v4411
  %vm4413 = vweird.f32 %v4407
  %vm4414 = vweird.f32 %v4408
  %vm4415 = vmor %vm4413, %vm4414
  %v4416 = vsel %vm4415, %v4408, %v4412
  %v4417 = vand.u32 2147483647, %v4407
  %vm4418 = vcmp.eq.f32.partialorder %v4417, 8.507059e+37
  %v4419 = vand.u32 %v4407, 2147483648
  %v4420 = vor.u32 1.1754944e-38, %v4419
  %v4421 = vsel %vm4418, %v4420, %v4416
  %v4422 = vmul.f32 1.0, %v4421
  %v4423 = vmul.f32 %v4402, %v4269
  %v4424 = vmul.f32 %v4383, %v4403
  %v4425 = vadd.f32 %v4423, %v4424
  %v4426 = vtanh.pop %v4425
  %v4427 = vmul.f32 %v4422, %v4426
  %s4428 = scalar_lea.vmem [#allocation3], 64
  %4429 = vst [vmem:[%s4428] sm:$0xff] %v4427
  %s4430 = smul.u32 9, 4
  %s4431 = smul.addr %s4430, 8
  %s4432 = scalar_lea.vmem [#allocation2], %s4431
  %v4433 = vld [vmem:[%s4432] sm:$0xff]
  %v4434 = vld [vmem:[%s4432 + $0x8] sm:$0xff]
  %v4435 = vld [vmem:[%s4432 + $0x10] sm:$0xff]
  %v4436 = vld [vmem:[%s4432 + $0x18] sm:$0xff]
  %4437 = vmatpush.msra.mxu0 %v3023
  %4438 = vmatpush.msra.mxu0 %v3019
  %4439 = vmatpush.msra.mxu0 %v3015
  %4440 = vmatpush.msra.mxu0 %v3011
  %4441 = vmatpush.msra.mxu0 %v3007
  %4442 = vmatpush.msra.mxu0 %v3003
  %4443 = vmatpush.msra.mxu0 %v2999
  %4444 = vmatpush.msra.mxu0 %v2995
  %4445 = vmatpush.msra.mxu0 %v2991
  %4446 = vmatpush.msra.mxu0 %v2987
  %4447 = vmatpush.msra.mxu0 %v2983
  %4448 = vmatpush.msra.mxu0 %v2979
  %4449 = vmatpush.msra.mxu0 %v2975
  %4450 = vmatpush.msra.mxu0 %v2971
  %4451 = vmatpush.msra.mxu0 %v2967
  %4452 = vmatpush.msra.mxu0 %v2963
  %4453 = vmatmul.f32.gmra.mxu0 %v4427
  %v4454 = vpop.f32.mrf.mxu0
  %v4455 = vadd.f32 0.0, %v4454
  %4456 = vdwg.mxu0
  %4457 = vmatpush.msra.mxu0 %v3024
  %4458 = vmatpush.msra.mxu0 %v3020
  %4459 = vmatpush.msra.mxu0 %v3016
  %4460 = vmatpush.msra.mxu0 %v3012
  %4461 = vmatpush.msra.mxu0 %v3008
  %4462 = vmatpush.msra.mxu0 %v3004
  %4463 = vmatpush.msra.mxu0 %v3000
  %4464 = vmatpush.msra.mxu0 %v2996
  %4465 = vmatpush.msra.mxu0 %v2992
  %4466 = vmatpush.msra.mxu0 %v2988
  %4467 = vmatpush.msra.mxu0 %v2984
  %4468 = vmatpush.msra.mxu0 %v2980
  %4469 = vmatpush.msra.mxu0 %v2976
  %4470 = vmatpush.msra.mxu0 %v2972
  %4471 = vmatpush.msra.mxu0 %v2968
  %4472 = vmatpush.msra.mxu0 %v2964
  %4473 = vmatmul.f32.gmra.mxu0 %v4427
  %v4474 = vpop.f32.mrf.mxu0
  %v4475 = vadd.f32 0.0, %v4474
  %4476 = vdwg.mxu0
  %4477 = vmatpush.msra.mxu0 %v3025
  %4478 = vmatpush.msra.mxu0 %v3021
  %4479 = vmatpush.msra.mxu0 %v3017
  %4480 = vmatpush.msra.mxu0 %v3013
  %4481 = vmatpush.msra.mxu0 %v3009
  %4482 = vmatpush.msra.mxu0 %v3005
  %4483 = vmatpush.msra.mxu0 %v3001
  %4484 = vmatpush.msra.mxu0 %v2997
  %4485 = vmatpush.msra.mxu0 %v2993
  %4486 = vmatpush.msra.mxu0 %v2989
  %4487 = vmatpush.msra.mxu0 %v2985
  %4488 = vmatpush.msra.mxu0 %v2981
  %4489 = vmatpush.msra.mxu0 %v2977
  %4490 = vmatpush.msra.mxu0 %v2973
  %4491 = vmatpush.msra.mxu0 %v2969
  %4492 = vmatpush.msra.mxu0 %v2965
  %4493 = vmatmul.f32.gmra.mxu0 %v4427
  %v4494 = vpop.f32.mrf.mxu0
  %v4495 = vadd.f32 0.0, %v4494
  %4496 = vdwg.mxu0
  %4497 = vmatpush.msra.mxu0 %v3026
  %4498 = vmatpush.msra.mxu0 %v3022
  %4499 = vmatpush.msra.mxu0 %v3018
  %4500 = vmatpush.msra.mxu0 %v3014
  %4501 = vmatpush.msra.mxu0 %v3010
  %4502 = vmatpush.msra.mxu0 %v3006
  %4503 = vmatpush.msra.mxu0 %v3002
  %4504 = vmatpush.msra.mxu0 %v2998
  %4505 = vmatpush.msra.mxu0 %v2994
  %4506 = vmatpush.msra.mxu0 %v2990
  %4507 = vmatpush.msra.mxu0 %v2986
  %4508 = vmatpush.msra.mxu0 %v2982
  %4509 = vmatpush.msra.mxu0 %v2978
  %4510 = vmatpush.msra.mxu0 %v2974
  %4511 = vmatpush.msra.mxu0 %v2970
  %4512 = vmatpush.msra.mxu0 %v2966
  %4513 = vmatmul.f32.gmra.mxu0 %v4427
  %v4514 = vpop.f32.mrf.mxu0
  %v4515 = vadd.f32 0.0, %v4514
  %4516 = vdwg.mxu0
  %v4517 = vadd.f32 %v4433, %v4455
  %v4518 = vadd.f32 %v4434, %v4475
  %v4519 = vadd.f32 %v4435, %v4495
  %v4520 = vadd.f32 %v4436, %v4515
  %v4521 = vxor.u32 %v4517, 2147483648
  %v4522 = vmul.f32 %v4521, 1.442695
  %v4523 = vpow.pop %v4522
  %v4524 = vadd.f32 %v4523, 1.0
  %v4525 = vrcp.pop %v4524
  %v4526 = vmul.f32 %v4524, %v4525
  %v4527 = vsub.f32 1.0, %v4526
  %v4528 = vmul.f32 %v4525, %v4527
  %v4529 = vadd.f32 %v4525, %v4528
  %vm4530 = vweird.f32 %v4524
  %vm4531 = vweird.f32 %v4525
  %vm4532 = vmor %vm4530, %vm4531
  %v4533 = vsel %vm4532, %v4525, %v4529
  %v4534 = vand.u32 2147483647, %v4524
  %vm4535 = vcmp.eq.f32.partialorder %v4534, 8.507059e+37
  %v4536 = vand.u32 %v4524, 2147483648
  %v4537 = vor.u32 1.1754944e-38, %v4536
  %v4538 = vsel %vm4535, %v4537, %v4533
  %v4539 = vmul.f32 1.0, %v4538
  %v4540 = vxor.u32 %v4518, 2147483648
  %v4541 = vmul.f32 %v4540, 1.442695
  %v4542 = vpow.pop %v4541
  %v4543 = vadd.f32 %v4542, 1.0
  %v4544 = vrcp.pop %v4543
  %v4545 = vmul.f32 %v4543, %v4544
  %v4546 = vsub.f32 1.0, %v4545
  %v4547 = vmul.f32 %v4544, %v4546
  %v4548 = vadd.f32 %v4544, %v4547
  %vm4549 = vweird.f32 %v4543
  %vm4550 = vweird.f32 %v4544
  %vm4551 = vmor %vm4549, %vm4550
  %v4552 = vsel %vm4551, %v4544, %v4548
  %v4553 = vand.u32 2147483647, %v4543
  %vm4554 = vcmp.eq.f32.partialorder %v4553, 8.507059e+37
  %v4555 = vand.u32 %v4543, 2147483648
  %v4556 = vor.u32 1.1754944e-38, %v4555
  %v4557 = vsel %vm4554, %v4556, %v4552
  %v4558 = vmul.f32 1.0, %v4557
  %v4559 = vtanh.pop %v4519
  %v4560 = vxor.u32 %v4520, 2147483648
  %v4561 = vmul.f32 %v4560, 1.442695
  %v4562 = vpow.pop %v4561
  %v4563 = vadd.f32 %v4562, 1.0
  %v4564 = vrcp.pop %v4563
  %v4565 = vmul.f32 %v4563, %v4564
  %v4566 = vsub.f32 1.0, %v4565
  %v4567 = vmul.f32 %v4564, %v4566
  %v4568 = vadd.f32 %v4564, %v4567
  %vm4569 = vweird.f32 %v4563
  %vm4570 = vweird.f32 %v4564
  %vm4571 = vmor %vm4569, %vm4570
  %v4572 = vsel %vm4571, %v4564, %v4568
  %v4573 = vand.u32 2147483647, %v4563
  %vm4574 = vcmp.eq.f32.partialorder %v4573, 8.507059e+37
  %v4575 = vand.u32 %v4563, 2147483648
  %v4576 = vor.u32 1.1754944e-38, %v4575
  %v4577 = vsel %vm4574, %v4576, %v4572
  %v4578 = vmul.f32 1.0, %v4577
  %v4579 = vmul.f32 %v4558, %v4425
  %v4580 = vmul.f32 %v4539, %v4559
  %v4581 = vadd.f32 %v4579, %v4580
  %v4582 = vtanh.pop %v4581
  %v4583 = vmul.f32 %v4578, %v4582
  %s4584 = scalar_lea.vmem [#allocation3], 72
  %4585 = vst [vmem:[%s4584] sm:$0xff] %v4583
  %s4586 = smul.u32 10, 4
  %s4587 = smul.addr %s4586, 8
  %s4588 = scalar_lea.vmem [#allocation2], %s4587
  %v4589 = vld [vmem:[%s4588] sm:$0xff]
  %v4590 = vld [vmem:[%s4588 + $0x8] sm:$0xff]
  %v4591 = vld [vmem:[%s4588 + $0x10] sm:$0xff]
  %v4592 = vld [vmem:[%s4588 + $0x18] sm:$0xff]
  %4593 = vmatpush.msra.mxu0 %v3023
  %4594 = vmatpush.msra.mxu0 %v3019
  %4595 = vmatpush.msra.mxu0 %v3015
  %4596 = vmatpush.msra.mxu0 %v3011
  %4597 = vmatpush.msra.mxu0 %v3007
  %4598 = vmatpush.msra.mxu0 %v3003
  %4599 = vmatpush.msra.mxu0 %v2999
  %4600 = vmatpush.msra.mxu0 %v2995
  %4601 = vmatpush.msra.mxu0 %v2991
  %4602 = vmatpush.msra.mxu0 %v2987
  %4603 = vmatpush.msra.mxu0 %v2983
  %4604 = vmatpush.msra.mxu0 %v2979
  %4605 = vmatpush.msra.mxu0 %v2975
  %4606 = vmatpush.msra.mxu0 %v2971
  %4607 = vmatpush.msra.mxu0 %v2967
  %4608 = vmatpush.msra.mxu0 %v2963
  %4609 = vmatmul.f32.gmra.mxu0 %v4583
  %v4610 = vpop.f32.mrf.mxu0
  %v4611 = vadd.f32 0.0, %v4610
  %4612 = vdwg.mxu0
  %4613 = vmatpush.msra.mxu0 %v3024
  %4614 = vmatpush.msra.mxu0 %v3020
  %4615 = vmatpush.msra.mxu0 %v3016
  %4616 = vmatpush.msra.mxu0 %v3012
  %4617 = vmatpush.msra.mxu0 %v3008
  %4618 = vmatpush.msra.mxu0 %v3004
  %4619 = vmatpush.msra.mxu0 %v3000
  %4620 = vmatpush.msra.mxu0 %v2996
  %4621 = vmatpush.msra.mxu0 %v2992
  %4622 = vmatpush.msra.mxu0 %v2988
  %4623 = vmatpush.msra.mxu0 %v2984
  %4624 = vmatpush.msra.mxu0 %v2980
  %4625 = vmatpush.msra.mxu0 %v2976
  %4626 = vmatpush.msra.mxu0 %v2972
  %4627 = vmatpush.msra.mxu0 %v2968
  %4628 = vmatpush.msra.mxu0 %v2964
  %4629 = vmatmul.f32.gmra.mxu0 %v4583
  %v4630 = vpop.f32.mrf.mxu0
  %v4631 = vadd.f32 0.0, %v4630
  %4632 = vdwg.mxu0
  %4633 = vmatpush.msra.mxu0 %v3025
  %4634 = vmatpush.msra.mxu0 %v3021
  %4635 = vmatpush.msra.mxu0 %v3017
  %4636 = vmatpush.msra.mxu0 %v3013
  %4637 = vmatpush.msra.mxu0 %v3009
  %4638 = vmatpush.msra.mxu0 %v3005
  %4639 = vmatpush.msra.mxu0 %v3001
  %4640 = vmatpush.msra.mxu0 %v2997
  %4641 = vmatpush.msra.mxu0 %v2993
  %4642 = vmatpush.msra.mxu0 %v2989
  %4643 = vmatpush.msra.mxu0 %v2985
  %4644 = vmatpush.msra.mxu0 %v2981
  %4645 = vmatpush.msra.mxu0 %v2977
  %4646 = vmatpush.msra.mxu0 %v2973
  %4647 = vmatpush.msra.mxu0 %v2969
  %4648 = vmatpush.msra.mxu0 %v2965
  %4649 = vmatmul.f32.gmra.mxu0 %v4583
  %v4650 = vpop.f32.mrf.mxu0
  %v4651 = vadd.f32 0.0, %v4650
  %4652 = vdwg.mxu0
  %4653 = vmatpush.msra.mxu0 %v3026
  %4654 = vmatpush.msra.mxu0 %v3022
  %4655 = vmatpush.msra.mxu0 %v3018
  %4656 = vmatpush.msra.mxu0 %v3014
  %4657 = vmatpush.msra.mxu0 %v3010
  %4658 = vmatpush.msra.mxu0 %v3006
  %4659 = vmatpush.msra.mxu0 %v3002
  %4660 = vmatpush.msra.mxu0 %v2998
  %4661 = vmatpush.msra.mxu0 %v2994
  %4662 = vmatpush.msra.mxu0 %v2990
  %4663 = vmatpush.msra.mxu0 %v2986
  %4664 = vmatpush.msra.mxu0 %v2982
  %4665 = vmatpush.msra.mxu0 %v2978
  %4666 = vmatpush.msra.mxu0 %v2974
  %4667 = vmatpush.msra.mxu0 %v2970
  %4668 = vmatpush.msra.mxu0 %v2966
  %4669 = vmatmul.f32.gmra.mxu0 %v4583
  %v4670 = vpop.f32.mrf.mxu0
  %v4671 = vadd.f32 0.0, %v4670
  %4672 = vdwg.mxu0
  %v4673 = vadd.f32 %v4589, %v4611
  %v4674 = vadd.f32 %v4590, %v4631
  %v4675 = vadd.f32 %v4591, %v4651
  %v4676 = vadd.f32 %v4592, %v4671
  %v4677 = vxor.u32 %v4673, 2147483648
  %v4678 = vmul.f32 %v4677, 1.442695
  %v4679 = vpow.pop %v4678
  %v4680 = vadd.f32 %v4679, 1.0
  %v4681 = vrcp.pop %v4680
  %v4682 = vmul.f32 %v4680, %v4681
  %v4683 = vsub.f32 1.0, %v4682
  %v4684 = vmul.f32 %v4681, %v4683
  %v4685 = vadd.f32 %v4681, %v4684
  %vm4686 = vweird.f32 %v4680
  %vm4687 = vweird.f32 %v4681
  %vm4688 = vmor %vm4686, %vm4687
  %v4689 = vsel %vm4688, %v4681, %v4685
  %v4690 = vand.u32 2147483647, %v4680
  %vm4691 = vcmp.eq.f32.partialorder %v4690, 8.507059e+37
  %v4692 = vand.u32 %v4680, 2147483648
  %v4693 = vor.u32 1.1754944e-38, %v4692
  %v4694 = vsel %vm4691, %v4693, %v4689
  %v4695 = vmul.f32 1.0, %v4694
  %v4696 = vxor.u32 %v4674, 2147483648
  %v4697 = vmul.f32 %v4696, 1.442695
  %v4698 = vpow.pop %v4697
  %v4699 = vadd.f32 %v4698, 1.0
  %v4700 = vrcp.pop %v4699
  %v4701 = vmul.f32 %v4699, %v4700
  %v4702 = vsub.f32 1.0, %v4701
  %v4703 = vmul.f32 %v4700, %v4702
  %v4704 = vadd.f32 %v4700, %v4703
  %vm4705 = vweird.f32 %v4699
  %vm4706 = vweird.f32 %v4700
  %vm4707 = vmor %vm4705, %vm4706
  %v4708 = vsel %vm4707, %v4700, %v4704
  %v4709 = vand.u32 2147483647, %v4699
  %vm4710 = vcmp.eq.f32.partialorder %v4709, 8.507059e+37
  %v4711 = vand.u32 %v4699, 2147483648
  %v4712 = vor.u32 1.1754944e-38, %v4711
  %v4713 = vsel %vm4710, %v4712, %v4708
  %v4714 = vmul.f32 1.0, %v4713
  %v4715 = vtanh.pop %v4675
  %v4716 = vxor.u32 %v4676, 2147483648
  %v4717 = vmul.f32 %v4716, 1.442695
  %v4718 = vpow.pop %v4717
  %v4719 = vadd.f32 %v4718, 1.0
  %v4720 = vrcp.pop %v4719
  %v4721 = vmul.f32 %v4719, %v4720
  %v4722 = vsub.f32 1.0, %v4721
  %v4723 = vmul.f32 %v4720, %v4722
  %v4724 = vadd.f32 %v4720, %v4723
  %vm4725 = vweird.f32 %v4719
  %vm4726 = vweird.f32 %v4720
  %vm4727 = vmor %vm4725, %vm4726
  %v4728 = vsel %vm4727, %v4720, %v4724
  %v4729 = vand.u32 2147483647, %v4719
  %vm4730 = vcmp.eq.f32.partialorder %v4729, 8.507059e+37
  %v4731 = vand.u32 %v4719, 2147483648
  %v4732 = vor.u32 1.1754944e-38, %v4731
  %v4733 = vsel %vm4730, %v4732, %v4728
  %v4734 = vmul.f32 1.0, %v4733
  %v4735 = vmul.f32 %v4714, %v4581
  %v4736 = vmul.f32 %v4695, %v4715
  %v4737 = vadd.f32 %v4735, %v4736
  %v4738 = vtanh.pop %v4737
  %v4739 = vmul.f32 %v4734, %v4738
  %s4740 = scalar_lea.vmem [#allocation3], 80
  %4741 = vst [vmem:[%s4740] sm:$0xff] %v4739
  %s4742 = smul.u32 11, 4
  %s4743 = smul.addr %s4742, 8
  %s4744 = scalar_lea.vmem [#allocation2], %s4743
  %v4745 = vld [vmem:[%s4744] sm:$0xff]
  %v4746 = vld [vmem:[%s4744 + $0x8] sm:$0xff]
  %v4747 = vld [vmem:[%s4744 + $0x10] sm:$0xff]
  %v4748 = vld [vmem:[%s4744 + $0x18] sm:$0xff]
  %4749 = vmatpush.msra.mxu0 %v3023
  %4750 = vmatpush.msra.mxu0 %v3019
  %4751 = vmatpush.msra.mxu0 %v3015
  %4752 = vmatpush.msra.mxu0 %v3011
  %4753 = vmatpush.msra.mxu0 %v3007
  %4754 = vmatpush.msra.mxu0 %v3003
  %4755 = vmatpush.msra.mxu0 %v2999
  %4756 = vmatpush.msra.mxu0 %v2995
  %4757 = vmatpush.msra.mxu0 %v2991
  %4758 = vmatpush.msra.mxu0 %v2987
  %4759 = vmatpush.msra.mxu0 %v2983
  %4760 = vmatpush.msra.mxu0 %v2979
  %4761 = vmatpush.msra.mxu0 %v2975
  %4762 = vmatpush.msra.mxu0 %v2971
  %4763 = vmatpush.msra.mxu0 %v2967
  %4764 = vmatpush.msra.mxu0 %v2963
  %4765 = vmatmul.f32.gmra.mxu0 %v4739
  %v4766 = vpop.f32.mrf.mxu0
  %v4767 = vadd.f32 0.0, %v4766
  %4768 = vdwg.mxu0
  %4769 = vmatpush.msra.mxu0 %v3024
  %4770 = vmatpush.msra.mxu0 %v3020
  %4771 = vmatpush.msra.mxu0 %v3016
  %4772 = vmatpush.msra.mxu0 %v3012
  %4773 = vmatpush.msra.mxu0 %v3008
  %4774 = vmatpush.msra.mxu0 %v3004
  %4775 = vmatpush.msra.mxu0 %v3000
  %4776 = vmatpush.msra.mxu0 %v2996
  %4777 = vmatpush.msra.mxu0 %v2992
  %4778 = vmatpush.msra.mxu0 %v2988
  %4779 = vmatpush.msra.mxu0 %v2984
  %4780 = vmatpush.msra.mxu0 %v2980
  %4781 = vmatpush.msra.mxu0 %v2976
  %4782 = vmatpush.msra.mxu0 %v2972
  %4783 = vmatpush.msra.mxu0 %v2968
  %4784 = vmatpush.msra.mxu0 %v2964
  %4785 = vmatmul.f32.gmra.mxu0 %v4739
  %v4786 = vpop.f32.mrf.mxu0
  %v4787 = vadd.f32 0.0, %v4786
  %4788 = vdwg.mxu0
  %4789 = vmatpush.msra.mxu0 %v3025
  %4790 = vmatpush.msra.mxu0 %v3021
  %4791 = vmatpush.msra.mxu0 %v3017
  %4792 = vmatpush.msra.mxu0 %v3013
  %4793 = vmatpush.msra.mxu0 %v3009
  %4794 = vmatpush.msra.mxu0 %v3005
  %4795 = vmatpush.msra.mxu0 %v3001
  %4796 = vmatpush.msra.mxu0 %v2997
  %4797 = vmatpush.msra.mxu0 %v2993
  %4798 = vmatpush.msra.mxu0 %v2989
  %4799 = vmatpush.msra.mxu0 %v2985
  %4800 = vmatpush.msra.mxu0 %v2981
  %4801 = vmatpush.msra.mxu0 %v2977
  %4802 = vmatpush.msra.mxu0 %v2973
  %4803 = vmatpush.msra.mxu0 %v2969
  %4804 = vmatpush.msra.mxu0 %v2965
  %4805 = vmatmul.f32.gmra.mxu0 %v4739
  %v4806 = vpop.f32.mrf.mxu0
  %v4807 = vadd.f32 0.0, %v4806
  %4808 = vdwg.mxu0
  %4809 = vmatpush.msra.mxu0 %v3026
  %4810 = vmatpush.msra.mxu0 %v3022
  %4811 = vmatpush.msra.mxu0 %v3018
  %4812 = vmatpush.msra.mxu0 %v3014
  %4813 = vmatpush.msra.mxu0 %v3010
  %4814 = vmatpush.msra.mxu0 %v3006
  %4815 = vmatpush.msra.mxu0 %v3002
  %4816 = vmatpush.msra.mxu0 %v2998
  %4817 = vmatpush.msra.mxu0 %v2994
  %4818 = vmatpush.msra.mxu0 %v2990
  %4819 = vmatpush.msra.mxu0 %v2986
  %4820 = vmatpush.msra.mxu0 %v2982
  %4821 = vmatpush.msra.mxu0 %v2978
  %4822 = vmatpush.msra.mxu0 %v2974
  %4823 = vmatpush.msra.mxu0 %v2970
  %4824 = vmatpush.msra.mxu0 %v2966
  %4825 = vmatmul.f32.gmra.mxu0 %v4739
  %v4826 = vpop.f32.mrf.mxu0
  %v4827 = vadd.f32 0.0, %v4826
  %4828 = vdwg.mxu0
  %v4829 = vadd.f32 %v4745, %v4767
  %v4830 = vadd.f32 %v4746, %v4787
  %v4831 = vadd.f32 %v4747, %v4807
  %v4832 = vadd.f32 %v4748, %v4827
  %v4833 = vxor.u32 %v4829, 2147483648
  %v4834 = vmul.f32 %v4833, 1.442695
  %v4835 = vpow.pop %v4834
  %v4836 = vadd.f32 %v4835, 1.0
  %v4837 = vrcp.pop %v4836
  %v4838 = vmul.f32 %v4836, %v4837
  %v4839 = vsub.f32 1.0, %v4838
  %v4840 = vmul.f32 %v4837, %v4839
  %v4841 = vadd.f32 %v4837, %v4840
  %vm4842 = vweird.f32 %v4836
  %vm4843 = vweird.f32 %v4837
  %vm4844 = vmor %vm4842, %vm4843
  %v4845 = vsel %vm4844, %v4837, %v4841
  %v4846 = vand.u32 2147483647, %v4836
  %vm4847 = vcmp.eq.f32.partialorder %v4846, 8.507059e+37
  %v4848 = vand.u32 %v4836, 2147483648
  %v4849 = vor.u32 1.1754944e-38, %v4848
  %v4850 = vsel %vm4847, %v4849, %v4845
  %v4851 = vmul.f32 1.0, %v4850
  %v4852 = vxor.u32 %v4830, 2147483648
  %v4853 = vmul.f32 %v4852, 1.442695
  %v4854 = vpow.pop %v4853
  %v4855 = vadd.f32 %v4854, 1.0
  %v4856 = vrcp.pop %v4855
  %v4857 = vmul.f32 %v4855, %v4856
  %v4858 = vsub.f32 1.0, %v4857
  %v4859 = vmul.f32 %v4856, %v4858
  %v4860 = vadd.f32 %v4856, %v4859
  %vm4861 = vweird.f32 %v4855
  %vm4862 = vweird.f32 %v4856
  %vm4863 = vmor %vm4861, %vm4862
  %v4864 = vsel %vm4863, %v4856, %v4860
  %v4865 = vand.u32 2147483647, %v4855
  %vm4866 = vcmp.eq.f32.partialorder %v4865, 8.507059e+37
  %v4867 = vand.u32 %v4855, 2147483648
  %v4868 = vor.u32 1.1754944e-38, %v4867
  %v4869 = vsel %vm4866, %v4868, %v4864
  %v4870 = vmul.f32 1.0, %v4869
  %v4871 = vtanh.pop %v4831
  %v4872 = vxor.u32 %v4832, 2147483648
  %v4873 = vmul.f32 %v4872, 1.442695
  %v4874 = vpow.pop %v4873
  %v4875 = vadd.f32 %v4874, 1.0
  %v4876 = vrcp.pop %v4875
  %v4877 = vmul.f32 %v4875, %v4876
  %v4878 = vsub.f32 1.0, %v4877
  %v4879 = vmul.f32 %v4876, %v4878
  %v4880 = vadd.f32 %v4876, %v4879
  %vm4881 = vweird.f32 %v4875
  %vm4882 = vweird.f32 %v4876
  %vm4883 = vmor %vm4881, %vm4882
  %v4884 = vsel %vm4883, %v4876, %v4880
  %v4885 = vand.u32 2147483647, %v4875
  %vm4886 = vcmp.eq.f32.partialorder %v4885, 8.507059e+37
  %v4887 = vand.u32 %v4875, 2147483648
  %v4888 = vor.u32 1.1754944e-38, %v4887
  %v4889 = vsel %vm4886, %v4888, %v4884
  %v4890 = vmul.f32 1.0, %v4889
  %v4891 = vmul.f32 %v4870, %v4737
  %v4892 = vmul.f32 %v4851, %v4871
  %v4893 = vadd.f32 %v4891, %v4892
  %v4894 = vtanh.pop %v4893
  %v4895 = vmul.f32 %v4890, %v4894
  %s4896 = scalar_lea.vmem [#allocation3], 88
  %4897 = vst [vmem:[%s4896] sm:$0xff] %v4895
  %s4898 = smul.u32 12, 4
  %s4899 = smul.addr %s4898, 8
  %s4900 = scalar_lea.vmem [#allocation2], %s4899
  %v4901 = vld [vmem:[%s4900] sm:$0xff]
  %v4902 = vld [vmem:[%s4900 + $0x8] sm:$0xff]
  %v4903 = vld [vmem:[%s4900 + $0x10] sm:$0xff]
  %v4904 = vld [vmem:[%s4900 + $0x18] sm:$0xff]
  %4905 = vmatpush.msra.mxu0 %v3023
  %4906 = vmatpush.msra.mxu0 %v3019
  %4907 = vmatpush.msra.mxu0 %v3015
  %4908 = vmatpush.msra.mxu0 %v3011
  %4909 = vmatpush.msra.mxu0 %v3007
  %4910 = vmatpush.msra.mxu0 %v3003
  %4911 = vmatpush.msra.mxu0 %v2999
  %4912 = vmatpush.msra.mxu0 %v2995
  %4913 = vmatpush.msra.mxu0 %v2991
  %4914 = vmatpush.msra.mxu0 %v2987
  %4915 = vmatpush.msra.mxu0 %v2983
  %4916 = vmatpush.msra.mxu0 %v2979
  %4917 = vmatpush.msra.mxu0 %v2975
  %4918 = vmatpush.msra.mxu0 %v2971
  %4919 = vmatpush.msra.mxu0 %v2967
  %4920 = vmatpush.msra.mxu0 %v2963
  %4921 = vmatmul.f32.gmra.mxu0 %v4895
  %v4922 = vpop.f32.mrf.mxu0
  %v4923 = vadd.f32 0.0, %v4922
  %4924 = vdwg.mxu0
  %4925 = vmatpush.msra.mxu0 %v3024
  %4926 = vmatpush.msra.mxu0 %v3020
  %4927 = vmatpush.msra.mxu0 %v3016
  %4928 = vmatpush.msra.mxu0 %v3012
  %4929 = vmatpush.msra.mxu0 %v3008
  %4930 = vmatpush.msra.mxu0 %v3004
  %4931 = vmatpush.msra.mxu0 %v3000
  %4932 = vmatpush.msra.mxu0 %v2996
  %4933 = vmatpush.msra.mxu0 %v2992
  %4934 = vmatpush.msra.mxu0 %v2988
  %4935 = vmatpush.msra.mxu0 %v2984
  %4936 = vmatpush.msra.mxu0 %v2980
  %4937 = vmatpush.msra.mxu0 %v2976
  %4938 = vmatpush.msra.mxu0 %v2972
  %4939 = vmatpush.msra.mxu0 %v2968
  %4940 = vmatpush.msra.mxu0 %v2964
  %4941 = vmatmul.f32.gmra.mxu0 %v4895
  %v4942 = vpop.f32.mrf.mxu0
  %v4943 = vadd.f32 0.0, %v4942
  %4944 = vdwg.mxu0
  %4945 = vmatpush.msra.mxu0 %v3025
  %4946 = vmatpush.msra.mxu0 %v3021
  %4947 = vmatpush.msra.mxu0 %v3017
  %4948 = vmatpush.msra.mxu0 %v3013
  %4949 = vmatpush.msra.mxu0 %v3009
  %4950 = vmatpush.msra.mxu0 %v3005
  %4951 = vmatpush.msra.mxu0 %v3001
  %4952 = vmatpush.msra.mxu0 %v2997
  %4953 = vmatpush.msra.mxu0 %v2993
  %4954 = vmatpush.msra.mxu0 %v2989
  %4955 = vmatpush.msra.mxu0 %v2985
  %4956 = vmatpush.msra.mxu0 %v2981
  %4957 = vmatpush.msra.mxu0 %v2977
  %4958 = vmatpush.msra.mxu0 %v2973
  %4959 = vmatpush.msra.mxu0 %v2969
  %4960 = vmatpush.msra.mxu0 %v2965
  %4961 = vmatmul.f32.gmra.mxu0 %v4895
  %v4962 = vpop.f32.mrf.mxu0
  %v4963 = vadd.f32 0.0, %v4962
  %4964 = vdwg.mxu0
  %4965 = vmatpush.msra.mxu0 %v3026
  %4966 = vmatpush.msra.mxu0 %v3022
  %4967 = vmatpush.msra.mxu0 %v3018
  %4968 = vmatpush.msra.mxu0 %v3014
  %4969 = vmatpush.msra.mxu0 %v3010
  %4970 = vmatpush.msra.mxu0 %v3006
  %4971 = vmatpush.msra.mxu0 %v3002
  %4972 = vmatpush.msra.mxu0 %v2998
  %4973 = vmatpush.msra.mxu0 %v2994
  %4974 = vmatpush.msra.mxu0 %v2990
  %4975 = vmatpush.msra.mxu0 %v2986
  %4976 = vmatpush.msra.mxu0 %v2982
  %4977 = vmatpush.msra.mxu0 %v2978
  %4978 = vmatpush.msra.mxu0 %v2974
  %4979 = vmatpush.msra.mxu0 %v2970
  %4980 = vmatpush.msra.mxu0 %v2966
  %4981 = vmatmul.f32.gmra.mxu0 %v4895
  %v4982 = vpop.f32.mrf.mxu0
  %v4983 = vadd.f32 0.0, %v4982
  %4984 = vdwg.mxu0
  %v4985 = vadd.f32 %v4901, %v4923
  %v4986 = vadd.f32 %v4902, %v4943
  %v4987 = vadd.f32 %v4903, %v4963
  %v4988 = vadd.f32 %v4904, %v4983
  %v4989 = vxor.u32 %v4985, 2147483648
  %v4990 = vmul.f32 %v4989, 1.442695
  %v4991 = vpow.pop %v4990
  %v4992 = vadd.f32 %v4991, 1.0
  %v4993 = vrcp.pop %v4992
  %v4994 = vmul.f32 %v4992, %v4993
  %v4995 = vsub.f32 1.0, %v4994
  %v4996 = vmul.f32 %v4993, %v4995
  %v4997 = vadd.f32 %v4993, %v4996
  %vm4998 = vweird.f32 %v4992
  %vm4999 = vweird.f32 %v4993
  %vm5000 = vmor %vm4998, %vm4999
  %v5001 = vsel %vm5000, %v4993, %v4997
  %v5002 = vand.u32 2147483647, %v4992
  %vm5003 = vcmp.eq.f32.partialorder %v5002, 8.507059e+37
  %v5004 = vand.u32 %v4992, 2147483648
  %v5005 = vor.u32 1.1754944e-38, %v5004
  %v5006 = vsel %vm5003, %v5005, %v5001
  %v5007 = vmul.f32 1.0, %v5006
  %v5008 = vxor.u32 %v4986, 2147483648
  %v5009 = vmul.f32 %v5008, 1.442695
  %v5010 = vpow.pop %v5009
  %v5011 = vadd.f32 %v5010, 1.0
  %v5012 = vrcp.pop %v5011
  %v5013 = vmul.f32 %v5011, %v5012
  %v5014 = vsub.f32 1.0, %v5013
  %v5015 = vmul.f32 %v5012, %v5014
  %v5016 = vadd.f32 %v5012, %v5015
  %vm5017 = vweird.f32 %v5011
  %vm5018 = vweird.f32 %v5012
  %vm5019 = vmor %vm5017, %vm5018
  %v5020 = vsel %vm5019, %v5012, %v5016
  %v5021 = vand.u32 2147483647, %v5011
  %vm5022 = vcmp.eq.f32.partialorder %v5021, 8.507059e+37
  %v5023 = vand.u32 %v5011, 2147483648
  %v5024 = vor.u32 1.1754944e-38, %v5023
  %v5025 = vsel %vm5022, %v5024, %v5020
  %v5026 = vmul.f32 1.0, %v5025
  %v5027 = vtanh.pop %v4987
  %v5028 = vxor.u32 %v4988, 2147483648
  %v5029 = vmul.f32 %v5028, 1.442695
  %v5030 = vpow.pop %v5029
  %v5031 = vadd.f32 %v5030, 1.0
  %v5032 = vrcp.pop %v5031
  %v5033 = vmul.f32 %v5031, %v5032
  %v5034 = vsub.f32 1.0, %v5033
  %v5035 = vmul.f32 %v5032, %v5034
  %v5036 = vadd.f32 %v5032, %v5035
  %vm5037 = vweird.f32 %v5031
  %vm5038 = vweird.f32 %v5032
  %vm5039 = vmor %vm5037, %vm5038
  %v5040 = vsel %vm5039, %v5032, %v5036
  %v5041 = vand.u32 2147483647, %v5031
  %vm5042 = vcmp.eq.f32.partialorder %v5041, 8.507059e+37
  %v5043 = vand.u32 %v5031, 2147483648
  %v5044 = vor.u32 1.1754944e-38, %v5043
  %v5045 = vsel %vm5042, %v5044, %v5040
  %v5046 = vmul.f32 1.0, %v5045
  %v5047 = vmul.f32 %v5026, %v4893
  %v5048 = vmul.f32 %v5007, %v5027
  %v5049 = vadd.f32 %v5047, %v5048
  %v5050 = vtanh.pop %v5049
  %v5051 = vmul.f32 %v5046, %v5050
  %s5052 = scalar_lea.vmem [#allocation3], 96
  %5053 = vst [vmem:[%s5052] sm:$0xff] %v5051
  %s5054 = smul.u32 13, 4
  %s5055 = smul.addr %s5054, 8
  %s5056 = scalar_lea.vmem [#allocation2], %s5055
  %v5057 = vld [vmem:[%s5056] sm:$0xff]
  %v5058 = vld [vmem:[%s5056 + $0x8] sm:$0xff]
  %v5059 = vld [vmem:[%s5056 + $0x10] sm:$0xff]
  %v5060 = vld [vmem:[%s5056 + $0x18] sm:$0xff]
  %5061 = vmatpush.msra.mxu0 %v3023
  %5062 = vmatpush.msra.mxu0 %v3019
  %5063 = vmatpush.msra.mxu0 %v3015
  %5064 = vmatpush.msra.mxu0 %v3011
  %5065 = vmatpush.msra.mxu0 %v3007
  %5066 = vmatpush.msra.mxu0 %v3003
  %5067 = vmatpush.msra.mxu0 %v2999
  %5068 = vmatpush.msra.mxu0 %v2995
  %5069 = vmatpush.msra.mxu0 %v2991
  %5070 = vmatpush.msra.mxu0 %v2987
  %5071 = vmatpush.msra.mxu0 %v2983
  %5072 = vmatpush.msra.mxu0 %v2979
  %5073 = vmatpush.msra.mxu0 %v2975
  %5074 = vmatpush.msra.mxu0 %v2971
  %5075 = vmatpush.msra.mxu0 %v2967
  %5076 = vmatpush.msra.mxu0 %v2963
  %5077 = vmatmul.f32.gmra.mxu0 %v5051
  %v5078 = vpop.f32.mrf.mxu0
  %v5079 = vadd.f32 0.0, %v5078
  %5080 = vdwg.mxu0
  %5081 = vmatpush.msra.mxu0 %v3024
  %5082 = vmatpush.msra.mxu0 %v3020
  %5083 = vmatpush.msra.mxu0 %v3016
  %5084 = vmatpush.msra.mxu0 %v3012
  %5085 = vmatpush.msra.mxu0 %v3008
  %5086 = vmatpush.msra.mxu0 %v3004
  %5087 = vmatpush.msra.mxu0 %v3000
  %5088 = vmatpush.msra.mxu0 %v2996
  %5089 = vmatpush.msra.mxu0 %v2992
  %5090 = vmatpush.msra.mxu0 %v2988
  %5091 = vmatpush.msra.mxu0 %v2984
  %5092 = vmatpush.msra.mxu0 %v2980
  %5093 = vmatpush.msra.mxu0 %v2976
  %5094 = vmatpush.msra.mxu0 %v2972
  %5095 = vmatpush.msra.mxu0 %v2968
  %5096 = vmatpush.msra.mxu0 %v2964
  %5097 = vmatmul.f32.gmra.mxu0 %v5051
  %v5098 = vpop.f32.mrf.mxu0
  %v5099 = vadd.f32 0.0, %v5098
  %5100 = vdwg.mxu0
  %5101 = vmatpush.msra.mxu0 %v3025
  %5102 = vmatpush.msra.mxu0 %v3021
  %5103 = vmatpush.msra.mxu0 %v3017
  %5104 = vmatpush.msra.mxu0 %v3013
  %5105 = vmatpush.msra.mxu0 %v3009
  %5106 = vmatpush.msra.mxu0 %v3005
  %5107 = vmatpush.msra.mxu0 %v3001
  %5108 = vmatpush.msra.mxu0 %v2997
  %5109 = vmatpush.msra.mxu0 %v2993
  %5110 = vmatpush.msra.mxu0 %v2989
  %5111 = vmatpush.msra.mxu0 %v2985
  %5112 = vmatpush.msra.mxu0 %v2981
  %5113 = vmatpush.msra.mxu0 %v2977
  %5114 = vmatpush.msra.mxu0 %v2973
  %5115 = vmatpush.msra.mxu0 %v2969
  %5116 = vmatpush.msra.mxu0 %v2965
  %5117 = vmatmul.f32.gmra.mxu0 %v5051
  %v5118 = vpop.f32.mrf.mxu0
  %v5119 = vadd.f32 0.0, %v5118
  %5120 = vdwg.mxu0
  %5121 = vmatpush.msra.mxu0 %v3026
  %5122 = vmatpush.msra.mxu0 %v3022
  %5123 = vmatpush.msra.mxu0 %v3018
  %5124 = vmatpush.msra.mxu0 %v3014
  %5125 = vmatpush.msra.mxu0 %v3010
  %5126 = vmatpush.msra.mxu0 %v3006
  %5127 = vmatpush.msra.mxu0 %v3002
  %5128 = vmatpush.msra.mxu0 %v2998
  %5129 = vmatpush.msra.mxu0 %v2994
  %5130 = vmatpush.msra.mxu0 %v2990
  %5131 = vmatpush.msra.mxu0 %v2986
  %5132 = vmatpush.msra.mxu0 %v2982
  %5133 = vmatpush.msra.mxu0 %v2978
  %5134 = vmatpush.msra.mxu0 %v2974
  %5135 = vmatpush.msra.mxu0 %v2970
  %5136 = vmatpush.msra.mxu0 %v2966
  %5137 = vmatmul.f32.gmra.mxu0 %v5051
  %v5138 = vpop.f32.mrf.mxu0
  %v5139 = vadd.f32 0.0, %v5138
  %5140 = vdwg.mxu0
  %v5141 = vadd.f32 %v5057, %v5079
  %v5142 = vadd.f32 %v5058, %v5099
  %v5143 = vadd.f32 %v5059, %v5119
  %v5144 = vadd.f32 %v5060, %v5139
  %v5145 = vxor.u32 %v5141, 2147483648
  %v5146 = vmul.f32 %v5145, 1.442695
  %v5147 = vpow.pop %v5146
  %v5148 = vadd.f32 %v5147, 1.0
  %v5149 = vrcp.pop %v5148
  %v5150 = vmul.f32 %v5148, %v5149
  %v5151 = vsub.f32 1.0, %v5150
  %v5152 = vmul.f32 %v5149, %v5151
  %v5153 = vadd.f32 %v5149, %v5152
  %vm5154 = vweird.f32 %v5148
  %vm5155 = vweird.f32 %v5149
  %vm5156 = vmor %vm5154, %vm5155
  %v5157 = vsel %vm5156, %v5149, %v5153
  %v5158 = vand.u32 2147483647, %v5148
  %vm5159 = vcmp.eq.f32.partialorder %v5158, 8.507059e+37
  %v5160 = vand.u32 %v5148, 2147483648
  %v5161 = vor.u32 1.1754944e-38, %v5160
  %v5162 = vsel %vm5159, %v5161, %v5157
  %v5163 = vmul.f32 1.0, %v5162
  %v5164 = vxor.u32 %v5142, 2147483648
  %v5165 = vmul.f32 %v5164, 1.442695
  %v5166 = vpow.pop %v5165
  %v5167 = vadd.f32 %v5166, 1.0
  %v5168 = vrcp.pop %v5167
  %v5169 = vmul.f32 %v5167, %v5168
  %v5170 = vsub.f32 1.0, %v5169
  %v5171 = vmul.f32 %v5168, %v5170
  %v5172 = vadd.f32 %v5168, %v5171
  %vm5173 = vweird.f32 %v5167
  %vm5174 = vweird.f32 %v5168
  %vm5175 = vmor %vm5173, %vm5174
  %v5176 = vsel %vm5175, %v5168, %v5172
  %v5177 = vand.u32 2147483647, %v5167
  %vm5178 = vcmp.eq.f32.partialorder %v5177, 8.507059e+37
  %v5179 = vand.u32 %v5167, 2147483648
  %v5180 = vor.u32 1.1754944e-38, %v5179
  %v5181 = vsel %vm5178, %v5180, %v5176
  %v5182 = vmul.f32 1.0, %v5181
  %v5183 = vtanh.pop %v5143
  %v5184 = vxor.u32 %v5144, 2147483648
  %v5185 = vmul.f32 %v5184, 1.442695
  %v5186 = vpow.pop %v5185
  %v5187 = vadd.f32 %v5186, 1.0
  %v5188 = vrcp.pop %v5187
  %v5189 = vmul.f32 %v5187, %v5188
  %v5190 = vsub.f32 1.0, %v5189
  %v5191 = vmul.f32 %v5188, %v5190
  %v5192 = vadd.f32 %v5188, %v5191
  %vm5193 = vweird.f32 %v5187
  %vm5194 = vweird.f32 %v5188
  %vm5195 = vmor %vm5193, %vm5194
  %v5196 = vsel %vm5195, %v5188, %v5192
  %v5197 = vand.u32 2147483647, %v5187
  %vm5198 = vcmp.eq.f32.partialorder %v5197, 8.507059e+37
  %v5199 = vand.u32 %v5187, 2147483648
  %v5200 = vor.u32 1.1754944e-38, %v5199
  %v5201 = vsel %vm5198, %v5200, %v5196
  %v5202 = vmul.f32 1.0, %v5201
  %v5203 = vmul.f32 %v5182, %v5049
  %v5204 = vmul.f32 %v5163, %v5183
  %v5205 = vadd.f32 %v5203, %v5204
  %v5206 = vtanh.pop %v5205
  %v5207 = vmul.f32 %v5202, %v5206
  %s5208 = scalar_lea.vmem [#allocation3], 104
  %5209 = vst [vmem:[%s5208] sm:$0xff] %v5207
  %s5210 = smul.u32 14, 4
  %s5211 = smul.addr %s5210, 8
  %s5212 = scalar_lea.vmem [#allocation2], %s5211
  %v5213 = vld [vmem:[%s5212] sm:$0xff]
  %v5214 = vld [vmem:[%s5212 + $0x8] sm:$0xff]
  %v5215 = vld [vmem:[%s5212 + $0x10] sm:$0xff]
  %v5216 = vld [vmem:[%s5212 + $0x18] sm:$0xff]
  %5217 = vmatpush.msra.mxu0 %v3023
  %5218 = vmatpush.msra.mxu0 %v3019
  %5219 = vmatpush.msra.mxu0 %v3015
  %5220 = vmatpush.msra.mxu0 %v3011
  %5221 = vmatpush.msra.mxu0 %v3007
  %5222 = vmatpush.msra.mxu0 %v3003
  %5223 = vmatpush.msra.mxu0 %v2999
  %5224 = vmatpush.msra.mxu0 %v2995
  %5225 = vmatpush.msra.mxu0 %v2991
  %5226 = vmatpush.msra.mxu0 %v2987
  %5227 = vmatpush.msra.mxu0 %v2983
  %5228 = vmatpush.msra.mxu0 %v2979
  %5229 = vmatpush.msra.mxu0 %v2975
  %5230 = vmatpush.msra.mxu0 %v2971
  %5231 = vmatpush.msra.mxu0 %v2967
  %5232 = vmatpush.msra.mxu0 %v2963
  %5233 = vmatmul.f32.gmra.mxu0 %v5207
  %v5234 = vpop.f32.mrf.mxu0
  %v5235 = vadd.f32 0.0, %v5234
  %5236 = vdwg.mxu0
  %5237 = vmatpush.msra.mxu0 %v3024
  %5238 = vmatpush.msra.mxu0 %v3020
  %5239 = vmatpush.msra.mxu0 %v3016
  %5240 = vmatpush.msra.mxu0 %v3012
  %5241 = vmatpush.msra.mxu0 %v3008
  %5242 = vmatpush.msra.mxu0 %v3004
  %5243 = vmatpush.msra.mxu0 %v3000
  %5244 = vmatpush.msra.mxu0 %v2996
  %5245 = vmatpush.msra.mxu0 %v2992
  %5246 = vmatpush.msra.mxu0 %v2988
  %5247 = vmatpush.msra.mxu0 %v2984
  %5248 = vmatpush.msra.mxu0 %v2980
  %5249 = vmatpush.msra.mxu0 %v2976
  %5250 = vmatpush.msra.mxu0 %v2972
  %5251 = vmatpush.msra.mxu0 %v2968
  %5252 = vmatpush.msra.mxu0 %v2964
  %5253 = vmatmul.f32.gmra.mxu0 %v5207
  %v5254 = vpop.f32.mrf.mxu0
  %v5255 = vadd.f32 0.0, %v5254
  %5256 = vdwg.mxu0
  %5257 = vmatpush.msra.mxu0 %v3025
  %5258 = vmatpush.msra.mxu0 %v3021
  %5259 = vmatpush.msra.mxu0 %v3017
  %5260 = vmatpush.msra.mxu0 %v3013
  %5261 = vmatpush.msra.mxu0 %v3009
  %5262 = vmatpush.msra.mxu0 %v3005
  %5263 = vmatpush.msra.mxu0 %v3001
  %5264 = vmatpush.msra.mxu0 %v2997
  %5265 = vmatpush.msra.mxu0 %v2993
  %5266 = vmatpush.msra.mxu0 %v2989
  %5267 = vmatpush.msra.mxu0 %v2985
  %5268 = vmatpush.msra.mxu0 %v2981
  %5269 = vmatpush.msra.mxu0 %v2977
  %5270 = vmatpush.msra.mxu0 %v2973
  %5271 = vmatpush.msra.mxu0 %v2969
  %5272 = vmatpush.msra.mxu0 %v2965
  %5273 = vmatmul.f32.gmra.mxu0 %v5207
  %v5274 = vpop.f32.mrf.mxu0
  %v5275 = vadd.f32 0.0, %v5274
  %5276 = vdwg.mxu0
  %5277 = vmatpush.msra.mxu0 %v3026
  %5278 = vmatpush.msra.mxu0 %v3022
  %5279 = vmatpush.msra.mxu0 %v3018
  %5280 = vmatpush.msra.mxu0 %v3014
  %5281 = vmatpush.msra.mxu0 %v3010
  %5282 = vmatpush.msra.mxu0 %v3006
  %5283 = vmatpush.msra.mxu0 %v3002
  %5284 = vmatpush.msra.mxu0 %v2998
  %5285 = vmatpush.msra.mxu0 %v2994
  %5286 = vmatpush.msra.mxu0 %v2990
  %5287 = vmatpush.msra.mxu0 %v2986
  %5288 = vmatpush.msra.mxu0 %v2982
  %5289 = vmatpush.msra.mxu0 %v2978
  %5290 = vmatpush.msra.mxu0 %v2974
  %5291 = vmatpush.msra.mxu0 %v2970
  %5292 = vmatpush.msra.mxu0 %v2966
  %5293 = vmatmul.f32.gmra.mxu0 %v5207
  %v5294 = vpop.f32.mrf.mxu0
  %v5295 = vadd.f32 0.0, %v5294
  %5296 = vdwg.mxu0
  %v5297 = vadd.f32 %v5213, %v5235
  %v5298 = vadd.f32 %v5214, %v5255
  %v5299 = vadd.f32 %v5215, %v5275
  %v5300 = vadd.f32 %v5216, %v5295
  %v5301 = vxor.u32 %v5297, 2147483648
  %v5302 = vmul.f32 %v5301, 1.442695
  %v5303 = vpow.pop %v5302
  %v5304 = vadd.f32 %v5303, 1.0
  %v5305 = vrcp.pop %v5304
  %v5306 = vmul.f32 %v5304, %v5305
  %v5307 = vsub.f32 1.0, %v5306
  %v5308 = vmul.f32 %v5305, %v5307
  %v5309 = vadd.f32 %v5305, %v5308
  %vm5310 = vweird.f32 %v5304
  %vm5311 = vweird.f32 %v5305
  %vm5312 = vmor %vm5310, %vm5311
  %v5313 = vsel %vm5312, %v5305, %v5309
  %v5314 = vand.u32 2147483647, %v5304
  %vm5315 = vcmp.eq.f32.partialorder %v5314, 8.507059e+37
  %v5316 = vand.u32 %v5304, 2147483648
  %v5317 = vor.u32 1.1754944e-38, %v5316
  %v5318 = vsel %vm5315, %v5317, %v5313
  %v5319 = vmul.f32 1.0, %v5318
  %v5320 = vxor.u32 %v5298, 2147483648
  %v5321 = vmul.f32 %v5320, 1.442695
  %v5322 = vpow.pop %v5321
  %v5323 = vadd.f32 %v5322, 1.0
  %v5324 = vrcp.pop %v5323
  %v5325 = vmul.f32 %v5323, %v5324
  %v5326 = vsub.f32 1.0, %v5325
  %v5327 = vmul.f32 %v5324, %v5326
  %v5328 = vadd.f32 %v5324, %v5327
  %vm5329 = vweird.f32 %v5323
  %vm5330 = vweird.f32 %v5324
  %vm5331 = vmor %vm5329, %vm5330
  %v5332 = vsel %vm5331, %v5324, %v5328
  %v5333 = vand.u32 2147483647, %v5323
  %vm5334 = vcmp.eq.f32.partialorder %v5333, 8.507059e+37
  %v5335 = vand.u32 %v5323, 2147483648
  %v5336 = vor.u32 1.1754944e-38, %v5335
  %v5337 = vsel %vm5334, %v5336, %v5332
  %v5338 = vmul.f32 1.0, %v5337
  %v5339 = vtanh.pop %v5299
  %v5340 = vxor.u32 %v5300, 2147483648
  %v5341 = vmul.f32 %v5340, 1.442695
  %v5342 = vpow.pop %v5341
  %v5343 = vadd.f32 %v5342, 1.0
  %v5344 = vrcp.pop %v5343
  %v5345 = vmul.f32 %v5343, %v5344
  %v5346 = vsub.f32 1.0, %v5345
  %v5347 = vmul.f32 %v5344, %v5346
  %v5348 = vadd.f32 %v5344, %v5347
  %vm5349 = vweird.f32 %v5343
  %vm5350 = vweird.f32 %v5344
  %vm5351 = vmor %vm5349, %vm5350
  %v5352 = vsel %vm5351, %v5344, %v5348
  %v5353 = vand.u32 2147483647, %v5343
  %vm5354 = vcmp.eq.f32.partialorder %v5353, 8.507059e+37
  %v5355 = vand.u32 %v5343, 2147483648
  %v5356 = vor.u32 1.1754944e-38, %v5355
  %v5357 = vsel %vm5354, %v5356, %v5352
  %v5358 = vmul.f32 1.0, %v5357
  %v5359 = vmul.f32 %v5338, %v5205
  %v5360 = vmul.f32 %v5319, %v5339
  %v5361 = vadd.f32 %v5359, %v5360
  %v5362 = vtanh.pop %v5361
  %v5363 = vmul.f32 %v5358, %v5362
  %s5364 = scalar_lea.vmem [#allocation3], 112
  %5365 = vst [vmem:[%s5364] sm:$0xff] %v5363
  %s5366 = smul.u32 15, 4
  %s5367 = smul.addr %s5366, 8
  %s5368 = scalar_lea.vmem [#allocation2], %s5367
  %v5369 = vld [vmem:[%s5368] sm:$0xff]
  %v5370 = vld [vmem:[%s5368 + $0x8] sm:$0xff]
  %v5371 = vld [vmem:[%s5368 + $0x10] sm:$0xff]
  %v5372 = vld [vmem:[%s5368 + $0x18] sm:$0xff]
  %5373 = vmatpush.msra.mxu0 %v3023
  %5374 = vmatpush.msra.mxu0 %v3019
  %5375 = vmatpush.msra.mxu0 %v3015
  %5376 = vmatpush.msra.mxu0 %v3011
  %5377 = vmatpush.msra.mxu0 %v3007
  %5378 = vmatpush.msra.mxu0 %v3003
  %5379 = vmatpush.msra.mxu0 %v2999
  %5380 = vmatpush.msra.mxu0 %v2995
  %5381 = vmatpush.msra.mxu0 %v2991
  %5382 = vmatpush.msra.mxu0 %v2987
  %5383 = vmatpush.msra.mxu0 %v2983
  %5384 = vmatpush.msra.mxu0 %v2979
  %5385 = vmatpush.msra.mxu0 %v2975
  %5386 = vmatpush.msra.mxu0 %v2971
  %5387 = vmatpush.msra.mxu0 %v2967
  %5388 = vmatpush.msra.mxu0 %v2963
  %5389 = vmatmul.f32.gmra.mxu0 %v5363
  %v5390 = vpop.f32.mrf.mxu0
  %v5391 = vadd.f32 0.0, %v5390
  %5392 = vdwg.mxu0
  %5393 = vmatpush.msra.mxu0 %v3024
  %5394 = vmatpush.msra.mxu0 %v3020
  %5395 = vmatpush.msra.mxu0 %v3016
  %5396 = vmatpush.msra.mxu0 %v3012
  %5397 = vmatpush.msra.mxu0 %v3008
  %5398 = vmatpush.msra.mxu0 %v3004
  %5399 = vmatpush.msra.mxu0 %v3000
  %5400 = vmatpush.msra.mxu0 %v2996
  %5401 = vmatpush.msra.mxu0 %v2992
  %5402 = vmatpush.msra.mxu0 %v2988
  %5403 = vmatpush.msra.mxu0 %v2984
  %5404 = vmatpush.msra.mxu0 %v2980
  %5405 = vmatpush.msra.mxu0 %v2976
  %5406 = vmatpush.msra.mxu0 %v2972
  %5407 = vmatpush.msra.mxu0 %v2968
  %5408 = vmatpush.msra.mxu0 %v2964
  %5409 = vmatmul.f32.gmra.mxu0 %v5363
  %v5410 = vpop.f32.mrf.mxu0
  %v5411 = vadd.f32 0.0, %v5410
  %5412 = vdwg.mxu0
  %5413 = vmatpush.msra.mxu0 %v3025
  %5414 = vmatpush.msra.mxu0 %v3021
  %5415 = vmatpush.msra.mxu0 %v3017
  %5416 = vmatpush.msra.mxu0 %v3013
  %5417 = vmatpush.msra.mxu0 %v3009
  %5418 = vmatpush.msra.mxu0 %v3005
  %5419 = vmatpush.msra.mxu0 %v3001
  %5420 = vmatpush.msra.mxu0 %v2997
  %5421 = vmatpush.msra.mxu0 %v2993
  %5422 = vmatpush.msra.mxu0 %v2989
  %5423 = vmatpush.msra.mxu0 %v2985
  %5424 = vmatpush.msra.mxu0 %v2981
  %5425 = vmatpush.msra.mxu0 %v2977
  %5426 = vmatpush.msra.mxu0 %v2973
  %5427 = vmatpush.msra.mxu0 %v2969
  %5428 = vmatpush.msra.mxu0 %v2965
  %5429 = vmatmul.f32.gmra.mxu0 %v5363
  %v5430 = vpop.f32.mrf.mxu0
  %v5431 = vadd.f32 0.0, %v5430
  %5432 = vdwg.mxu0
  %5433 = vmatpush.msra.mxu0 %v3026
  %5434 = vmatpush.msra.mxu0 %v3022
  %5435 = vmatpush.msra.mxu0 %v3018
  %5436 = vmatpush.msra.mxu0 %v3014
  %5437 = vmatpush.msra.mxu0 %v3010
  %5438 = vmatpush.msra.mxu0 %v3006
  %5439 = vmatpush.msra.mxu0 %v3002
  %5440 = vmatpush.msra.mxu0 %v2998
  %5441 = vmatpush.msra.mxu0 %v2994
  %5442 = vmatpush.msra.mxu0 %v2990
  %5443 = vmatpush.msra.mxu0 %v2986
  %5444 = vmatpush.msra.mxu0 %v2982
  %5445 = vmatpush.msra.mxu0 %v2978
  %5446 = vmatpush.msra.mxu0 %v2974
  %5447 = vmatpush.msra.mxu0 %v2970
  %5448 = vmatpush.msra.mxu0 %v2966
  %5449 = vmatmul.f32.gmra.mxu0 %v5363
  %v5450 = vpop.f32.mrf.mxu0
  %v5451 = vadd.f32 0.0, %v5450
  %5452 = vdwg.mxu0
  %v5453 = vadd.f32 %v5369, %v5391
  %v5454 = vadd.f32 %v5370, %v5411
  %v5455 = vadd.f32 %v5371, %v5431
  %v5456 = vadd.f32 %v5372, %v5451
  %v5457 = vxor.u32 %v5453, 2147483648
  %v5458 = vmul.f32 %v5457, 1.442695
  %v5459 = vpow.pop %v5458
  %v5460 = vadd.f32 %v5459, 1.0
  %v5461 = vrcp.pop %v5460
  %v5462 = vmul.f32 %v5460, %v5461
  %v5463 = vsub.f32 1.0, %v5462
  %v5464 = vmul.f32 %v5461, %v5463
  %v5465 = vadd.f32 %v5461, %v5464
  %vm5466 = vweird.f32 %v5460
  %vm5467 = vweird.f32 %v5461
  %vm5468 = vmor %vm5466, %vm5467
  %v5469 = vsel %vm5468, %v5461, %v5465
  %v5470 = vand.u32 2147483647, %v5460
  %vm5471 = vcmp.eq.f32.partialorder %v5470, 8.507059e+37
  %v5472 = vand.u32 %v5460, 2147483648
  %v5473 = vor.u32 1.1754944e-38, %v5472
  %v5474 = vsel %vm5471, %v5473, %v5469
  %v5475 = vmul.f32 1.0, %v5474
  %v5476 = vxor.u32 %v5454, 2147483648
  %v5477 = vmul.f32 %v5476, 1.442695
  %v5478 = vpow.pop %v5477
  %v5479 = vadd.f32 %v5478, 1.0
  %v5480 = vrcp.pop %v5479
  %v5481 = vmul.f32 %v5479, %v5480
  %v5482 = vsub.f32 1.0, %v5481
  %v5483 = vmul.f32 %v5480, %v5482
  %v5484 = vadd.f32 %v5480, %v5483
  %vm5485 = vweird.f32 %v5479
  %vm5486 = vweird.f32 %v5480
  %vm5487 = vmor %vm5485, %vm5486
  %v5488 = vsel %vm5487, %v5480, %v5484
  %v5489 = vand.u32 2147483647, %v5479
  %vm5490 = vcmp.eq.f32.partialorder %v5489, 8.507059e+37
  %v5491 = vand.u32 %v5479, 2147483648
  %v5492 = vor.u32 1.1754944e-38, %v5491
  %v5493 = vsel %vm5490, %v5492, %v5488
  %v5494 = vmul.f32 1.0, %v5493
  %v5495 = vtanh.pop %v5455
  %v5496 = vxor.u32 %v5456, 2147483648
  %v5497 = vmul.f32 %v5496, 1.442695
  %v5498 = vpow.pop %v5497
  %v5499 = vadd.f32 %v5498, 1.0
  %v5500 = vrcp.pop %v5499
  %v5501 = vmul.f32 %v5499, %v5500
  %v5502 = vsub.f32 1.0, %v5501
  %v5503 = vmul.f32 %v5500, %v5502
  %v5504 = vadd.f32 %v5500, %v5503
  %vm5505 = vweird.f32 %v5499
  %vm5506 = vweird.f32 %v5500
  %vm5507 = vmor %vm5505, %vm5506
  %v5508 = vsel %vm5507, %v5500, %v5504
  %v5509 = vand.u32 2147483647, %v5499
  %vm5510 = vcmp.eq.f32.partialorder %v5509, 8.507059e+37
  %v5511 = vand.u32 %v5499, 2147483648
  %v5512 = vor.u32 1.1754944e-38, %v5511
  %v5513 = vsel %vm5510, %v5512, %v5508
  %v5514 = vmul.f32 1.0, %v5513
  %v5515 = vmul.f32 %v5494, %v5361
  %v5516 = vmul.f32 %v5475, %v5495
  %v5517 = vadd.f32 %v5515, %v5516
  %v5518 = vtanh.pop %v5517
  %v5519 = vmul.f32 %v5514, %v5518
  %s5520 = scalar_lea.vmem [#allocation3], 120
  %5521 = vst [vmem:[%s5520] sm:$0xff] %v5519
  %s5522 = smul.u32 16, 4
  %s5523 = smul.addr %s5522, 8
  %s5524 = scalar_lea.vmem [#allocation2], %s5523
  %v5525 = vld [vmem:[%s5524] sm:$0xff]
  %v5526 = vld [vmem:[%s5524 + $0x8] sm:$0xff]
  %v5527 = vld [vmem:[%s5524 + $0x10] sm:$0xff]
  %v5528 = vld [vmem:[%s5524 + $0x18] sm:$0xff]
  %5529 = vmatpush.msra.mxu0 %v3023
  %5530 = vmatpush.msra.mxu0 %v3019
  %5531 = vmatpush.msra.mxu0 %v3015
  %5532 = vmatpush.msra.mxu0 %v3011
  %5533 = vmatpush.msra.mxu0 %v3007
  %5534 = vmatpush.msra.mxu0 %v3003
  %5535 = vmatpush.msra.mxu0 %v2999
  %5536 = vmatpush.msra.mxu0 %v2995
  %5537 = vmatpush.msra.mxu0 %v2991
  %5538 = vmatpush.msra.mxu0 %v2987
  %5539 = vmatpush.msra.mxu0 %v2983
  %5540 = vmatpush.msra.mxu0 %v2979
  %5541 = vmatpush.msra.mxu0 %v2975
  %5542 = vmatpush.msra.mxu0 %v2971
  %5543 = vmatpush.msra.mxu0 %v2967
  %5544 = vmatpush.msra.mxu0 %v2963
  %5545 = vmatmul.f32.gmra.mxu0 %v5519
  %v5546 = vpop.f32.mrf.mxu0
  %v5547 = vadd.f32 0.0, %v5546
  %5548 = vdwg.mxu0
  %5549 = vmatpush.msra.mxu0 %v3024
  %5550 = vmatpush.msra.mxu0 %v3020
  %5551 = vmatpush.msra.mxu0 %v3016
  %5552 = vmatpush.msra.mxu0 %v3012
  %5553 = vmatpush.msra.mxu0 %v3008
  %5554 = vmatpush.msra.mxu0 %v3004
  %5555 = vmatpush.msra.mxu0 %v3000
  %5556 = vmatpush.msra.mxu0 %v2996
  %5557 = vmatpush.msra.mxu0 %v2992
  %5558 = vmatpush.msra.mxu0 %v2988
  %5559 = vmatpush.msra.mxu0 %v2984
  %5560 = vmatpush.msra.mxu0 %v2980
  %5561 = vmatpush.msra.mxu0 %v2976
  %5562 = vmatpush.msra.mxu0 %v2972
  %5563 = vmatpush.msra.mxu0 %v2968
  %5564 = vmatpush.msra.mxu0 %v2964
  %5565 = vmatmul.f32.gmra.mxu0 %v5519
  %v5566 = vpop.f32.mrf.mxu0
  %v5567 = vadd.f32 0.0, %v5566
  %5568 = vdwg.mxu0
  %5569 = vmatpush.msra.mxu0 %v3025
  %5570 = vmatpush.msra.mxu0 %v3021
  %5571 = vmatpush.msra.mxu0 %v3017
  %5572 = vmatpush.msra.mxu0 %v3013
  %5573 = vmatpush.msra.mxu0 %v3009
  %5574 = vmatpush.msra.mxu0 %v3005
  %5575 = vmatpush.msra.mxu0 %v3001
  %5576 = vmatpush.msra.mxu0 %v2997
  %5577 = vmatpush.msra.mxu0 %v2993
  %5578 = vmatpush.msra.mxu0 %v2989
  %5579 = vmatpush.msra.mxu0 %v2985
  %5580 = vmatpush.msra.mxu0 %v2981
  %5581 = vmatpush.msra.mxu0 %v2977
  %5582 = vmatpush.msra.mxu0 %v2973
  %5583 = vmatpush.msra.mxu0 %v2969
  %5584 = vmatpush.msra.mxu0 %v2965
  %5585 = vmatmul.f32.gmra.mxu0 %v5519
  %v5586 = vpop.f32.mrf.mxu0
  %v5587 = vadd.f32 0.0, %v5586
  %5588 = vdwg.mxu0
  %5589 = vmatpush.msra.mxu0 %v3026
  %5590 = vmatpush.msra.mxu0 %v3022
  %5591 = vmatpush.msra.mxu0 %v3018
  %5592 = vmatpush.msra.mxu0 %v3014
  %5593 = vmatpush.msra.mxu0 %v3010
  %5594 = vmatpush.msra.mxu0 %v3006
  %5595 = vmatpush.msra.mxu0 %v3002
  %5596 = vmatpush.msra.mxu0 %v2998
  %5597 = vmatpush.msra.mxu0 %v2994
  %5598 = vmatpush.msra.mxu0 %v2990
  %5599 = vmatpush.msra.mxu0 %v2986
  %5600 = vmatpush.msra.mxu0 %v2982
  %5601 = vmatpush.msra.mxu0 %v2978
  %5602 = vmatpush.msra.mxu0 %v2974
  %5603 = vmatpush.msra.mxu0 %v2970
  %5604 = vmatpush.msra.mxu0 %v2966
  %5605 = vmatmul.f32.gmra.mxu0 %v5519
  %v5606 = vpop.f32.mrf.mxu0
  %v5607 = vadd.f32 0.0, %v5606
  %5608 = vdwg.mxu0
  %v5609 = vadd.f32 %v5525, %v5547
  %v5610 = vadd.f32 %v5526, %v5567
  %v5611 = vadd.f32 %v5527, %v5587
  %v5612 = vadd.f32 %v5528, %v5607
  %v5613 = vxor.u32 %v5609, 2147483648
  %v5614 = vmul.f32 %v5613, 1.442695
  %v5615 = vpow.pop %v5614
  %v5616 = vadd.f32 %v5615, 1.0
  %v5617 = vrcp.pop %v5616
  %v5618 = vmul.f32 %v5616, %v5617
  %v5619 = vsub.f32 1.0, %v5618
  %v5620 = vmul.f32 %v5617, %v5619
  %v5621 = vadd.f32 %v5617, %v5620
  %vm5622 = vweird.f32 %v5616
  %vm5623 = vweird.f32 %v5617
  %vm5624 = vmor %vm5622, %vm5623
  %v5625 = vsel %vm5624, %v5617, %v5621
  %v5626 = vand.u32 2147483647, %v5616
  %vm5627 = vcmp.eq.f32.partialorder %v5626, 8.507059e+37
  %v5628 = vand.u32 %v5616, 2147483648
  %v5629 = vor.u32 1.1754944e-38, %v5628
  %v5630 = vsel %vm5627, %v5629, %v5625
  %v5631 = vmul.f32 1.0, %v5630
  %v5632 = vxor.u32 %v5610, 2147483648
  %v5633 = vmul.f32 %v5632, 1.442695
  %v5634 = vpow.pop %v5633
  %v5635 = vadd.f32 %v5634, 1.0
  %v5636 = vrcp.pop %v5635
  %v5637 = vmul.f32 %v5635, %v5636
  %v5638 = vsub.f32 1.0, %v5637
  %v5639 = vmul.f32 %v5636, %v5638
  %v5640 = vadd.f32 %v5636, %v5639
  %vm5641 = vweird.f32 %v5635
  %vm5642 = vweird.f32 %v5636
  %vm5643 = vmor %vm5641, %vm5642
  %v5644 = vsel %vm5643, %v5636, %v5640
  %v5645 = vand.u32 2147483647, %v5635
  %vm5646 = vcmp.eq.f32.partialorder %v5645, 8.507059e+37
  %v5647 = vand.u32 %v5635, 2147483648
  %v5648 = vor.u32 1.1754944e-38, %v5647
  %v5649 = vsel %vm5646, %v5648, %v5644
  %v5650 = vmul.f32 1.0, %v5649
  %v5651 = vtanh.pop %v5611
  %v5652 = vxor.u32 %v5612, 2147483648
  %v5653 = vmul.f32 %v5652, 1.442695
  %v5654 = vpow.pop %v5653
  %v5655 = vadd.f32 %v5654, 1.0
  %v5656 = vrcp.pop %v5655
  %v5657 = vmul.f32 %v5655, %v5656
  %v5658 = vsub.f32 1.0, %v5657
  %v5659 = vmul.f32 %v5656, %v5658
  %v5660 = vadd.f32 %v5656, %v5659
  %vm5661 = vweird.f32 %v5655
  %vm5662 = vweird.f32 %v5656
  %vm5663 = vmor %vm5661, %vm5662
  %v5664 = vsel %vm5663, %v5656, %v5660
  %v5665 = vand.u32 2147483647, %v5655
  %vm5666 = vcmp.eq.f32.partialorder %v5665, 8.507059e+37
  %v5667 = vand.u32 %v5655, 2147483648
  %v5668 = vor.u32 1.1754944e-38, %v5667
  %v5669 = vsel %vm5666, %v5668, %v5664
  %v5670 = vmul.f32 1.0, %v5669
  %v5671 = vmul.f32 %v5650, %v5517
  %v5672 = vmul.f32 %v5631, %v5651
  %v5673 = vadd.f32 %v5671, %v5672
  %v5674 = vtanh.pop %v5673
  %v5675 = vmul.f32 %v5670, %v5674
  %s5676 = scalar_lea.vmem [#allocation3], 128
  %5677 = vst [vmem:[%s5676] sm:$0xff] %v5675
  %s5678 = smul.u32 17, 4
  %s5679 = smul.addr %s5678, 8
  %s5680 = scalar_lea.vmem [#allocation2], %s5679
  %v5681 = vld [vmem:[%s5680] sm:$0xff]
  %v5682 = vld [vmem:[%s5680 + $0x8] sm:$0xff]
  %v5683 = vld [vmem:[%s5680 + $0x10] sm:$0xff]
  %v5684 = vld [vmem:[%s5680 + $0x18] sm:$0xff]
  %5685 = vmatpush.msra.mxu0 %v3023
  %5686 = vmatpush.msra.mxu0 %v3019
  %5687 = vmatpush.msra.mxu0 %v3015
  %5688 = vmatpush.msra.mxu0 %v3011
  %5689 = vmatpush.msra.mxu0 %v3007
  %5690 = vmatpush.msra.mxu0 %v3003
  %5691 = vmatpush.msra.mxu0 %v2999
  %5692 = vmatpush.msra.mxu0 %v2995
  %5693 = vmatpush.msra.mxu0 %v2991
  %5694 = vmatpush.msra.mxu0 %v2987
  %5695 = vmatpush.msra.mxu0 %v2983
  %5696 = vmatpush.msra.mxu0 %v2979
  %5697 = vmatpush.msra.mxu0 %v2975
  %5698 = vmatpush.msra.mxu0 %v2971
  %5699 = vmatpush.msra.mxu0 %v2967
  %5700 = vmatpush.msra.mxu0 %v2963
  %5701 = vmatmul.f32.gmra.mxu0 %v5675
  %v5702 = vpop.f32.mrf.mxu0
  %v5703 = vadd.f32 0.0, %v5702
  %5704 = vdwg.mxu0
  %5705 = vmatpush.msra.mxu0 %v3024
  %5706 = vmatpush.msra.mxu0 %v3020
  %5707 = vmatpush.msra.mxu0 %v3016
  %5708 = vmatpush.msra.mxu0 %v3012
  %5709 = vmatpush.msra.mxu0 %v3008
  %5710 = vmatpush.msra.mxu0 %v3004
  %5711 = vmatpush.msra.mxu0 %v3000
  %5712 = vmatpush.msra.mxu0 %v2996
  %5713 = vmatpush.msra.mxu0 %v2992
  %5714 = vmatpush.msra.mxu0 %v2988
  %5715 = vmatpush.msra.mxu0 %v2984
  %5716 = vmatpush.msra.mxu0 %v2980
  %5717 = vmatpush.msra.mxu0 %v2976
  %5718 = vmatpush.msra.mxu0 %v2972
  %5719 = vmatpush.msra.mxu0 %v2968
  %5720 = vmatpush.msra.mxu0 %v2964
  %5721 = vmatmul.f32.gmra.mxu0 %v5675
  %v5722 = vpop.f32.mrf.mxu0
  %v5723 = vadd.f32 0.0, %v5722
  %5724 = vdwg.mxu0
  %5725 = vmatpush.msra.mxu0 %v3025
  %5726 = vmatpush.msra.mxu0 %v3021
  %5727 = vmatpush.msra.mxu0 %v3017
  %5728 = vmatpush.msra.mxu0 %v3013
  %5729 = vmatpush.msra.mxu0 %v3009
  %5730 = vmatpush.msra.mxu0 %v3005
  %5731 = vmatpush.msra.mxu0 %v3001
  %5732 = vmatpush.msra.mxu0 %v2997
  %5733 = vmatpush.msra.mxu0 %v2993
  %5734 = vmatpush.msra.mxu0 %v2989
  %5735 = vmatpush.msra.mxu0 %v2985
  %5736 = vmatpush.msra.mxu0 %v2981
  %5737 = vmatpush.msra.mxu0 %v2977
  %5738 = vmatpush.msra.mxu0 %v2973
  %5739 = vmatpush.msra.mxu0 %v2969
  %5740 = vmatpush.msra.mxu0 %v2965
  %5741 = vmatmul.f32.gmra.mxu0 %v5675
  %v5742 = vpop.f32.mrf.mxu0
  %v5743 = vadd.f32 0.0, %v5742
  %5744 = vdwg.mxu0
  %5745 = vmatpush.msra.mxu0 %v3026
  %5746 = vmatpush.msra.mxu0 %v3022
  %5747 = vmatpush.msra.mxu0 %v3018
  %5748 = vmatpush.msra.mxu0 %v3014
  %5749 = vmatpush.msra.mxu0 %v3010
  %5750 = vmatpush.msra.mxu0 %v3006
  %5751 = vmatpush.msra.mxu0 %v3002
  %5752 = vmatpush.msra.mxu0 %v2998
  %5753 = vmatpush.msra.mxu0 %v2994
  %5754 = vmatpush.msra.mxu0 %v2990
  %5755 = vmatpush.msra.mxu0 %v2986
  %5756 = vmatpush.msra.mxu0 %v2982
  %5757 = vmatpush.msra.mxu0 %v2978
  %5758 = vmatpush.msra.mxu0 %v2974
  %5759 = vmatpush.msra.mxu0 %v2970
  %5760 = vmatpush.msra.mxu0 %v2966
  %5761 = vmatmul.f32.gmra.mxu0 %v5675
  %v5762 = vpop.f32.mrf.mxu0
  %v5763 = vadd.f32 0.0, %v5762
  %5764 = vdwg.mxu0
  %v5765 = vadd.f32 %v5681, %v5703
  %v5766 = vadd.f32 %v5682, %v5723
  %v5767 = vadd.f32 %v5683, %v5743
  %v5768 = vadd.f32 %v5684, %v5763
  %v5769 = vxor.u32 %v5765, 2147483648
  %v5770 = vmul.f32 %v5769, 1.442695
  %v5771 = vpow.pop %v5770
  %v5772 = vadd.f32 %v5771, 1.0
  %v5773 = vrcp.pop %v5772
  %v5774 = vmul.f32 %v5772, %v5773
  %v5775 = vsub.f32 1.0, %v5774
  %v5776 = vmul.f32 %v5773, %v5775
  %v5777 = vadd.f32 %v5773, %v5776
  %vm5778 = vweird.f32 %v5772
  %vm5779 = vweird.f32 %v5773
  %vm5780 = vmor %vm5778, %vm5779
  %v5781 = vsel %vm5780, %v5773, %v5777
  %v5782 = vand.u32 2147483647, %v5772
  %vm5783 = vcmp.eq.f32.partialorder %v5782, 8.507059e+37
  %v5784 = vand.u32 %v5772, 2147483648
  %v5785 = vor.u32 1.1754944e-38, %v5784
  %v5786 = vsel %vm5783, %v5785, %v5781
  %v5787 = vmul.f32 1.0, %v5786
  %v5788 = vxor.u32 %v5766, 2147483648
  %v5789 = vmul.f32 %v5788, 1.442695
  %v5790 = vpow.pop %v5789
  %v5791 = vadd.f32 %v5790, 1.0
  %v5792 = vrcp.pop %v5791
  %v5793 = vmul.f32 %v5791, %v5792
  %v5794 = vsub.f32 1.0, %v5793
  %v5795 = vmul.f32 %v5792, %v5794
  %v5796 = vadd.f32 %v5792, %v5795
  %vm5797 = vweird.f32 %v5791
  %vm5798 = vweird.f32 %v5792
  %vm5799 = vmor %vm5797, %vm5798
  %v5800 = vsel %vm5799, %v5792, %v5796
  %v5801 = vand.u32 2147483647, %v5791
  %vm5802 = vcmp.eq.f32.partialorder %v5801, 8.507059e+37
  %v5803 = vand.u32 %v5791, 2147483648
  %v5804 = vor.u32 1.1754944e-38, %v5803
  %v5805 = vsel %vm5802, %v5804, %v5800
  %v5806 = vmul.f32 1.0, %v5805
  %v5807 = vtanh.pop %v5767
  %v5808 = vxor.u32 %v5768, 2147483648
  %v5809 = vmul.f32 %v5808, 1.442695
  %v5810 = vpow.pop %v5809
  %v5811 = vadd.f32 %v5810, 1.0
  %v5812 = vrcp.pop %v5811
  %v5813 = vmul.f32 %v5811, %v5812
  %v5814 = vsub.f32 1.0, %v5813
  %v5815 = vmul.f32 %v5812, %v5814
  %v5816 = vadd.f32 %v5812, %v5815
  %vm5817 = vweird.f32 %v5811
  %vm5818 = vweird.f32 %v5812
  %vm5819 = vmor %vm5817, %vm5818
  %v5820 = vsel %vm5819, %v5812, %v5816
  %v5821 = vand.u32 2147483647, %v5811
  %vm5822 = vcmp.eq.f32.partialorder %v5821, 8.507059e+37
  %v5823 = vand.u32 %v5811, 2147483648
  %v5824 = vor.u32 1.1754944e-38, %v5823
  %v5825 = vsel %vm5822, %v5824, %v5820
  %v5826 = vmul.f32 1.0, %v5825
  %v5827 = vmul.f32 %v5806, %v5673
  %v5828 = vmul.f32 %v5787, %v5807
  %v5829 = vadd.f32 %v5827, %v5828
  %v5830 = vtanh.pop %v5829
  %v5831 = vmul.f32 %v5826, %v5830
  %s5832 = scalar_lea.vmem [#allocation3], 136
  %5833 = vst [vmem:[%s5832] sm:$0xff] %v5831
  %s5834 = smul.u32 18, 4
  %s5835 = smul.addr %s5834, 8
  %s5836 = scalar_lea.vmem [#allocation2], %s5835
  %v5837 = vld [vmem:[%s5836] sm:$0xff]
  %v5838 = vld [vmem:[%s5836 + $0x8] sm:$0xff]
  %v5839 = vld [vmem:[%s5836 + $0x10] sm:$0xff]
  %v5840 = vld [vmem:[%s5836 + $0x18] sm:$0xff]
  %5841 = vmatpush.msra.mxu0 %v3023
  %5842 = vmatpush.msra.mxu0 %v3019
  %5843 = vmatpush.msra.mxu0 %v3015
  %5844 = vmatpush.msra.mxu0 %v3011
  %5845 = vmatpush.msra.mxu0 %v3007
  %5846 = vmatpush.msra.mxu0 %v3003
  %5847 = vmatpush.msra.mxu0 %v2999
  %5848 = vmatpush.msra.mxu0 %v2995
  %5849 = vmatpush.msra.mxu0 %v2991
  %5850 = vmatpush.msra.mxu0 %v2987
  %5851 = vmatpush.msra.mxu0 %v2983
  %5852 = vmatpush.msra.mxu0 %v2979
  %5853 = vmatpush.msra.mxu0 %v2975
  %5854 = vmatpush.msra.mxu0 %v2971
  %5855 = vmatpush.msra.mxu0 %v2967
  %5856 = vmatpush.msra.mxu0 %v2963
  %5857 = vmatmul.f32.gmra.mxu0 %v5831
  %v5858 = vpop.f32.mrf.mxu0
  %v5859 = vadd.f32 0.0, %v5858
  %5860 = vdwg.mxu0
  %5861 = vmatpush.msra.mxu0 %v3024
  %5862 = vmatpush.msra.mxu0 %v3020
  %5863 = vmatpush.msra.mxu0 %v3016
  %5864 = vmatpush.msra.mxu0 %v3012
  %5865 = vmatpush.msra.mxu0 %v3008
  %5866 = vmatpush.msra.mxu0 %v3004
  %5867 = vmatpush.msra.mxu0 %v3000
  %5868 = vmatpush.msra.mxu0 %v2996
  %5869 = vmatpush.msra.mxu0 %v2992
  %5870 = vmatpush.msra.mxu0 %v2988
  %5871 = vmatpush.msra.mxu0 %v2984
  %5872 = vmatpush.msra.mxu0 %v2980
  %5873 = vmatpush.msra.mxu0 %v2976
  %5874 = vmatpush.msra.mxu0 %v2972
  %5875 = vmatpush.msra.mxu0 %v2968
  %5876 = vmatpush.msra.mxu0 %v2964
  %5877 = vmatmul.f32.gmra.mxu0 %v5831
  %v5878 = vpop.f32.mrf.mxu0
  %v5879 = vadd.f32 0.0, %v5878
  %5880 = vdwg.mxu0
  %5881 = vmatpush.msra.mxu0 %v3025
  %5882 = vmatpush.msra.mxu0 %v3021
  %5883 = vmatpush.msra.mxu0 %v3017
  %5884 = vmatpush.msra.mxu0 %v3013
  %5885 = vmatpush.msra.mxu0 %v3009
  %5886 = vmatpush.msra.mxu0 %v3005
  %5887 = vmatpush.msra.mxu0 %v3001
  %5888 = vmatpush.msra.mxu0 %v2997
  %5889 = vmatpush.msra.mxu0 %v2993
  %5890 = vmatpush.msra.mxu0 %v2989
  %5891 = vmatpush.msra.mxu0 %v2985
  %5892 = vmatpush.msra.mxu0 %v2981
  %5893 = vmatpush.msra.mxu0 %v2977
  %5894 = vmatpush.msra.mxu0 %v2973
  %5895 = vmatpush.msra.mxu0 %v2969
  %5896 = vmatpush.msra.mxu0 %v2965
  %5897 = vmatmul.f32.gmra.mxu0 %v5831
  %v5898 = vpop.f32.mrf.mxu0
  %v5899 = vadd.f32 0.0, %v5898
  %5900 = vdwg.mxu0
  %5901 = vmatpush.msra.mxu0 %v3026
  %5902 = vmatpush.msra.mxu0 %v3022
  %5903 = vmatpush.msra.mxu0 %v3018
  %5904 = vmatpush.msra.mxu0 %v3014
  %5905 = vmatpush.msra.mxu0 %v3010
  %5906 = vmatpush.msra.mxu0 %v3006
  %5907 = vmatpush.msra.mxu0 %v3002
  %5908 = vmatpush.msra.mxu0 %v2998
  %5909 = vmatpush.msra.mxu0 %v2994
  %5910 = vmatpush.msra.mxu0 %v2990
  %5911 = vmatpush.msra.mxu0 %v2986
  %5912 = vmatpush.msra.mxu0 %v2982
  %5913 = vmatpush.msra.mxu0 %v2978
  %5914 = vmatpush.msra.mxu0 %v2974
  %5915 = vmatpush.msra.mxu0 %v2970
  %5916 = vmatpush.msra.mxu0 %v2966
  %5917 = vmatmul.f32.gmra.mxu0 %v5831
  %v5918 = vpop.f32.mrf.mxu0
  %v5919 = vadd.f32 0.0, %v5918
  %5920 = vdwg.mxu0
  %v5921 = vadd.f32 %v5837, %v5859
  %v5922 = vadd.f32 %v5838, %v5879
  %v5923 = vadd.f32 %v5839, %v5899
  %v5924 = vadd.f32 %v5840, %v5919
  %v5925 = vxor.u32 %v5921, 2147483648
  %v5926 = vmul.f32 %v5925, 1.442695
  %v5927 = vpow.pop %v5926
  %v5928 = vadd.f32 %v5927, 1.0
  %v5929 = vrcp.pop %v5928
  %v5930 = vmul.f32 %v5928, %v5929
  %v5931 = vsub.f32 1.0, %v5930
  %v5932 = vmul.f32 %v5929, %v5931
  %v5933 = vadd.f32 %v5929, %v5932
  %vm5934 = vweird.f32 %v5928
  %vm5935 = vweird.f32 %v5929
  %vm5936 = vmor %vm5934, %vm5935
  %v5937 = vsel %vm5936, %v5929, %v5933
  %v5938 = vand.u32 2147483647, %v5928
  %vm5939 = vcmp.eq.f32.partialorder %v5938, 8.507059e+37
  %v5940 = vand.u32 %v5928, 2147483648
  %v5941 = vor.u32 1.1754944e-38, %v5940
  %v5942 = vsel %vm5939, %v5941, %v5937
  %v5943 = vmul.f32 1.0, %v5942
  %v5944 = vxor.u32 %v5922, 2147483648
  %v5945 = vmul.f32 %v5944, 1.442695
  %v5946 = vpow.pop %v5945
  %v5947 = vadd.f32 %v5946, 1.0
  %v5948 = vrcp.pop %v5947
  %v5949 = vmul.f32 %v5947, %v5948
  %v5950 = vsub.f32 1.0, %v5949
  %v5951 = vmul.f32 %v5948, %v5950
  %v5952 = vadd.f32 %v5948, %v5951
  %vm5953 = vweird.f32 %v5947
  %vm5954 = vweird.f32 %v5948
  %vm5955 = vmor %vm5953, %vm5954
  %v5956 = vsel %vm5955, %v5948, %v5952
  %v5957 = vand.u32 2147483647, %v5947
  %vm5958 = vcmp.eq.f32.partialorder %v5957, 8.507059e+37
  %v5959 = vand.u32 %v5947, 2147483648
  %v5960 = vor.u32 1.1754944e-38, %v5959
  %v5961 = vsel %vm5958, %v5960, %v5956
  %v5962 = vmul.f32 1.0, %v5961
  %v5963 = vtanh.pop %v5923
  %v5964 = vxor.u32 %v5924, 2147483648
  %v5965 = vmul.f32 %v5964, 1.442695
  %v5966 = vpow.pop %v5965
  %v5967 = vadd.f32 %v5966, 1.0
  %v5968 = vrcp.pop %v5967
  %v5969 = vmul.f32 %v5967, %v5968
  %v5970 = vsub.f32 1.0, %v5969
  %v5971 = vmul.f32 %v5968, %v5970
  %v5972 = vadd.f32 %v5968, %v5971
  %vm5973 = vweird.f32 %v5967
  %vm5974 = vweird.f32 %v5968
  %vm5975 = vmor %vm5973, %vm5974
  %v5976 = vsel %vm5975, %v5968, %v5972
  %v5977 = vand.u32 2147483647, %v5967
  %vm5978 = vcmp.eq.f32.partialorder %v5977, 8.507059e+37
  %v5979 = vand.u32 %v5967, 2147483648
  %v5980 = vor.u32 1.1754944e-38, %v5979
  %v5981 = vsel %vm5978, %v5980, %v5976
  %v5982 = vmul.f32 1.0, %v5981
  %v5983 = vmul.f32 %v5962, %v5829
  %v5984 = vmul.f32 %v5943, %v5963
  %v5985 = vadd.f32 %v5983, %v5984
  %v5986 = vtanh.pop %v5985
  %v5987 = vmul.f32 %v5982, %v5986
  %s5988 = scalar_lea.vmem [#allocation3], 144
  %5989 = vst [vmem:[%s5988] sm:$0xff] %v5987
  %s5990 = smul.u32 19, 4
  %s5991 = smul.addr %s5990, 8
  %s5992 = scalar_lea.vmem [#allocation2], %s5991
  %v5993 = vld [vmem:[%s5992] sm:$0xff]
  %v5994 = vld [vmem:[%s5992 + $0x8] sm:$0xff]
  %v5995 = vld [vmem:[%s5992 + $0x10] sm:$0xff]
  %v5996 = vld [vmem:[%s5992 + $0x18] sm:$0xff]
  %5997 = vmatpush.msra.mxu0 %v3023
  %5998 = vmatpush.msra.mxu0 %v3019
  %5999 = vmatpush.msra.mxu0 %v3015
  %6000 = vmatpush.msra.mxu0 %v3011
  %6001 = vmatpush.msra.mxu0 %v3007
  %6002 = vmatpush.msra.mxu0 %v3003
  %6003 = vmatpush.msra.mxu0 %v2999
  %6004 = vmatpush.msra.mxu0 %v2995
  %6005 = vmatpush.msra.mxu0 %v2991
  %6006 = vmatpush.msra.mxu0 %v2987
  %6007 = vmatpush.msra.mxu0 %v2983
  %6008 = vmatpush.msra.mxu0 %v2979
  %6009 = vmatpush.msra.mxu0 %v2975
  %6010 = vmatpush.msra.mxu0 %v2971
  %6011 = vmatpush.msra.mxu0 %v2967
  %6012 = vmatpush.msra.mxu0 %v2963
  %6013 = vmatmul.f32.gmra.mxu0 %v5987
  %v6014 = vpop.f32.mrf.mxu0
  %v6015 = vadd.f32 0.0, %v6014
  %6016 = vdwg.mxu0
  %6017 = vmatpush.msra.mxu0 %v3024
  %6018 = vmatpush.msra.mxu0 %v3020
  %6019 = vmatpush.msra.mxu0 %v3016
  %6020 = vmatpush.msra.mxu0 %v3012
  %6021 = vmatpush.msra.mxu0 %v3008
  %6022 = vmatpush.msra.mxu0 %v3004
  %6023 = vmatpush.msra.mxu0 %v3000
  %6024 = vmatpush.msra.mxu0 %v2996
  %6025 = vmatpush.msra.mxu0 %v2992
  %6026 = vmatpush.msra.mxu0 %v2988
  %6027 = vmatpush.msra.mxu0 %v2984
  %6028 = vmatpush.msra.mxu0 %v2980
  %6029 = vmatpush.msra.mxu0 %v2976
  %6030 = vmatpush.msra.mxu0 %v2972
  %6031 = vmatpush.msra.mxu0 %v2968
  %6032 = vmatpush.msra.mxu0 %v2964
  %6033 = vmatmul.f32.gmra.mxu0 %v5987
  %v6034 = vpop.f32.mrf.mxu0
  %v6035 = vadd.f32 0.0, %v6034
  %6036 = vdwg.mxu0
  %6037 = vmatpush.msra.mxu0 %v3025
  %6038 = vmatpush.msra.mxu0 %v3021
  %6039 = vmatpush.msra.mxu0 %v3017
  %6040 = vmatpush.msra.mxu0 %v3013
  %6041 = vmatpush.msra.mxu0 %v3009
  %6042 = vmatpush.msra.mxu0 %v3005
  %6043 = vmatpush.msra.mxu0 %v3001
  %6044 = vmatpush.msra.mxu0 %v2997
  %6045 = vmatpush.msra.mxu0 %v2993
  %6046 = vmatpush.msra.mxu0 %v2989
  %6047 = vmatpush.msra.mxu0 %v2985
  %6048 = vmatpush.msra.mxu0 %v2981
  %6049 = vmatpush.msra.mxu0 %v2977
  %6050 = vmatpush.msra.mxu0 %v2973
  %6051 = vmatpush.msra.mxu0 %v2969
  %6052 = vmatpush.msra.mxu0 %v2965
  %6053 = vmatmul.f32.gmra.mxu0 %v5987
  %v6054 = vpop.f32.mrf.mxu0
  %v6055 = vadd.f32 0.0, %v6054
  %6056 = vdwg.mxu0
  %6057 = vmatpush.msra.mxu0 %v3026
  %6058 = vmatpush.msra.mxu0 %v3022
  %6059 = vmatpush.msra.mxu0 %v3018
  %6060 = vmatpush.msra.mxu0 %v3014
  %6061 = vmatpush.msra.mxu0 %v3010
  %6062 = vmatpush.msra.mxu0 %v3006
  %6063 = vmatpush.msra.mxu0 %v3002
  %6064 = vmatpush.msra.mxu0 %v2998
  %6065 = vmatpush.msra.mxu0 %v2994
  %6066 = vmatpush.msra.mxu0 %v2990
  %6067 = vmatpush.msra.mxu0 %v2986
  %6068 = vmatpush.msra.mxu0 %v2982
  %6069 = vmatpush.msra.mxu0 %v2978
  %6070 = vmatpush.msra.mxu0 %v2974
  %6071 = vmatpush.msra.mxu0 %v2970
  %6072 = vmatpush.msra.mxu0 %v2966
  %6073 = vmatmul.f32.gmra.mxu0 %v5987
  %v6074 = vpop.f32.mrf.mxu0
  %v6075 = vadd.f32 0.0, %v6074
  %6076 = vdwg.mxu0
  %v6077 = vadd.f32 %v5993, %v6015
  %v6078 = vadd.f32 %v5994, %v6035
  %v6079 = vadd.f32 %v5995, %v6055
  %v6080 = vadd.f32 %v5996, %v6075
  %v6081 = vxor.u32 %v6077, 2147483648
  %v6082 = vmul.f32 %v6081, 1.442695
  %v6083 = vpow.pop %v6082
  %v6084 = vadd.f32 %v6083, 1.0
  %v6085 = vrcp.pop %v6084
  %v6086 = vmul.f32 %v6084, %v6085
  %v6087 = vsub.f32 1.0, %v6086
  %v6088 = vmul.f32 %v6085, %v6087
  %v6089 = vadd.f32 %v6085, %v6088
  %vm6090 = vweird.f32 %v6084
  %vm6091 = vweird.f32 %v6085
  %vm6092 = vmor %vm6090, %vm6091
  %v6093 = vsel %vm6092, %v6085, %v6089
  %v6094 = vand.u32 2147483647, %v6084
  %vm6095 = vcmp.eq.f32.partialorder %v6094, 8.507059e+37
  %v6096 = vand.u32 %v6084, 2147483648
  %v6097 = vor.u32 1.1754944e-38, %v6096
  %v6098 = vsel %vm6095, %v6097, %v6093
  %v6099 = vmul.f32 1.0, %v6098
  %v6100 = vxor.u32 %v6078, 2147483648
  %v6101 = vmul.f32 %v6100, 1.442695
  %v6102 = vpow.pop %v6101
  %v6103 = vadd.f32 %v6102, 1.0
  %v6104 = vrcp.pop %v6103
  %v6105 = vmul.f32 %v6103, %v6104
  %v6106 = vsub.f32 1.0, %v6105
  %v6107 = vmul.f32 %v6104, %v6106
  %v6108 = vadd.f32 %v6104, %v6107
  %vm6109 = vweird.f32 %v6103
  %vm6110 = vweird.f32 %v6104
  %vm6111 = vmor %vm6109, %vm6110
  %v6112 = vsel %vm6111, %v6104, %v6108
  %v6113 = vand.u32 2147483647, %v6103
  %vm6114 = vcmp.eq.f32.partialorder %v6113, 8.507059e+37
  %v6115 = vand.u32 %v6103, 2147483648
  %v6116 = vor.u32 1.1754944e-38, %v6115
  %v6117 = vsel %vm6114, %v6116, %v6112
  %v6118 = vmul.f32 1.0, %v6117
  %v6119 = vtanh.pop %v6079
  %v6120 = vxor.u32 %v6080, 2147483648
  %v6121 = vmul.f32 %v6120, 1.442695
  %v6122 = vpow.pop %v6121
  %v6123 = vadd.f32 %v6122, 1.0
  %v6124 = vrcp.pop %v6123
  %v6125 = vmul.f32 %v6123, %v6124
  %v6126 = vsub.f32 1.0, %v6125
  %v6127 = vmul.f32 %v6124, %v6126
  %v6128 = vadd.f32 %v6124, %v6127
  %vm6129 = vweird.f32 %v6123
  %vm6130 = vweird.f32 %v6124
  %vm6131 = vmor %vm6129, %vm6130
  %v6132 = vsel %vm6131, %v6124, %v6128
  %v6133 = vand.u32 2147483647, %v6123
  %vm6134 = vcmp.eq.f32.partialorder %v6133, 8.507059e+37
  %v6135 = vand.u32 %v6123, 2147483648
  %v6136 = vor.u32 1.1754944e-38, %v6135
  %v6137 = vsel %vm6134, %v6136, %v6132
  %v6138 = vmul.f32 1.0, %v6137
  %v6139 = vmul.f32 %v6118, %v5985
  %v6140 = vmul.f32 %v6099, %v6119
  %v6141 = vadd.f32 %v6139, %v6140
  %v6142 = vtanh.pop %v6141
  %v6143 = vmul.f32 %v6138, %v6142
  %s6144 = scalar_lea.vmem [#allocation3], 152
  %6145 = vst [vmem:[%s6144] sm:$0xff] %v6143
  %s6146 = smul.u32 20, 4
  %s6147 = smul.addr %s6146, 8
  %s6148 = scalar_lea.vmem [#allocation2], %s6147
  %v6149 = vld [vmem:[%s6148] sm:$0xff]
  %v6150 = vld [vmem:[%s6148 + $0x8] sm:$0xff]
  %v6151 = vld [vmem:[%s6148 + $0x10] sm:$0xff]
  %v6152 = vld [vmem:[%s6148 + $0x18] sm:$0xff]
  %6153 = vmatpush.msra.mxu0 %v3023
  %6154 = vmatpush.msra.mxu0 %v3019
  %6155 = vmatpush.msra.mxu0 %v3015
  %6156 = vmatpush.msra.mxu0 %v3011
  %6157 = vmatpush.msra.mxu0 %v3007
  %6158 = vmatpush.msra.mxu0 %v3003
  %6159 = vmatpush.msra.mxu0 %v2999
  %6160 = vmatpush.msra.mxu0 %v2995
  %6161 = vmatpush.msra.mxu0 %v2991
  %6162 = vmatpush.msra.mxu0 %v2987
  %6163 = vmatpush.msra.mxu0 %v2983
  %6164 = vmatpush.msra.mxu0 %v2979
  %6165 = vmatpush.msra.mxu0 %v2975
  %6166 = vmatpush.msra.mxu0 %v2971
  %6167 = vmatpush.msra.mxu0 %v2967
  %6168 = vmatpush.msra.mxu0 %v2963
  %6169 = vmatmul.f32.gmra.mxu0 %v6143
  %v6170 = vpop.f32.mrf.mxu0
  %v6171 = vadd.f32 0.0, %v6170
  %6172 = vdwg.mxu0
  %6173 = vmatpush.msra.mxu0 %v3024
  %6174 = vmatpush.msra.mxu0 %v3020
  %6175 = vmatpush.msra.mxu0 %v3016
  %6176 = vmatpush.msra.mxu0 %v3012
  %6177 = vmatpush.msra.mxu0 %v3008
  %6178 = vmatpush.msra.mxu0 %v3004
  %6179 = vmatpush.msra.mxu0 %v3000
  %6180 = vmatpush.msra.mxu0 %v2996
  %6181 = vmatpush.msra.mxu0 %v2992
  %6182 = vmatpush.msra.mxu0 %v2988
  %6183 = vmatpush.msra.mxu0 %v2984
  %6184 = vmatpush.msra.mxu0 %v2980
  %6185 = vmatpush.msra.mxu0 %v2976
  %6186 = vmatpush.msra.mxu0 %v2972
  %6187 = vmatpush.msra.mxu0 %v2968
  %6188 = vmatpush.msra.mxu0 %v2964
  %6189 = vmatmul.f32.gmra.mxu0 %v6143
  %v6190 = vpop.f32.mrf.mxu0
  %v6191 = vadd.f32 0.0, %v6190
  %6192 = vdwg.mxu0
  %6193 = vmatpush.msra.mxu0 %v3025
  %6194 = vmatpush.msra.mxu0 %v3021
  %6195 = vmatpush.msra.mxu0 %v3017
  %6196 = vmatpush.msra.mxu0 %v3013
  %6197 = vmatpush.msra.mxu0 %v3009
  %6198 = vmatpush.msra.mxu0 %v3005
  %6199 = vmatpush.msra.mxu0 %v3001
  %6200 = vmatpush.msra.mxu0 %v2997
  %6201 = vmatpush.msra.mxu0 %v2993
  %6202 = vmatpush.msra.mxu0 %v2989
  %6203 = vmatpush.msra.mxu0 %v2985
  %6204 = vmatpush.msra.mxu0 %v2981
  %6205 = vmatpush.msra.mxu0 %v2977
  %6206 = vmatpush.msra.mxu0 %v2973
  %6207 = vmatpush.msra.mxu0 %v2969
  %6208 = vmatpush.msra.mxu0 %v2965
  %6209 = vmatmul.f32.gmra.mxu0 %v6143
  %v6210 = vpop.f32.mrf.mxu0
  %v6211 = vadd.f32 0.0, %v6210
  %6212 = vdwg.mxu0
  %6213 = vmatpush.msra.mxu0 %v3026
  %6214 = vmatpush.msra.mxu0 %v3022
  %6215 = vmatpush.msra.mxu0 %v3018
  %6216 = vmatpush.msra.mxu0 %v3014
  %6217 = vmatpush.msra.mxu0 %v3010
  %6218 = vmatpush.msra.mxu0 %v3006
  %6219 = vmatpush.msra.mxu0 %v3002
  %6220 = vmatpush.msra.mxu0 %v2998
  %6221 = vmatpush.msra.mxu0 %v2994
  %6222 = vmatpush.msra.mxu0 %v2990
  %6223 = vmatpush.msra.mxu0 %v2986
  %6224 = vmatpush.msra.mxu0 %v2982
  %6225 = vmatpush.msra.mxu0 %v2978
  %6226 = vmatpush.msra.mxu0 %v2974
  %6227 = vmatpush.msra.mxu0 %v2970
  %6228 = vmatpush.msra.mxu0 %v2966
  %6229 = vmatmul.f32.gmra.mxu0 %v6143
  %v6230 = vpop.f32.mrf.mxu0
  %v6231 = vadd.f32 0.0, %v6230
  %6232 = vdwg.mxu0
  %v6233 = vadd.f32 %v6149, %v6171
  %v6234 = vadd.f32 %v6150, %v6191
  %v6235 = vadd.f32 %v6151, %v6211
  %v6236 = vadd.f32 %v6152, %v6231
  %v6237 = vxor.u32 %v6233, 2147483648
  %v6238 = vmul.f32 %v6237, 1.442695
  %v6239 = vpow.pop %v6238
  %v6240 = vadd.f32 %v6239, 1.0
  %v6241 = vrcp.pop %v6240
  %v6242 = vmul.f32 %v6240, %v6241
  %v6243 = vsub.f32 1.0, %v6242
  %v6244 = vmul.f32 %v6241, %v6243
  %v6245 = vadd.f32 %v6241, %v6244
  %vm6246 = vweird.f32 %v6240
  %vm6247 = vweird.f32 %v6241
  %vm6248 = vmor %vm6246, %vm6247
  %v6249 = vsel %vm6248, %v6241, %v6245
  %v6250 = vand.u32 2147483647, %v6240
  %vm6251 = vcmp.eq.f32.partialorder %v6250, 8.507059e+37
  %v6252 = vand.u32 %v6240, 2147483648
  %v6253 = vor.u32 1.1754944e-38, %v6252
  %v6254 = vsel %vm6251, %v6253, %v6249
  %v6255 = vmul.f32 1.0, %v6254
  %v6256 = vxor.u32 %v6234, 2147483648
  %v6257 = vmul.f32 %v6256, 1.442695
  %v6258 = vpow.pop %v6257
  %v6259 = vadd.f32 %v6258, 1.0
  %v6260 = vrcp.pop %v6259
  %v6261 = vmul.f32 %v6259, %v6260
  %v6262 = vsub.f32 1.0, %v6261
  %v6263 = vmul.f32 %v6260, %v6262
  %v6264 = vadd.f32 %v6260, %v6263
  %vm6265 = vweird.f32 %v6259
  %vm6266 = vweird.f32 %v6260
  %vm6267 = vmor %vm6265, %vm6266
  %v6268 = vsel %vm6267, %v6260, %v6264
  %v6269 = vand.u32 2147483647, %v6259
  %vm6270 = vcmp.eq.f32.partialorder %v6269, 8.507059e+37
  %v6271 = vand.u32 %v6259, 2147483648
  %v6272 = vor.u32 1.1754944e-38, %v6271
  %v6273 = vsel %vm6270, %v6272, %v6268
  %v6274 = vmul.f32 1.0, %v6273
  %v6275 = vtanh.pop %v6235
  %v6276 = vxor.u32 %v6236, 2147483648
  %v6277 = vmul.f32 %v6276, 1.442695
  %v6278 = vpow.pop %v6277
  %v6279 = vadd.f32 %v6278, 1.0
  %v6280 = vrcp.pop %v6279
  %v6281 = vmul.f32 %v6279, %v6280
  %v6282 = vsub.f32 1.0, %v6281
  %v6283 = vmul.f32 %v6280, %v6282
  %v6284 = vadd.f32 %v6280, %v6283
  %vm6285 = vweird.f32 %v6279
  %vm6286 = vweird.f32 %v6280
  %vm6287 = vmor %vm6285, %vm6286
  %v6288 = vsel %vm6287, %v6280, %v6284
  %v6289 = vand.u32 2147483647, %v6279
  %vm6290 = vcmp.eq.f32.partialorder %v6289, 8.507059e+37
  %v6291 = vand.u32 %v6279, 2147483648
  %v6292 = vor.u32 1.1754944e-38, %v6291
  %v6293 = vsel %vm6290, %v6292, %v6288
  %v6294 = vmul.f32 1.0, %v6293
  %v6295 = vmul.f32 %v6274, %v6141
  %v6296 = vmul.f32 %v6255, %v6275
  %v6297 = vadd.f32 %v6295, %v6296
  %v6298 = vtanh.pop %v6297
  %v6299 = vmul.f32 %v6294, %v6298
  %s6300 = scalar_lea.vmem [#allocation3], 160
  %6301 = vst [vmem:[%s6300] sm:$0xff] %v6299
  %s6302 = smul.u32 21, 4
  %s6303 = smul.addr %s6302, 8
  %s6304 = scalar_lea.vmem [#allocation2], %s6303
  %v6305 = vld [vmem:[%s6304] sm:$0xff]
  %v6306 = vld [vmem:[%s6304 + $0x8] sm:$0xff]
  %v6307 = vld [vmem:[%s6304 + $0x10] sm:$0xff]
  %v6308 = vld [vmem:[%s6304 + $0x18] sm:$0xff]
  %6309 = vmatpush.msra.mxu0 %v3023
  %6310 = vmatpush.msra.mxu0 %v3019
  %6311 = vmatpush.msra.mxu0 %v3015
  %6312 = vmatpush.msra.mxu0 %v3011
  %6313 = vmatpush.msra.mxu0 %v3007
  %6314 = vmatpush.msra.mxu0 %v3003
  %6315 = vmatpush.msra.mxu0 %v2999
  %6316 = vmatpush.msra.mxu0 %v2995
  %6317 = vmatpush.msra.mxu0 %v2991
  %6318 = vmatpush.msra.mxu0 %v2987
  %6319 = vmatpush.msra.mxu0 %v2983
  %6320 = vmatpush.msra.mxu0 %v2979
  %6321 = vmatpush.msra.mxu0 %v2975
  %6322 = vmatpush.msra.mxu0 %v2971
  %6323 = vmatpush.msra.mxu0 %v2967
  %6324 = vmatpush.msra.mxu0 %v2963
  %6325 = vmatmul.f32.gmra.mxu0 %v6299
  %v6326 = vpop.f32.mrf.mxu0
  %v6327 = vadd.f32 0.0, %v6326
  %6328 = vdwg.mxu0
  %6329 = vmatpush.msra.mxu0 %v3024
  %6330 = vmatpush.msra.mxu0 %v3020
  %6331 = vmatpush.msra.mxu0 %v3016
  %6332 = vmatpush.msra.mxu0 %v3012
  %6333 = vmatpush.msra.mxu0 %v3008
  %6334 = vmatpush.msra.mxu0 %v3004
  %6335 = vmatpush.msra.mxu0 %v3000
  %6336 = vmatpush.msra.mxu0 %v2996
  %6337 = vmatpush.msra.mxu0 %v2992
  %6338 = vmatpush.msra.mxu0 %v2988
  %6339 = vmatpush.msra.mxu0 %v2984
  %6340 = vmatpush.msra.mxu0 %v2980
  %6341 = vmatpush.msra.mxu0 %v2976
  %6342 = vmatpush.msra.mxu0 %v2972
  %6343 = vmatpush.msra.mxu0 %v2968
  %6344 = vmatpush.msra.mxu0 %v2964
  %6345 = vmatmul.f32.gmra.mxu0 %v6299
  %v6346 = vpop.f32.mrf.mxu0
  %v6347 = vadd.f32 0.0, %v6346
  %6348 = vdwg.mxu0
  %6349 = vmatpush.msra.mxu0 %v3025
  %6350 = vmatpush.msra.mxu0 %v3021
  %6351 = vmatpush.msra.mxu0 %v3017
  %6352 = vmatpush.msra.mxu0 %v3013
  %6353 = vmatpush.msra.mxu0 %v3009
  %6354 = vmatpush.msra.mxu0 %v3005
  %6355 = vmatpush.msra.mxu0 %v3001
  %6356 = vmatpush.msra.mxu0 %v2997
  %6357 = vmatpush.msra.mxu0 %v2993
  %6358 = vmatpush.msra.mxu0 %v2989
  %6359 = vmatpush.msra.mxu0 %v2985
  %6360 = vmatpush.msra.mxu0 %v2981
  %6361 = vmatpush.msra.mxu0 %v2977
  %6362 = vmatpush.msra.mxu0 %v2973
  %6363 = vmatpush.msra.mxu0 %v2969
  %6364 = vmatpush.msra.mxu0 %v2965
  %6365 = vmatmul.f32.gmra.mxu0 %v6299
  %v6366 = vpop.f32.mrf.mxu0
  %v6367 = vadd.f32 0.0, %v6366
  %6368 = vdwg.mxu0
  %6369 = vmatpush.msra.mxu0 %v3026
  %6370 = vmatpush.msra.mxu0 %v3022
  %6371 = vmatpush.msra.mxu0 %v3018
  %6372 = vmatpush.msra.mxu0 %v3014
  %6373 = vmatpush.msra.mxu0 %v3010
  %6374 = vmatpush.msra.mxu0 %v3006
  %6375 = vmatpush.msra.mxu0 %v3002
  %6376 = vmatpush.msra.mxu0 %v2998
  %6377 = vmatpush.msra.mxu0 %v2994
  %6378 = vmatpush.msra.mxu0 %v2990
  %6379 = vmatpush.msra.mxu0 %v2986
  %6380 = vmatpush.msra.mxu0 %v2982
  %6381 = vmatpush.msra.mxu0 %v2978
  %6382 = vmatpush.msra.mxu0 %v2974
  %6383 = vmatpush.msra.mxu0 %v2970
  %6384 = vmatpush.msra.mxu0 %v2966
  %6385 = vmatmul.f32.gmra.mxu0 %v6299
  %v6386 = vpop.f32.mrf.mxu0
  %v6387 = vadd.f32 0.0, %v6386
  %6388 = vdwg.mxu0
  %v6389 = vadd.f32 %v6305, %v6327
  %v6390 = vadd.f32 %v6306, %v6347
  %v6391 = vadd.f32 %v6307, %v6367
  %v6392 = vadd.f32 %v6308, %v6387
  %v6393 = vxor.u32 %v6389, 2147483648
  %v6394 = vmul.f32 %v6393, 1.442695
  %v6395 = vpow.pop %v6394
  %v6396 = vadd.f32 %v6395, 1.0
  %v6397 = vrcp.pop %v6396
  %v6398 = vmul.f32 %v6396, %v6397
  %v6399 = vsub.f32 1.0, %v6398
  %v6400 = vmul.f32 %v6397, %v6399
  %v6401 = vadd.f32 %v6397, %v6400
  %vm6402 = vweird.f32 %v6396
  %vm6403 = vweird.f32 %v6397
  %vm6404 = vmor %vm6402, %vm6403
  %v6405 = vsel %vm6404, %v6397, %v6401
  %v6406 = vand.u32 2147483647, %v6396
  %vm6407 = vcmp.eq.f32.partialorder %v6406, 8.507059e+37
  %v6408 = vand.u32 %v6396, 2147483648
  %v6409 = vor.u32 1.1754944e-38, %v6408
  %v6410 = vsel %vm6407, %v6409, %v6405
  %v6411 = vmul.f32 1.0, %v6410
  %v6412 = vxor.u32 %v6390, 2147483648
  %v6413 = vmul.f32 %v6412, 1.442695
  %v6414 = vpow.pop %v6413
  %v6415 = vadd.f32 %v6414, 1.0
  %v6416 = vrcp.pop %v6415
  %v6417 = vmul.f32 %v6415, %v6416
  %v6418 = vsub.f32 1.0, %v6417
  %v6419 = vmul.f32 %v6416, %v6418
  %v6420 = vadd.f32 %v6416, %v6419
  %vm6421 = vweird.f32 %v6415
  %vm6422 = vweird.f32 %v6416
  %vm6423 = vmor %vm6421, %vm6422
  %v6424 = vsel %vm6423, %v6416, %v6420
  %v6425 = vand.u32 2147483647, %v6415
  %vm6426 = vcmp.eq.f32.partialorder %v6425, 8.507059e+37
  %v6427 = vand.u32 %v6415, 2147483648
  %v6428 = vor.u32 1.1754944e-38, %v6427
  %v6429 = vsel %vm6426, %v6428, %v6424
  %v6430 = vmul.f32 1.0, %v6429
  %v6431 = vtanh.pop %v6391
  %v6432 = vxor.u32 %v6392, 2147483648
  %v6433 = vmul.f32 %v6432, 1.442695
  %v6434 = vpow.pop %v6433
  %v6435 = vadd.f32 %v6434, 1.0
  %v6436 = vrcp.pop %v6435
  %v6437 = vmul.f32 %v6435, %v6436
  %v6438 = vsub.f32 1.0, %v6437
  %v6439 = vmul.f32 %v6436, %v6438
  %v6440 = vadd.f32 %v6436, %v6439
  %vm6441 = vweird.f32 %v6435
  %vm6442 = vweird.f32 %v6436
  %vm6443 = vmor %vm6441, %vm6442
  %v6444 = vsel %vm6443, %v6436, %v6440
  %v6445 = vand.u32 2147483647, %v6435
  %vm6446 = vcmp.eq.f32.partialorder %v6445, 8.507059e+37
  %v6447 = vand.u32 %v6435, 2147483648
  %v6448 = vor.u32 1.1754944e-38, %v6447
  %v6449 = vsel %vm6446, %v6448, %v6444
  %v6450 = vmul.f32 1.0, %v6449
  %v6451 = vmul.f32 %v6430, %v6297
  %v6452 = vmul.f32 %v6411, %v6431
  %v6453 = vadd.f32 %v6451, %v6452
  %v6454 = vtanh.pop %v6453
  %v6455 = vmul.f32 %v6450, %v6454
  %s6456 = scalar_lea.vmem [#allocation3], 168
  %6457 = vst [vmem:[%s6456] sm:$0xff] %v6455
  %s6458 = smul.u32 22, 4
  %s6459 = smul.addr %s6458, 8
  %s6460 = scalar_lea.vmem [#allocation2], %s6459
  %v6461 = vld [vmem:[%s6460] sm:$0xff]
  %v6462 = vld [vmem:[%s6460 + $0x8] sm:$0xff]
  %v6463 = vld [vmem:[%s6460 + $0x10] sm:$0xff]
  %v6464 = vld [vmem:[%s6460 + $0x18] sm:$0xff]
  %6465 = vmatpush.msra.mxu0 %v3023
  %6466 = vmatpush.msra.mxu0 %v3019
  %6467 = vmatpush.msra.mxu0 %v3015
  %6468 = vmatpush.msra.mxu0 %v3011
  %6469 = vmatpush.msra.mxu0 %v3007
  %6470 = vmatpush.msra.mxu0 %v3003
  %6471 = vmatpush.msra.mxu0 %v2999
  %6472 = vmatpush.msra.mxu0 %v2995
  %6473 = vmatpush.msra.mxu0 %v2991
  %6474 = vmatpush.msra.mxu0 %v2987
  %6475 = vmatpush.msra.mxu0 %v2983
  %6476 = vmatpush.msra.mxu0 %v2979
  %6477 = vmatpush.msra.mxu0 %v2975
  %6478 = vmatpush.msra.mxu0 %v2971
  %6479 = vmatpush.msra.mxu0 %v2967
  %6480 = vmatpush.msra.mxu0 %v2963
  %6481 = vmatmul.f32.gmra.mxu0 %v6455
  %v6482 = vpop.f32.mrf.mxu0
  %v6483 = vadd.f32 0.0, %v6482
  %6484 = vdwg.mxu0
  %6485 = vmatpush.msra.mxu0 %v3024
  %6486 = vmatpush.msra.mxu0 %v3020
  %6487 = vmatpush.msra.mxu0 %v3016
  %6488 = vmatpush.msra.mxu0 %v3012
  %6489 = vmatpush.msra.mxu0 %v3008
  %6490 = vmatpush.msra.mxu0 %v3004
  %6491 = vmatpush.msra.mxu0 %v3000
  %6492 = vmatpush.msra.mxu0 %v2996
  %6493 = vmatpush.msra.mxu0 %v2992
  %6494 = vmatpush.msra.mxu0 %v2988
  %6495 = vmatpush.msra.mxu0 %v2984
  %6496 = vmatpush.msra.mxu0 %v2980
  %6497 = vmatpush.msra.mxu0 %v2976
  %6498 = vmatpush.msra.mxu0 %v2972
  %6499 = vmatpush.msra.mxu0 %v2968
  %6500 = vmatpush.msra.mxu0 %v2964
  %6501 = vmatmul.f32.gmra.mxu0 %v6455
  %v6502 = vpop.f32.mrf.mxu0
  %v6503 = vadd.f32 0.0, %v6502
  %6504 = vdwg.mxu0
  %6505 = vmatpush.msra.mxu0 %v3025
  %6506 = vmatpush.msra.mxu0 %v3021
  %6507 = vmatpush.msra.mxu0 %v3017
  %6508 = vmatpush.msra.mxu0 %v3013
  %6509 = vmatpush.msra.mxu0 %v3009
  %6510 = vmatpush.msra.mxu0 %v3005
  %6511 = vmatpush.msra.mxu0 %v3001
  %6512 = vmatpush.msra.mxu0 %v2997
  %6513 = vmatpush.msra.mxu0 %v2993
  %6514 = vmatpush.msra.mxu0 %v2989
  %6515 = vmatpush.msra.mxu0 %v2985
  %6516 = vmatpush.msra.mxu0 %v2981
  %6517 = vmatpush.msra.mxu0 %v2977
  %6518 = vmatpush.msra.mxu0 %v2973
  %6519 = vmatpush.msra.mxu0 %v2969
  %6520 = vmatpush.msra.mxu0 %v2965
  %6521 = vmatmul.f32.gmra.mxu0 %v6455
  %v6522 = vpop.f32.mrf.mxu0
  %v6523 = vadd.f32 0.0, %v6522
  %6524 = vdwg.mxu0
  %6525 = vmatpush.msra.mxu0 %v3026
  %6526 = vmatpush.msra.mxu0 %v3022
  %6527 = vmatpush.msra.mxu0 %v3018
  %6528 = vmatpush.msra.mxu0 %v3014
  %6529 = vmatpush.msra.mxu0 %v3010
  %6530 = vmatpush.msra.mxu0 %v3006
  %6531 = vmatpush.msra.mxu0 %v3002
  %6532 = vmatpush.msra.mxu0 %v2998
  %6533 = vmatpush.msra.mxu0 %v2994
  %6534 = vmatpush.msra.mxu0 %v2990
  %6535 = vmatpush.msra.mxu0 %v2986
  %6536 = vmatpush.msra.mxu0 %v2982
  %6537 = vmatpush.msra.mxu0 %v2978
  %6538 = vmatpush.msra.mxu0 %v2974
  %6539 = vmatpush.msra.mxu0 %v2970
  %6540 = vmatpush.msra.mxu0 %v2966
  %6541 = vmatmul.f32.gmra.mxu0 %v6455
  %v6542 = vpop.f32.mrf.mxu0
  %v6543 = vadd.f32 0.0, %v6542
  %6544 = vdwg.mxu0
  %v6545 = vadd.f32 %v6461, %v6483
  %v6546 = vadd.f32 %v6462, %v6503
  %v6547 = vadd.f32 %v6463, %v6523
  %v6548 = vadd.f32 %v6464, %v6543
  %v6549 = vxor.u32 %v6545, 2147483648
  %v6550 = vmul.f32 %v6549, 1.442695
  %v6551 = vpow.pop %v6550
  %v6552 = vadd.f32 %v6551, 1.0
  %v6553 = vrcp.pop %v6552
  %v6554 = vmul.f32 %v6552, %v6553
  %v6555 = vsub.f32 1.0, %v6554
  %v6556 = vmul.f32 %v6553, %v6555
  %v6557 = vadd.f32 %v6553, %v6556
  %vm6558 = vweird.f32 %v6552
  %vm6559 = vweird.f32 %v6553
  %vm6560 = vmor %vm6558, %vm6559
  %v6561 = vsel %vm6560, %v6553, %v6557
  %v6562 = vand.u32 2147483647, %v6552
  %vm6563 = vcmp.eq.f32.partialorder %v6562, 8.507059e+37
  %v6564 = vand.u32 %v6552, 2147483648
  %v6565 = vor.u32 1.1754944e-38, %v6564
  %v6566 = vsel %vm6563, %v6565, %v6561
  %v6567 = vmul.f32 1.0, %v6566
  %v6568 = vxor.u32 %v6546, 2147483648
  %v6569 = vmul.f32 %v6568, 1.442695
  %v6570 = vpow.pop %v6569
  %v6571 = vadd.f32 %v6570, 1.0
  %v6572 = vrcp.pop %v6571
  %v6573 = vmul.f32 %v6571, %v6572
  %v6574 = vsub.f32 1.0, %v6573
  %v6575 = vmul.f32 %v6572, %v6574
  %v6576 = vadd.f32 %v6572, %v6575
  %vm6577 = vweird.f32 %v6571
  %vm6578 = vweird.f32 %v6572
  %vm6579 = vmor %vm6577, %vm6578
  %v6580 = vsel %vm6579, %v6572, %v6576
  %v6581 = vand.u32 2147483647, %v6571
  %vm6582 = vcmp.eq.f32.partialorder %v6581, 8.507059e+37
  %v6583 = vand.u32 %v6571, 2147483648
  %v6584 = vor.u32 1.1754944e-38, %v6583
  %v6585 = vsel %vm6582, %v6584, %v6580
  %v6586 = vmul.f32 1.0, %v6585
  %v6587 = vtanh.pop %v6547
  %v6588 = vxor.u32 %v6548, 2147483648
  %v6589 = vmul.f32 %v6588, 1.442695
  %v6590 = vpow.pop %v6589
  %v6591 = vadd.f32 %v6590, 1.0
  %v6592 = vrcp.pop %v6591
  %v6593 = vmul.f32 %v6591, %v6592
  %v6594 = vsub.f32 1.0, %v6593
  %v6595 = vmul.f32 %v6592, %v6594
  %v6596 = vadd.f32 %v6592, %v6595
  %vm6597 = vweird.f32 %v6591
  %vm6598 = vweird.f32 %v6592
  %vm6599 = vmor %vm6597, %vm6598
  %v6600 = vsel %vm6599, %v6592, %v6596
  %v6601 = vand.u32 2147483647, %v6591
  %vm6602 = vcmp.eq.f32.partialorder %v6601, 8.507059e+37
  %v6603 = vand.u32 %v6591, 2147483648
  %v6604 = vor.u32 1.1754944e-38, %v6603
  %v6605 = vsel %vm6602, %v6604, %v6600
  %v6606 = vmul.f32 1.0, %v6605
  %v6607 = vmul.f32 %v6586, %v6453
  %v6608 = vmul.f32 %v6567, %v6587
  %v6609 = vadd.f32 %v6607, %v6608
  %v6610 = vtanh.pop %v6609
  %v6611 = vmul.f32 %v6606, %v6610
  %s6612 = scalar_lea.vmem [#allocation3], 176
  %6613 = vst [vmem:[%s6612] sm:$0xff] %v6611
  %s6614 = smul.u32 23, 4
  %s6615 = smul.addr %s6614, 8
  %s6616 = scalar_lea.vmem [#allocation2], %s6615
  %v6617 = vld [vmem:[%s6616] sm:$0xff]
  %v6618 = vld [vmem:[%s6616 + $0x8] sm:$0xff]
  %v6619 = vld [vmem:[%s6616 + $0x10] sm:$0xff]
  %v6620 = vld [vmem:[%s6616 + $0x18] sm:$0xff]
  %6621 = vmatpush.msra.mxu0 %v3023
  %6622 = vmatpush.msra.mxu0 %v3019
  %6623 = vmatpush.msra.mxu0 %v3015
  %6624 = vmatpush.msra.mxu0 %v3011
  %6625 = vmatpush.msra.mxu0 %v3007
  %6626 = vmatpush.msra.mxu0 %v3003
  %6627 = vmatpush.msra.mxu0 %v2999
  %6628 = vmatpush.msra.mxu0 %v2995
  %6629 = vmatpush.msra.mxu0 %v2991
  %6630 = vmatpush.msra.mxu0 %v2987
  %6631 = vmatpush.msra.mxu0 %v2983
  %6632 = vmatpush.msra.mxu0 %v2979
  %6633 = vmatpush.msra.mxu0 %v2975
  %6634 = vmatpush.msra.mxu0 %v2971
  %6635 = vmatpush.msra.mxu0 %v2967
  %6636 = vmatpush.msra.mxu0 %v2963
  %6637 = vmatmul.f32.gmra.mxu0 %v6611
  %v6638 = vpop.f32.mrf.mxu0
  %v6639 = vadd.f32 0.0, %v6638
  %6640 = vdwg.mxu0
  %6641 = vmatpush.msra.mxu0 %v3024
  %6642 = vmatpush.msra.mxu0 %v3020
  %6643 = vmatpush.msra.mxu0 %v3016
  %6644 = vmatpush.msra.mxu0 %v3012
  %6645 = vmatpush.msra.mxu0 %v3008
  %6646 = vmatpush.msra.mxu0 %v3004
  %6647 = vmatpush.msra.mxu0 %v3000
  %6648 = vmatpush.msra.mxu0 %v2996
  %6649 = vmatpush.msra.mxu0 %v2992
  %6650 = vmatpush.msra.mxu0 %v2988
  %6651 = vmatpush.msra.mxu0 %v2984
  %6652 = vmatpush.msra.mxu0 %v2980
  %6653 = vmatpush.msra.mxu0 %v2976
  %6654 = vmatpush.msra.mxu0 %v2972
  %6655 = vmatpush.msra.mxu0 %v2968
  %6656 = vmatpush.msra.mxu0 %v2964
  %6657 = vmatmul.f32.gmra.mxu0 %v6611
  %v6658 = vpop.f32.mrf.mxu0
  %v6659 = vadd.f32 0.0, %v6658
  %6660 = vdwg.mxu0
  %6661 = vmatpush.msra.mxu0 %v3025
  %6662 = vmatpush.msra.mxu0 %v3021
  %6663 = vmatpush.msra.mxu0 %v3017
  %6664 = vmatpush.msra.mxu0 %v3013
  %6665 = vmatpush.msra.mxu0 %v3009
  %6666 = vmatpush.msra.mxu0 %v3005
  %6667 = vmatpush.msra.mxu0 %v3001
  %6668 = vmatpush.msra.mxu0 %v2997
  %6669 = vmatpush.msra.mxu0 %v2993
  %6670 = vmatpush.msra.mxu0 %v2989
  %6671 = vmatpush.msra.mxu0 %v2985
  %6672 = vmatpush.msra.mxu0 %v2981
  %6673 = vmatpush.msra.mxu0 %v2977
  %6674 = vmatpush.msra.mxu0 %v2973
  %6675 = vmatpush.msra.mxu0 %v2969
  %6676 = vmatpush.msra.mxu0 %v2965
  %6677 = vmatmul.f32.gmra.mxu0 %v6611
  %v6678 = vpop.f32.mrf.mxu0
  %v6679 = vadd.f32 0.0, %v6678
  %6680 = vdwg.mxu0
  %6681 = vmatpush.msra.mxu0 %v3026
  %6682 = vmatpush.msra.mxu0 %v3022
  %6683 = vmatpush.msra.mxu0 %v3018
  %6684 = vmatpush.msra.mxu0 %v3014
  %6685 = vmatpush.msra.mxu0 %v3010
  %6686 = vmatpush.msra.mxu0 %v3006
  %6687 = vmatpush.msra.mxu0 %v3002
  %6688 = vmatpush.msra.mxu0 %v2998
  %6689 = vmatpush.msra.mxu0 %v2994
  %6690 = vmatpush.msra.mxu0 %v2990
  %6691 = vmatpush.msra.mxu0 %v2986
  %6692 = vmatpush.msra.mxu0 %v2982
  %6693 = vmatpush.msra.mxu0 %v2978
  %6694 = vmatpush.msra.mxu0 %v2974
  %6695 = vmatpush.msra.mxu0 %v2970
  %6696 = vmatpush.msra.mxu0 %v2966
  %6697 = vmatmul.f32.gmra.mxu0 %v6611
  %v6698 = vpop.f32.mrf.mxu0
  %v6699 = vadd.f32 0.0, %v6698
  %6700 = vdwg.mxu0
  %v6701 = vadd.f32 %v6617, %v6639
  %v6702 = vadd.f32 %v6618, %v6659
  %v6703 = vadd.f32 %v6619, %v6679
  %v6704 = vadd.f32 %v6620, %v6699
  %v6705 = vxor.u32 %v6701, 2147483648
  %v6706 = vmul.f32 %v6705, 1.442695
  %v6707 = vpow.pop %v6706
  %v6708 = vadd.f32 %v6707, 1.0
  %v6709 = vrcp.pop %v6708
  %v6710 = vmul.f32 %v6708, %v6709
  %v6711 = vsub.f32 1.0, %v6710
  %v6712 = vmul.f32 %v6709, %v6711
  %v6713 = vadd.f32 %v6709, %v6712
  %vm6714 = vweird.f32 %v6708
  %vm6715 = vweird.f32 %v6709
  %vm6716 = vmor %vm6714, %vm6715
  %v6717 = vsel %vm6716, %v6709, %v6713
  %v6718 = vand.u32 2147483647, %v6708
  %vm6719 = vcmp.eq.f32.partialorder %v6718, 8.507059e+37
  %v6720 = vand.u32 %v6708, 2147483648
  %v6721 = vor.u32 1.1754944e-38, %v6720
  %v6722 = vsel %vm6719, %v6721, %v6717
  %v6723 = vmul.f32 1.0, %v6722
  %v6724 = vxor.u32 %v6702, 2147483648
  %v6725 = vmul.f32 %v6724, 1.442695
  %v6726 = vpow.pop %v6725
  %v6727 = vadd.f32 %v6726, 1.0
  %v6728 = vrcp.pop %v6727
  %v6729 = vmul.f32 %v6727, %v6728
  %v6730 = vsub.f32 1.0, %v6729
  %v6731 = vmul.f32 %v6728, %v6730
  %v6732 = vadd.f32 %v6728, %v6731
  %vm6733 = vweird.f32 %v6727
  %vm6734 = vweird.f32 %v6728
  %vm6735 = vmor %vm6733, %vm6734
  %v6736 = vsel %vm6735, %v6728, %v6732
  %v6737 = vand.u32 2147483647, %v6727
  %vm6738 = vcmp.eq.f32.partialorder %v6737, 8.507059e+37
  %v6739 = vand.u32 %v6727, 2147483648
  %v6740 = vor.u32 1.1754944e-38, %v6739
  %v6741 = vsel %vm6738, %v6740, %v6736
  %v6742 = vmul.f32 1.0, %v6741
  %v6743 = vtanh.pop %v6703
  %v6744 = vxor.u32 %v6704, 2147483648
  %v6745 = vmul.f32 %v6744, 1.442695
  %v6746 = vpow.pop %v6745
  %v6747 = vadd.f32 %v6746, 1.0
  %v6748 = vrcp.pop %v6747
  %v6749 = vmul.f32 %v6747, %v6748
  %v6750 = vsub.f32 1.0, %v6749
  %v6751 = vmul.f32 %v6748, %v6750
  %v6752 = vadd.f32 %v6748, %v6751
  %vm6753 = vweird.f32 %v6747
  %vm6754 = vweird.f32 %v6748
  %vm6755 = vmor %vm6753, %vm6754
  %v6756 = vsel %vm6755, %v6748, %v6752
  %v6757 = vand.u32 2147483647, %v6747
  %vm6758 = vcmp.eq.f32.partialorder %v6757, 8.507059e+37
  %v6759 = vand.u32 %v6747, 2147483648
  %v6760 = vor.u32 1.1754944e-38, %v6759
  %v6761 = vsel %vm6758, %v6760, %v6756
  %v6762 = vmul.f32 1.0, %v6761
  %v6763 = vmul.f32 %v6742, %v6609
  %v6764 = vmul.f32 %v6723, %v6743
  %v6765 = vadd.f32 %v6763, %v6764
  %v6766 = vtanh.pop %v6765
  %v6767 = vmul.f32 %v6762, %v6766
  %s6768 = scalar_lea.vmem [#allocation3], 184
  %6769 = vst [vmem:[%s6768] sm:$0xff] %v6767
  %s6770 = smul.u32 24, 4
  %s6771 = smul.addr %s6770, 8
  %s6772 = scalar_lea.vmem [#allocation2], %s6771
  %v6773 = vld [vmem:[%s6772] sm:$0xff]
  %v6774 = vld [vmem:[%s6772 + $0x8] sm:$0xff]
  %v6775 = vld [vmem:[%s6772 + $0x10] sm:$0xff]
  %v6776 = vld [vmem:[%s6772 + $0x18] sm:$0xff]
  %6777 = vmatpush.msra.mxu0 %v3023
  %6778 = vmatpush.msra.mxu0 %v3019
  %6779 = vmatpush.msra.mxu0 %v3015
  %6780 = vmatpush.msra.mxu0 %v3011
  %6781 = vmatpush.msra.mxu0 %v3007
  %6782 = vmatpush.msra.mxu0 %v3003
  %6783 = vmatpush.msra.mxu0 %v2999
  %6784 = vmatpush.msra.mxu0 %v2995
  %6785 = vmatpush.msra.mxu0 %v2991
  %6786 = vmatpush.msra.mxu0 %v2987
  %6787 = vmatpush.msra.mxu0 %v2983
  %6788 = vmatpush.msra.mxu0 %v2979
  %6789 = vmatpush.msra.mxu0 %v2975
  %6790 = vmatpush.msra.mxu0 %v2971
  %6791 = vmatpush.msra.mxu0 %v2967
  %6792 = vmatpush.msra.mxu0 %v2963
  %6793 = vmatmul.f32.gmra.mxu0 %v6767
  %v6794 = vpop.f32.mrf.mxu0
  %v6795 = vadd.f32 0.0, %v6794
  %6796 = vdwg.mxu0
  %6797 = vmatpush.msra.mxu0 %v3024
  %6798 = vmatpush.msra.mxu0 %v3020
  %6799 = vmatpush.msra.mxu0 %v3016
  %6800 = vmatpush.msra.mxu0 %v3012
  %6801 = vmatpush.msra.mxu0 %v3008
  %6802 = vmatpush.msra.mxu0 %v3004
  %6803 = vmatpush.msra.mxu0 %v3000
  %6804 = vmatpush.msra.mxu0 %v2996
  %6805 = vmatpush.msra.mxu0 %v2992
  %6806 = vmatpush.msra.mxu0 %v2988
  %6807 = vmatpush.msra.mxu0 %v2984
  %6808 = vmatpush.msra.mxu0 %v2980
  %6809 = vmatpush.msra.mxu0 %v2976
  %6810 = vmatpush.msra.mxu0 %v2972
  %6811 = vmatpush.msra.mxu0 %v2968
  %6812 = vmatpush.msra.mxu0 %v2964
  %6813 = vmatmul.f32.gmra.mxu0 %v6767
  %v6814 = vpop.f32.mrf.mxu0
  %v6815 = vadd.f32 0.0, %v6814
  %6816 = vdwg.mxu0
  %6817 = vmatpush.msra.mxu0 %v3025
  %6818 = vmatpush.msra.mxu0 %v3021
  %6819 = vmatpush.msra.mxu0 %v3017
  %6820 = vmatpush.msra.mxu0 %v3013
  %6821 = vmatpush.msra.mxu0 %v3009
  %6822 = vmatpush.msra.mxu0 %v3005
  %6823 = vmatpush.msra.mxu0 %v3001
  %6824 = vmatpush.msra.mxu0 %v2997
  %6825 = vmatpush.msra.mxu0 %v2993
  %6826 = vmatpush.msra.mxu0 %v2989
  %6827 = vmatpush.msra.mxu0 %v2985
  %6828 = vmatpush.msra.mxu0 %v2981
  %6829 = vmatpush.msra.mxu0 %v2977
  %6830 = vmatpush.msra.mxu0 %v2973
  %6831 = vmatpush.msra.mxu0 %v2969
  %6832 = vmatpush.msra.mxu0 %v2965
  %6833 = vmatmul.f32.gmra.mxu0 %v6767
  %v6834 = vpop.f32.mrf.mxu0
  %v6835 = vadd.f32 0.0, %v6834
  %6836 = vdwg.mxu0
  %6837 = vmatpush.msra.mxu0 %v3026
  %6838 = vmatpush.msra.mxu0 %v3022
  %6839 = vmatpush.msra.mxu0 %v3018
  %6840 = vmatpush.msra.mxu0 %v3014
  %6841 = vmatpush.msra.mxu0 %v3010
  %6842 = vmatpush.msra.mxu0 %v3006
  %6843 = vmatpush.msra.mxu0 %v3002
  %6844 = vmatpush.msra.mxu0 %v2998
  %6845 = vmatpush.msra.mxu0 %v2994
  %6846 = vmatpush.msra.mxu0 %v2990
  %6847 = vmatpush.msra.mxu0 %v2986
  %6848 = vmatpush.msra.mxu0 %v2982
  %6849 = vmatpush.msra.mxu0 %v2978
  %6850 = vmatpush.msra.mxu0 %v2974
  %6851 = vmatpush.msra.mxu0 %v2970
  %6852 = vmatpush.msra.mxu0 %v2966
  %6853 = vmatmul.f32.gmra.mxu0 %v6767
  %v6854 = vpop.f32.mrf.mxu0
  %v6855 = vadd.f32 0.0, %v6854
  %6856 = vdwg.mxu0
  %v6857 = vadd.f32 %v6773, %v6795
  %v6858 = vadd.f32 %v6774, %v6815
  %v6859 = vadd.f32 %v6775, %v6835
  %v6860 = vadd.f32 %v6776, %v6855
  %v6861 = vxor.u32 %v6857, 2147483648
  %v6862 = vmul.f32 %v6861, 1.442695
  %v6863 = vpow.pop %v6862
  %v6864 = vadd.f32 %v6863, 1.0
  %v6865 = vrcp.pop %v6864
  %v6866 = vmul.f32 %v6864, %v6865
  %v6867 = vsub.f32 1.0, %v6866
  %v6868 = vmul.f32 %v6865, %v6867
  %v6869 = vadd.f32 %v6865, %v6868
  %vm6870 = vweird.f32 %v6864
  %vm6871 = vweird.f32 %v6865
  %vm6872 = vmor %vm6870, %vm6871
  %v6873 = vsel %vm6872, %v6865, %v6869
  %v6874 = vand.u32 2147483647, %v6864
  %vm6875 = vcmp.eq.f32.partialorder %v6874, 8.507059e+37
  %v6876 = vand.u32 %v6864, 2147483648
  %v6877 = vor.u32 1.1754944e-38, %v6876
  %v6878 = vsel %vm6875, %v6877, %v6873
  %v6879 = vmul.f32 1.0, %v6878
  %v6880 = vxor.u32 %v6858, 2147483648
  %v6881 = vmul.f32 %v6880, 1.442695
  %v6882 = vpow.pop %v6881
  %v6883 = vadd.f32 %v6882, 1.0
  %v6884 = vrcp.pop %v6883
  %v6885 = vmul.f32 %v6883, %v6884
  %v6886 = vsub.f32 1.0, %v6885
  %v6887 = vmul.f32 %v6884, %v6886
  %v6888 = vadd.f32 %v6884, %v6887
  %vm6889 = vweird.f32 %v6883
  %vm6890 = vweird.f32 %v6884
  %vm6891 = vmor %vm6889, %vm6890
  %v6892 = vsel %vm6891, %v6884, %v6888
  %v6893 = vand.u32 2147483647, %v6883
  %vm6894 = vcmp.eq.f32.partialorder %v6893, 8.507059e+37
  %v6895 = vand.u32 %v6883, 2147483648
  %v6896 = vor.u32 1.1754944e-38, %v6895
  %v6897 = vsel %vm6894, %v6896, %v6892
  %v6898 = vmul.f32 1.0, %v6897
  %v6899 = vtanh.pop %v6859
  %v6900 = vxor.u32 %v6860, 2147483648
  %v6901 = vmul.f32 %v6900, 1.442695
  %v6902 = vpow.pop %v6901
  %v6903 = vadd.f32 %v6902, 1.0
  %v6904 = vrcp.pop %v6903
  %v6905 = vmul.f32 %v6903, %v6904
  %v6906 = vsub.f32 1.0, %v6905
  %v6907 = vmul.f32 %v6904, %v6906
  %v6908 = vadd.f32 %v6904, %v6907
  %vm6909 = vweird.f32 %v6903
  %vm6910 = vweird.f32 %v6904
  %vm6911 = vmor %vm6909, %vm6910
  %v6912 = vsel %vm6911, %v6904, %v6908
  %v6913 = vand.u32 2147483647, %v6903
  %vm6914 = vcmp.eq.f32.partialorder %v6913, 8.507059e+37
  %v6915 = vand.u32 %v6903, 2147483648
  %v6916 = vor.u32 1.1754944e-38, %v6915
  %v6917 = vsel %vm6914, %v6916, %v6912
  %v6918 = vmul.f32 1.0, %v6917
  %v6919 = vmul.f32 %v6898, %v6765
  %v6920 = vmul.f32 %v6879, %v6899
  %v6921 = vadd.f32 %v6919, %v6920
  %v6922 = vtanh.pop %v6921
  %v6923 = vmul.f32 %v6918, %v6922
  %s6924 = scalar_lea.vmem [#allocation3], 192
  %6925 = vst [vmem:[%s6924] sm:$0xff] %v6923
  %s6926 = smul.u32 25, 4
  %s6927 = smul.addr %s6926, 8
  %s6928 = scalar_lea.vmem [#allocation2], %s6927
  %v6929 = vld [vmem:[%s6928] sm:$0xff]
  %v6930 = vld [vmem:[%s6928 + $0x8] sm:$0xff]
  %v6931 = vld [vmem:[%s6928 + $0x10] sm:$0xff]
  %v6932 = vld [vmem:[%s6928 + $0x18] sm:$0xff]
  %6933 = vmatpush.msra.mxu0 %v3023
  %6934 = vmatpush.msra.mxu0 %v3019
  %6935 = vmatpush.msra.mxu0 %v3015
  %6936 = vmatpush.msra.mxu0 %v3011
  %6937 = vmatpush.msra.mxu0 %v3007
  %6938 = vmatpush.msra.mxu0 %v3003
  %6939 = vmatpush.msra.mxu0 %v2999
  %6940 = vmatpush.msra.mxu0 %v2995
  %6941 = vmatpush.msra.mxu0 %v2991
  %6942 = vmatpush.msra.mxu0 %v2987
  %6943 = vmatpush.msra.mxu0 %v2983
  %6944 = vmatpush.msra.mxu0 %v2979
  %6945 = vmatpush.msra.mxu0 %v2975
  %6946 = vmatpush.msra.mxu0 %v2971
  %6947 = vmatpush.msra.mxu0 %v2967
  %6948 = vmatpush.msra.mxu0 %v2963
  %6949 = vmatmul.f32.gmra.mxu0 %v6923
  %v6950 = vpop.f32.mrf.mxu0
  %v6951 = vadd.f32 0.0, %v6950
  %6952 = vdwg.mxu0
  %6953 = vmatpush.msra.mxu0 %v3024
  %6954 = vmatpush.msra.mxu0 %v3020
  %6955 = vmatpush.msra.mxu0 %v3016
  %6956 = vmatpush.msra.mxu0 %v3012
  %6957 = vmatpush.msra.mxu0 %v3008
  %6958 = vmatpush.msra.mxu0 %v3004
  %6959 = vmatpush.msra.mxu0 %v3000
  %6960 = vmatpush.msra.mxu0 %v2996
  %6961 = vmatpush.msra.mxu0 %v2992
  %6962 = vmatpush.msra.mxu0 %v2988
  %6963 = vmatpush.msra.mxu0 %v2984
  %6964 = vmatpush.msra.mxu0 %v2980
  %6965 = vmatpush.msra.mxu0 %v2976
  %6966 = vmatpush.msra.mxu0 %v2972
  %6967 = vmatpush.msra.mxu0 %v2968
  %6968 = vmatpush.msra.mxu0 %v2964
  %6969 = vmatmul.f32.gmra.mxu0 %v6923
  %v6970 = vpop.f32.mrf.mxu0
  %v6971 = vadd.f32 0.0, %v6970
  %6972 = vdwg.mxu0
  %6973 = vmatpush.msra.mxu0 %v3025
  %6974 = vmatpush.msra.mxu0 %v3021
  %6975 = vmatpush.msra.mxu0 %v3017
  %6976 = vmatpush.msra.mxu0 %v3013
  %6977 = vmatpush.msra.mxu0 %v3009
  %6978 = vmatpush.msra.mxu0 %v3005
  %6979 = vmatpush.msra.mxu0 %v3001
  %6980 = vmatpush.msra.mxu0 %v2997
  %6981 = vmatpush.msra.mxu0 %v2993
  %6982 = vmatpush.msra.mxu0 %v2989
  %6983 = vmatpush.msra.mxu0 %v2985
  %6984 = vmatpush.msra.mxu0 %v2981
  %6985 = vmatpush.msra.mxu0 %v2977
  %6986 = vmatpush.msra.mxu0 %v2973
  %6987 = vmatpush.msra.mxu0 %v2969
  %6988 = vmatpush.msra.mxu0 %v2965
  %6989 = vmatmul.f32.gmra.mxu0 %v6923
  %v6990 = vpop.f32.mrf.mxu0
  %v6991 = vadd.f32 0.0, %v6990
  %6992 = vdwg.mxu0
  %6993 = vmatpush.msra.mxu0 %v3026
  %6994 = vmatpush.msra.mxu0 %v3022
  %6995 = vmatpush.msra.mxu0 %v3018
  %6996 = vmatpush.msra.mxu0 %v3014
  %6997 = vmatpush.msra.mxu0 %v3010
  %6998 = vmatpush.msra.mxu0 %v3006
  %6999 = vmatpush.msra.mxu0 %v3002
  %7000 = vmatpush.msra.mxu0 %v2998
  %7001 = vmatpush.msra.mxu0 %v2994
  %7002 = vmatpush.msra.mxu0 %v2990
  %7003 = vmatpush.msra.mxu0 %v2986
  %7004 = vmatpush.msra.mxu0 %v2982
  %7005 = vmatpush.msra.mxu0 %v2978
  %7006 = vmatpush.msra.mxu0 %v2974
  %7007 = vmatpush.msra.mxu0 %v2970
  %7008 = vmatpush.msra.mxu0 %v2966
  %7009 = vmatmul.f32.gmra.mxu0 %v6923
  %v7010 = vpop.f32.mrf.mxu0
  %v7011 = vadd.f32 0.0, %v7010
  %7012 = vdwg.mxu0
  %v7013 = vadd.f32 %v6929, %v6951
  %v7014 = vadd.f32 %v6930, %v6971
  %v7015 = vadd.f32 %v6931, %v6991
  %v7016 = vadd.f32 %v6932, %v7011
  %v7017 = vxor.u32 %v7013, 2147483648
  %v7018 = vmul.f32 %v7017, 1.442695
  %v7019 = vpow.pop %v7018
  %v7020 = vadd.f32 %v7019, 1.0
  %v7021 = vrcp.pop %v7020
  %v7022 = vmul.f32 %v7020, %v7021
  %v7023 = vsub.f32 1.0, %v7022
  %v7024 = vmul.f32 %v7021, %v7023
  %v7025 = vadd.f32 %v7021, %v7024
  %vm7026 = vweird.f32 %v7020
  %vm7027 = vweird.f32 %v7021
  %vm7028 = vmor %vm7026, %vm7027
  %v7029 = vsel %vm7028, %v7021, %v7025
  %v7030 = vand.u32 2147483647, %v7020
  %vm7031 = vcmp.eq.f32.partialorder %v7030, 8.507059e+37
  %v7032 = vand.u32 %v7020, 2147483648
  %v7033 = vor.u32 1.1754944e-38, %v7032
  %v7034 = vsel %vm7031, %v7033, %v7029
  %v7035 = vmul.f32 1.0, %v7034
  %v7036 = vxor.u32 %v7014, 2147483648
  %v7037 = vmul.f32 %v7036, 1.442695
  %v7038 = vpow.pop %v7037
  %v7039 = vadd.f32 %v7038, 1.0
  %v7040 = vrcp.pop %v7039
  %v7041 = vmul.f32 %v7039, %v7040
  %v7042 = vsub.f32 1.0, %v7041
  %v7043 = vmul.f32 %v7040, %v7042
  %v7044 = vadd.f32 %v7040, %v7043
  %vm7045 = vweird.f32 %v7039
  %vm7046 = vweird.f32 %v7040
  %vm7047 = vmor %vm7045, %vm7046
  %v7048 = vsel %vm7047, %v7040, %v7044
  %v7049 = vand.u32 2147483647, %v7039
  %vm7050 = vcmp.eq.f32.partialorder %v7049, 8.507059e+37
  %v7051 = vand.u32 %v7039, 2147483648
  %v7052 = vor.u32 1.1754944e-38, %v7051
  %v7053 = vsel %vm7050, %v7052, %v7048
  %v7054 = vmul.f32 1.0, %v7053
  %v7055 = vtanh.pop %v7015
  %v7056 = vxor.u32 %v7016, 2147483648
  %v7057 = vmul.f32 %v7056, 1.442695
  %v7058 = vpow.pop %v7057
  %v7059 = vadd.f32 %v7058, 1.0
  %v7060 = vrcp.pop %v7059
  %v7061 = vmul.f32 %v7059, %v7060
  %v7062 = vsub.f32 1.0, %v7061
  %v7063 = vmul.f32 %v7060, %v7062
  %v7064 = vadd.f32 %v7060, %v7063
  %vm7065 = vweird.f32 %v7059
  %vm7066 = vweird.f32 %v7060
  %vm7067 = vmor %vm7065, %vm7066
  %v7068 = vsel %vm7067, %v7060, %v7064
  %v7069 = vand.u32 2147483647, %v7059
  %vm7070 = vcmp.eq.f32.partialorder %v7069, 8.507059e+37
  %v7071 = vand.u32 %v7059, 2147483648
  %v7072 = vor.u32 1.1754944e-38, %v7071
  %v7073 = vsel %vm7070, %v7072, %v7068
  %v7074 = vmul.f32 1.0, %v7073
  %v7075 = vmul.f32 %v7054, %v6921
  %v7076 = vmul.f32 %v7035, %v7055
  %v7077 = vadd.f32 %v7075, %v7076
  %v7078 = vtanh.pop %v7077
  %v7079 = vmul.f32 %v7074, %v7078
  %s7080 = scalar_lea.vmem [#allocation3], 200
  %7081 = vst [vmem:[%s7080] sm:$0xff] %v7079
  %v7082 = vld [vmem:[#allocation3] sm:$0xff]
  %7083 = vst [vmem:[#allocation4] sm:$0xff] %v7082
  %v7084 = vld [vmem:[#allocation3 + $0x8] sm:$0xff]
  %7085 = vst [vmem:[#allocation4 + $0x8] sm:$0xff] %v7084
  %v7086 = vld [vmem:[#allocation3 + $0x10] sm:$0xff]
  %7087 = vst [vmem:[#allocation4 + $0x10] sm:$0xff] %v7086
  %v7088 = vld [vmem:[#allocation3 + $0x18] sm:$0xff]
  %7089 = vst [vmem:[#allocation4 + $0x18] sm:$0xff] %v7088
  %v7090 = vld [vmem:[#allocation3 + $0x20] sm:$0xff]
  %7091 = vst [vmem:[#allocation4 + $0x20] sm:$0xff] %v7090
  %v7092 = vld [vmem:[#allocation3 + $0x28] sm:$0xff]
  %7093 = vst [vmem:[#allocation4 + $0x28] sm:$0xff] %v7092
  %v7094 = vld [vmem:[#allocation3 + $0x30] sm:$0xff]
  %7095 = vst [vmem:[#allocation4 + $0x30] sm:$0xff] %v7094
  %v7096 = vld [vmem:[#allocation3 + $0x38] sm:$0xff]
  %7097 = vst [vmem:[#allocation4 + $0x38] sm:$0xff] %v7096
  %v7098 = vld [vmem:[#allocation3 + $0x40] sm:$0xff]
  %7099 = vst [vmem:[#allocation4 + $0x40] sm:$0xff] %v7098
  %v7100 = vld [vmem:[#allocation3 + $0x48] sm:$0xff]
  %7101 = vst [vmem:[#allocation4 + $0x48] sm:$0xff] %v7100
  %v7102 = vld [vmem:[#allocation3 + $0x50] sm:$0xff]
  %7103 = vst [vmem:[#allocation4 + $0x50] sm:$0xff] %v7102
  %v7104 = vld [vmem:[#allocation3 + $0x58] sm:$0xff]
  %7105 = vst [vmem:[#allocation4 + $0x58] sm:$0xff] %v7104
  %v7106 = vld [vmem:[#allocation3 + $0x60] sm:$0xff]
  %7107 = vst [vmem:[#allocation4 + $0x60] sm:$0xff] %v7106
  %v7108 = vld [vmem:[#allocation3 + $0x68] sm:$0xff]
  %7109 = vst [vmem:[#allocation4 + $0x68] sm:$0xff] %v7108
  %v7110 = vld [vmem:[#allocation3 + $0x70] sm:$0xff]
  %7111 = vst [vmem:[#allocation4 + $0x70] sm:$0xff] %v7110
  %v7112 = vld [vmem:[#allocation3 + $0x78] sm:$0xff]
  %7113 = vst [vmem:[#allocation4 + $0x78] sm:$0xff] %v7112
  %v7114 = vld [vmem:[#allocation3 + $0x80] sm:$0xff]
  %7115 = vst [vmem:[#allocation4 + $0x80] sm:$0xff] %v7114
  %v7116 = vld [vmem:[#allocation3 + $0x88] sm:$0xff]
  %7117 = vst [vmem:[#allocation4 + $0x88] sm:$0xff] %v7116
  %v7118 = vld [vmem:[#allocation3 + $0x90] sm:$0xff]
  %7119 = vst [vmem:[#allocation4 + $0x90] sm:$0xff] %v7118
  %v7120 = vld [vmem:[#allocation3 + $0x98] sm:$0xff]
  %7121 = vst [vmem:[#allocation4 + $0x98] sm:$0xff] %v7120
  %v7122 = vld [vmem:[#allocation3 + $0x10] sm:$0xff]
  %7123 = vst [vmem:[#allocation4 + $0xa0] sm:$0xff] %v7122
  %v7124 = vld [vmem:[#allocation3 + $0x18] sm:$0xff]
  %7125 = vst [vmem:[#allocation4 + $0xa8] sm:$0xff] %v7124
  %v7126 = vld [vmem:[#allocation3 + $0x20] sm:$0xff]
  %7127 = vst [vmem:[#allocation4 + $0xb0] sm:$0xff] %v7126
  %v7128 = vld [vmem:[#allocation3 + $0x28] sm:$0xff]
  %7129 = vst [vmem:[#allocation4 + $0xb8] sm:$0xff] %v7128
  %v7130 = vld [vmem:[#allocation3 + $0x30] sm:$0xff]
  %7131 = vst [vmem:[#allocation4 + $0xc0] sm:$0xff] %v7130
  %v7132 = vld [vmem:[#allocation3 + $0x38] sm:$0xff]
  %7133 = vst [vmem:[#allocation4 + $0xc8] sm:$0xff] %v7132
  %v7134 = vld [vmem:[#allocation3 + $0x40] sm:$0xff]
  %7135 = vst [vmem:[#allocation4 + $0xd0] sm:$0xff] %v7134
  %v7136 = vld [vmem:[#allocation3 + $0x48] sm:$0xff]
  %7137 = vst [vmem:[#allocation4 + $0xd8] sm:$0xff] %v7136
  %v7138 = vld [vmem:[#allocation3 + $0x50] sm:$0xff]
  %7139 = vst [vmem:[#allocation4 + $0xe0] sm:$0xff] %v7138
  %v7140 = vld [vmem:[#allocation3 + $0x58] sm:$0xff]
  %7141 = vst [vmem:[#allocation4 + $0xe8] sm:$0xff] %v7140
  %v7142 = vld [vmem:[#allocation3 + $0x60] sm:$0xff]
  %7143 = vst [vmem:[#allocation4 + $0xf0] sm:$0xff] %v7142
  %v7144 = vld [vmem:[#allocation3 + $0x68] sm:$0xff]
  %7145 = vst [vmem:[#allocation4 + $0xf8] sm:$0xff] %v7144
  %v7146 = vld [vmem:[#allocation3 + $0x70] sm:$0xff]
  %7147 = vst [vmem:[#allocation4 + $0x100] sm:$0xff] %v7146
  %v7148 = vld [vmem:[#allocation3 + $0x78] sm:$0xff]
  %7149 = vst [vmem:[#allocation4 + $0x108] sm:$0xff] %v7148
  %v7150 = vld [vmem:[#allocation3 + $0x80] sm:$0xff]
  %7151 = vst [vmem:[#allocation4 + $0x110] sm:$0xff] %v7150
  %v7152 = vld [vmem:[#allocation3 + $0x88] sm:$0xff]
  %7153 = vst [vmem:[#allocation4 + $0x118] sm:$0xff] %v7152
  %v7154 = vld [vmem:[#allocation3 + $0x90] sm:$0xff]
  %7155 = vst [vmem:[#allocation4 + $0x120] sm:$0xff] %v7154
  %v7156 = vld [vmem:[#allocation3 + $0x98] sm:$0xff]
  %7157 = vst [vmem:[#allocation4 + $0x128] sm:$0xff] %v7156
  %v7158 = vld [vmem:[#allocation3 + $0xa0] sm:$0xff]
  %7159 = vst [vmem:[#allocation4 + $0x130] sm:$0xff] %v7158
  %v7160 = vld [vmem:[#allocation3 + $0xa8] sm:$0xff]
  %7161 = vst [vmem:[#allocation4 + $0x138] sm:$0xff] %v7160
  %v7162 = vld [vmem:[#allocation3 + $0x20] sm:$0xff]
  %7163 = vst [vmem:[#allocation4 + $0x140] sm:$0xff] %v7162
  %v7164 = vld [vmem:[#allocation3 + $0x28] sm:$0xff]
  %7165 = vst [vmem:[#allocation4 + $0x148] sm:$0xff] %v7164
  %v7166 = vld [vmem:[#allocation3 + $0x30] sm:$0xff]
  %7167 = vst [vmem:[#allocation4 + $0x150] sm:$0xff] %v7166
  %v7168 = vld [vmem:[#allocation3 + $0x38] sm:$0xff]
  %7169 = vst [vmem:[#allocation4 + $0x158] sm:$0xff] %v7168
  %v7170 = vld [vmem:[#allocation3 + $0x40] sm:$0xff]
  %7171 = vst [vmem:[#allocation4 + $0x160] sm:$0xff] %v7170
  %v7172 = vld [vmem:[#allocation3 + $0x48] sm:$0xff]
  %7173 = vst [vmem:[#allocation4 + $0x168] sm:$0xff] %v7172
  %v7174 = vld [vmem:[#allocation3 + $0x50] sm:$0xff]
  %7175 = vst [vmem:[#allocation4 + $0x170] sm:$0xff] %v7174
  %v7176 = vld [vmem:[#allocation3 + $0x58] sm:$0xff]
  %7177 = vst [vmem:[#allocation4 + $0x178] sm:$0xff] %v7176
  %v7178 = vld [vmem:[#allocation3 + $0x60] sm:$0xff]
  %7179 = vst [vmem:[#allocation4 + $0x180] sm:$0xff] %v7178
  %v7180 = vld [vmem:[#allocation3 + $0x68] sm:$0xff]
  %7181 = vst [vmem:[#allocation4 + $0x188] sm:$0xff] %v7180
  %v7182 = vld [vmem:[#allocation3 + $0x70] sm:$0xff]
  %7183 = vst [vmem:[#allocation4 + $0x190] sm:$0xff] %v7182
  %v7184 = vld [vmem:[#allocation3 + $0x78] sm:$0xff]
  %7185 = vst [vmem:[#allocation4 + $0x198] sm:$0xff] %v7184
  %v7186 = vld [vmem:[#allocation3 + $0x80] sm:$0xff]
  %7187 = vst [vmem:[#allocation4 + $0x1a0] sm:$0xff] %v7186
  %v7188 = vld [vmem:[#allocation3 + $0x88] sm:$0xff]
  %7189 = vst [vmem:[#allocation4 + $0x1a8] sm:$0xff] %v7188
  %v7190 = vld [vmem:[#allocation3 + $0x90] sm:$0xff]
  %7191 = vst [vmem:[#allocation4 + $0x1b0] sm:$0xff] %v7190
  %v7192 = vld [vmem:[#allocation3 + $0x98] sm:$0xff]
  %7193 = vst [vmem:[#allocation4 + $0x1b8] sm:$0xff] %v7192
  %v7194 = vld [vmem:[#allocation3 + $0xa0] sm:$0xff]
  %7195 = vst [vmem:[#allocation4 + $0x1c0] sm:$0xff] %v7194
  %v7196 = vld [vmem:[#allocation3 + $0xa8] sm:$0xff]
  %7197 = vst [vmem:[#allocation4 + $0x1c8] sm:$0xff] %v7196
  %v7198 = vld [vmem:[#allocation3 + $0xb0] sm:$0xff]
  %7199 = vst [vmem:[#allocation4 + $0x1d0] sm:$0xff] %v7198
  %v7200 = vld [vmem:[#allocation3 + $0xb8] sm:$0xff]
  %7201 = vst [vmem:[#allocation4 + $0x1d8] sm:$0xff] %v7200
  %v7202 = vld [vmem:[#allocation3 + $0x30] sm:$0xff]
  %7203 = vst [vmem:[#allocation4 + $0x1e0] sm:$0xff] %v7202
  %v7204 = vld [vmem:[#allocation3 + $0x38] sm:$0xff]
  %7205 = vst [vmem:[#allocation4 + $0x1e8] sm:$0xff] %v7204
  %v7206 = vld [vmem:[#allocation3 + $0x40] sm:$0xff]
  %7207 = vst [vmem:[#allocation4 + $0x1f0] sm:$0xff] %v7206
  %v7208 = vld [vmem:[#allocation3 + $0x48] sm:$0xff]
  %7209 = vst [vmem:[#allocation4 + $0x1f8] sm:$0xff] %v7208
  %v7210 = vld [vmem:[#allocation3 + $0x50] sm:$0xff]
  %7211 = vst [vmem:[#allocation4 + $0x200] sm:$0xff] %v7210
  %v7212 = vld [vmem:[#allocation3 + $0x58] sm:$0xff]
  %7213 = vst [vmem:[#allocation4 + $0x208] sm:$0xff] %v7212
  %v7214 = vld [vmem:[#allocation3 + $0x60] sm:$0xff]
  %7215 = vst [vmem:[#allocation4 + $0x210] sm:$0xff] %v7214
  %v7216 = vld [vmem:[#allocation3 + $0x68] sm:$0xff]
  %7217 = vst [vmem:[#allocation4 + $0x218] sm:$0xff] %v7216
  %v7218 = vld [vmem:[#allocation3 + $0x70] sm:$0xff]
  %7219 = vst [vmem:[#allocation4 + $0x220] sm:$0xff] %v7218
  %v7220 = vld [vmem:[#allocation3 + $0x78] sm:$0xff]
  %7221 = vst [vmem:[#allocation4 + $0x228] sm:$0xff] %v7220
  %v7222 = vld [vmem:[#allocation3 + $0x80] sm:$0xff]
  %7223 = vst [vmem:[#allocation4 + $0x230] sm:$0xff] %v7222
  %v7224 = vld [vmem:[#allocation3 + $0x88] sm:$0xff]
  %7225 = vst [vmem:[#allocation4 + $0x238] sm:$0xff] %v7224
  %v7226 = vld [vmem:[#allocation3 + $0x90] sm:$0xff]
  %7227 = vst [vmem:[#allocation4 + $0x240] sm:$0xff] %v7226
  %v7228 = vld [vmem:[#allocation3 + $0x98] sm:$0xff]
  %7229 = vst [vmem:[#allocation4 + $0x248] sm:$0xff] %v7228
  %v7230 = vld [vmem:[#allocation3 + $0xa0] sm:$0xff]
  %7231 = vst [vmem:[#allocation4 + $0x250] sm:$0xff] %v7230
  %v7232 = vld [vmem:[#allocation3 + $0xa8] sm:$0xff]
  %7233 = vst [vmem:[#allocation4 + $0x258] sm:$0xff] %v7232
  %v7234 = vld [vmem:[#allocation3 + $0xb0] sm:$0xff]
  %7235 = vst [vmem:[#allocation4 + $0x260] sm:$0xff] %v7234
  %v7236 = vld [vmem:[#allocation3 + $0xb8] sm:$0xff]
  %7237 = vst [vmem:[#allocation4 + $0x268] sm:$0xff] %v7236
  %v7238 = vld [vmem:[#allocation3 + $0xc0] sm:$0xff]
  %7239 = vst [vmem:[#allocation4 + $0x270] sm:$0xff] %v7238
  %v7240 = vld [vmem:[#allocation3 + $0xc8] sm:$0xff]
  %7241 = vst [vmem:[#allocation4 + $0x278] sm:$0xff] %v7240
  %v7242 = vld [vmem:[#allocation4] sm:$0xff]
  %v7243 = vld [vmem:[#allocation4 + $0x8] sm:$0xff]
  %v7244 = vld [vmem:[#allocation4 + $0x10] sm:$0xff]
  %v7245 = vld [vmem:[#allocation4 + $0x18] sm:$0xff]
  %v7246 = vld [vmem:[#allocation4 + $0x20] sm:$0xff]
  %v7247 = vld [vmem:[#allocation4 + $0x28] sm:$0xff]
  %v7248 = vld [vmem:[#allocation4 + $0x30] sm:$0xff]
  %v7249 = vld [vmem:[#allocation4 + $0x38] sm:$0xff]
  %v7250 = vld [vmem:[#allocation4 + $0x40] sm:$0xff]
  %v7251 = vld [vmem:[#allocation4 + $0x48] sm:$0xff]
  %v7252 = vld [vmem:[#allocation4 + $0x50] sm:$0xff]
  %v7253 = vld [vmem:[#allocation4 + $0x58] sm:$0xff]
  %v7254 = vld [vmem:[#allocation4 + $0x60] sm:$0xff]
  %v7255 = vld [vmem:[#allocation4 + $0x68] sm:$0xff]
  %v7256 = vld [vmem:[#allocation4 + $0x70] sm:$0xff]
  %v7257 = vld [vmem:[#allocation4 + $0x78] sm:$0xff]
  %v7258 = vld [vmem:[#allocation4 + $0x80] sm:$0xff]
  %v7259 = vld [vmem:[#allocation4 + $0x88] sm:$0xff]
  %v7260 = vld [vmem:[#allocation4 + $0x90] sm:$0xff]
  %v7261 = vld [vmem:[#allocation4 + $0x98] sm:$0xff]
  %v7262 = vld [vmem:[#allocation4 + $0xa0] sm:$0xff]
  %v7263 = vld [vmem:[#allocation4 + $0xa8] sm:$0xff]
  %v7264 = vld [vmem:[#allocation4 + $0xb0] sm:$0xff]
  %v7265 = vld [vmem:[#allocation4 + $0xb8] sm:$0xff]
  %v7266 = vld [vmem:[#allocation4 + $0xc0] sm:$0xff]
  %v7267 = vld [vmem:[#allocation4 + $0xc8] sm:$0xff]
  %v7268 = vld [vmem:[#allocation4 + $0xd0] sm:$0xff]
  %v7269 = vld [vmem:[#allocation4 + $0xd8] sm:$0xff]
  %v7270 = vld [vmem:[#allocation4 + $0xe0] sm:$0xff]
  %v7271 = vld [vmem:[#allocation4 + $0xe8] sm:$0xff]
  %v7272 = vld [vmem:[#allocation4 + $0xf0] sm:$0xff]
  %v7273 = vld [vmem:[#allocation4 + $0xf8] sm:$0xff]
  %v7274 = vld [vmem:[#allocation4 + $0x100] sm:$0xff]
  %v7275 = vld [vmem:[#allocation4 + $0x108] sm:$0xff]
  %v7276 = vld [vmem:[#allocation4 + $0x110] sm:$0xff]
  %v7277 = vld [vmem:[#allocation4 + $0x118] sm:$0xff]
  %v7278 = vld [vmem:[#allocation4 + $0x120] sm:$0xff]
  %v7279 = vld [vmem:[#allocation4 + $0x128] sm:$0xff]
  %v7280 = vld [vmem:[#allocation4 + $0x130] sm:$0xff]
  %v7281 = vld [vmem:[#allocation4 + $0x138] sm:$0xff]
  %v7282 = vld [vmem:[#allocation4 + $0x140] sm:$0xff]
  %v7283 = vld [vmem:[#allocation4 + $0x148] sm:$0xff]
  %v7284 = vld [vmem:[#allocation4 + $0x150] sm:$0xff]
  %v7285 = vld [vmem:[#allocation4 + $0x158] sm:$0xff]
  %v7286 = vld [vmem:[#allocation4 + $0x160] sm:$0xff]
  %v7287 = vld [vmem:[#allocation4 + $0x168] sm:$0xff]
  %v7288 = vld [vmem:[#allocation4 + $0x170] sm:$0xff]
  %v7289 = vld [vmem:[#allocation4 + $0x178] sm:$0xff]
  %v7290 = vld [vmem:[#allocation4 + $0x180] sm:$0xff]
  %v7291 = vld [vmem:[#allocation4 + $0x188] sm:$0xff]
  %v7292 = vld [vmem:[#allocation4 + $0x190] sm:$0xff]
  %v7293 = vld [vmem:[#allocation4 + $0x198] sm:$0xff]
  %v7294 = vld [vmem:[#allocation4 + $0x1a0] sm:$0xff]
  %v7295 = vld [vmem:[#allocation4 + $0x1a8] sm:$0xff]
  %v7296 = vld [vmem:[#allocation4 + $0x1b0] sm:$0xff]
  %v7297 = vld [vmem:[#allocation4 + $0x1b8] sm:$0xff]
  %v7298 = vld [vmem:[#allocation4 + $0x1c0] sm:$0xff]
  %v7299 = vld [vmem:[#allocation4 + $0x1c8] sm:$0xff]
  %v7300 = vld [vmem:[#allocation4 + $0x1d0] sm:$0xff]
  %v7301 = vld [vmem:[#allocation4 + $0x1d8] sm:$0xff]
  %v7302 = vld [vmem:[#allocation4 + $0x1e0] sm:$0xff]
  %v7303 = vld [vmem:[#allocation4 + $0x1e8] sm:$0xff]
  %v7304 = vld [vmem:[#allocation4 + $0x1f0] sm:$0xff]
  %v7305 = vld [vmem:[#allocation4 + $0x1f8] sm:$0xff]
  %v7306 = vld [vmem:[#allocation4 + $0x200] sm:$0xff]
  %v7307 = vld [vmem:[#allocation4 + $0x208] sm:$0xff]
  %v7308 = vld [vmem:[#allocation4 + $0x210] sm:$0xff]
  %v7309 = vld [vmem:[#allocation4 + $0x218] sm:$0xff]
  %v7310 = vld [vmem:[#allocation4 + $0x220] sm:$0xff]
  %v7311 = vld [vmem:[#allocation4 + $0x228] sm:$0xff]
  %v7312 = vld [vmem:[#allocation4 + $0x230] sm:$0xff]
  %v7313 = vld [vmem:[#allocation4 + $0x238] sm:$0xff]
  %v7314 = vld [vmem:[#allocation4 + $0x240] sm:$0xff]
  %v7315 = vld [vmem:[#allocation4 + $0x248] sm:$0xff]
  %v7316 = vld [vmem:[#allocation4 + $0x250] sm:$0xff]
  %v7317 = vld [vmem:[#allocation4 + $0x258] sm:$0xff]
  %v7318 = vld [vmem:[#allocation4 + $0x260] sm:$0xff]
  %v7319 = vld [vmem:[#allocation4 + $0x268] sm:$0xff]
  %v7320 = vld [vmem:[#allocation4 + $0x270] sm:$0xff]
  %v7321 = vld [vmem:[#allocation4 + $0x278] sm:$0xff]
  %v7322 = vld [vmem:[%s4] sm:$0xff]
  %v7323 = vld [vmem:[%s4 + $0x8] sm:$0xff]
  %v7324 = vld [vmem:[%s4 + $0x10] sm:$0xff]
  %v7325 = vld [vmem:[%s4 + $0x18] sm:$0xff]
  %v7326 = vld [vmem:[%s4 + $0x20] sm:$0xff]
  %v7327 = vld [vmem:[%s4 + $0x28] sm:$0xff]
  %v7328 = vld [vmem:[%s4 + $0x30] sm:$0xff]
  %v7329 = vld [vmem:[%s4 + $0x38] sm:$0xff]
  %v7330 = vld [vmem:[%s4 + $0x40] sm:$0xff]
  %v7331 = vld [vmem:[%s4 + $0x48] sm:$0xff]
  %v7332 = vld [vmem:[%s4 + $0x50] sm:$0xff]
  %v7333 = vld [vmem:[%s4 + $0x58] sm:$0xff]
  %v7334 = vld [vmem:[%s4 + $0x60] sm:$0xff]
  %v7335 = vld [vmem:[%s4 + $0x68] sm:$0xff]
  %v7336 = vld [vmem:[%s4 + $0x70] sm:$0xff]
  %v7337 = vld [vmem:[%s4 + $0x78] sm:$0xff]
  %v7338 = vld [vmem:[%s4 + $0x80] sm:$0xff]
  %v7339 = vld [vmem:[%s4 + $0x88] sm:$0xff]
  %v7340 = vld [vmem:[%s4 + $0x90] sm:$0xff]
  %v7341 = vld [vmem:[%s4 + $0x98] sm:$0xff]
  %v7342 = vld [vmem:[%s4 + $0xa0] sm:$0xff]
  %v7343 = vld [vmem:[%s4 + $0xa8] sm:$0xff]
  %v7344 = vld [vmem:[%s4 + $0xb0] sm:$0xff]
  %v7345 = vld [vmem:[%s4 + $0xb8] sm:$0xff]
  %v7346 = vld [vmem:[%s4 + $0xc0] sm:$0xff]
  %v7347 = vld [vmem:[%s4 + $0xc8] sm:$0xff]
  %v7348 = vld [vmem:[%s4 + $0xd0] sm:$0xff]
  %v7349 = vld [vmem:[%s4 + $0xd8] sm:$0xff]
  %v7350 = vld [vmem:[%s4 + $0xe0] sm:$0xff]
  %v7351 = vld [vmem:[%s4 + $0xe8] sm:$0xff]
  %v7352 = vld [vmem:[%s4 + $0xf0] sm:$0xff]
  %v7353 = vld [vmem:[%s4 + $0xf8] sm:$0xff]
  %v7354 = vld [vmem:[%s4 + $0x100] sm:$0xff]
  %v7355 = vld [vmem:[%s4 + $0x108] sm:$0xff]
  %v7356 = vld [vmem:[%s4 + $0x110] sm:$0xff]
  %v7357 = vld [vmem:[%s4 + $0x118] sm:$0xff]
  %v7358 = vld [vmem:[%s4 + $0x120] sm:$0xff]
  %v7359 = vld [vmem:[%s4 + $0x128] sm:$0xff]
  %v7360 = vld [vmem:[%s4 + $0x130] sm:$0xff]
  %v7361 = vld [vmem:[%s4 + $0x138] sm:$0xff]
  %v7362 = vld [vmem:[%s4 + $0x140] sm:$0xff]
  %v7363 = vld [vmem:[%s4 + $0x148] sm:$0xff]
  %v7364 = vld [vmem:[%s4 + $0x150] sm:$0xff]
  %v7365 = vld [vmem:[%s4 + $0x158] sm:$0xff]
  %v7366 = vld [vmem:[%s4 + $0x160] sm:$0xff]
  %v7367 = vld [vmem:[%s4 + $0x168] sm:$0xff]
  %v7368 = vld [vmem:[%s4 + $0x170] sm:$0xff]
  %v7369 = vld [vmem:[%s4 + $0x178] sm:$0xff]
  %v7370 = vld [vmem:[%s4 + $0x180] sm:$0xff]
  %v7371 = vld [vmem:[%s4 + $0x188] sm:$0xff]
  %v7372 = vld [vmem:[%s4 + $0x190] sm:$0xff]
  %v7373 = vld [vmem:[%s4 + $0x198] sm:$0xff]
  %v7374 = vld [vmem:[%s4 + $0x1a0] sm:$0xff]
  %v7375 = vld [vmem:[%s4 + $0x1a8] sm:$0xff]
  %v7376 = vld [vmem:[%s4 + $0x1b0] sm:$0xff]
  %v7377 = vld [vmem:[%s4 + $0x1b8] sm:$0xff]
  %v7378 = vld [vmem:[%s4 + $0x1c0] sm:$0xff]
  %v7379 = vld [vmem:[%s4 + $0x1c8] sm:$0xff]
  %v7380 = vld [vmem:[%s4 + $0x1d0] sm:$0xff]
  %v7381 = vld [vmem:[%s4 + $0x1d8] sm:$0xff]
  %v7382 = vld [vmem:[%s4 + $0x1e0] sm:$0xff]
  %v7383 = vld [vmem:[%s4 + $0x1e8] sm:$0xff]
  %v7384 = vld [vmem:[%s4 + $0x1f0] sm:$0xff]
  %v7385 = vld [vmem:[%s4 + $0x1f8] sm:$0xff]
  %v7386 = vld [vmem:[%s4 + $0x200] sm:$0xff]
  %v7387 = vld [vmem:[%s4 + $0x208] sm:$0xff]
  %v7388 = vld [vmem:[%s4 + $0x210] sm:$0xff]
  %v7389 = vld [vmem:[%s4 + $0x218] sm:$0xff]
  %v7390 = vld [vmem:[%s4 + $0x220] sm:$0xff]
  %v7391 = vld [vmem:[%s4 + $0x228] sm:$0xff]
  %v7392 = vld [vmem:[%s4 + $0x230] sm:$0xff]
  %v7393 = vld [vmem:[%s4 + $0x238] sm:$0xff]
  %v7394 = vld [vmem:[%s4 + $0x240] sm:$0xff]
  %v7395 = vld [vmem:[%s4 + $0x248] sm:$0xff]
  %v7396 = vld [vmem:[%s4 + $0x250] sm:$0xff]
  %v7397 = vld [vmem:[%s4 + $0x258] sm:$0xff]
  %v7398 = vld [vmem:[%s4 + $0x260] sm:$0xff]
  %v7399 = vld [vmem:[%s4 + $0x268] sm:$0xff]
  %v7400 = vld [vmem:[%s4 + $0x270] sm:$0xff]
  %v7401 = vld [vmem:[%s4 + $0x278] sm:$0xff]
  %v7402 = vld [vmem:[%s4 + $0x280] sm:$0xff]
  %v7403 = vld [vmem:[%s4 + $0x288] sm:$0xff]
  %v7404 = vld [vmem:[%s4 + $0x290] sm:$0xff]
  %v7405 = vld [vmem:[%s4 + $0x298] sm:$0xff]
  %v7406 = vld [vmem:[%s4 + $0x2a0] sm:$0xff]
  %v7407 = vld [vmem:[%s4 + $0x2a8] sm:$0xff]
  %v7408 = vld [vmem:[%s4 + $0x2b0] sm:$0xff]
  %v7409 = vld [vmem:[%s4 + $0x2b8] sm:$0xff]
  %v7410 = vld [vmem:[%s4 + $0x2c0] sm:$0xff]
  %v7411 = vld [vmem:[%s4 + $0x2c8] sm:$0xff]
  %v7412 = vld [vmem:[%s4 + $0x2d0] sm:$0xff]
  %v7413 = vld [vmem:[%s4 + $0x2d8] sm:$0xff]
  %v7414 = vld [vmem:[%s4 + $0x2e0] sm:$0xff]
  %v7415 = vld [vmem:[%s4 + $0x2e8] sm:$0xff]
  %v7416 = vld [vmem:[%s4 + $0x2f0] sm:$0xff]
  %v7417 = vld [vmem:[%s4 + $0x2f8] sm:$0xff]
  %v7418 = vld [vmem:[%s4 + $0x300] sm:$0xff]
  %v7419 = vld [vmem:[%s4 + $0x308] sm:$0xff]
  %v7420 = vld [vmem:[%s4 + $0x310] sm:$0xff]
  %v7421 = vld [vmem:[%s4 + $0x318] sm:$0xff]
  %v7422 = vld [vmem:[%s4 + $0x320] sm:$0xff]
  %v7423 = vld [vmem:[%s4 + $0x328] sm:$0xff]
  %v7424 = vld [vmem:[%s4 + $0x330] sm:$0xff]
  %v7425 = vld [vmem:[%s4 + $0x338] sm:$0xff]
  %v7426 = vld [vmem:[%s4 + $0x340] sm:$0xff]
  %v7427 = vld [vmem:[%s4 + $0x348] sm:$0xff]
  %v7428 = vld [vmem:[%s4 + $0x350] sm:$0xff]
  %v7429 = vld [vmem:[%s4 + $0x358] sm:$0xff]
  %v7430 = vld [vmem:[%s4 + $0x360] sm:$0xff]
  %v7431 = vld [vmem:[%s4 + $0x368] sm:$0xff]
  %v7432 = vld [vmem:[%s4 + $0x370] sm:$0xff]
  %v7433 = vld [vmem:[%s4 + $0x378] sm:$0xff]
  %v7434 = vld [vmem:[%s4 + $0x380] sm:$0xff]
  %v7435 = vld [vmem:[%s4 + $0x388] sm:$0xff]
  %v7436 = vld [vmem:[%s4 + $0x390] sm:$0xff]
  %v7437 = vld [vmem:[%s4 + $0x398] sm:$0xff]
  %v7438 = vld [vmem:[%s4 + $0x3a0] sm:$0xff]
  %v7439 = vld [vmem:[%s4 + $0x3a8] sm:$0xff]
  %v7440 = vld [vmem:[%s4 + $0x3b0] sm:$0xff]
  %v7441 = vld [vmem:[%s4 + $0x3b8] sm:$0xff]
  %v7442 = vld [vmem:[%s4 + $0x3c0] sm:$0xff]
  %v7443 = vld [vmem:[%s4 + $0x3c8] sm:$0xff]
  %v7444 = vld [vmem:[%s4 + $0x3d0] sm:$0xff]
  %v7445 = vld [vmem:[%s4 + $0x3d8] sm:$0xff]
  %v7446 = vld [vmem:[%s4 + $0x3e0] sm:$0xff]
  %v7447 = vld [vmem:[%s4 + $0x3e8] sm:$0xff]
  %v7448 = vld [vmem:[%s4 + $0x3f0] sm:$0xff]
  %v7449 = vld [vmem:[%s4 + $0x3f8] sm:$0xff]
  %v7450 = vld [vmem:[%s4 + $0x400] sm:$0xff]
  %v7451 = vld [vmem:[%s4 + $0x408] sm:$0xff]
  %v7452 = vld [vmem:[%s4 + $0x410] sm:$0xff]
  %v7453 = vld [vmem:[%s4 + $0x418] sm:$0xff]
  %v7454 = vld [vmem:[%s4 + $0x420] sm:$0xff]
  %v7455 = vld [vmem:[%s4 + $0x428] sm:$0xff]
  %v7456 = vld [vmem:[%s4 + $0x430] sm:$0xff]
  %v7457 = vld [vmem:[%s4 + $0x438] sm:$0xff]
  %v7458 = vld [vmem:[%s4 + $0x440] sm:$0xff]
  %v7459 = vld [vmem:[%s4 + $0x448] sm:$0xff]
  %v7460 = vld [vmem:[%s4 + $0x450] sm:$0xff]
  %v7461 = vld [vmem:[%s4 + $0x458] sm:$0xff]
  %v7462 = vld [vmem:[%s4 + $0x460] sm:$0xff]
  %v7463 = vld [vmem:[%s4 + $0x468] sm:$0xff]
  %v7464 = vld [vmem:[%s4 + $0x470] sm:$0xff]
  %v7465 = vld [vmem:[%s4 + $0x478] sm:$0xff]
  %v7466 = vld [vmem:[%s4 + $0x480] sm:$0xff]
  %v7467 = vld [vmem:[%s4 + $0x488] sm:$0xff]
  %v7468 = vld [vmem:[%s4 + $0x490] sm:$0xff]
  %v7469 = vld [vmem:[%s4 + $0x498] sm:$0xff]
  %v7470 = vld [vmem:[%s4 + $0x4a0] sm:$0xff]
  %v7471 = vld [vmem:[%s4 + $0x4a8] sm:$0xff]
  %v7472 = vld [vmem:[%s4 + $0x4b0] sm:$0xff]
  %v7473 = vld [vmem:[%s4 + $0x4b8] sm:$0xff]
  %v7474 = vld [vmem:[%s4 + $0x4c0] sm:$0xff]
  %v7475 = vld [vmem:[%s4 + $0x4c8] sm:$0xff]
  %v7476 = vld [vmem:[%s4 + $0x4d0] sm:$0xff]
  %v7477 = vld [vmem:[%s4 + $0x4d8] sm:$0xff]
  %v7478 = vld [vmem:[%s4 + $0x4e0] sm:$0xff]
  %v7479 = vld [vmem:[%s4 + $0x4e8] sm:$0xff]
  %v7480 = vld [vmem:[%s4 + $0x4f0] sm:$0xff]
  %v7481 = vld [vmem:[%s4 + $0x4f8] sm:$0xff]
  %v7482 = vld [vmem:[%s4 + $0x500] sm:$0xff]
  %v7483 = vld [vmem:[%s4 + $0x508] sm:$0xff]
  %v7484 = vld [vmem:[%s4 + $0x510] sm:$0xff]
  %v7485 = vld [vmem:[%s4 + $0x518] sm:$0xff]
  %v7486 = vld [vmem:[%s4 + $0x520] sm:$0xff]
  %v7487 = vld [vmem:[%s4 + $0x528] sm:$0xff]
  %v7488 = vld [vmem:[%s4 + $0x530] sm:$0xff]
  %v7489 = vld [vmem:[%s4 + $0x538] sm:$0xff]
  %v7490 = vld [vmem:[%s4 + $0x540] sm:$0xff]
  %v7491 = vld [vmem:[%s4 + $0x548] sm:$0xff]
  %v7492 = vld [vmem:[%s4 + $0x550] sm:$0xff]
  %v7493 = vld [vmem:[%s4 + $0x558] sm:$0xff]
  %v7494 = vld [vmem:[%s4 + $0x560] sm:$0xff]
  %v7495 = vld [vmem:[%s4 + $0x568] sm:$0xff]
  %v7496 = vld [vmem:[%s4 + $0x570] sm:$0xff]
  %v7497 = vld [vmem:[%s4 + $0x578] sm:$0xff]
  %v7498 = vld [vmem:[%s4 + $0x580] sm:$0xff]
  %v7499 = vld [vmem:[%s4 + $0x588] sm:$0xff]
  %v7500 = vld [vmem:[%s4 + $0x590] sm:$0xff]
  %v7501 = vld [vmem:[%s4 + $0x598] sm:$0xff]
  %v7502 = vld [vmem:[%s4 + $0x5a0] sm:$0xff]
  %v7503 = vld [vmem:[%s4 + $0x5a8] sm:$0xff]
  %v7504 = vld [vmem:[%s4 + $0x5b0] sm:$0xff]
  %v7505 = vld [vmem:[%s4 + $0x5b8] sm:$0xff]
  %v7506 = vld [vmem:[%s4 + $0x5c0] sm:$0xff]
  %v7507 = vld [vmem:[%s4 + $0x5c8] sm:$0xff]
  %v7508 = vld [vmem:[%s4 + $0x5d0] sm:$0xff]
  %v7509 = vld [vmem:[%s4 + $0x5d8] sm:$0xff]
  %v7510 = vld [vmem:[%s4 + $0x5e0] sm:$0xff]
  %v7511 = vld [vmem:[%s4 + $0x5e8] sm:$0xff]
  %v7512 = vld [vmem:[%s4 + $0x5f0] sm:$0xff]
  %v7513 = vld [vmem:[%s4 + $0x5f8] sm:$0xff]
  %v7514 = vld [vmem:[%s4 + $0x600] sm:$0xff]
  %v7515 = vld [vmem:[%s4 + $0x608] sm:$0xff]
  %v7516 = vld [vmem:[%s4 + $0x610] sm:$0xff]
  %v7517 = vld [vmem:[%s4 + $0x618] sm:$0xff]
  %v7518 = vld [vmem:[%s4 + $0x620] sm:$0xff]
  %v7519 = vld [vmem:[%s4 + $0x628] sm:$0xff]
  %v7520 = vld [vmem:[%s4 + $0x630] sm:$0xff]
  %v7521 = vld [vmem:[%s4 + $0x638] sm:$0xff]
  %v7522 = vld [vmem:[%s4 + $0x640] sm:$0xff]
  %v7523 = vld [vmem:[%s4 + $0x648] sm:$0xff]
  %v7524 = vld [vmem:[%s4 + $0x650] sm:$0xff]
  %v7525 = vld [vmem:[%s4 + $0x658] sm:$0xff]
  %v7526 = vld [vmem:[%s4 + $0x660] sm:$0xff]
  %v7527 = vld [vmem:[%s4 + $0x668] sm:$0xff]
  %v7528 = vld [vmem:[%s4 + $0x670] sm:$0xff]
  %v7529 = vld [vmem:[%s4 + $0x678] sm:$0xff]
  %v7530 = vld [vmem:[%s4 + $0x680] sm:$0xff]
  %v7531 = vld [vmem:[%s4 + $0x688] sm:$0xff]
  %v7532 = vld [vmem:[%s4 + $0x690] sm:$0xff]
  %v7533 = vld [vmem:[%s4 + $0x698] sm:$0xff]
  %v7534 = vld [vmem:[%s4 + $0x6a0] sm:$0xff]
  %v7535 = vld [vmem:[%s4 + $0x6a8] sm:$0xff]
  %v7536 = vld [vmem:[%s4 + $0x6b0] sm:$0xff]
  %v7537 = vld [vmem:[%s4 + $0x6b8] sm:$0xff]
  %v7538 = vld [vmem:[%s4 + $0x6c0] sm:$0xff]
  %v7539 = vld [vmem:[%s4 + $0x6c8] sm:$0xff]
  %v7540 = vld [vmem:[%s4 + $0x6d0] sm:$0xff]
  %v7541 = vld [vmem:[%s4 + $0x6d8] sm:$0xff]
  %v7542 = vld [vmem:[%s4 + $0x6e0] sm:$0xff]
  %v7543 = vld [vmem:[%s4 + $0x6e8] sm:$0xff]
  %v7544 = vld [vmem:[%s4 + $0x6f0] sm:$0xff]
  %v7545 = vld [vmem:[%s4 + $0x6f8] sm:$0xff]
  %v7546 = vld [vmem:[%s4 + $0x700] sm:$0xff]
  %v7547 = vld [vmem:[%s4 + $0x708] sm:$0xff]
  %v7548 = vld [vmem:[%s4 + $0x710] sm:$0xff]
  %v7549 = vld [vmem:[%s4 + $0x718] sm:$0xff]
  %v7550 = vld [vmem:[%s4 + $0x720] sm:$0xff]
  %v7551 = vld [vmem:[%s4 + $0x728] sm:$0xff]
  %v7552 = vld [vmem:[%s4 + $0x730] sm:$0xff]
  %v7553 = vld [vmem:[%s4 + $0x738] sm:$0xff]
  %v7554 = vld [vmem:[%s4 + $0x740] sm:$0xff]
  %v7555 = vld [vmem:[%s4 + $0x748] sm:$0xff]
  %v7556 = vld [vmem:[%s4 + $0x750] sm:$0xff]
  %v7557 = vld [vmem:[%s4 + $0x758] sm:$0xff]
  %v7558 = vld [vmem:[%s4 + $0x760] sm:$0xff]
  %v7559 = vld [vmem:[%s4 + $0x768] sm:$0xff]
  %v7560 = vld [vmem:[%s4 + $0x770] sm:$0xff]
  %v7561 = vld [vmem:[%s4 + $0x778] sm:$0xff]
  %v7562 = vld [vmem:[%s4 + $0x780] sm:$0xff]
  %v7563 = vld [vmem:[%s4 + $0x788] sm:$0xff]
  %v7564 = vld [vmem:[%s4 + $0x790] sm:$0xff]
  %v7565 = vld [vmem:[%s4 + $0x798] sm:$0xff]
  %v7566 = vld [vmem:[%s4 + $0x7a0] sm:$0xff]
  %v7567 = vld [vmem:[%s4 + $0x7a8] sm:$0xff]
  %v7568 = vld [vmem:[%s4 + $0x7b0] sm:$0xff]
  %v7569 = vld [vmem:[%s4 + $0x7b8] sm:$0xff]
  %v7570 = vld [vmem:[%s4 + $0x7c0] sm:$0xff]
  %v7571 = vld [vmem:[%s4 + $0x7c8] sm:$0xff]
  %v7572 = vld [vmem:[%s4 + $0x7d0] sm:$0xff]
  %v7573 = vld [vmem:[%s4 + $0x7d8] sm:$0xff]
  %v7574 = vld [vmem:[%s4 + $0x7e0] sm:$0xff]
  %v7575 = vld [vmem:[%s4 + $0x7e8] sm:$0xff]
  %v7576 = vld [vmem:[%s4 + $0x7f0] sm:$0xff]
  %v7577 = vld [vmem:[%s4 + $0x7f8] sm:$0xff]
  %v7578 = vld [vmem:[%s4 + $0x800] sm:$0xff]
  %v7579 = vld [vmem:[%s4 + $0x808] sm:$0xff]
  %v7580 = vld [vmem:[%s4 + $0x810] sm:$0xff]
  %v7581 = vld [vmem:[%s4 + $0x818] sm:$0xff]
  %v7582 = vld [vmem:[%s4 + $0x820] sm:$0xff]
  %v7583 = vld [vmem:[%s4 + $0x828] sm:$0xff]
  %v7584 = vld [vmem:[%s4 + $0x830] sm:$0xff]
  %v7585 = vld [vmem:[%s4 + $0x838] sm:$0xff]
  %v7586 = vld [vmem:[%s4 + $0x840] sm:$0xff]
  %v7587 = vld [vmem:[%s4 + $0x848] sm:$0xff]
  %v7588 = vld [vmem:[%s4 + $0x850] sm:$0xff]
  %v7589 = vld [vmem:[%s4 + $0x858] sm:$0xff]
  %v7590 = vld [vmem:[%s4 + $0x860] sm:$0xff]
  %v7591 = vld [vmem:[%s4 + $0x868] sm:$0xff]
  %v7592 = vld [vmem:[%s4 + $0x870] sm:$0xff]
  %v7593 = vld [vmem:[%s4 + $0x878] sm:$0xff]
  %v7594 = vld [vmem:[%s4 + $0x880] sm:$0xff]
  %v7595 = vld [vmem:[%s4 + $0x888] sm:$0xff]
  %v7596 = vld [vmem:[%s4 + $0x890] sm:$0xff]
  %v7597 = vld [vmem:[%s4 + $0x898] sm:$0xff]
  %v7598 = vld [vmem:[%s4 + $0x8a0] sm:$0xff]
  %v7599 = vld [vmem:[%s4 + $0x8a8] sm:$0xff]
  %v7600 = vld [vmem:[%s4 + $0x8b0] sm:$0xff]
  %v7601 = vld [vmem:[%s4 + $0x8b8] sm:$0xff]
  %v7602 = vld [vmem:[%s4 + $0x8c0] sm:$0xff]
  %v7603 = vld [vmem:[%s4 + $0x8c8] sm:$0xff]
  %v7604 = vld [vmem:[%s4 + $0x8d0] sm:$0xff]
  %v7605 = vld [vmem:[%s4 + $0x8d8] sm:$0xff]
  %v7606 = vld [vmem:[%s4 + $0x8e0] sm:$0xff]
  %v7607 = vld [vmem:[%s4 + $0x8e8] sm:$0xff]
  %v7608 = vld [vmem:[%s4 + $0x8f0] sm:$0xff]
  %v7609 = vld [vmem:[%s4 + $0x8f8] sm:$0xff]
  %v7610 = vld [vmem:[%s4 + $0x900] sm:$0xff]
  %v7611 = vld [vmem:[%s4 + $0x908] sm:$0xff]
  %v7612 = vld [vmem:[%s4 + $0x910] sm:$0xff]
  %v7613 = vld [vmem:[%s4 + $0x918] sm:$0xff]
  %v7614 = vld [vmem:[%s4 + $0x920] sm:$0xff]
  %v7615 = vld [vmem:[%s4 + $0x928] sm:$0xff]
  %v7616 = vld [vmem:[%s4 + $0x930] sm:$0xff]
  %v7617 = vld [vmem:[%s4 + $0x938] sm:$0xff]
  %v7618 = vld [vmem:[%s4 + $0x940] sm:$0xff]
  %v7619 = vld [vmem:[%s4 + $0x948] sm:$0xff]
  %v7620 = vld [vmem:[%s4 + $0x950] sm:$0xff]
  %v7621 = vld [vmem:[%s4 + $0x958] sm:$0xff]
  %v7622 = vld [vmem:[%s4 + $0x960] sm:$0xff]
  %v7623 = vld [vmem:[%s4 + $0x968] sm:$0xff]
  %v7624 = vld [vmem:[%s4 + $0x970] sm:$0xff]
  %v7625 = vld [vmem:[%s4 + $0x978] sm:$0xff]
  %v7626 = vld [vmem:[%s4 + $0x980] sm:$0xff]
  %v7627 = vld [vmem:[%s4 + $0x988] sm:$0xff]
  %v7628 = vld [vmem:[%s4 + $0x990] sm:$0xff]
  %v7629 = vld [vmem:[%s4 + $0x998] sm:$0xff]
  %v7630 = vld [vmem:[%s4 + $0x9a0] sm:$0xff]
  %v7631 = vld [vmem:[%s4 + $0x9a8] sm:$0xff]
  %v7632 = vld [vmem:[%s4 + $0x9b0] sm:$0xff]
  %v7633 = vld [vmem:[%s4 + $0x9b8] sm:$0xff]
  %v7634 = vld [vmem:[%s4 + $0x9c0] sm:$0xff]
  %v7635 = vld [vmem:[%s4 + $0x9c8] sm:$0xff]
  %v7636 = vld [vmem:[%s4 + $0x9d0] sm:$0xff]
  %v7637 = vld [vmem:[%s4 + $0x9d8] sm:$0xff]
  %v7638 = vld [vmem:[%s4 + $0x9e0] sm:$0xff]
  %v7639 = vld [vmem:[%s4 + $0x9e8] sm:$0xff]
  %v7640 = vld [vmem:[%s4 + $0x9f0] sm:$0xff]
  %v7641 = vld [vmem:[%s4 + $0x9f8] sm:$0xff]
  %v7642 = vld [vmem:[%s5] sm:$0x1]
  %v7644 = vperm.slane %v7642, 0
  %7646 = vmatpush.msra.mxu0 %v7337
  %7647 = vmatpush.msra.mxu0 %v7336
  %7648 = vmatpush.msra.mxu0 %v7335
  %7649 = vmatpush.msra.mxu0 %v7334
  %7650 = vmatpush.msra.mxu0 %v7333
  %7651 = vmatpush.msra.mxu0 %v7332
  %7652 = vmatpush.msra.mxu0 %v7331
  %7653 = vmatpush.msra.mxu0 %v7330
  %7654 = vmatpush.msra.mxu0 %v7329
  %7655 = vmatpush.msra.mxu0 %v7328
  %7656 = vmatpush.msra.mxu0 %v7327
  %7657 = vmatpush.msra.mxu0 %v7326
  %7658 = vmatpush.msra.mxu0 %v7325
  %7659 = vmatpush.msra.mxu0 %v7324
  %7660 = vmatpush.msra.mxu0 %v7323
  %7661 = vmatpush.msra.mxu0 %v7322
  %7662 = vmatmul.f32.gmra.mxu0 %v7242
  %v7663 = vpop.f32.mrf.mxu0
  %v7664 = vadd.f32 %v7644, %v7663
  %7665 = vmatmul.f32.gmra.mxu0 %v7262
  %v7666 = vpop.f32.mrf.mxu0
  %v7667 = vadd.f32 %v7644, %v7666
  %7668 = vmatmul.f32.gmra.mxu0 %v7282
  %v7669 = vpop.f32.mrf.mxu0
  %v7670 = vadd.f32 %v7644, %v7669
  %7671 = vmatmul.f32.gmra.mxu0 %v7302
  %v7672 = vpop.f32.mrf.mxu0
  %v7673 = vadd.f32 %v7644, %v7672
  %7674 = vdwg.mxu0
  %7675 = vmatpush.msra.mxu0 %v7353
  %7676 = vmatpush.msra.mxu0 %v7352
  %7677 = vmatpush.msra.mxu0 %v7351
  %7678 = vmatpush.msra.mxu0 %v7350
  %7679 = vmatpush.msra.mxu0 %v7349
  %7680 = vmatpush.msra.mxu0 %v7348
  %7681 = vmatpush.msra.mxu0 %v7347
  %7682 = vmatpush.msra.mxu0 %v7346
  %7683 = vmatpush.msra.mxu0 %v7345
  %7684 = vmatpush.msra.mxu0 %v7344
  %7685 = vmatpush.msra.mxu0 %v7343
  %7686 = vmatpush.msra.mxu0 %v7342
  %7687 = vmatpush.msra.mxu0 %v7341
  %7688 = vmatpush.msra.mxu0 %v7340
  %7689 = vmatpush.msra.mxu0 %v7339
  %7690 = vmatpush.msra.mxu0 %v7338
  %7691 = vmatmul.f32.gmra.mxu0 %v7243
  %v7692 = vpop.f32.mrf.mxu0
  %v7693 = vadd.f32 %v7664, %v7692
  %7694 = vmatmul.f32.gmra.mxu0 %v7263
  %v7695 = vpop.f32.mrf.mxu0
  %v7696 = vadd.f32 %v7667, %v7695
  %7697 = vmatmul.f32.gmra.mxu0 %v7283
  %v7698 = vpop.f32.mrf.mxu0
  %v7699 = vadd.f32 %v7670, %v7698
  %7700 = vmatmul.f32.gmra.mxu0 %v7303
  %v7701 = vpop.f32.mrf.mxu0
  %v7702 = vadd.f32 %v7673, %v7701
  %7703 = vdwg.mxu0
  %7704 = vmatpush.msra.mxu0 %v7369
  %7705 = vmatpush.msra.mxu0 %v7368
  %7706 = vmatpush.msra.mxu0 %v7367
  %7707 = vmatpush.msra.mxu0 %v7366
  %7708 = vmatpush.msra.mxu0 %v7365
  %7709 = vmatpush.msra.mxu0 %v7364
  %7710 = vmatpush.msra.mxu0 %v7363
  %7711 = vmatpush.msra.mxu0 %v7362
  %7712 = vmatpush.msra.mxu0 %v7361
  %7713 = vmatpush.msra.mxu0 %v7360
  %7714 = vmatpush.msra.mxu0 %v7359
  %7715 = vmatpush.msra.mxu0 %v7358
  %7716 = vmatpush.msra.mxu0 %v7357
  %7717 = vmatpush.msra.mxu0 %v7356
  %7718 = vmatpush.msra.mxu0 %v7355
  %7719 = vmatpush.msra.mxu0 %v7354
  %7720 = vmatmul.f32.gmra.mxu0 %v7244
  %v7721 = vpop.f32.mrf.mxu0
  %v7722 = vadd.f32 %v7693, %v7721
  %7723 = vmatmul.f32.gmra.mxu0 %v7264
  %v7724 = vpop.f32.mrf.mxu0
  %v7725 = vadd.f32 %v7696, %v7724
  %7726 = vmatmul.f32.gmra.mxu0 %v7284
  %v7727 = vpop.f32.mrf.mxu0
  %v7728 = vadd.f32 %v7699, %v7727
  %7729 = vmatmul.f32.gmra.mxu0 %v7304
  %v7730 = vpop.f32.mrf.mxu0
  %v7731 = vadd.f32 %v7702, %v7730
  %7732 = vdwg.mxu0
  %7733 = vmatpush.msra.mxu0 %v7385
  %7734 = vmatpush.msra.mxu0 %v7384
  %7735 = vmatpush.msra.mxu0 %v7383
  %7736 = vmatpush.msra.mxu0 %v7382
  %7737 = vmatpush.msra.mxu0 %v7381
  %7738 = vmatpush.msra.mxu0 %v7380
  %7739 = vmatpush.msra.mxu0 %v7379
  %7740 = vmatpush.msra.mxu0 %v7378
  %7741 = vmatpush.msra.mxu0 %v7377
  %7742 = vmatpush.msra.mxu0 %v7376
  %7743 = vmatpush.msra.mxu0 %v7375
  %7744 = vmatpush.msra.mxu0 %v7374
  %7745 = vmatpush.msra.mxu0 %v7373
  %7746 = vmatpush.msra.mxu0 %v7372
  %7747 = vmatpush.msra.mxu0 %v7371
  %7748 = vmatpush.msra.mxu0 %v7370
  %7749 = vmatmul.f32.gmra.mxu0 %v7245
  %v7750 = vpop.f32.mrf.mxu0
  %v7751 = vadd.f32 %v7722, %v7750
  %7752 = vmatmul.f32.gmra.mxu0 %v7265
  %v7753 = vpop.f32.mrf.mxu0
  %v7754 = vadd.f32 %v7725, %v7753
  %7755 = vmatmul.f32.gmra.mxu0 %v7285
  %v7756 = vpop.f32.mrf.mxu0
  %v7757 = vadd.f32 %v7728, %v7756
  %7758 = vmatmul.f32.gmra.mxu0 %v7305
  %v7759 = vpop.f32.mrf.mxu0
  %v7760 = vadd.f32 %v7731, %v7759
  %7761 = vdwg.mxu0
  %7762 = vmatpush.msra.mxu0 %v7401
  %7763 = vmatpush.msra.mxu0 %v7400
  %7764 = vmatpush.msra.mxu0 %v7399
  %7765 = vmatpush.msra.mxu0 %v7398
  %7766 = vmatpush.msra.mxu0 %v7397
  %7767 = vmatpush.msra.mxu0 %v7396
  %7768 = vmatpush.msra.mxu0 %v7395
  %7769 = vmatpush.msra.mxu0 %v7394
  %7770 = vmatpush.msra.mxu0 %v7393
  %7771 = vmatpush.msra.mxu0 %v7392
  %7772 = vmatpush.msra.mxu0 %v7391
  %7773 = vmatpush.msra.mxu0 %v7390
  %7774 = vmatpush.msra.mxu0 %v7389
  %7775 = vmatpush.msra.mxu0 %v7388
  %7776 = vmatpush.msra.mxu0 %v7387
  %7777 = vmatpush.msra.mxu0 %v7386
  %7778 = vmatmul.f32.gmra.mxu0 %v7246
  %v7779 = vpop.f32.mrf.mxu0
  %v7780 = vadd.f32 %v7751, %v7779
  %7781 = vmatmul.f32.gmra.mxu0 %v7266
  %v7782 = vpop.f32.mrf.mxu0
  %v7783 = vadd.f32 %v7754, %v7782
  %7784 = vmatmul.f32.gmra.mxu0 %v7286
  %v7785 = vpop.f32.mrf.mxu0
  %v7786 = vadd.f32 %v7757, %v7785
  %7787 = vmatmul.f32.gmra.mxu0 %v7306
  %v7788 = vpop.f32.mrf.mxu0
  %v7789 = vadd.f32 %v7760, %v7788
  %7790 = vdwg.mxu0
  %7791 = vmatpush.msra.mxu0 %v7417
  %7792 = vmatpush.msra.mxu0 %v7416
  %7793 = vmatpush.msra.mxu0 %v7415
  %7794 = vmatpush.msra.mxu0 %v7414
  %7795 = vmatpush.msra.mxu0 %v7413
  %7796 = vmatpush.msra.mxu0 %v7412
  %7797 = vmatpush.msra.mxu0 %v7411
  %7798 = vmatpush.msra.mxu0 %v7410
  %7799 = vmatpush.msra.mxu0 %v7409
  %7800 = vmatpush.msra.mxu0 %v7408
  %7801 = vmatpush.msra.mxu0 %v7407
  %7802 = vmatpush.msra.mxu0 %v7406
  %7803 = vmatpush.msra.mxu0 %v7405
  %7804 = vmatpush.msra.mxu0 %v7404
  %7805 = vmatpush.msra.mxu0 %v7403
  %7806 = vmatpush.msra.mxu0 %v7402
  %7807 = vmatmul.f32.gmra.mxu0 %v7247
  %v7808 = vpop.f32.mrf.mxu0
  %v7809 = vadd.f32 %v7780, %v7808
  %7810 = vmatmul.f32.gmra.mxu0 %v7267
  %v7811 = vpop.f32.mrf.mxu0
  %v7812 = vadd.f32 %v7783, %v7811
  %7813 = vmatmul.f32.gmra.mxu0 %v7287
  %v7814 = vpop.f32.mrf.mxu0
  %v7815 = vadd.f32 %v7786, %v7814
  %7816 = vmatmul.f32.gmra.mxu0 %v7307
  %v7817 = vpop.f32.mrf.mxu0
  %v7818 = vadd.f32 %v7789, %v7817
  %7819 = vdwg.mxu0
  %7820 = vmatpush.msra.mxu0 %v7433
  %7821 = vmatpush.msra.mxu0 %v7432
  %7822 = vmatpush.msra.mxu0 %v7431
  %7823 = vmatpush.msra.mxu0 %v7430
  %7824 = vmatpush.msra.mxu0 %v7429
  %7825 = vmatpush.msra.mxu0 %v7428
  %7826 = vmatpush.msra.mxu0 %v7427
  %7827 = vmatpush.msra.mxu0 %v7426
  %7828 = vmatpush.msra.mxu0 %v7425
  %7829 = vmatpush.msra.mxu0 %v7424
  %7830 = vmatpush.msra.mxu0 %v7423
  %7831 = vmatpush.msra.mxu0 %v7422
  %7832 = vmatpush.msra.mxu0 %v7421
  %7833 = vmatpush.msra.mxu0 %v7420
  %7834 = vmatpush.msra.mxu0 %v7419
  %7835 = vmatpush.msra.mxu0 %v7418
  %7836 = vmatmul.f32.gmra.mxu0 %v7248
  %v7837 = vpop.f32.mrf.mxu0
  %v7838 = vadd.f32 %v7809, %v7837
  %7839 = vmatmul.f32.gmra.mxu0 %v7268
  %v7840 = vpop.f32.mrf.mxu0
  %v7841 = vadd.f32 %v7812, %v7840
  %7842 = vmatmul.f32.gmra.mxu0 %v7288
  %v7843 = vpop.f32.mrf.mxu0
  %v7844 = vadd.f32 %v7815, %v7843
  %7845 = vmatmul.f32.gmra.mxu0 %v7308
  %v7846 = vpop.f32.mrf.mxu0
  %v7847 = vadd.f32 %v7818, %v7846
  %7848 = vdwg.mxu0
  %7849 = vmatpush.msra.mxu0 %v7449
  %7850 = vmatpush.msra.mxu0 %v7448
  %7851 = vmatpush.msra.mxu0 %v7447
  %7852 = vmatpush.msra.mxu0 %v7446
  %7853 = vmatpush.msra.mxu0 %v7445
  %7854 = vmatpush.msra.mxu0 %v7444
  %7855 = vmatpush.msra.mxu0 %v7443
  %7856 = vmatpush.msra.mxu0 %v7442
  %7857 = vmatpush.msra.mxu0 %v7441
  %7858 = vmatpush.msra.mxu0 %v7440
  %7859 = vmatpush.msra.mxu0 %v7439
  %7860 = vmatpush.msra.mxu0 %v7438
  %7861 = vmatpush.msra.mxu0 %v7437
  %7862 = vmatpush.msra.mxu0 %v7436
  %7863 = vmatpush.msra.mxu0 %v7435
  %7864 = vmatpush.msra.mxu0 %v7434
  %7865 = vmatmul.f32.gmra.mxu0 %v7249
  %v7866 = vpop.f32.mrf.mxu0
  %v7867 = vadd.f32 %v7838, %v7866
  %7868 = vmatmul.f32.gmra.mxu0 %v7269
  %v7869 = vpop.f32.mrf.mxu0
  %v7870 = vadd.f32 %v7841, %v7869
  %7871 = vmatmul.f32.gmra.mxu0 %v7289
  %v7872 = vpop.f32.mrf.mxu0
  %v7873 = vadd.f32 %v7844, %v7872
  %7874 = vmatmul.f32.gmra.mxu0 %v7309
  %v7875 = vpop.f32.mrf.mxu0
  %v7876 = vadd.f32 %v7847, %v7875
  %7877 = vdwg.mxu0
  %7878 = vmatpush.msra.mxu0 %v7465
  %7879 = vmatpush.msra.mxu0 %v7464
  %7880 = vmatpush.msra.mxu0 %v7463
  %7881 = vmatpush.msra.mxu0 %v7462
  %7882 = vmatpush.msra.mxu0 %v7461
  %7883 = vmatpush.msra.mxu0 %v7460
  %7884 = vmatpush.msra.mxu0 %v7459
  %7885 = vmatpush.msra.mxu0 %v7458
  %7886 = vmatpush.msra.mxu0 %v7457
  %7887 = vmatpush.msra.mxu0 %v7456
  %7888 = vmatpush.msra.mxu0 %v7455
  %7889 = vmatpush.msra.mxu0 %v7454
  %7890 = vmatpush.msra.mxu0 %v7453
  %7891 = vmatpush.msra.mxu0 %v7452
  %7892 = vmatpush.msra.mxu0 %v7451
  %7893 = vmatpush.msra.mxu0 %v7450
  %7894 = vmatmul.f32.gmra.mxu0 %v7250
  %v7895 = vpop.f32.mrf.mxu0
  %v7896 = vadd.f32 %v7867, %v7895
  %7897 = vmatmul.f32.gmra.mxu0 %v7270
  %v7898 = vpop.f32.mrf.mxu0
  %v7899 = vadd.f32 %v7870, %v7898
  %7900 = vmatmul.f32.gmra.mxu0 %v7290
  %v7901 = vpop.f32.mrf.mxu0
  %v7902 = vadd.f32 %v7873, %v7901
  %7903 = vmatmul.f32.gmra.mxu0 %v7310
  %v7904 = vpop.f32.mrf.mxu0
  %v7905 = vadd.f32 %v7876, %v7904
  %7906 = vdwg.mxu0
  %7907 = vmatpush.msra.mxu0 %v7481
  %7908 = vmatpush.msra.mxu0 %v7480
  %7909 = vmatpush.msra.mxu0 %v7479
  %7910 = vmatpush.msra.mxu0 %v7478
  %7911 = vmatpush.msra.mxu0 %v7477
  %7912 = vmatpush.msra.mxu0 %v7476
  %7913 = vmatpush.msra.mxu0 %v7475
  %7914 = vmatpush.msra.mxu0 %v7474
  %7915 = vmatpush.msra.mxu0 %v7473
  %7916 = vmatpush.msra.mxu0 %v7472
  %7917 = vmatpush.msra.mxu0 %v7471
  %7918 = vmatpush.msra.mxu0 %v7470
  %7919 = vmatpush.msra.mxu0 %v7469
  %7920 = vmatpush.msra.mxu0 %v7468
  %7921 = vmatpush.msra.mxu0 %v7467
  %7922 = vmatpush.msra.mxu0 %v7466
  %7923 = vmatmul.f32.gmra.mxu0 %v7251
  %v7924 = vpop.f32.mrf.mxu0
  %v7925 = vadd.f32 %v7896, %v7924
  %7926 = vmatmul.f32.gmra.mxu0 %v7271
  %v7927 = vpop.f32.mrf.mxu0
  %v7928 = vadd.f32 %v7899, %v7927
  %7929 = vmatmul.f32.gmra.mxu0 %v7291
  %v7930 = vpop.f32.mrf.mxu0
  %v7931 = vadd.f32 %v7902, %v7930
  %7932 = vmatmul.f32.gmra.mxu0 %v7311
  %v7933 = vpop.f32.mrf.mxu0
  %v7934 = vadd.f32 %v7905, %v7933
  %7935 = vdwg.mxu0
  %7936 = vmatpush.msra.mxu0 %v7497
  %7937 = vmatpush.msra.mxu0 %v7496
  %7938 = vmatpush.msra.mxu0 %v7495
  %7939 = vmatpush.msra.mxu0 %v7494
  %7940 = vmatpush.msra.mxu0 %v7493
  %7941 = vmatpush.msra.mxu0 %v7492
  %7942 = vmatpush.msra.mxu0 %v7491
  %7943 = vmatpush.msra.mxu0 %v7490
  %7944 = vmatpush.msra.mxu0 %v7489
  %7945 = vmatpush.msra.mxu0 %v7488
  %7946 = vmatpush.msra.mxu0 %v7487
  %7947 = vmatpush.msra.mxu0 %v7486
  %7948 = vmatpush.msra.mxu0 %v7485
  %7949 = vmatpush.msra.mxu0 %v7484
  %7950 = vmatpush.msra.mxu0 %v7483
  %7951 = vmatpush.msra.mxu0 %v7482
  %7952 = vmatmul.f32.gmra.mxu0 %v7252
  %v7953 = vpop.f32.mrf.mxu0
  %v7954 = vadd.f32 %v7925, %v7953
  %7955 = vmatmul.f32.gmra.mxu0 %v7272
  %v7956 = vpop.f32.mrf.mxu0
  %v7957 = vadd.f32 %v7928, %v7956
  %7958 = vmatmul.f32.gmra.mxu0 %v7292
  %v7959 = vpop.f32.mrf.mxu0
  %v7960 = vadd.f32 %v7931, %v7959
  %7961 = vmatmul.f32.gmra.mxu0 %v7312
  %v7962 = vpop.f32.mrf.mxu0
  %v7963 = vadd.f32 %v7934, %v7962
  %7964 = vdwg.mxu0
  %7965 = vmatpush.msra.mxu0 %v7513
  %7966 = vmatpush.msra.mxu0 %v7512
  %7967 = vmatpush.msra.mxu0 %v7511
  %7968 = vmatpush.msra.mxu0 %v7510
  %7969 = vmatpush.msra.mxu0 %v7509
  %7970 = vmatpush.msra.mxu0 %v7508
  %7971 = vmatpush.msra.mxu0 %v7507
  %7972 = vmatpush.msra.mxu0 %v7506
  %7973 = vmatpush.msra.mxu0 %v7505
  %7974 = vmatpush.msra.mxu0 %v7504
  %7975 = vmatpush.msra.mxu0 %v7503
  %7976 = vmatpush.msra.mxu0 %v7502
  %7977 = vmatpush.msra.mxu0 %v7501
  %7978 = vmatpush.msra.mxu0 %v7500
  %7979 = vmatpush.msra.mxu0 %v7499
  %7980 = vmatpush.msra.mxu0 %v7498
  %7981 = vmatmul.f32.gmra.mxu0 %v7253
  %v7982 = vpop.f32.mrf.mxu0
  %v7983 = vadd.f32 %v7954, %v7982
  %7984 = vmatmul.f32.gmra.mxu0 %v7273
  %v7985 = vpop.f32.mrf.mxu0
  %v7986 = vadd.f32 %v7957, %v7985
  %7987 = vmatmul.f32.gmra.mxu0 %v7293
  %v7988 = vpop.f32.mrf.mxu0
  %v7989 = vadd.f32 %v7960, %v7988
  %7990 = vmatmul.f32.gmra.mxu0 %v7313
  %v7991 = vpop.f32.mrf.mxu0
  %v7992 = vadd.f32 %v7963, %v7991
  %7993 = vdwg.mxu0
  %7994 = vmatpush.msra.mxu0 %v7529
  %7995 = vmatpush.msra.mxu0 %v7528
  %7996 = vmatpush.msra.mxu0 %v7527
  %7997 = vmatpush.msra.mxu0 %v7526
  %7998 = vmatpush.msra.mxu0 %v7525
  %7999 = vmatpush.msra.mxu0 %v7524
  %8000 = vmatpush.msra.mxu0 %v7523
  %8001 = vmatpush.msra.mxu0 %v7522
  %8002 = vmatpush.msra.mxu0 %v7521
  %8003 = vmatpush.msra.mxu0 %v7520
  %8004 = vmatpush.msra.mxu0 %v7519
  %8005 = vmatpush.msra.mxu0 %v7518
  %8006 = vmatpush.msra.mxu0 %v7517
  %8007 = vmatpush.msra.mxu0 %v7516
  %8008 = vmatpush.msra.mxu0 %v7515
  %8009 = vmatpush.msra.mxu0 %v7514
  %8010 = vmatmul.f32.gmra.mxu0 %v7254
  %v8011 = vpop.f32.mrf.mxu0
  %v8012 = vadd.f32 %v7983, %v8011
  %8013 = vmatmul.f32.gmra.mxu0 %v7274
  %v8014 = vpop.f32.mrf.mxu0
  %v8015 = vadd.f32 %v7986, %v8014
  %8016 = vmatmul.f32.gmra.mxu0 %v7294
  %v8017 = vpop.f32.mrf.mxu0
  %v8018 = vadd.f32 %v7989, %v8017
  %8019 = vmatmul.f32.gmra.mxu0 %v7314
  %v8020 = vpop.f32.mrf.mxu0
  %v8021 = vadd.f32 %v7992, %v8020
  %8022 = vdwg.mxu0
  %8023 = vmatpush.msra.mxu0 %v7545
  %8024 = vmatpush.msra.mxu0 %v7544
  %8025 = vmatpush.msra.mxu0 %v7543
  %8026 = vmatpush.msra.mxu0 %v7542
  %8027 = vmatpush.msra.mxu0 %v7541
  %8028 = vmatpush.msra.mxu0 %v7540
  %8029 = vmatpush.msra.mxu0 %v7539
  %8030 = vmatpush.msra.mxu0 %v7538
  %8031 = vmatpush.msra.mxu0 %v7537
  %8032 = vmatpush.msra.mxu0 %v7536
  %8033 = vmatpush.msra.mxu0 %v7535
  %8034 = vmatpush.msra.mxu0 %v7534
  %8035 = vmatpush.msra.mxu0 %v7533
  %8036 = vmatpush.msra.mxu0 %v7532
  %8037 = vmatpush.msra.mxu0 %v7531
  %8038 = vmatpush.msra.mxu0 %v7530
  %8039 = vmatmul.f32.gmra.mxu0 %v7255
  %v8040 = vpop.f32.mrf.mxu0
  %v8041 = vadd.f32 %v8012, %v8040
  %8042 = vmatmul.f32.gmra.mxu0 %v7275
  %v8043 = vpop.f32.mrf.mxu0
  %v8044 = vadd.f32 %v8015, %v8043
  %8045 = vmatmul.f32.gmra.mxu0 %v7295
  %v8046 = vpop.f32.mrf.mxu0
  %v8047 = vadd.f32 %v8018, %v8046
  %8048 = vmatmul.f32.gmra.mxu0 %v7315
  %v8049 = vpop.f32.mrf.mxu0
  %v8050 = vadd.f32 %v8021, %v8049
  %8051 = vdwg.mxu0
  %8052 = vmatpush.msra.mxu0 %v7561
  %8053 = vmatpush.msra.mxu0 %v7560
  %8054 = vmatpush.msra.mxu0 %v7559
  %8055 = vmatpush.msra.mxu0 %v7558
  %8056 = vmatpush.msra.mxu0 %v7557
  %8057 = vmatpush.msra.mxu0 %v7556
  %8058 = vmatpush.msra.mxu0 %v7555
  %8059 = vmatpush.msra.mxu0 %v7554
  %8060 = vmatpush.msra.mxu0 %v7553
  %8061 = vmatpush.msra.mxu0 %v7552
  %8062 = vmatpush.msra.mxu0 %v7551
  %8063 = vmatpush.msra.mxu0 %v7550
  %8064 = vmatpush.msra.mxu0 %v7549
  %8065 = vmatpush.msra.mxu0 %v7548
  %8066 = vmatpush.msra.mxu0 %v7547
  %8067 = vmatpush.msra.mxu0 %v7546
  %8068 = vmatmul.f32.gmra.mxu0 %v7256
  %v8069 = vpop.f32.mrf.mxu0
  %v8070 = vadd.f32 %v8041, %v8069
  %8071 = vmatmul.f32.gmra.mxu0 %v7276
  %v8072 = vpop.f32.mrf.mxu0
  %v8073 = vadd.f32 %v8044, %v8072
  %8074 = vmatmul.f32.gmra.mxu0 %v7296
  %v8075 = vpop.f32.mrf.mxu0
  %v8076 = vadd.f32 %v8047, %v8075
  %8077 = vmatmul.f32.gmra.mxu0 %v7316
  %v8078 = vpop.f32.mrf.mxu0
  %v8079 = vadd.f32 %v8050, %v8078
  %8080 = vdwg.mxu0
  %8081 = vmatpush.msra.mxu0 %v7577
  %8082 = vmatpush.msra.mxu0 %v7576
  %8083 = vmatpush.msra.mxu0 %v7575
  %8084 = vmatpush.msra.mxu0 %v7574
  %8085 = vmatpush.msra.mxu0 %v7573
  %8086 = vmatpush.msra.mxu0 %v7572
  %8087 = vmatpush.msra.mxu0 %v7571
  %8088 = vmatpush.msra.mxu0 %v7570
  %8089 = vmatpush.msra.mxu0 %v7569
  %8090 = vmatpush.msra.mxu0 %v7568
  %8091 = vmatpush.msra.mxu0 %v7567
  %8092 = vmatpush.msra.mxu0 %v7566
  %8093 = vmatpush.msra.mxu0 %v7565
  %8094 = vmatpush.msra.mxu0 %v7564
  %8095 = vmatpush.msra.mxu0 %v7563
  %8096 = vmatpush.msra.mxu0 %v7562
  %8097 = vmatmul.f32.gmra.mxu0 %v7257
  %v8098 = vpop.f32.mrf.mxu0
  %v8099 = vadd.f32 %v8070, %v8098
  %8100 = vmatmul.f32.gmra.mxu0 %v7277
  %v8101 = vpop.f32.mrf.mxu0
  %v8102 = vadd.f32 %v8073, %v8101
  %8103 = vmatmul.f32.gmra.mxu0 %v7297
  %v8104 = vpop.f32.mrf.mxu0
  %v8105 = vadd.f32 %v8076, %v8104
  %8106 = vmatmul.f32.gmra.mxu0 %v7317
  %v8107 = vpop.f32.mrf.mxu0
  %v8108 = vadd.f32 %v8079, %v8107
  %8109 = vdwg.mxu0
  %8110 = vmatpush.msra.mxu0 %v7593
  %8111 = vmatpush.msra.mxu0 %v7592
  %8112 = vmatpush.msra.mxu0 %v7591
  %8113 = vmatpush.msra.mxu0 %v7590
  %8114 = vmatpush.msra.mxu0 %v7589
  %8115 = vmatpush.msra.mxu0 %v7588
  %8116 = vmatpush.msra.mxu0 %v7587
  %8117 = vmatpush.msra.mxu0 %v7586
  %8118 = vmatpush.msra.mxu0 %v7585
  %8119 = vmatpush.msra.mxu0 %v7584
  %8120 = vmatpush.msra.mxu0 %v7583
  %8121 = vmatpush.msra.mxu0 %v7582
  %8122 = vmatpush.msra.mxu0 %v7581
  %8123 = vmatpush.msra.mxu0 %v7580
  %8124 = vmatpush.msra.mxu0 %v7579
  %8125 = vmatpush.msra.mxu0 %v7578
  %8126 = vmatmul.f32.gmra.mxu0 %v7258
  %v8127 = vpop.f32.mrf.mxu0
  %v8128 = vadd.f32 %v8099, %v8127
  %8129 = vmatmul.f32.gmra.mxu0 %v7278
  %v8130 = vpop.f32.mrf.mxu0
  %v8131 = vadd.f32 %v8102, %v8130
  %8132 = vmatmul.f32.gmra.mxu0 %v7298
  %v8133 = vpop.f32.mrf.mxu0
  %v8134 = vadd.f32 %v8105, %v8133
  %8135 = vmatmul.f32.gmra.mxu0 %v7318
  %v8136 = vpop.f32.mrf.mxu0
  %v8137 = vadd.f32 %v8108, %v8136
  %8138 = vdwg.mxu0
  %8139 = vmatpush.msra.mxu0 %v7609
  %8140 = vmatpush.msra.mxu0 %v7608
  %8141 = vmatpush.msra.mxu0 %v7607
  %8142 = vmatpush.msra.mxu0 %v7606
  %8143 = vmatpush.msra.mxu0 %v7605
  %8144 = vmatpush.msra.mxu0 %v7604
  %8145 = vmatpush.msra.mxu0 %v7603
  %8146 = vmatpush.msra.mxu0 %v7602
  %8147 = vmatpush.msra.mxu0 %v7601
  %8148 = vmatpush.msra.mxu0 %v7600
  %8149 = vmatpush.msra.mxu0 %v7599
  %8150 = vmatpush.msra.mxu0 %v7598
  %8151 = vmatpush.msra.mxu0 %v7597
  %8152 = vmatpush.msra.mxu0 %v7596
  %8153 = vmatpush.msra.mxu0 %v7595
  %8154 = vmatpush.msra.mxu0 %v7594
  %8155 = vmatmul.f32.gmra.mxu0 %v7259
  %v8156 = vpop.f32.mrf.mxu0
  %v8157 = vadd.f32 %v8128, %v8156
  %8158 = vmatmul.f32.gmra.mxu0 %v7279
  %v8159 = vpop.f32.mrf.mxu0
  %v8160 = vadd.f32 %v8131, %v8159
  %8161 = vmatmul.f32.gmra.mxu0 %v7299
  %v8162 = vpop.f32.mrf.mxu0
  %v8163 = vadd.f32 %v8134, %v8162
  %8164 = vmatmul.f32.gmra.mxu0 %v7319
  %v8165 = vpop.f32.mrf.mxu0
  %v8166 = vadd.f32 %v8137, %v8165
  %8167 = vdwg.mxu0
  %8168 = vmatpush.msra.mxu0 %v7625
  %8169 = vmatpush.msra.mxu0 %v7624
  %8170 = vmatpush.msra.mxu0 %v7623
  %8171 = vmatpush.msra.mxu0 %v7622
  %8172 = vmatpush.msra.mxu0 %v7621
  %8173 = vmatpush.msra.mxu0 %v7620
  %8174 = vmatpush.msra.mxu0 %v7619
  %8175 = vmatpush.msra.mxu0 %v7618
  %8176 = vmatpush.msra.mxu0 %v7617
  %8177 = vmatpush.msra.mxu0 %v7616
  %8178 = vmatpush.msra.mxu0 %v7615
  %8179 = vmatpush.msra.mxu0 %v7614
  %8180 = vmatpush.msra.mxu0 %v7613
  %8181 = vmatpush.msra.mxu0 %v7612
  %8182 = vmatpush.msra.mxu0 %v7611
  %8183 = vmatpush.msra.mxu0 %v7610
  %8184 = vmatmul.f32.gmra.mxu0 %v7260
  %v8185 = vpop.f32.mrf.mxu0
  %v8186 = vadd.f32 %v8157, %v8185
  %8187 = vmatmul.f32.gmra.mxu0 %v7280
  %v8188 = vpop.f32.mrf.mxu0
  %v8189 = vadd.f32 %v8160, %v8188
  %8190 = vmatmul.f32.gmra.mxu0 %v7300
  %v8191 = vpop.f32.mrf.mxu0
  %v8192 = vadd.f32 %v8163, %v8191
  %8193 = vmatmul.f32.gmra.mxu0 %v7320
  %v8194 = vpop.f32.mrf.mxu0
  %v8195 = vadd.f32 %v8166, %v8194
  %8196 = vdwg.mxu0
  %8197 = vmatpush.msra.mxu0 %v7641
  %8198 = vmatpush.msra.mxu0 %v7640
  %8199 = vmatpush.msra.mxu0 %v7639
  %8200 = vmatpush.msra.mxu0 %v7638
  %8201 = vmatpush.msra.mxu0 %v7637
  %8202 = vmatpush.msra.mxu0 %v7636
  %8203 = vmatpush.msra.mxu0 %v7635
  %8204 = vmatpush.msra.mxu0 %v7634
  %8205 = vmatpush.msra.mxu0 %v7633
  %8206 = vmatpush.msra.mxu0 %v7632
  %8207 = vmatpush.msra.mxu0 %v7631
  %8208 = vmatpush.msra.mxu0 %v7630
  %8209 = vmatpush.msra.mxu0 %v7629
  %8210 = vmatpush.msra.mxu0 %v7628
  %8211 = vmatpush.msra.mxu0 %v7627
  %8212 = vmatpush.msra.mxu0 %v7626
  %8213 = vmatmul.f32.gmra.mxu0 %v7261
  %v8214 = vpop.f32.mrf.mxu0
  %v8215 = vadd.f32 %v8186, %v8214
  %8216 = vmatmul.f32.gmra.mxu0 %v7281
  %v8217 = vpop.f32.mrf.mxu0
  %v8218 = vadd.f32 %v8189, %v8217
  %8219 = vmatmul.f32.gmra.mxu0 %v7301
  %v8220 = vpop.f32.mrf.mxu0
  %v8221 = vadd.f32 %v8192, %v8220
  %8222 = vmatmul.f32.gmra.mxu0 %v7321
  %v8223 = vpop.f32.mrf.mxu0
  %v8224 = vadd.f32 %v8195, %v8223
  %8225 = vdwg.mxu0
  %v8226 = vld [vmem:[%s6] sm:$0xff]
  %v8227 = vld [vmem:[%s6 + $0x8] sm:$0xff]
  %v8228 = vld [vmem:[%s6 + $0x10] sm:$0xff]
  %v8229 = vld [vmem:[%s6 + $0x18] sm:$0xff]
  %v8230 = vld [vmem:[%s6 + $0x20] sm:$0xff]
  %v8231 = vld [vmem:[%s6 + $0x28] sm:$0xff]
  %v8232 = vld [vmem:[%s6 + $0x30] sm:$0x3]
  %v8233 = vld [vmem:[%s7] sm:$0x1]
  %v8235 = vperm.slane %v8233, 0
  %vm8237 = vcmask 408576
  %v8239 = vsel %vm8237, %v8215, 0
  %v8242 = vsel %vm8237, %v8218, 0
  %v8245 = vsel %vm8237, %v8221, 0
  %v8248 = vsel %vm8237, %v8224, 0
  %vm8250 = vcmask 1041408
  %v8252 = vsel %vm8250, %v8232, 0
  %8254 = vmatpush.msra.mxu0 0.0
  %8255 = vmatpush.msra.mxu0 0.0
  %8256 = vmatpush.msra.mxu0 0.0
  %8257 = vmatpush.msra.mxu0 0.0
  %8258 = vmatpush.msra.mxu0 0.0
  %8259 = vmatpush.msra.mxu0 0.0
  %8260 = vmatpush.msra.mxu0 0.0
  %8261 = vmatpush.msra.mxu0 0.0
  %8262 = vmatpush.msra.mxu0 0.0
  %8263 = vmatpush.msra.mxu0 %v8252
  %8264 = vmatpush.msra.mxu0 %v8231
  %8265 = vmatpush.msra.mxu0 %v8230
  %8266 = vmatpush.msra.mxu0 %v8229
  %8267 = vmatpush.msra.mxu0 %v8228
  %8268 = vmatpush.msra.mxu0 %v8227
  %8269 = vmatpush.msra.mxu0 %v8226
  %8270 = vmatmul.f32.gmra.mxu0 %v8239
  %v8271 = vpop.f32.mrf.mxu0
  %v8272 = vadd.f32 %v8235, %v8271
  %8273 = vmatmul.f32.gmra.mxu0 %v8242
  %v8274 = vpop.f32.mrf.mxu0
  %v8275 = vadd.f32 %v8235, %v8274
  %8276 = vmatmul.f32.gmra.mxu0 %v8245
  %v8277 = vpop.f32.mrf.mxu0
  %v8278 = vadd.f32 %v8235, %v8277
  %8279 = vmatmul.f32.gmra.mxu0 %v8248
  %v8280 = vpop.f32.mrf.mxu0
  %v8281 = vadd.f32 %v8235, %v8280
  %8282 = vdwg.mxu0
  %v8283 = vxor.u32 %v8272, 2147483648
  %v8284 = vxor.u32 %v8275, 2147483648
  %v8285 = vxor.u32 %v8278, 2147483648
  %v8286 = vxor.u32 %v8281, 2147483648
  %v8287 = vmul.f32 %v8283, 1.442695
  %v8288 = vpow.pop %v8287
  %v8289 = vmul.f32 %v8284, 1.442695
  %v8290 = vpow.pop %v8289
  %v8291 = vmul.f32 %v8285, 1.442695
  %v8292 = vpow.pop %v8291
  %v8293 = vmul.f32 %v8286, 1.442695
  %v8294 = vpow.pop %v8293
  %v8295 = vadd.f32 %v8288, 1.0
  %v8296 = vadd.f32 %v8290, 1.0
  %v8297 = vadd.f32 %v8292, 1.0
  %v8298 = vadd.f32 %v8294, 1.0
  %v8299 = vrcp.pop %v8295
  %v8300 = vmul.f32 %v8295, %v8299
  %v8301 = vsub.f32 1.0, %v8300
  %v8302 = vmul.f32 %v8299, %v8301
  %v8303 = vadd.f32 %v8299, %v8302
  %vm8304 = vweird.f32 %v8295
  %vm8305 = vweird.f32 %v8299
  %vm8306 = vmor %vm8304, %vm8305
  %v8307 = vsel %vm8306, %v8299, %v8303
  %v8308 = vand.u32 2147483647, %v8295
  %vm8309 = vcmp.eq.f32.partialorder %v8308, 8.507059e+37
  %v8310 = vand.u32 %v8295, 2147483648
  %v8311 = vor.u32 1.1754944e-38, %v8310
  %v8312 = vsel %vm8309, %v8311, %v8307
  %v8313 = vmul.f32 1.0, %v8312
  %v8314 = vrcp.pop %v8296
  %v8315 = vmul.f32 %v8296, %v8314
  %v8316 = vsub.f32 1.0, %v8315
  %v8317 = vmul.f32 %v8314, %v8316
  %v8318 = vadd.f32 %v8314, %v8317
  %vm8319 = vweird.f32 %v8296
  %vm8320 = vweird.f32 %v8314
  %vm8321 = vmor %vm8319, %vm8320
  %v8322 = vsel %vm8321, %v8314, %v8318
  %v8323 = vand.u32 2147483647, %v8296
  %vm8324 = vcmp.eq.f32.partialorder %v8323, 8.507059e+37
  %v8325 = vand.u32 %v8296, 2147483648
  %v8326 = vor.u32 1.1754944e-38, %v8325
  %v8327 = vsel %vm8324, %v8326, %v8322
  %v8328 = vmul.f32 1.0, %v8327
  %v8329 = vrcp.pop %v8297
  %v8330 = vmul.f32 %v8297, %v8329
  %v8331 = vsub.f32 1.0, %v8330
  %v8332 = vmul.f32 %v8329, %v8331
  %v8333 = vadd.f32 %v8329, %v8332
  %vm8334 = vweird.f32 %v8297
  %vm8335 = vweird.f32 %v8329
  %vm8336 = vmor %vm8334, %vm8335
  %v8337 = vsel %vm8336, %v8329, %v8333
  %v8338 = vand.u32 2147483647, %v8297
  %vm8339 = vcmp.eq.f32.partialorder %v8338, 8.507059e+37
  %v8340 = vand.u32 %v8297, 2147483648
  %v8341 = vor.u32 1.1754944e-38, %v8340
  %v8342 = vsel %vm8339, %v8341, %v8337
  %v8343 = vmul.f32 1.0, %v8342
  %v8344 = vrcp.pop %v8298
  %v8345 = vmul.f32 %v8298, %v8344
  %v8346 = vsub.f32 1.0, %v8345
  %v8347 = vmul.f32 %v8344, %v8346
  %v8348 = vadd.f32 %v8344, %v8347
  %vm8349 = vweird.f32 %v8298
  %vm8350 = vweird.f32 %v8344
  %vm8351 = vmor %vm8349, %vm8350
  %v8352 = vsel %vm8351, %v8344, %v8348
  %v8353 = vand.u32 2147483647, %v8298
  %vm8354 = vcmp.eq.f32.partialorder %v8353, 8.507059e+37
  %v8355 = vand.u32 %v8298, 2147483648
  %v8356 = vor.u32 1.1754944e-38, %v8355
  %v8357 = vsel %vm8354, %v8356, %v8352
  %v8358 = vmul.f32 1.0, %v8357
  %vm8359 = vcmask 31744
  %8360 = vst.msk [vmem:[%s8] sm:$0xff] %vm8359, %v8313
  %8361 = vst.msk [vmem:[%s8 + $0x8] sm:$0xff] %vm8359, %v8328
  %8362 = vst.msk [vmem:[%s8 + $0x10] sm:$0xff] %vm8359, %v8343
  %8363 = vst.msk [vmem:[%s8 + $0x18] sm:$0xff] %vm8359, %v8358
  // Predicated region
  $region34: #{bert_lstm_model.1} parent=0 // pred_check
    _
  $region35: #{bert_lstm_model.1} parent=0 // pred_check_branch
    %8365 = sbr.rel (0) target = $region37
  $region36: #{bert_lstm_model.1} parent=0 // pred_region
    _
  $region37: #{bert_lstm_model.1} parent=0 // pred_fallthru
    _
  // Predicated region
  $region38: #{bert_lstm_model.1} parent=0 // pred_check
    _
  $region39: #{bert_lstm_model.1} parent=0 // pred_check_branch
    %8367 = sbr.rel (0) target = $region41
  $region40: #{bert_lstm_model.1} parent=0 // pred_region
    _
  $region41: #{bert_lstm_model.1} parent=0 // pred_fallthru
    _

</llo_original>
